<compile_context>
chip_gen: v7x
topology: tpu7x:2x2x1
jax: 0.10.0
libtpu: 0.0.40
codegen_flags: <defaults>
</compile_context>

<pallas_src>
import math

import jax
import jax.numpy as jnp
from jax.experimental import pallas as pl
from jax.experimental.pallas import tpu as pltpu


# ----------------------------------------------------------------------------
# Fused kernel: 4-layer bi-GRU + double attention + output head
# ----------------------------------------------------------------------------
def make_encoder_kernel(n_layers, T, Bp, H, out_size, slab_lanes):
    H2, H4, H6 = 2 * H, 4 * H, 6 * H
    pad_lanes = slab_lanes - (H2 + T + out_size)

    def kernel(x_ref,
               w0i_ref, wri_ref, wh_ref, bi_ref, bh_ref,
               attn_w_ref, attn_b_ref, comb_w_ref, comb_b_ref,
               outw_ref, outb_ref,
               slab_ref,
               gi_scr, out_scr):

        def linear(v, w_ref, b_ref):
            return jnp.dot(v, w_ref[...],
                           preferred_element_type=jnp.float32) + b_ref[...]

        # Compile-time lane mask: within each 2H gate pair, first H lanes = fwd dir.
        col = jax.lax.broadcasted_iota(jnp.int32, (Bp, H6), 1)
        fwd_mask = (col % H2) < H

        # -------------------- stacked bidirectional GRU -----------------------
        hidden_cat = None
        for l in range(n_layers):
            # Input-gate projections for ALL timesteps & BOTH directions: 1 MXU matmul.
            if l == 0:
                gi_all = jnp.dot(x_ref[...], w0i_ref[...],
                                 preferred_element_type=jnp.float32) + bi_ref[0]
            else:
                gi_all = jnp.dot(out_scr[...], wri_ref[l - 1],
                                 preferred_element_type=jnp.float32) + bi_ref[l]
            gi_scr[...] = gi_all          # park in VMEM; per-step reads are aligned

            whh = wh_ref[l]               # (2H, 6H) direction-interleaved block weights
            bhh = bh_ref[l]               # (1, 6H)

            h = jnp.zeros((Bp, H2), jnp.float32)        # [h_fwd | h_bwd]
            for s in range(T):            # fully unrolled (T is small)
                rt = T - 1 - s
                gi_f = gi_scr[s * Bp:(s + 1) * Bp, :]   # aligned 8-row tile view
                gi_b = gi_scr[rt * Bp:(rt + 1) * Bp, :]
                gi = jnp.where(fwd_mask, gi_f, gi_b)    # fwd lanes <- t=s, bwd <- t=rt
                gh = jnp.dot(h, whh, preferred_element_type=jnp.float32) + bhh
                r = jax.nn.sigmoid(gi[:, 0:H2] + gh[:, 0:H2])
                z = jax.nn.sigmoid(gi[:, H2:H4] + gh[:, H2:H4])
                n = jnp.tanh(gi[:, H4:H6] + r * gh[:, H4:H6])
                h = (1.0 - z) * n + z * h
                # Layer output at time s (fwd half) / time rt (bwd half).
                out_scr[s * Bp:(s + 1) * Bp, 0:H] = h[:, 0:H]
                out_scr[rt * Bp:(rt + 1) * Bp, H:H2] = h[:, H:H2]

            if l == 0:
                hidden_cat = h            # layer-0 final [h_fwd | h_bwd] == cat(h_n[0], h_n[1])

        # -------------------- double attention + output head ------------------
        # Last layer's outputs are resident in out_scr: row block t = [out_f(t)|out_b(t)].
        rows = [out_scr[t * Bp:(t + 1) * Bp, :] for t in range(T)]   # T x (Bp, 2H)

        def weighted_ctx(w):              # (Bp, T) -> (Bp, 2H), VPU multiply-accumulate
            ctx = w[:, 0:1] * rows[0]
            for t in range(1, T):
                ctx = ctx + w[:, t:t + 1] * rows[t]
            return ctx

        aw1 = linear(hidden_cat, attn_w_ref, attn_b_ref)             # (Bp, T), no softmax
        ctx1 = weighted_ctx(aw1)                                     # (Bp, 2H)
        logits = linear(ctx1, attn_w_ref, attn_b_ref)                # (Bp, T)
        m = jnp.max(logits, axis=1, keepdims=True)
        e = jnp.exp(logits - m)
        attn_w2 = e * pl.reciprocal(jnp.sum(e, axis=1, keepdims=True), approx=True)
        ctx2 = weighted_ctx(attn_w2)                                 # (Bp, 2H)
        comb = jnp.maximum(linear(ctx2, comb_w_ref, comb_b_ref), 0.0)
        y = linear(comb, outw_ref, outb_ref)                         # (Bp, out)

        # Single lane-dense output slab: [hidden(2H) | attn(T) | y(out) | zero pad].
        parts = [hidden_cat, attn_w2, y]
        if pad_lanes > 0:
            parts.append(jnp.zeros((Bp, pad_lanes), jnp.float32))
        slab_ref[...] = jnp.concatenate(parts, axis=1)

    return kernel


def encoder_rnn_forward(x, packed):
    """x: (T, B, input_size). Returns (y, hidden, attn_weights) like the PyTorch module."""
    T, B, input_size = x.shape
    H = packed["wh"].shape[1] // 2
    H2 = 2 * H
    n_layers = packed["wh"].shape[0]
    out_size = packed["out_w"].shape[1]
    # The module's attention is only well-defined when max_length == T.
    assert packed["attn_w"].shape == (H2, T), "attention assumes max_length == T"

    Bp = ((B + 7) // 8) * 8                                   # pad batch to 8-sublane tile
    slab_lanes = ((H2 + T + out_size + 127) // 128) * 128     # lane-dense output width

    x_pad = jnp.pad(x.astype(jnp.float32), ((0, 0), (0, Bp - B), (0, 0)))
    flat_x = x_pad.reshape(T * Bp, input_size)                # row index = t*Bp + b

    kernel = make_encoder_kernel(n_layers, T, Bp, H, out_size, slab_lanes)
    vmem = pl.BlockSpec(memory_space=pltpu.MemorySpace.VMEM)

    slab = pl.pallas_call(
        kernel,
        out_shape=jax.ShapeDtypeStruct((Bp, slab_lanes), jnp.float32),
        in_specs=[vmem] * 12,
        out_specs=vmem,
        scratch_shapes=[pltpu.VMEM((T * Bp, 6 * H), jnp.float32),   # gi_scr
                        pltpu.VMEM((T * Bp, H2), jnp.float32)],     # out_scr
    )(flat_x,
      packed["w0i"], packed["wri"], packed["wh"], packed["bi"], packed["bh"],
      packed["attn_w"], packed["attn_b"], packed["comb_w"], packed["comb_b"],
      packed["out_w"], packed["out_b"])

    hidden = slab[:B, 0:H2]
    attn_w = slab[:B, H2:H2 + T]
    y = slab[:B, H2 + T:H2 + T + out_size]
    return y, hidden, attn_w


# ----------------------------------------------------------------------------
# Host-side weight packing (pre-transpose, direction-interleaved gate columns)
# ----------------------------------------------------------------------------
def pack_params(params, hidden_size):
    H = hidden_size
    n_layers = len(params["gru"])

    def interleave(a_f, a_b):
        # a_f / a_b have last dim 3H in PyTorch gate order [r|z|n];
        # output last dim 6H ordered [r_f|r_b|z_f|z_b|n_f|n_b].
        parts = []
        for g in range(3):
            parts.append(a_f[..., g * H:(g + 1) * H])
            parts.append(a_b[..., g * H:(g + 1) * H])
        return jnp.concatenate(parts, axis=-1)

    def pack_layer(layer):
        wih = interleave(layer["wih_f"].T, layer["wih_b"].T)     # (Din, 6H)
        bih = interleave(layer["bih_f"], layer["bih_b"])         # (1, 6H)
        bhh = interleave(layer["bhh_f"], layer["bhh_b"])         # (1, 6H)
        whh_fT, whh_bT = layer["whh_f"].T, layer["whh_b"].T      # (H, 3H)
        whh = jnp.zeros((2 * H, 6 * H), jnp.float32)             # rows: [h_f | h_b]
        for g in range(3):
            whh = whh.at[0:H, (2 * g) * H:(2 * g + 1) * H].set(whh_fT[:, g * H:(g + 1) * H])
            whh = whh.at[H:2 * H, (2 * g + 1) * H:(2 * g + 2) * H].set(whh_bT[:, g * H:(g + 1) * H])
        return wih, whh, bih, bhh

    layers = [pack_layer(p) for p in params["gru"]]
    w0i = layers[0][0]                                           # (input_size, 6H)
    if n_layers > 1:
        wri = jnp.stack([l[0] for l in layers[1:]], axis=0)      # (L-1, 2H, 6H)
    else:
        wri = jnp.zeros((1, 2 * H, 6 * H), jnp.float32)          # dummy, never indexed
    return {
        "w0i": w0i,
        "wri": wri,
        "wh": jnp.stack([l[1] for l in layers], axis=0),         # (L, 2H, 6H)
        "bi": jnp.stack([l[2] for l in layers], axis=0),         # (L, 1, 6H)
        "bh": jnp.stack([l[3] for l in layers], axis=0),         # (L, 1, 6H)
        "attn_w": params["attn_w"].T,                            # (2H, T)
        "attn_b": params["attn_b"],                              # (1, T)
        "comb_w": params["comb_w"].T,                            # (2H, H)
        "comb_b": params["comb_b"],                              # (1, H)
        "out_w": params["out_w"].T,                              # (H, out)
        "out_b": params["out_b"],                                # (1, out)
    }


# ----------------------------------------------------------------------------
# Deterministic parameter init (PyTorch-style uniform bounds, PyTorch layouts)
# ----------------------------------------------------------------------------
def init_params(key, input_size, hidden_size, output_size, n_layers, max_length):
    keys = iter(jax.random.split(key, 64))

    def uni(shape, bound):
        return jax.random.uniform(next(keys), shape, jnp.float32, -bound, bound)

    gru_bound = 1.0 / math.sqrt(hidden_size)
    params = {"gru": []}
    for l in range(n_layers):
        in_sz = input_size if l == 0 else 2 * hidden_size
        layer = {}
        for d in ("f", "b"):
            layer["wih_" + d] = uni((3 * hidden_size, in_sz), gru_bound)
            layer["whh_" + d] = uni((3 * hidden_size, hidden_size), gru_bound)
            layer["bih_" + d] = uni((1, 3 * hidden_size), gru_bound)
            layer["bhh_" + d] = uni((1, 3 * hidden_size), gru_bound)
        params["gru"].append(layer)

    b2h = 1.0 / math.sqrt(2 * hidden_size)
    bh = 1.0 / math.sqrt(hidden_size)
    params["attn_w"] = uni((max_length, 2 * hidden_size), b2h)
    params["attn_b"] = uni((1, max_length), b2h)
    params["comb_w"] = uni((hidden_size, 2 * hidden_size), b2h)
    params["comb_b"] = uni((1, hidden_size), b2h)
    params["out_w"] = uni((output_size, hidden_size), bh)
    params["out_b"] = uni((1, output_size), bh)
    return params


# ----------------------------------------------------------------------------
# Plain-JAX reference of the PyTorch module (eval mode), for verification
# ----------------------------------------------------------------------------
def encoder_rnn_reference(x, params, n_layers):
    T, B, _ = x.shape
    H = params["gru"][0]["whh_f"].shape[1]

    def gru_dir(xs, wih, whh, bih, bhh, reverse):
        h = jnp.zeros((B, H), jnp.float32)
        outs = [None] * T
        order = range(T - 1, -1, -1) if reverse else range(T)
        for t in order:
            gi = xs[t] @ wih.T + bih[0]
            gh = h @ whh.T + bhh[0]
            r = jax.nn.sigmoid(gi[:, :H] + gh[:, :H])
            z = jax.nn.sigmoid(gi[:, H:2 * H] + gh[:, H:2 * H])
            n = jnp.tanh(gi[:, 2 * H:] + r * gh[:, 2 * H:])
            h = (1.0 - z) * n + z * h
            outs[t] = h
        return jnp.stack(outs, axis=0), h

    layer_in = x
    h0f = h0b = None
    for l in range(n_layers):
        p = params["gru"][l]
        of, hf = gru_dir(layer_in, p["wih_f"], p["whh_f"], p["bih_f"], p["bhh_f"], False)
        ob, hb = gru_dir(layer_in, p["wih_b"], p["whh_b"], p["bih_b"], p["bhh_b"], True)
        if l == 0:
            h0f, h0b = hf, hb
        layer_in = jnp.concatenate([of, ob], axis=-1)

    out_seq = jnp.transpose(layer_in, (1, 0, 2))                  # (B, T, 2H)
    hidden = jnp.concatenate([h0f, h0b], axis=1)                  # (B, 2H)
    aw = hidden @ params["attn_w"].T + params["attn_b"][0]        # (B, T)
    ctx1 = jnp.einsum("bt,bth->bh", aw, out_seq)
    logits = ctx1 @ params["attn_w"].T + params["attn_b"][0]
    attn_w2 = jax.nn.softmax(logits, axis=1)
    ctx2 = jnp.einsum("bt,bth->bh", attn_w2, out_seq)
    comb = jax.nn.relu(ctx2 @ params["comb_w"].T + params["comb_b"][0])
    y = comb @ params["out_w"].T + params["out_b"][0]
    return y, hidden, attn_w2


if __name__ == "__main__":
    T, B = 8, 2
    input_size, hidden_size, output_size, n_layers = 16, 32, 4, 4

    key = jax.random.PRNGKey(0)
    kx, kp = jax.random.split(key)
    x = jax.random.normal(kx, (T, B, input_size), jnp.float32)    # (T, B, input_size)
    params = init_params(kp, input_size, hidden_size, output_size, n_layers, T)
    packed = pack_params(params, hidden_size)

    y, hidden, attn_weights = encoder_rnn_forward(x, packed)
    jax.block_until_ready((y, hidden, attn_weights))

    assert y.shape == (B, output_size)
    assert hidden.shape == (B, 2 * hidden_size)
    assert attn_weights.shape == (B, T)

    # Numerical check against the plain-JAX reference of the same module.
    y_ref_v, hid_ref_v, aw_ref_v = encoder_rnn_reference(x, params, n_layers)
    assert jnp.allclose(y, y_ref_v, atol=2e-3, rtol=2e-3)
    assert jnp.allclose(hidden, hid_ref_v, atol=2e-3, rtol=2e-3)
    assert jnp.allclose(attn_weights, aw_ref_v, atol=2e-3, rtol=2e-3)

    print("KERNEL_OK")
</pallas_src>

<mosaic_0001>
module attributes {stable_mosaic.version = 11 : i64} {
  func.func @kernel(%arg0: memref<64x16xf32, #tpu.memory_space<vmem>>, %arg1: memref<16x192xf32, #tpu.memory_space<vmem>>, %arg2: memref<3x64x192xf32, #tpu.memory_space<vmem>>, %arg3: memref<4x64x192xf32, #tpu.memory_space<vmem>>, %arg4: memref<4x1x192xf32, #tpu.memory_space<vmem>>, %arg5: memref<4x1x192xf32, #tpu.memory_space<vmem>>, %arg6: memref<64x8xf32, #tpu.memory_space<vmem>>, %arg7: memref<1x8xf32, #tpu.memory_space<vmem>>, %arg8: memref<64x32xf32, #tpu.memory_space<vmem>>, %arg9: memref<1x32xf32, #tpu.memory_space<vmem>>, %arg10: memref<32x4xf32, #tpu.memory_space<vmem>>, %arg11: memref<1x4xf32, #tpu.memory_space<vmem>>, %arg12: memref<8x128xf32, #tpu.memory_space<vmem>>, %arg13: memref<64x192xf32, #tpu.memory_space<vmem>>, %arg14: memref<64x64xf32, #tpu.memory_space<vmem>>) attributes {dimension_semantics = [], scalar_prefetch = 0 : i64, scratch_operands = 2 : i64, tpu.core_type = #tpu.core_type<tc>} {
    %0 = tpu.iota {dimensions = array<i32: 1>} : vector<8x192xi32>
    %c64_i32 = arith.constant 64 : i32
    %c0_i32 = arith.constant 0 : i32
    %1 = arith.cmpi eq, %c64_i32, %c0_i32 : i32
    %c1_i32 = arith.constant 1 : i32
    %2 = arith.select %1, %c1_i32, %c64_i32 : i32
    %3 = vector.broadcast %2 : i32 to vector<8x192xi32>
    %4 = arith.remsi %0, %3 : vector<8x192xi32>
    %c0_i32_0 = arith.constant 0 : i32
    %5 = vector.broadcast %c0_i32_0 : i32 to vector<8x192xi32>
    %6 = arith.cmpi ne, %4, %5 : vector<8x192xi32>
    %c0_i32_1 = arith.constant 0 : i32
    %7 = vector.broadcast %c0_i32_1 : i32 to vector<8x192xi32>
    %8 = arith.cmpi slt, %4, %7 : vector<8x192xi32>
    %c0_i32_2 = arith.constant 0 : i32
    %9 = arith.cmpi slt, %2, %c0_i32_2 : i32
    %10 = vector.broadcast %9 : i1 to vector<8x192xi1>
    %11 = vector.broadcast %10 : vector<8x192xi1> to vector<8x192xi1>
    %12 = arith.xori %8, %11 : vector<8x192xi1>
    %13 = arith.andi %12, %6 : vector<8x192xi1>
    %14 = vector.broadcast %2 : i32 to vector<8x192xi32>
    %15 = arith.addi %4, %14 : vector<8x192xi32>
    %16 = arith.select %13, %15, %4 : vector<8x192xi1>, vector<8x192xi32>
    %c32_i32 = arith.constant 32 : i32
    %17 = vector.broadcast %c32_i32 : i32 to vector<8x192xi32>
    %18 = arith.cmpi slt, %16, %17 : vector<8x192xi32>
    %c0 = arith.constant 0 : index
    %c0_3 = arith.constant 0 : index
    %19 = vector.load %arg0[%c0, %c0_3] : memref<64x16xf32, #tpu.memory_space<vmem>>, vector<64x16xf32>
    %c0_4 = arith.constant 0 : index
    %c0_5 = arith.constant 0 : index
    %20 = vector.load %arg1[%c0_4, %c0_5] : memref<16x192xf32, #tpu.memory_space<vmem>>, vector<16x192xf32>
    %cst = arith.constant dense<0.000000e+00> : vector<64x192xf32>
    %21 = tpu.matmul %19, %20, %cst {dimension_numbers = #tpu.dot_dimension_numbers<[1], [0], [0], [1], [0, 0, 1, 1], [], []>} : vector<64x16xf32>, vector<16x192xf32>, vector<64x192xf32> -> vector<64x192xf32>
    %c0_6 = arith.constant 0 : index
    %c0_7 = arith.constant 0 : index
    %c0_8 = arith.constant 0 : index
    %22 = vector.load %arg4[%c0_6, %c0_7, %c0_8] : memref<4x1x192xf32, #tpu.memory_space<vmem>>, vector<1x1x192xf32>
    %23 = vector.shape_cast %22 : vector<1x1x192xf32> to vector<1x192xf32>
    %24 = vector.broadcast %23 : vector<1x192xf32> to vector<64x192xf32>
    %25 = arith.addf %21, %24 : vector<64x192xf32>
    %c0_9 = arith.constant 0 : index
    %c0_10 = arith.constant 0 : index
    %26 = vector.load %arg13[%c0_9, %c0_10] : memref<64x192xf32, #tpu.memory_space<vmem>>, vector<64x192xf32>
    tpu.vector_store %arg13[%c0_9, %c0_10], %25 {strides = array<i32>} : memref<64x192xf32, #tpu.memory_space<vmem>>, vector<64x192xf32>,
    %c0_11 = arith.constant 0 : index
    %c0_12 = arith.constant 0 : index
    %c0_13 = arith.constant 0 : index
    %27 = vector.load %arg3[%c0_11, %c0_12, %c0_13] : memref<4x64x192xf32, #tpu.memory_space<vmem>>, vector<1x64x192xf32>
    %28 = vector.shape_cast %27 : vector<1x64x192xf32> to vector<64x192xf32>
    %c0_14 = arith.constant 0 : index
    %c0_15 = arith.constant 0 : index
    %c0_16 = arith.constant 0 : index
    %29 = vector.load %arg5[%c0_14, %c0_15, %c0_16] : memref<4x1x192xf32, #tpu.memory_space<vmem>>, vector<1x1x192xf32>
    %30 = vector.shape_cast %29 : vector<1x1x192xf32> to vector<1x192xf32>
    %cst_17 = arith.constant 0.000000e+00 : f32
    %31 = vector.broadcast %cst_17 : f32 to vector<8x64xf32>
    %c0_18 = arith.constant 0 : index
    %c0_19 = arith.constant 0 : index
    %32 = vector.load %arg13[%c0_18, %c0_19] : memref<64x192xf32, #tpu.memory_space<vmem>>, vector<8x192xf32>
    %c56 = arith.constant 56 : index
    %c0_20 = arith.constant 0 : index
    %33 = vector.load %arg13[%c56, %c0_20] : memref<64x192xf32, #tpu.memory_space<vmem>>, vector<8x192xf32>
    %34 = arith.select %18, %32, %33 : vector<8x192xi1>, vector<8x192xf32>
    %cst_21 = arith.constant dense<0.000000e+00> : vector<8x192xf32>
    %35 = tpu.matmul %31, %28, %cst_21 {dimension_numbers = #tpu.dot_dimension_numbers<[1], [0], [0], [1], [0, 0, 1, 1], [], []>} : vector<8x64xf32>, vector<64x192xf32>, vector<8x192xf32> -> vector<8x192xf32>
    %36 = vector.broadcast %30 : vector<1x192xf32> to vector<8x192xf32>
    %37 = arith.addf %35, %36 : vector<8x192xf32>
    %38 = vector.extract_strided_slice %34 {offsets = [0, 0], sizes = [8, 64], strides = [1, 1]} : vector<8x192xf32> to vector<8x64xf32>
    %39 = vector.extract_strided_slice %37 {offsets = [0, 0], sizes = [8, 64], strides = [1, 1]} : vector<8x192xf32> to vector<8x64xf32>
    %40 = arith.addf %38, %39 : vector<8x64xf32>
    %41 = arith.negf %40 : vector<8x64xf32>
    %42 = math.exp %41 : vector<8x64xf32>
    %cst_22 = arith.constant 1.000000e+00 : f32
    %43 = vector.broadcast %cst_22 : f32 to vector<8x64xf32>
    %44 = arith.addf %43, %42 : vector<8x64xf32>
    %45 = arith.divf %43, %44 : vector<8x64xf32>
    %46 = vector.extract_strided_slice %34 {offsets = [0, 64], sizes = [8, 64], strides = [1, 1]} : vector<8x192xf32> to vector<8x64xf32>
    %47 = vector.extract_strided_slice %37 {offsets = [0, 64], sizes = [8, 64], strides = [1, 1]} : vector<8x192xf32> to vector<8x64xf32>
    %48 = arith.addf %46, %47 : vector<8x64xf32>
    %49 = arith.negf %48 : vector<8x64xf32>
    %50 = math.exp %49 : vector<8x64xf32>
    %cst_23 = arith.constant 1.000000e+00 : f32
    %51 = vector.broadcast %cst_23 : f32 to vector<8x64xf32>
    %52 = arith.addf %51, %50 : vector<8x64xf32>
    %53 = arith.divf %51, %52 : vector<8x64xf32>
    %54 = vector.extract_strided_slice %34 {offsets = [0, 128], sizes = [8, 64], strides = [1, 1]} : vector<8x192xf32> to vector<8x64xf32>
    %55 = vector.extract_strided_slice %37 {offsets = [0, 128], sizes = [8, 64], strides = [1, 1]} : vector<8x192xf32> to vector<8x64xf32>
    %56 = arith.mulf %45, %55 : vector<8x64xf32>
    %57 = arith.addf %54, %56 : vector<8x64xf32>
    %58 = math.tanh %57 : vector<8x64xf32>
    %cst_24 = arith.constant 1.000000e+00 : f32
    %59 = vector.broadcast %cst_24 : f32 to vector<8x64xf32>
    %60 = arith.subf %59, %53 : vector<8x64xf32>
    %61 = arith.mulf %60, %58 : vector<8x64xf32>
    %62 = arith.mulf %53, %31 : vector<8x64xf32>
    %63 = arith.addf %61, %62 : vector<8x64xf32>
    %64 = vector.extract_strided_slice %63 {offsets = [0, 0], sizes = [8, 32], strides = [1, 1]} : vector<8x64xf32> to vector<8x32xf32>
    %c0_25 = arith.constant 0 : index
    %c0_26 = arith.constant 0 : index
    %65 = vector.load %arg14[%c0_25, %c0_26] : memref<64x64xf32, #tpu.memory_space<vmem>>, vector<8x32xf32>
    tpu.vector_store %arg14[%c0_25, %c0_26], %64 {strides = array<i32>} : memref<64x64xf32, #tpu.memory_space<vmem>>, vector<8x32xf32>,
    %66 = vector.extract_strided_slice %63 {offsets = [0, 32], sizes = [8, 32], strides = [1, 1]} : vector<8x64xf32> to vector<8x32xf32>
    %c56_27 = arith.constant 56 : index
    %c32 = arith.constant 32 : index
    %67 = vector.load %arg14[%c56_27, %c32] : memref<64x64xf32, #tpu.memory_space<vmem>>, vector<8x32xf32>
    tpu.vector_store %arg14[%c56_27, %c32], %66 {strides = array<i32>} : memref<64x64xf32, #tpu.memory_space<vmem>>, vector<8x32xf32>,
    %c8 = arith.constant 8 : index
    %c0_28 = arith.constant 0 : index
    %68 = vector.load %arg13[%c8, %c0_28] : memref<64x192xf32, #tpu.memory_space<vmem>>, vector<8x192xf32>
    %c48 = arith.constant 48 : index
    %c0_29 = arith.constant 0 : index
    %69 = vector.load %arg13[%c48, %c0_29] : memref<64x192xf32, #tpu.memory_space<vmem>>, vector<8x192xf32>
    %70 = arith.select %18, %68, %69 : vector<8x192xi1>, vector<8x192xf32>
    %cst_30 = arith.constant dense<0.000000e+00> : vector<8x192xf32>
    %71 = tpu.matmul %63, %28, %cst_30 {dimension_numbers = #tpu.dot_dimension_numbers<[1], [0], [0], [1], [0, 0, 1, 1], [], []>} : vector<8x64xf32>, vector<64x192xf32>, vector<8x192xf32> -> vector<8x192xf32>
    %72 = vector.broadcast %30 : vector<1x192xf32> to vector<8x192xf32>
    %73 = arith.addf %71, %72 : vector<8x192xf32>
    %74 = vector.extract_strided_slice %70 {offsets = [0, 0], sizes = [8, 64], strides = [1, 1]} : vector<8x192xf32> to vector<8x64xf32>
    %75 = vector.extract_strided_slice %73 {offsets = [0, 0], sizes = [8, 64], strides = [1, 1]} : vector<8x192xf32> to vector<8x64xf32>
    %76 = arith.addf %74, %75 : vector<8x64xf32>
    %77 = arith.negf %76 : vector<8x64xf32>
    %78 = math.exp %77 : vector<8x64xf32>
    %cst_31 = arith.constant 1.000000e+00 : f32
    %79 = vector.broadcast %cst_31 : f32 to vector<8x64xf32>
    %80 = arith.addf %79, %78 : vector<8x64xf32>
    %81 = arith.divf %79, %80 : vector<8x64xf32>
    %82 = vector.extract_strided_slice %70 {offsets = [0, 64], sizes = [8, 64], strides = [1, 1]} : vector<8x192xf32> to vector<8x64xf32>
    %83 = vector.extract_strided_slice %73 {offsets = [0, 64], sizes = [8, 64], strides = [1, 1]} : vector<8x192xf32> to vector<8x64xf32>
    %84 = arith.addf %82, %83 : vector<8x64xf32>
    %85 = arith.negf %84 : vector<8x64xf32>
    %86 = math.exp %85 : vector<8x64xf32>
    %cst_32 = arith.constant 1.000000e+00 : f32
    %87 = vector.broadcast %cst_32 : f32 to vector<8x64xf32>
    %88 = arith.addf %87, %86 : vector<8x64xf32>
    %89 = arith.divf %87, %88 : vector<8x64xf32>
    %90 = vector.extract_strided_slice %70 {offsets = [0, 128], sizes = [8, 64], strides = [1, 1]} : vector<8x192xf32> to vector<8x64xf32>
    %91 = vector.extract_strided_slice %73 {offsets = [0, 128], sizes = [8, 64], strides = [1, 1]} : vector<8x192xf32> to vector<8x64xf32>
    %92 = arith.mulf %81, %91 : vector<8x64xf32>
    %93 = arith.addf %90, %92 : vector<8x64xf32>
    %94 = math.tanh %93 : vector<8x64xf32>
    %cst_33 = arith.constant 1.000000e+00 : f32
    %95 = vector.broadcast %cst_33 : f32 to vector<8x64xf32>
    %96 = arith.subf %95, %89 : vector<8x64xf32>
    %97 = arith.mulf %96, %94 : vector<8x64xf32>
    %98 = arith.mulf %89, %63 : vector<8x64xf32>
    %99 = arith.addf %97, %98 : vector<8x64xf32>
    %100 = vector.extract_strided_slice %99 {offsets = [0, 0], sizes = [8, 32], strides = [1, 1]} : vector<8x64xf32> to vector<8x32xf32>
    %c8_34 = arith.constant 8 : index
    %c0_35 = arith.constant 0 : index
    %101 = vector.load %arg14[%c8_34, %c0_35] : memref<64x64xf32, #tpu.memory_space<vmem>>, vector<8x32xf32>
    tpu.vector_store %arg14[%c8_34, %c0_35], %100 {strides = array<i32>} : memref<64x64xf32, #tpu.memory_space<vmem>>, vector<8x32xf32>,
    %102 = vector.extract_strided_slice %99 {offsets = [0, 32], sizes = [8, 32], strides = [1, 1]} : vector<8x64xf32> to vector<8x32xf32>
    %c48_36 = arith.constant 48 : index
    %c32_37 = arith.constant 32 : index
    %103 = vector.load %arg14[%c48_36, %c32_37] : memref<64x64xf32, #tpu.memory_space<vmem>>, vector<8x32xf32>
    tpu.vector_store %arg14[%c48_36, %c32_37], %102 {strides = array<i32>} : memref<64x64xf32, #tpu.memory_space<vmem>>, vector<8x32xf32>,
    %c16 = arith.constant 16 : index
    %c0_38 = arith.constant 0 : index
    %104 = vector.load %arg13[%c16, %c0_38] : memref<64x192xf32, #tpu.memory_space<vmem>>, vector<8x192xf32>
    %c40 = arith.constant 40 : index
    %c0_39 = arith.constant 0 : index
    %105 = vector.load %arg13[%c40, %c0_39] : memref<64x192xf32, #tpu.memory_space<vmem>>, vector<8x192xf32>
    %106 = arith.select %18, %104, %105 : vector<8x192xi1>, vector<8x192xf32>
    %cst_40 = arith.constant dense<0.000000e+00> : vector<8x192xf32>
    %107 = tpu.matmul %99, %28, %cst_40 {dimension_numbers = #tpu.dot_dimension_numbers<[1], [0], [0], [1], [0, 0, 1, 1], [], []>} : vector<8x64xf32>, vector<64x192xf32>, vector<8x192xf32> -> vector<8x192xf32>
    %108 = vector.broadcast %30 : vector<1x192xf32> to vector<8x192xf32>
    %109 = arith.addf %107, %108 : vector<8x192xf32>
    %110 = vector.extract_strided_slice %106 {offsets = [0, 0], sizes = [8, 64], strides = [1, 1]} : vector<8x192xf32> to vector<8x64xf32>
    %111 = vector.extract_strided_slice %109 {offsets = [0, 0], sizes = [8, 64], strides = [1, 1]} : vector<8x192xf32> to vector<8x64xf32>
    %112 = arith.addf %110, %111 : vector<8x64xf32>
    %113 = arith.negf %112 : vector<8x64xf32>
    %114 = math.exp %113 : vector<8x64xf32>
    %cst_41 = arith.constant 1.000000e+00 : f32
    %115 = vector.broadcast %cst_41 : f32 to vector<8x64xf32>
    %116 = arith.addf %115, %114 : vector<8x64xf32>
    %117 = arith.divf %115, %116 : vector<8x64xf32>
    %118 = vector.extract_strided_slice %106 {offsets = [0, 64], sizes = [8, 64], strides = [1, 1]} : vector<8x192xf32> to vector<8x64xf32>
    %119 = vector.extract_strided_slice %109 {offsets = [0, 64], sizes = [8, 64], strides = [1, 1]} : vector<8x192xf32> to vector<8x64xf32>
    %120 = arith.addf %118, %119 : vector<8x64xf32>
    %121 = arith.negf %120 : vector<8x64xf32>
    %122 = math.exp %121 : vector<8x64xf32>
    %cst_42 = arith.constant 1.000000e+00 : f32
    %123 = vector.broadcast %cst_42 : f32 to vector<8x64xf32>
    %124 = arith.addf %123, %122 : vector<8x64xf32>
    %125 = arith.divf %123, %124 : vector<8x64xf32>
    %126 = vector.extract_strided_slice %106 {offsets = [0, 128], sizes = [8, 64], strides = [1, 1]} : vector<8x192xf32> to vector<8x64xf32>
    %127 = vector.extract_strided_slice %109 {offsets = [0, 128], sizes = [8, 64], strides = [1, 1]} : vector<8x192xf32> to vector<8x64xf32>
    %128 = arith.mulf %117, %127 : vector<8x64xf32>
    %129 = arith.addf %126, %128 : vector<8x64xf32>
    %130 = math.tanh %129 : vector<8x64xf32>
    %cst_43 = arith.constant 1.000000e+00 : f32
    %131 = vector.broadcast %cst_43 : f32 to vector<8x64xf32>
    %132 = arith.subf %131, %125 : vector<8x64xf32>
    %133 = arith.mulf %132, %130 : vector<8x64xf32>
    %134 = arith.mulf %125, %99 : vector<8x64xf32>
    %135 = arith.addf %133, %134 : vector<8x64xf32>
    %136 = vector.extract_strided_slice %135 {offsets = [0, 0], sizes = [8, 32], strides = [1, 1]} : vector<8x64xf32> to vector<8x32xf32>
    %c16_44 = arith.constant 16 : index
    %c0_45 = arith.constant 0 : index
    %137 = vector.load %arg14[%c16_44, %c0_45] : memref<64x64xf32, #tpu.memory_space<vmem>>, vector<8x32xf32>
    tpu.vector_store %arg14[%c16_44, %c0_45], %136 {strides = array<i32>} : memref<64x64xf32, #tpu.memory_space<vmem>>, vector<8x32xf32>,
    %138 = vector.extract_strided_slice %135 {offsets = [0, 32], sizes = [8, 32], strides = [1, 1]} : vector<8x64xf32> to vector<8x32xf32>
    %c40_46 = arith.constant 40 : index
    %c32_47 = arith.constant 32 : index
    %139 = vector.load %arg14[%c40_46, %c32_47] : memref<64x64xf32, #tpu.memory_space<vmem>>, vector<8x32xf32>
    tpu.vector_store %arg14[%c40_46, %c32_47], %138 {strides = array<i32>} : memref<64x64xf32, #tpu.memory_space<vmem>>, vector<8x32xf32>,
    %c24 = arith.constant 24 : index
    %c0_48 = arith.constant 0 : index
    %140 = vector.load %arg13[%c24, %c0_48] : memref<64x192xf32, #tpu.memory_space<vmem>>, vector<8x192xf32>
    %c32_49 = arith.constant 32 : index
    %c0_50 = arith.constant 0 : index
    %141 = vector.load %arg13[%c32_49, %c0_50] : memref<64x192xf32, #tpu.memory_space<vmem>>, vector<8x192xf32>
    %142 = arith.select %18, %140, %141 : vector<8x192xi1>, vector<8x192xf32>
    %cst_51 = arith.constant dense<0.000000e+00> : vector<8x192xf32>
    %143 = tpu.matmul %135, %28, %cst_51 {dimension_numbers = #tpu.dot_dimension_numbers<[1], [0], [0], [1], [0, 0, 1, 1], [], []>} : vector<8x64xf32>, vector<64x192xf32>, vector<8x192xf32> -> vector<8x192xf32>
    %144 = vector.broadcast %30 : vector<1x192xf32> to vector<8x192xf32>
    %145 = arith.addf %143, %144 : vector<8x192xf32>
    %146 = vector.extract_strided_slice %142 {offsets = [0, 0], sizes = [8, 64], strides = [1, 1]} : vector<8x192xf32> to vector<8x64xf32>
    %147 = vector.extract_strided_slice %145 {offsets = [0, 0], sizes = [8, 64], strides = [1, 1]} : vector<8x192xf32> to vector<8x64xf32>
    %148 = arith.addf %146, %147 : vector<8x64xf32>
    %149 = arith.negf %148 : vector<8x64xf32>
    %150 = math.exp %149 : vector<8x64xf32>
    %cst_52 = arith.constant 1.000000e+00 : f32
    %151 = vector.broadcast %cst_52 : f32 to vector<8x64xf32>
    %152 = arith.addf %151, %150 : vector<8x64xf32>
    %153 = arith.divf %151, %152 : vector<8x64xf32>
    %154 = vector.extract_strided_slice %142 {offsets = [0, 64], sizes = [8, 64], strides = [1, 1]} : vector<8x192xf32> to vector<8x64xf32>
    %155 = vector.extract_strided_slice %145 {offsets = [0, 64], sizes = [8, 64], strides = [1, 1]} : vector<8x192xf32> to vector<8x64xf32>
    %156 = arith.addf %154, %155 : vector<8x64xf32>
    %157 = arith.negf %156 : vector<8x64xf32>
    %158 = math.exp %157 : vector<8x64xf32>
    %cst_53 = arith.constant 1.000000e+00 : f32
    %159 = vector.broadcast %cst_53 : f32 to vector<8x64xf32>
    %160 = arith.addf %159, %158 : vector<8x64xf32>
    %161 = arith.divf %159, %160 : vector<8x64xf32>
    %162 = vector.extract_strided_slice %142 {offsets = [0, 128], sizes = [8, 64], strides = [1, 1]} : vector<8x192xf32> to vector<8x64xf32>
    %163 = vector.extract_strided_slice %145 {offsets = [0, 128], sizes = [8, 64], strides = [1, 1]} : vector<8x192xf32> to vector<8x64xf32>
    %164 = arith.mulf %153, %163 : vector<8x64xf32>
    %165 = arith.addf %162, %164 : vector<8x64xf32>
    %166 = math.tanh %165 : vector<8x64xf32>
    %cst_54 = arith.constant 1.000000e+00 : f32
    %167 = vector.broadcast %cst_54 : f32 to vector<8x64xf32>
    %168 = arith.subf %167, %161 : vector<8x64xf32>
    %169 = arith.mulf %168, %166 : vector<8x64xf32>
    %170 = arith.mulf %161, %135 : vector<8x64xf32>
    %171 = arith.addf %169, %170 : vector<8x64xf32>
    %172 = vector.extract_strided_slice %171 {offsets = [0, 0], sizes = [8, 32], strides = [1, 1]} : vector<8x64xf32> to vector<8x32xf32>
    %c24_55 = arith.constant 24 : index
    %c0_56 = arith.constant 0 : index
    %173 = vector.load %arg14[%c24_55, %c0_56] : memref<64x64xf32, #tpu.memory_space<vmem>>, vector<8x32xf32>
    tpu.vector_store %arg14[%c24_55, %c0_56], %172 {strides = array<i32>} : memref<64x64xf32, #tpu.memory_space<vmem>>, vector<8x32xf32>,
    %174 = vector.extract_strided_slice %171 {offsets = [0, 32], sizes = [8, 32], strides = [1, 1]} : vector<8x64xf32> to vector<8x32xf32>
    %c32_57 = arith.constant 32 : index
    %c32_58 = arith.constant 32 : index
    %175 = vector.load %arg14[%c32_57, %c32_58] : memref<64x64xf32, #tpu.memory_space<vmem>>, vector<8x32xf32>
    tpu.vector_store %arg14[%c32_57, %c32_58], %174 {strides = array<i32>} : memref<64x64xf32, #tpu.memory_space<vmem>>, vector<8x32xf32>,
    %c32_59 = arith.constant 32 : index
    %c0_60 = arith.constant 0 : index
    %176 = vector.load %arg13[%c32_59, %c0_60] : memref<64x192xf32, #tpu.memory_space<vmem>>, vector<8x192xf32>
    %c24_61 = arith.constant 24 : index
    %c0_62 = arith.constant 0 : index
    %177 = vector.load %arg13[%c24_61, %c0_62] : memref<64x192xf32, #tpu.memory_space<vmem>>, vector<8x192xf32>
    %178 = arith.select %18, %176, %177 : vector<8x192xi1>, vector<8x192xf32>
    %cst_63 = arith.constant dense<0.000000e+00> : vector<8x192xf32>
    %179 = tpu.matmul %171, %28, %cst_63 {dimension_numbers = #tpu.dot_dimension_numbers<[1], [0], [0], [1], [0, 0, 1, 1], [], []>} : vector<8x64xf32>, vector<64x192xf32>, vector<8x192xf32> -> vector<8x192xf32>
    %180 = vector.broadcast %30 : vector<1x192xf32> to vector<8x192xf32>
    %181 = arith.addf %179, %180 : vector<8x192xf32>
    %182 = vector.extract_strided_slice %178 {offsets = [0, 0], sizes = [8, 64], strides = [1, 1]} : vector<8x192xf32> to vector<8x64xf32>
    %183 = vector.extract_strided_slice %181 {offsets = [0, 0], sizes = [8, 64], strides = [1, 1]} : vector<8x192xf32> to vector<8x64xf32>
    %184 = arith.addf %182, %183 : vector<8x64xf32>
    %185 = arith.negf %184 : vector<8x64xf32>
    %186 = math.exp %185 : vector<8x64xf32>
    %cst_64 = arith.constant 1.000000e+00 : f32
    %187 = vector.broadcast %cst_64 : f32 to vector<8x64xf32>
    %188 = arith.addf %187, %186 : vector<8x64xf32>
    %189 = arith.divf %187, %188 : vector<8x64xf32>
    %190 = vector.extract_strided_slice %178 {offsets = [0, 64], sizes = [8, 64], strides = [1, 1]} : vector<8x192xf32> to vector<8x64xf32>
    %191 = vector.extract_strided_slice %181 {offsets = [0, 64], sizes = [8, 64], strides = [1, 1]} : vector<8x192xf32> to vector<8x64xf32>
    %192 = arith.addf %190, %191 : vector<8x64xf32>
    %193 = arith.negf %192 : vector<8x64xf32>
    %194 = math.exp %193 : vector<8x64xf32>
    %cst_65 = arith.constant 1.000000e+00 : f32
    %195 = vector.broadcast %cst_65 : f32 to vector<8x64xf32>
    %196 = arith.addf %195, %194 : vector<8x64xf32>
    %197 = arith.divf %195, %196 : vector<8x64xf32>
    %198 = vector.extract_strided_slice %178 {offsets = [0, 128], sizes = [8, 64], strides = [1, 1]} : vector<8x192xf32> to vector<8x64xf32>
    %199 = vector.extract_strided_slice %181 {offsets = [0, 128], sizes = [8, 64], strides = [1, 1]} : vector<8x192xf32> to vector<8x64xf32>
    %200 = arith.mulf %189, %199 : vector<8x64xf32>
    %201 = arith.addf %198, %200 : vector<8x64xf32>
    %202 = math.tanh %201 : vector<8x64xf32>
    %cst_66 = arith.constant 1.000000e+00 : f32
    %203 = vector.broadcast %cst_66 : f32 to vector<8x64xf32>
    %204 = arith.subf %203, %197 : vector<8x64xf32>
    %205 = arith.mulf %204, %202 : vector<8x64xf32>
    %206 = arith.mulf %197, %171 : vector<8x64xf32>
    %207 = arith.addf %205, %206 : vector<8x64xf32>
    %208 = vector.extract_strided_slice %207 {offsets = [0, 0], sizes = [8, 32], strides = [1, 1]} : vector<8x64xf32> to vector<8x32xf32>
    %c32_67 = arith.constant 32 : index
    %c0_68 = arith.constant 0 : index
    %209 = vector.load %arg14[%c32_67, %c0_68] : memref<64x64xf32, #tpu.memory_space<vmem>>, vector<8x32xf32>
    tpu.vector_store %arg14[%c32_67, %c0_68], %208 {strides = array<i32>} : memref<64x64xf32, #tpu.memory_space<vmem>>, vector<8x32xf32>,
    %210 = vector.extract_strided_slice %207 {offsets = [0, 32], sizes = [8, 32], strides = [1, 1]} : vector<8x64xf32> to vector<8x32xf32>
    %c24_69 = arith.constant 24 : index
    %c32_70 = arith.constant 32 : index
    %211 = vector.load %arg14[%c24_69, %c32_70] : memref<64x64xf32, #tpu.memory_space<vmem>>, vector<8x32xf32>
    tpu.vector_store %arg14[%c24_69, %c32_70], %210 {strides = array<i32>} : memref<64x64xf32, #tpu.memory_space<vmem>>, vector<8x32xf32>,
    %c40_71 = arith.constant 40 : index
    %c0_72 = arith.constant 0 : index
    %212 = vector.load %arg13[%c40_71, %c0_72] : memref<64x192xf32, #tpu.memory_space<vmem>>, vector<8x192xf32>
    %c16_73 = arith.constant 16 : index
    %c0_74 = arith.constant 0 : index
    %213 = vector.load %arg13[%c16_73, %c0_74] : memref<64x192xf32, #tpu.memory_space<vmem>>, vector<8x192xf32>
    %214 = arith.select %18, %212, %213 : vector<8x192xi1>, vector<8x192xf32>
    %cst_75 = arith.constant dense<0.000000e+00> : vector<8x192xf32>
    %215 = tpu.matmul %207, %28, %cst_75 {dimension_numbers = #tpu.dot_dimension_numbers<[1], [0], [0], [1], [0, 0, 1, 1], [], []>} : vector<8x64xf32>, vector<64x192xf32>, vector<8x192xf32> -> vector<8x192xf32>
    %216 = vector.broadcast %30 : vector<1x192xf32> to vector<8x192xf32>
    %217 = arith.addf %215, %216 : vector<8x192xf32>
    %218 = vector.extract_strided_slice %214 {offsets = [0, 0], sizes = [8, 64], strides = [1, 1]} : vector<8x192xf32> to vector<8x64xf32>
    %219 = vector.extract_strided_slice %217 {offsets = [0, 0], sizes = [8, 64], strides = [1, 1]} : vector<8x192xf32> to vector<8x64xf32>
    %220 = arith.addf %218, %219 : vector<8x64xf32>
    %221 = arith.negf %220 : vector<8x64xf32>
    %222 = math.exp %221 : vector<8x64xf32>
    %cst_76 = arith.constant 1.000000e+00 : f32
    %223 = vector.broadcast %cst_76 : f32 to vector<8x64xf32>
    %224 = arith.addf %223, %222 : vector<8x64xf32>
    %225 = arith.divf %223, %224 : vector<8x64xf32>
    %226 = vector.extract_strided_slice %214 {offsets = [0, 64], sizes = [8, 64], strides = [1, 1]} : vector<8x192xf32> to vector<8x64xf32>
    %227 = vector.extract_strided_slice %217 {offsets = [0, 64], sizes = [8, 64], strides = [1, 1]} : vector<8x192xf32> to vector<8x64xf32>
    %228 = arith.addf %226, %227 : vector<8x64xf32>
    %229 = arith.negf %228 : vector<8x64xf32>
    %230 = math.exp %229 : vector<8x64xf32>
    %cst_77 = arith.constant 1.000000e+00 : f32
    %231 = vector.broadcast %cst_77 : f32 to vector<8x64xf32>
    %232 = arith.addf %231, %230 : vector<8x64xf32>
    %233 = arith.divf %231, %232 : vector<8x64xf32>
    %234 = vector.extract_strided_slice %214 {offsets = [0, 128], sizes = [8, 64], strides = [1, 1]} : vector<8x192xf32> to vector<8x64xf32>
    %235 = vector.extract_strided_slice %217 {offsets = [0, 128], sizes = [8, 64], strides = [1, 1]} : vector<8x192xf32> to vector<8x64xf32>
    %236 = arith.mulf %225, %235 : vector<8x64xf32>
    %237 = arith.addf %234, %236 : vector<8x64xf32>
    %238 = math.tanh %237 : vector<8x64xf32>
    %cst_78 = arith.constant 1.000000e+00 : f32
    %239 = vector.broadcast %cst_78 : f32 to vector<8x64xf32>
    %240 = arith.subf %239, %233 : vector<8x64xf32>
    %241 = arith.mulf %240, %238 : vector<8x64xf32>
    %242 = arith.mulf %233, %207 : vector<8x64xf32>
    %243 = arith.addf %241, %242 : vector<8x64xf32>
    %244 = vector.extract_strided_slice %243 {offsets = [0, 0], sizes = [8, 32], strides = [1, 1]} : vector<8x64xf32> to vector<8x32xf32>
    %c40_79 = arith.constant 40 : index
    %c0_80 = arith.constant 0 : index
    %245 = vector.load %arg14[%c40_79, %c0_80] : memref<64x64xf32, #tpu.memory_space<vmem>>, vector<8x32xf32>
    tpu.vector_store %arg14[%c40_79, %c0_80], %244 {strides = array<i32>} : memref<64x64xf32, #tpu.memory_space<vmem>>, vector<8x32xf32>,
    %246 = vector.extract_strided_slice %243 {offsets = [0, 32], sizes = [8, 32], strides = [1, 1]} : vector<8x64xf32> to vector<8x32xf32>
    %c16_81 = arith.constant 16 : index
    %c32_82 = arith.constant 32 : index
    %247 = vector.load %arg14[%c16_81, %c32_82] : memref<64x64xf32, #tpu.memory_space<vmem>>, vector<8x32xf32>
    tpu.vector_store %arg14[%c16_81, %c32_82], %246 {strides = array<i32>} : memref<64x64xf32, #tpu.memory_space<vmem>>, vector<8x32xf32>,
    %c48_83 = arith.constant 48 : index
    %c0_84 = arith.constant 0 : index
    %248 = vector.load %arg13[%c48_83, %c0_84] : memref<64x192xf32, #tpu.memory_space<vmem>>, vector<8x192xf32>
    %c8_85 = arith.constant 8 : index
    %c0_86 = arith.constant 0 : index
    %249 = vector.load %arg13[%c8_85, %c0_86] : memref<64x192xf32, #tpu.memory_space<vmem>>, vector<8x192xf32>
    %250 = arith.select %18, %248, %249 : vector<8x192xi1>, vector<8x192xf32>
    %cst_87 = arith.constant dense<0.000000e+00> : vector<8x192xf32>
    %251 = tpu.matmul %243, %28, %cst_87 {dimension_numbers = #tpu.dot_dimension_numbers<[1], [0], [0], [1], [0, 0, 1, 1], [], []>} : vector<8x64xf32>, vector<64x192xf32>, vector<8x192xf32> -> vector<8x192xf32>
    %252 = vector.broadcast %30 : vector<1x192xf32> to vector<8x192xf32>
    %253 = arith.addf %251, %252 : vector<8x192xf32>
    %254 = vector.extract_strided_slice %250 {offsets = [0, 0], sizes = [8, 64], strides = [1, 1]} : vector<8x192xf32> to vector<8x64xf32>
    %255 = vector.extract_strided_slice %253 {offsets = [0, 0], sizes = [8, 64], strides = [1, 1]} : vector<8x192xf32> to vector<8x64xf32>
    %256 = arith.addf %254, %255 : vector<8x64xf32>
    %257 = arith.negf %256 : vector<8x64xf32>
    %258 = math.exp %257 : vector<8x64xf32>
    %cst_88 = arith.constant 1.000000e+00 : f32
    %259 = vector.broadcast %cst_88 : f32 to vector<8x64xf32>
    %260 = arith.addf %259, %258 : vector<8x64xf32>
    %261 = arith.divf %259, %260 : vector<8x64xf32>
    %262 = vector.extract_strided_slice %250 {offsets = [0, 64], sizes = [8, 64], strides = [1, 1]} : vector<8x192xf32> to vector<8x64xf32>
    %263 = vector.extract_strided_slice %253 {offsets = [0, 64], sizes = [8, 64], strides = [1, 1]} : vector<8x192xf32> to vector<8x64xf32>
    %264 = arith.addf %262, %263 : vector<8x64xf32>
    %265 = arith.negf %264 : vector<8x64xf32>
    %266 = math.exp %265 : vector<8x64xf32>
    %cst_89 = arith.constant 1.000000e+00 : f32
    %267 = vector.broadcast %cst_89 : f32 to vector<8x64xf32>
    %268 = arith.addf %267, %266 : vector<8x64xf32>
    %269 = arith.divf %267, %268 : vector<8x64xf32>
    %270 = vector.extract_strided_slice %250 {offsets = [0, 128], sizes = [8, 64], strides = [1, 1]} : vector<8x192xf32> to vector<8x64xf32>
    %271 = vector.extract_strided_slice %253 {offsets = [0, 128], sizes = [8, 64], strides = [1, 1]} : vector<8x192xf32> to vector<8x64xf32>
    %272 = arith.mulf %261, %271 : vector<8x64xf32>
    %273 = arith.addf %270, %272 : vector<8x64xf32>
    %274 = math.tanh %273 : vector<8x64xf32>
    %cst_90 = arith.constant 1.000000e+00 : f32
    %275 = vector.broadcast %cst_90 : f32 to vector<8x64xf32>
    %276 = arith.subf %275, %269 : vector<8x64xf32>
    %277 = arith.mulf %276, %274 : vector<8x64xf32>
    %278 = arith.mulf %269, %243 : vector<8x64xf32>
    %279 = arith.addf %277, %278 : vector<8x64xf32>
    %280 = vector.extract_strided_slice %279 {offsets = [0, 0], sizes = [8, 32], strides = [1, 1]} : vector<8x64xf32> to vector<8x32xf32>
    %c48_91 = arith.constant 48 : index
    %c0_92 = arith.constant 0 : index
    %281 = vector.load %arg14[%c48_91, %c0_92] : memref<64x64xf32, #tpu.memory_space<vmem>>, vector<8x32xf32>
    tpu.vector_store %arg14[%c48_91, %c0_92], %280 {strides = array<i32>} : memref<64x64xf32, #tpu.memory_space<vmem>>, vector<8x32xf32>,
    %282 = vector.extract_strided_slice %279 {offsets = [0, 32], sizes = [8, 32], strides = [1, 1]} : vector<8x64xf32> to vector<8x32xf32>
    %c8_93 = arith.constant 8 : index
    %c32_94 = arith.constant 32 : index
    %283 = vector.load %arg14[%c8_93, %c32_94] : memref<64x64xf32, #tpu.memory_space<vmem>>, vector<8x32xf32>
    tpu.vector_store %arg14[%c8_93, %c32_94], %282 {strides = array<i32>} : memref<64x64xf32, #tpu.memory_space<vmem>>, vector<8x32xf32>,
    %c56_95 = arith.constant 56 : index
    %c0_96 = arith.constant 0 : index
    %284 = vector.load %arg13[%c56_95, %c0_96] : memref<64x192xf32, #tpu.memory_space<vmem>>, vector<8x192xf32>
    %c0_97 = arith.constant 0 : index
    %c0_98 = arith.constant 0 : index
    %285 = vector.load %arg13[%c0_97, %c0_98] : memref<64x192xf32, #tpu.memory_space<vmem>>, vector<8x192xf32>
    %286 = arith.select %18, %284, %285 : vector<8x192xi1>, vector<8x192xf32>
    %cst_99 = arith.constant dense<0.000000e+00> : vector<8x192xf32>
    %287 = tpu.matmul %279, %28, %cst_99 {dimension_numbers = #tpu.dot_dimension_numbers<[1], [0], [0], [1], [0, 0, 1, 1], [], []>} : vector<8x64xf32>, vector<64x192xf32>, vector<8x192xf32> -> vector<8x192xf32>
    %288 = vector.broadcast %30 : vector<1x192xf32> to vector<8x192xf32>
    %289 = arith.addf %287, %288 : vector<8x192xf32>
    %290 = vector.extract_strided_slice %286 {offsets = [0, 0], sizes = [8, 64], strides = [1, 1]} : vector<8x192xf32> to vector<8x64xf32>
    %291 = vector.extract_strided_slice %289 {offsets = [0, 0], sizes = [8, 64], strides = [1, 1]} : vector<8x192xf32> to vector<8x64xf32>
    %292 = arith.addf %290, %291 : vector<8x64xf32>
    %293 = arith.negf %292 : vector<8x64xf32>
    %294 = math.exp %293 : vector<8x64xf32>
    %cst_100 = arith.constant 1.000000e+00 : f32
    %295 = vector.broadcast %cst_100 : f32 to vector<8x64xf32>
    %296 = arith.addf %295, %294 : vector<8x64xf32>
    %297 = arith.divf %295, %296 : vector<8x64xf32>
    %298 = vector.extract_strided_slice %286 {offsets = [0, 64], sizes = [8, 64], strides = [1, 1]} : vector<8x192xf32> to vector<8x64xf32>
    %299 = vector.extract_strided_slice %289 {offsets = [0, 64], sizes = [8, 64], strides = [1, 1]} : vector<8x192xf32> to vector<8x64xf32>
    %300 = arith.addf %298, %299 : vector<8x64xf32>
    %301 = arith.negf %300 : vector<8x64xf32>
    %302 = math.exp %301 : vector<8x64xf32>
    %cst_101 = arith.constant 1.000000e+00 : f32
    %303 = vector.broadcast %cst_101 : f32 to vector<8x64xf32>
    %304 = arith.addf %303, %302 : vector<8x64xf32>
    %305 = arith.divf %303, %304 : vector<8x64xf32>
    %306 = vector.extract_strided_slice %286 {offsets = [0, 128], sizes = [8, 64], strides = [1, 1]} : vector<8x192xf32> to vector<8x64xf32>
    %307 = vector.extract_strided_slice %289 {offsets = [0, 128], sizes = [8, 64], strides = [1, 1]} : vector<8x192xf32> to vector<8x64xf32>
    %308 = arith.mulf %297, %307 : vector<8x64xf32>
    %309 = arith.addf %306, %308 : vector<8x64xf32>
    %310 = math.tanh %309 : vector<8x64xf32>
    %cst_102 = arith.constant 1.000000e+00 : f32
    %311 = vector.broadcast %cst_102 : f32 to vector<8x64xf32>
    %312 = arith.subf %311, %305 : vector<8x64xf32>
    %313 = arith.mulf %312, %310 : vector<8x64xf32>
    %314 = arith.mulf %305, %279 : vector<8x64xf32>
    %315 = arith.addf %313, %314 : vector<8x64xf32>
    %316 = vector.extract_strided_slice %315 {offsets = [0, 0], sizes = [8, 32], strides = [1, 1]} : vector<8x64xf32> to vector<8x32xf32>
    %c56_103 = arith.constant 56 : index
    %c0_104 = arith.constant 0 : index
    %317 = vector.load %arg14[%c56_103, %c0_104] : memref<64x64xf32, #tpu.memory_space<vmem>>, vector<8x32xf32>
    tpu.vector_store %arg14[%c56_103, %c0_104], %316 {strides = array<i32>} : memref<64x64xf32, #tpu.memory_space<vmem>>, vector<8x32xf32>,
    %318 = vector.extract_strided_slice %315 {offsets = [0, 32], sizes = [8, 32], strides = [1, 1]} : vector<8x64xf32> to vector<8x32xf32>
    %c0_105 = arith.constant 0 : index
    %c32_106 = arith.constant 32 : index
    %319 = vector.load %arg14[%c0_105, %c32_106] : memref<64x64xf32, #tpu.memory_space<vmem>>, vector<8x32xf32>
    tpu.vector_store %arg14[%c0_105, %c32_106], %318 {strides = array<i32>} : memref<64x64xf32, #tpu.memory_space<vmem>>, vector<8x32xf32>,
    %c0_107 = arith.constant 0 : index
    %c0_108 = arith.constant 0 : index
    %320 = vector.load %arg14[%c0_107, %c0_108] : memref<64x64xf32, #tpu.memory_space<vmem>>, vector<64x64xf32>
    %c0_109 = arith.constant 0 : index
    %c0_110 = arith.constant 0 : index
    %c0_111 = arith.constant 0 : index
    %321 = vector.load %arg2[%c0_109, %c0_110, %c0_111] : memref<3x64x192xf32, #tpu.memory_space<vmem>>, vector<1x64x192xf32>
    %322 = vector.shape_cast %321 : vector<1x64x192xf32> to vector<64x192xf32>
    %cst_112 = arith.constant dense<0.000000e+00> : vector<64x192xf32>
    %323 = tpu.matmul %320, %322, %cst_112 {dimension_numbers = #tpu.dot_dimension_numbers<[1], [0], [0], [1], [0, 0, 1, 1], [], []>} : vector<64x64xf32>, vector<64x192xf32>, vector<64x192xf32> -> vector<64x192xf32>
    %c1 = arith.constant 1 : index
    %c0_113 = arith.constant 0 : index
    %c0_114 = arith.constant 0 : index
    %324 = vector.load %arg4[%c1, %c0_113, %c0_114] : memref<4x1x192xf32, #tpu.memory_space<vmem>>, vector<1x1x192xf32>
    %325 = vector.shape_cast %324 : vector<1x1x192xf32> to vector<1x192xf32>
    %326 = vector.broadcast %325 : vector<1x192xf32> to vector<64x192xf32>
    %327 = arith.addf %323, %326 : vector<64x192xf32>
    %c0_115 = arith.constant 0 : index
    %c0_116 = arith.constant 0 : index
    %328 = vector.load %arg13[%c0_115, %c0_116] : memref<64x192xf32, #tpu.memory_space<vmem>>, vector<64x192xf32>
    tpu.vector_store %arg13[%c0_115, %c0_116], %327 {strides = array<i32>} : memref<64x192xf32, #tpu.memory_space<vmem>>, vector<64x192xf32>,
    %c1_117 = arith.constant 1 : index
    %c0_118 = arith.constant 0 : index
    %c0_119 = arith.constant 0 : index
    %329 = vector.load %arg3[%c1_117, %c0_118, %c0_119] : memref<4x64x192xf32, #tpu.memory_space<vmem>>, vector<1x64x192xf32>
    %330 = vector.shape_cast %329 : vector<1x64x192xf32> to vector<64x192xf32>
    %c1_120 = arith.constant 1 : index
    %c0_121 = arith.constant 0 : index
    %c0_122 = arith.constant 0 : index
    %331 = vector.load %arg5[%c1_120, %c0_121, %c0_122] : memref<4x1x192xf32, #tpu.memory_space<vmem>>, vector<1x1x192xf32>
    %332 = vector.shape_cast %331 : vector<1x1x192xf32> to vector<1x192xf32>
    %cst_123 = arith.constant 0.000000e+00 : f32
    %333 = vector.broadcast %cst_123 : f32 to vector<8x64xf32>
    %c0_124 = arith.constant 0 : index
    %c0_125 = arith.constant 0 : index
    %334 = vector.load %arg13[%c0_124, %c0_125] : memref<64x192xf32, #tpu.memory_space<vmem>>, vector<8x192xf32>
    %c56_126 = arith.constant 56 : index
    %c0_127 = arith.constant 0 : index
    %335 = vector.load %arg13[%c56_126, %c0_127] : memref<64x192xf32, #tpu.memory_space<vmem>>, vector<8x192xf32>
    %336 = arith.select %18, %334, %335 : vector<8x192xi1>, vector<8x192xf32>
    %cst_128 = arith.constant dense<0.000000e+00> : vector<8x192xf32>
    %337 = tpu.matmul %333, %330, %cst_128 {dimension_numbers = #tpu.dot_dimension_numbers<[1], [0], [0], [1], [0, 0, 1, 1], [], []>} : vector<8x64xf32>, vector<64x192xf32>, vector<8x192xf32> -> vector<8x192xf32>
    %338 = vector.broadcast %332 : vector<1x192xf32> to vector<8x192xf32>
    %339 = arith.addf %337, %338 : vector<8x192xf32>
    %340 = vector.extract_strided_slice %336 {offsets = [0, 0], sizes = [8, 64], strides = [1, 1]} : vector<8x192xf32> to vector<8x64xf32>
    %341 = vector.extract_strided_slice %339 {offsets = [0, 0], sizes = [8, 64], strides = [1, 1]} : vector<8x192xf32> to vector<8x64xf32>
    %342 = arith.addf %340, %341 : vector<8x64xf32>
    %343 = arith.negf %342 : vector<8x64xf32>
    %344 = math.exp %343 : vector<8x64xf32>
    %cst_129 = arith.constant 1.000000e+00 : f32
    %345 = vector.broadcast %cst_129 : f32 to vector<8x64xf32>
    %346 = arith.addf %345, %344 : vector<8x64xf32>
    %347 = arith.divf %345, %346 : vector<8x64xf32>
    %348 = vector.extract_strided_slice %336 {offsets = [0, 64], sizes = [8, 64], strides = [1, 1]} : vector<8x192xf32> to vector<8x64xf32>
    %349 = vector.extract_strided_slice %339 {offsets = [0, 64], sizes = [8, 64], strides = [1, 1]} : vector<8x192xf32> to vector<8x64xf32>
    %350 = arith.addf %348, %349 : vector<8x64xf32>
    %351 = arith.negf %350 : vector<8x64xf32>
    %352 = math.exp %351 : vector<8x64xf32>
    %cst_130 = arith.constant 1.000000e+00 : f32
    %353 = vector.broadcast %cst_130 : f32 to vector<8x64xf32>
    %354 = arith.addf %353, %352 : vector<8x64xf32>
    %355 = arith.divf %353, %354 : vector<8x64xf32>
    %356 = vector.extract_strided_slice %336 {offsets = [0, 128], sizes = [8, 64], strides = [1, 1]} : vector<8x192xf32> to vector<8x64xf32>
    %357 = vector.extract_strided_slice %339 {offsets = [0, 128], sizes = [8, 64], strides = [1, 1]} : vector<8x192xf32> to vector<8x64xf32>
    %358 = arith.mulf %347, %357 : vector<8x64xf32>
    %359 = arith.addf %356, %358 : vector<8x64xf32>
    %360 = math.tanh %359 : vector<8x64xf32>
    %cst_131 = arith.constant 1.000000e+00 : f32
    %361 = vector.broadcast %cst_131 : f32 to vector<8x64xf32>
    %362 = arith.subf %361, %355 : vector<8x64xf32>
    %363 = arith.mulf %362, %360 : vector<8x64xf32>
    %364 = arith.mulf %355, %333 : vector<8x64xf32>
    %365 = arith.addf %363, %364 : vector<8x64xf32>
    %366 = vector.extract_strided_slice %365 {offsets = [0, 0], sizes = [8, 32], strides = [1, 1]} : vector<8x64xf32> to vector<8x32xf32>
    %c0_132 = arith.constant 0 : index
    %c0_133 = arith.constant 0 : index
    %367 = vector.load %arg14[%c0_132, %c0_133] : memref<64x64xf32, #tpu.memory_space<vmem>>, vector<8x32xf32>
    tpu.vector_store %arg14[%c0_132, %c0_133], %366 {strides = array<i32>} : memref<64x64xf32, #tpu.memory_space<vmem>>, vector<8x32xf32>,
    %368 = vector.extract_strided_slice %365 {offsets = [0, 32], sizes = [8, 32], strides = [1, 1]} : vector<8x64xf32> to vector<8x32xf32>
    %c56_134 = arith.constant 56 : index
    %c32_135 = arith.constant 32 : index
    %369 = vector.load %arg14[%c56_134, %c32_135] : memref<64x64xf32, #tpu.memory_space<vmem>>, vector<8x32xf32>
    tpu.vector_store %arg14[%c56_134, %c32_135], %368 {strides = array<i32>} : memref<64x64xf32, #tpu.memory_space<vmem>>, vector<8x32xf32>,
    %c8_136 = arith.constant 8 : index
    %c0_137 = arith.constant 0 : index
    %370 = vector.load %arg13[%c8_136, %c0_137] : memref<64x192xf32, #tpu.memory_space<vmem>>, vector<8x192xf32>
    %c48_138 = arith.constant 48 : index
    %c0_139 = arith.constant 0 : index
    %371 = vector.load %arg13[%c48_138, %c0_139] : memref<64x192xf32, #tpu.memory_space<vmem>>, vector<8x192xf32>
    %372 = arith.select %18, %370, %371 : vector<8x192xi1>, vector<8x192xf32>
    %cst_140 = arith.constant dense<0.000000e+00> : vector<8x192xf32>
    %373 = tpu.matmul %365, %330, %cst_140 {dimension_numbers = #tpu.dot_dimension_numbers<[1], [0], [0], [1], [0, 0, 1, 1], [], []>} : vector<8x64xf32>, vector<64x192xf32>, vector<8x192xf32> -> vector<8x192xf32>
    %374 = vector.broadcast %332 : vector<1x192xf32> to vector<8x192xf32>
    %375 = arith.addf %373, %374 : vector<8x192xf32>
    %376 = vector.extract_strided_slice %372 {offsets = [0, 0], sizes = [8, 64], strides = [1, 1]} : vector<8x192xf32> to vector<8x64xf32>
    %377 = vector.extract_strided_slice %375 {offsets = [0, 0], sizes = [8, 64], strides = [1, 1]} : vector<8x192xf32> to vector<8x64xf32>
    %378 = arith.addf %376, %377 : vector<8x64xf32>
    %379 = arith.negf %378 : vector<8x64xf32>
    %380 = math.exp %379 : vector<8x64xf32>
    %cst_141 = arith.constant 1.000000e+00 : f32
    %381 = vector.broadcast %cst_141 : f32 to vector<8x64xf32>
    %382 = arith.addf %381, %380 : vector<8x64xf32>
    %383 = arith.divf %381, %382 : vector<8x64xf32>
    %384 = vector.extract_strided_slice %372 {offsets = [0, 64], sizes = [8, 64], strides = [1, 1]} : vector<8x192xf32> to vector<8x64xf32>
    %385 = vector.extract_strided_slice %375 {offsets = [0, 64], sizes = [8, 64], strides = [1, 1]} : vector<8x192xf32> to vector<8x64xf32>
    %386 = arith.addf %384, %385 : vector<8x64xf32>
    %387 = arith.negf %386 : vector<8x64xf32>
    %388 = math.exp %387 : vector<8x64xf32>
    %cst_142 = arith.constant 1.000000e+00 : f32
    %389 = vector.broadcast %cst_142 : f32 to vector<8x64xf32>
    %390 = arith.addf %389, %388 : vector<8x64xf32>
    %391 = arith.divf %389, %390 : vector<8x64xf32>
    %392 = vector.extract_strided_slice %372 {offsets = [0, 128], sizes = [8, 64], strides = [1, 1]} : vector<8x192xf32> to vector<8x64xf32>
    %393 = vector.extract_strided_slice %375 {offsets = [0, 128], sizes = [8, 64], strides = [1, 1]} : vector<8x192xf32> to vector<8x64xf32>
    %394 = arith.mulf %383, %393 : vector<8x64xf32>
    %395 = arith.addf %392, %394 : vector<8x64xf32>
    %396 = math.tanh %395 : vector<8x64xf32>
    %cst_143 = arith.constant 1.000000e+00 : f32
    %397 = vector.broadcast %cst_143 : f32 to vector<8x64xf32>
    %398 = arith.subf %397, %391 : vector<8x64xf32>
    %399 = arith.mulf %398, %396 : vector<8x64xf32>
    %400 = arith.mulf %391, %365 : vector<8x64xf32>
    %401 = arith.addf %399, %400 : vector<8x64xf32>
    %402 = vector.extract_strided_slice %401 {offsets = [0, 0], sizes = [8, 32], strides = [1, 1]} : vector<8x64xf32> to vector<8x32xf32>
    %c8_144 = arith.constant 8 : index
    %c0_145 = arith.constant 0 : index
    %403 = vector.load %arg14[%c8_144, %c0_145] : memref<64x64xf32, #tpu.memory_space<vmem>>, vector<8x32xf32>
    tpu.vector_store %arg14[%c8_144, %c0_145], %402 {strides = array<i32>} : memref<64x64xf32, #tpu.memory_space<vmem>>, vector<8x32xf32>,
    %404 = vector.extract_strided_slice %401 {offsets = [0, 32], sizes = [8, 32], strides = [1, 1]} : vector<8x64xf32> to vector<8x32xf32>
    %c48_146 = arith.constant 48 : index
    %c32_147 = arith.constant 32 : index
    %405 = vector.load %arg14[%c48_146, %c32_147] : memref<64x64xf32, #tpu.memory_space<vmem>>, vector<8x32xf32>
    tpu.vector_store %arg14[%c48_146, %c32_147], %404 {strides = array<i32>} : memref<64x64xf32, #tpu.memory_space<vmem>>, vector<8x32xf32>,
    %c16_148 = arith.constant 16 : index
    %c0_149 = arith.constant 0 : index
    %406 = vector.load %arg13[%c16_148, %c0_149] : memref<64x192xf32, #tpu.memory_space<vmem>>, vector<8x192xf32>
    %c40_150 = arith.constant 40 : index
    %c0_151 = arith.constant 0 : index
    %407 = vector.load %arg13[%c40_150, %c0_151] : memref<64x192xf32, #tpu.memory_space<vmem>>, vector<8x192xf32>
    %408 = arith.select %18, %406, %407 : vector<8x192xi1>, vector<8x192xf32>
    %cst_152 = arith.constant dense<0.000000e+00> : vector<8x192xf32>
    %409 = tpu.matmul %401, %330, %cst_152 {dimension_numbers = #tpu.dot_dimension_numbers<[1], [0], [0], [1], [0, 0, 1, 1], [], []>} : vector<8x64xf32>, vector<64x192xf32>, vector<8x192xf32> -> vector<8x192xf32>
    %410 = vector.broadcast %332 : vector<1x192xf32> to vector<8x192xf32>
    %411 = arith.addf %409, %410 : vector<8x192xf32>
    %412 = vector.extract_strided_slice %408 {offsets = [0, 0], sizes = [8, 64], strides = [1, 1]} : vector<8x192xf32> to vector<8x64xf32>
    %413 = vector.extract_strided_slice %411 {offsets = [0, 0], sizes = [8, 64], strides = [1, 1]} : vector<8x192xf32> to vector<8x64xf32>
    %414 = arith.addf %412, %413 : vector<8x64xf32>
    %415 = arith.negf %414 : vector<8x64xf32>
    %416 = math.exp %415 : vector<8x64xf32>
    %cst_153 = arith.constant 1.000000e+00 : f32
    %417 = vector.broadcast %cst_153 : f32 to vector<8x64xf32>
    %418 = arith.addf %417, %416 : vector<8x64xf32>
    %419 = arith.divf %417, %418 : vector<8x64xf32>
    %420 = vector.extract_strided_slice %408 {offsets = [0, 64], sizes = [8, 64], strides = [1, 1]} : vector<8x192xf32> to vector<8x64xf32>
    %421 = vector.extract_strided_slice %411 {offsets = [0, 64], sizes = [8, 64], strides = [1, 1]} : vector<8x192xf32> to vector<8x64xf32>
    %422 = arith.addf %420, %421 : vector<8x64xf32>
    %423 = arith.negf %422 : vector<8x64xf32>
    %424 = math.exp %423 : vector<8x64xf32>
    %cst_154 = arith.constant 1.000000e+00 : f32
    %425 = vector.broadcast %cst_154 : f32 to vector<8x64xf32>
    %426 = arith.addf %425, %424 : vector<8x64xf32>
    %427 = arith.divf %425, %426 : vector<8x64xf32>
    %428 = vector.extract_strided_slice %408 {offsets = [0, 128], sizes = [8, 64], strides = [1, 1]} : vector<8x192xf32> to vector<8x64xf32>
    %429 = vector.extract_strided_slice %411 {offsets = [0, 128], sizes = [8, 64], strides = [1, 1]} : vector<8x192xf32> to vector<8x64xf32>
    %430 = arith.mulf %419, %429 : vector<8x64xf32>
    %431 = arith.addf %428, %430 : vector<8x64xf32>
    %432 = math.tanh %431 : vector<8x64xf32>
    %cst_155 = arith.constant 1.000000e+00 : f32
    %433 = vector.broadcast %cst_155 : f32 to vector<8x64xf32>
    %434 = arith.subf %433, %427 : vector<8x64xf32>
    %435 = arith.mulf %434, %432 : vector<8x64xf32>
    %436 = arith.mulf %427, %401 : vector<8x64xf32>
    %437 = arith.addf %435, %436 : vector<8x64xf32>
    %438 = vector.extract_strided_slice %437 {offsets = [0, 0], sizes = [8, 32], strides = [1, 1]} : vector<8x64xf32> to vector<8x32xf32>
    %c16_156 = arith.constant 16 : index
    %c0_157 = arith.constant 0 : index
    %439 = vector.load %arg14[%c16_156, %c0_157] : memref<64x64xf32, #tpu.memory_space<vmem>>, vector<8x32xf32>
    tpu.vector_store %arg14[%c16_156, %c0_157], %438 {strides = array<i32>} : memref<64x64xf32, #tpu.memory_space<vmem>>, vector<8x32xf32>,
    %440 = vector.extract_strided_slice %437 {offsets = [0, 32], sizes = [8, 32], strides = [1, 1]} : vector<8x64xf32> to vector<8x32xf32>
    %c40_158 = arith.constant 40 : index
    %c32_159 = arith.constant 32 : index
    %441 = vector.load %arg14[%c40_158, %c32_159] : memref<64x64xf32, #tpu.memory_space<vmem>>, vector<8x32xf32>
    tpu.vector_store %arg14[%c40_158, %c32_159], %440 {strides = array<i32>} : memref<64x64xf32, #tpu.memory_space<vmem>>, vector<8x32xf32>,
    %c24_160 = arith.constant 24 : index
    %c0_161 = arith.constant 0 : index
    %442 = vector.load %arg13[%c24_160, %c0_161] : memref<64x192xf32, #tpu.memory_space<vmem>>, vector<8x192xf32>
    %c32_162 = arith.constant 32 : index
    %c0_163 = arith.constant 0 : index
    %443 = vector.load %arg13[%c32_162, %c0_163] : memref<64x192xf32, #tpu.memory_space<vmem>>, vector<8x192xf32>
    %444 = arith.select %18, %442, %443 : vector<8x192xi1>, vector<8x192xf32>
    %cst_164 = arith.constant dense<0.000000e+00> : vector<8x192xf32>
    %445 = tpu.matmul %437, %330, %cst_164 {dimension_numbers = #tpu.dot_dimension_numbers<[1], [0], [0], [1], [0, 0, 1, 1], [], []>} : vector<8x64xf32>, vector<64x192xf32>, vector<8x192xf32> -> vector<8x192xf32>
    %446 = vector.broadcast %332 : vector<1x192xf32> to vector<8x192xf32>
    %447 = arith.addf %445, %446 : vector<8x192xf32>
    %448 = vector.extract_strided_slice %444 {offsets = [0, 0], sizes = [8, 64], strides = [1, 1]} : vector<8x192xf32> to vector<8x64xf32>
    %449 = vector.extract_strided_slice %447 {offsets = [0, 0], sizes = [8, 64], strides = [1, 1]} : vector<8x192xf32> to vector<8x64xf32>
    %450 = arith.addf %448, %449 : vector<8x64xf32>
    %451 = arith.negf %450 : vector<8x64xf32>
    %452 = math.exp %451 : vector<8x64xf32>
    %cst_165 = arith.constant 1.000000e+00 : f32
    %453 = vector.broadcast %cst_165 : f32 to vector<8x64xf32>
    %454 = arith.addf %453, %452 : vector<8x64xf32>
    %455 = arith.divf %453, %454 : vector<8x64xf32>
    %456 = vector.extract_strided_slice %444 {offsets = [0, 64], sizes = [8, 64], strides = [1, 1]} : vector<8x192xf32> to vector<8x64xf32>
    %457 = vector.extract_strided_slice %447 {offsets = [0, 64], sizes = [8, 64], strides = [1, 1]} : vector<8x192xf32> to vector<8x64xf32>
    %458 = arith.addf %456, %457 : vector<8x64xf32>
    %459 = arith.negf %458 : vector<8x64xf32>
    %460 = math.exp %459 : vector<8x64xf32>
    %cst_166 = arith.constant 1.000000e+00 : f32
    %461 = vector.broadcast %cst_166 : f32 to vector<8x64xf32>
    %462 = arith.addf %461, %460 : vector<8x64xf32>
    %463 = arith.divf %461, %462 : vector<8x64xf32>
    %464 = vector.extract_strided_slice %444 {offsets = [0, 128], sizes = [8, 64], strides = [1, 1]} : vector<8x192xf32> to vector<8x64xf32>
    %465 = vector.extract_strided_slice %447 {offsets = [0, 128], sizes = [8, 64], strides = [1, 1]} : vector<8x192xf32> to vector<8x64xf32>
    %466 = arith.mulf %455, %465 : vector<8x64xf32>
    %467 = arith.addf %464, %466 : vector<8x64xf32>
    %468 = math.tanh %467 : vector<8x64xf32>
    %cst_167 = arith.constant 1.000000e+00 : f32
    %469 = vector.broadcast %cst_167 : f32 to vector<8x64xf32>
    %470 = arith.subf %469, %463 : vector<8x64xf32>
    %471 = arith.mulf %470, %468 : vector<8x64xf32>
    %472 = arith.mulf %463, %437 : vector<8x64xf32>
    %473 = arith.addf %471, %472 : vector<8x64xf32>
    %474 = vector.extract_strided_slice %473 {offsets = [0, 0], sizes = [8, 32], strides = [1, 1]} : vector<8x64xf32> to vector<8x32xf32>
    %c24_168 = arith.constant 24 : index
    %c0_169 = arith.constant 0 : index
    %475 = vector.load %arg14[%c24_168, %c0_169] : memref<64x64xf32, #tpu.memory_space<vmem>>, vector<8x32xf32>
    tpu.vector_store %arg14[%c24_168, %c0_169], %474 {strides = array<i32>} : memref<64x64xf32, #tpu.memory_space<vmem>>, vector<8x32xf32>,
    %476 = vector.extract_strided_slice %473 {offsets = [0, 32], sizes = [8, 32], strides = [1, 1]} : vector<8x64xf32> to vector<8x32xf32>
    %c32_170 = arith.constant 32 : index
    %c32_171 = arith.constant 32 : index
    %477 = vector.load %arg14[%c32_170, %c32_171] : memref<64x64xf32, #tpu.memory_space<vmem>>, vector<8x32xf32>
    tpu.vector_store %arg14[%c32_170, %c32_171], %476 {strides = array<i32>} : memref<64x64xf32, #tpu.memory_space<vmem>>, vector<8x32xf32>,
    %c32_172 = arith.constant 32 : index
    %c0_173 = arith.constant 0 : index
    %478 = vector.load %arg13[%c32_172, %c0_173] : memref<64x192xf32, #tpu.memory_space<vmem>>, vector<8x192xf32>
    %c24_174 = arith.constant 24 : index
    %c0_175 = arith.constant 0 : index
    %479 = vector.load %arg13[%c24_174, %c0_175] : memref<64x192xf32, #tpu.memory_space<vmem>>, vector<8x192xf32>
    %480 = arith.select %18, %478, %479 : vector<8x192xi1>, vector<8x192xf32>
    %cst_176 = arith.constant dense<0.000000e+00> : vector<8x192xf32>
    %481 = tpu.matmul %473, %330, %cst_176 {dimension_numbers = #tpu.dot_dimension_numbers<[1], [0], [0], [1], [0, 0, 1, 1], [], []>} : vector<8x64xf32>, vector<64x192xf32>, vector<8x192xf32> -> vector<8x192xf32>
    %482 = vector.broadcast %332 : vector<1x192xf32> to vector<8x192xf32>
    %483 = arith.addf %481, %482 : vector<8x192xf32>
    %484 = vector.extract_strided_slice %480 {offsets = [0, 0], sizes = [8, 64], strides = [1, 1]} : vector<8x192xf32> to vector<8x64xf32>
    %485 = vector.extract_strided_slice %483 {offsets = [0, 0], sizes = [8, 64], strides = [1, 1]} : vector<8x192xf32> to vector<8x64xf32>
    %486 = arith.addf %484, %485 : vector<8x64xf32>
    %487 = arith.negf %486 : vector<8x64xf32>
    %488 = math.exp %487 : vector<8x64xf32>
    %cst_177 = arith.constant 1.000000e+00 : f32
    %489 = vector.broadcast %cst_177 : f32 to vector<8x64xf32>
    %490 = arith.addf %489, %488 : vector<8x64xf32>
    %491 = arith.divf %489, %490 : vector<8x64xf32>
    %492 = vector.extract_strided_slice %480 {offsets = [0, 64], sizes = [8, 64], strides = [1, 1]} : vector<8x192xf32> to vector<8x64xf32>
    %493 = vector.extract_strided_slice %483 {offsets = [0, 64], sizes = [8, 64], strides = [1, 1]} : vector<8x192xf32> to vector<8x64xf32>
    %494 = arith.addf %492, %493 : vector<8x64xf32>
    %495 = arith.negf %494 : vector<8x64xf32>
    %496 = math.exp %495 : vector<8x64xf32>
    %cst_178 = arith.constant 1.000000e+00 : f32
    %497 = vector.broadcast %cst_178 : f32 to vector<8x64xf32>
    %498 = arith.addf %497, %496 : vector<8x64xf32>
    %499 = arith.divf %497, %498 : vector<8x64xf32>
    %500 = vector.extract_strided_slice %480 {offsets = [0, 128], sizes = [8, 64], strides = [1, 1]} : vector<8x192xf32> to vector<8x64xf32>
    %501 = vector.extract_strided_slice %483 {offsets = [0, 128], sizes = [8, 64], strides = [1, 1]} : vector<8x192xf32> to vector<8x64xf32>
    %502 = arith.mulf %491, %501 : vector<8x64xf32>
    %503 = arith.addf %500, %502 : vector<8x64xf32>
    %504 = math.tanh %503 : vector<8x64xf32>
    %cst_179 = arith.constant 1.000000e+00 : f32
    %505 = vector.broadcast %cst_179 : f32 to vector<8x64xf32>
    %506 = arith.subf %505, %499 : vector<8x64xf32>
    %507 = arith.mulf %506, %504 : vector<8x64xf32>
    %508 = arith.mulf %499, %473 : vector<8x64xf32>
    %509 = arith.addf %507, %508 : vector<8x64xf32>
    %510 = vector.extract_strided_slice %509 {offsets = [0, 0], sizes = [8, 32], strides = [1, 1]} : vector<8x64xf32> to vector<8x32xf32>
    %c32_180 = arith.constant 32 : index
    %c0_181 = arith.constant 0 : index
    %511 = vector.load %arg14[%c32_180, %c0_181] : memref<64x64xf32, #tpu.memory_space<vmem>>, vector<8x32xf32>
    tpu.vector_store %arg14[%c32_180, %c0_181], %510 {strides = array<i32>} : memref<64x64xf32, #tpu.memory_space<vmem>>, vector<8x32xf32>,
    %512 = vector.extract_strided_slice %509 {offsets = [0, 32], sizes = [8, 32], strides = [1, 1]} : vector<8x64xf32> to vector<8x32xf32>
    %c24_182 = arith.constant 24 : index
    %c32_183 = arith.constant 32 : index
    %513 = vector.load %arg14[%c24_182, %c32_183] : memref<64x64xf32, #tpu.memory_space<vmem>>, vector<8x32xf32>
    tpu.vector_store %arg14[%c24_182, %c32_183], %512 {strides = array<i32>} : memref<64x64xf32, #tpu.memory_space<vmem>>, vector<8x32xf32>,
    %c40_184 = arith.constant 40 : index
    %c0_185 = arith.constant 0 : index
    %514 = vector.load %arg13[%c40_184, %c0_185] : memref<64x192xf32, #tpu.memory_space<vmem>>, vector<8x192xf32>
    %c16_186 = arith.constant 16 : index
    %c0_187 = arith.constant 0 : index
    %515 = vector.load %arg13[%c16_186, %c0_187] : memref<64x192xf32, #tpu.memory_space<vmem>>, vector<8x192xf32>
    %516 = arith.select %18, %514, %515 : vector<8x192xi1>, vector<8x192xf32>
    %cst_188 = arith.constant dense<0.000000e+00> : vector<8x192xf32>
    %517 = tpu.matmul %509, %330, %cst_188 {dimension_numbers = #tpu.dot_dimension_numbers<[1], [0], [0], [1], [0, 0, 1, 1], [], []>} : vector<8x64xf32>, vector<64x192xf32>, vector<8x192xf32> -> vector<8x192xf32>
    %518 = vector.broadcast %332 : vector<1x192xf32> to vector<8x192xf32>
    %519 = arith.addf %517, %518 : vector<8x192xf32>
    %520 = vector.extract_strided_slice %516 {offsets = [0, 0], sizes = [8, 64], strides = [1, 1]} : vector<8x192xf32> to vector<8x64xf32>
    %521 = vector.extract_strided_slice %519 {offsets = [0, 0], sizes = [8, 64], strides = [1, 1]} : vector<8x192xf32> to vector<8x64xf32>
    %522 = arith.addf %520, %521 : vector<8x64xf32>
    %523 = arith.negf %522 : vector<8x64xf32>
    %524 = math.exp %523 : vector<8x64xf32>
    %cst_189 = arith.constant 1.000000e+00 : f32
    %525 = vector.broadcast %cst_189 : f32 to vector<8x64xf32>
    %526 = arith.addf %525, %524 : vector<8x64xf32>
    %527 = arith.divf %525, %526 : vector<8x64xf32>
    %528 = vector.extract_strided_slice %516 {offsets = [0, 64], sizes = [8, 64], strides = [1, 1]} : vector<8x192xf32> to vector<8x64xf32>
    %529 = vector.extract_strided_slice %519 {offsets = [0, 64], sizes = [8, 64], strides = [1, 1]} : vector<8x192xf32> to vector<8x64xf32>
    %530 = arith.addf %528, %529 : vector<8x64xf32>
    %531 = arith.negf %530 : vector<8x64xf32>
    %532 = math.exp %531 : vector<8x64xf32>
    %cst_190 = arith.constant 1.000000e+00 : f32
    %533 = vector.broadcast %cst_190 : f32 to vector<8x64xf32>
    %534 = arith.addf %533, %532 : vector<8x64xf32>
    %535 = arith.divf %533, %534 : vector<8x64xf32>
    %536 = vector.extract_strided_slice %516 {offsets = [0, 128], sizes = [8, 64], strides = [1, 1]} : vector<8x192xf32> to vector<8x64xf32>
    %537 = vector.extract_strided_slice %519 {offsets = [0, 128], sizes = [8, 64], strides = [1, 1]} : vector<8x192xf32> to vector<8x64xf32>
    %538 = arith.mulf %527, %537 : vector<8x64xf32>
    %539 = arith.addf %536, %538 : vector<8x64xf32>
    %540 = math.tanh %539 : vector<8x64xf32>
    %cst_191 = arith.constant 1.000000e+00 : f32
    %541 = vector.broadcast %cst_191 : f32 to vector<8x64xf32>
    %542 = arith.subf %541, %535 : vector<8x64xf32>
    %543 = arith.mulf %542, %540 : vector<8x64xf32>
    %544 = arith.mulf %535, %509 : vector<8x64xf32>
    %545 = arith.addf %543, %544 : vector<8x64xf32>
    %546 = vector.extract_strided_slice %545 {offsets = [0, 0], sizes = [8, 32], strides = [1, 1]} : vector<8x64xf32> to vector<8x32xf32>
    %c40_192 = arith.constant 40 : index
    %c0_193 = arith.constant 0 : index
    %547 = vector.load %arg14[%c40_192, %c0_193] : memref<64x64xf32, #tpu.memory_space<vmem>>, vector<8x32xf32>
    tpu.vector_store %arg14[%c40_192, %c0_193], %546 {strides = array<i32>} : memref<64x64xf32, #tpu.memory_space<vmem>>, vector<8x32xf32>,
    %548 = vector.extract_strided_slice %545 {offsets = [0, 32], sizes = [8, 32], strides = [1, 1]} : vector<8x64xf32> to vector<8x32xf32>
    %c16_194 = arith.constant 16 : index
    %c32_195 = arith.constant 32 : index
    %549 = vector.load %arg14[%c16_194, %c32_195] : memref<64x64xf32, #tpu.memory_space<vmem>>, vector<8x32xf32>
    tpu.vector_store %arg14[%c16_194, %c32_195], %548 {strides = array<i32>} : memref<64x64xf32, #tpu.memory_space<vmem>>, vector<8x32xf32>,
    %c48_196 = arith.constant 48 : index
    %c0_197 = arith.constant 0 : index
    %550 = vector.load %arg13[%c48_196, %c0_197] : memref<64x192xf32, #tpu.memory_space<vmem>>, vector<8x192xf32>
    %c8_198 = arith.constant 8 : index
    %c0_199 = arith.constant 0 : index
    %551 = vector.load %arg13[%c8_198, %c0_199] : memref<64x192xf32, #tpu.memory_space<vmem>>, vector<8x192xf32>
    %552 = arith.select %18, %550, %551 : vector<8x192xi1>, vector<8x192xf32>
    %cst_200 = arith.constant dense<0.000000e+00> : vector<8x192xf32>
    %553 = tpu.matmul %545, %330, %cst_200 {dimension_numbers = #tpu.dot_dimension_numbers<[1], [0], [0], [1], [0, 0, 1, 1], [], []>} : vector<8x64xf32>, vector<64x192xf32>, vector<8x192xf32> -> vector<8x192xf32>
    %554 = vector.broadcast %332 : vector<1x192xf32> to vector<8x192xf32>
    %555 = arith.addf %553, %554 : vector<8x192xf32>
    %556 = vector.extract_strided_slice %552 {offsets = [0, 0], sizes = [8, 64], strides = [1, 1]} : vector<8x192xf32> to vector<8x64xf32>
    %557 = vector.extract_strided_slice %555 {offsets = [0, 0], sizes = [8, 64], strides = [1, 1]} : vector<8x192xf32> to vector<8x64xf32>
    %558 = arith.addf %556, %557 : vector<8x64xf32>
    %559 = arith.negf %558 : vector<8x64xf32>
    %560 = math.exp %559 : vector<8x64xf32>
    %cst_201 = arith.constant 1.000000e+00 : f32
    %561 = vector.broadcast %cst_201 : f32 to vector<8x64xf32>
    %562 = arith.addf %561, %560 : vector<8x64xf32>
    %563 = arith.divf %561, %562 : vector<8x64xf32>
    %564 = vector.extract_strided_slice %552 {offsets = [0, 64], sizes = [8, 64], strides = [1, 1]} : vector<8x192xf32> to vector<8x64xf32>
    %565 = vector.extract_strided_slice %555 {offsets = [0, 64], sizes = [8, 64], strides = [1, 1]} : vector<8x192xf32> to vector<8x64xf32>
    %566 = arith.addf %564, %565 : vector<8x64xf32>
    %567 = arith.negf %566 : vector<8x64xf32>
    %568 = math.exp %567 : vector<8x64xf32>
    %cst_202 = arith.constant 1.000000e+00 : f32
    %569 = vector.broadcast %cst_202 : f32 to vector<8x64xf32>
    %570 = arith.addf %569, %568 : vector<8x64xf32>
    %571 = arith.divf %569, %570 : vector<8x64xf32>
    %572 = vector.extract_strided_slice %552 {offsets = [0, 128], sizes = [8, 64], strides = [1, 1]} : vector<8x192xf32> to vector<8x64xf32>
    %573 = vector.extract_strided_slice %555 {offsets = [0, 128], sizes = [8, 64], strides = [1, 1]} : vector<8x192xf32> to vector<8x64xf32>
    %574 = arith.mulf %563, %573 : vector<8x64xf32>
    %575 = arith.addf %572, %574 : vector<8x64xf32>
    %576 = math.tanh %575 : vector<8x64xf32>
    %cst_203 = arith.constant 1.000000e+00 : f32
    %577 = vector.broadcast %cst_203 : f32 to vector<8x64xf32>
    %578 = arith.subf %577, %571 : vector<8x64xf32>
    %579 = arith.mulf %578, %576 : vector<8x64xf32>
    %580 = arith.mulf %571, %545 : vector<8x64xf32>
    %581 = arith.addf %579, %580 : vector<8x64xf32>
    %582 = vector.extract_strided_slice %581 {offsets = [0, 0], sizes = [8, 32], strides = [1, 1]} : vector<8x64xf32> to vector<8x32xf32>
    %c48_204 = arith.constant 48 : index
    %c0_205 = arith.constant 0 : index
    %583 = vector.load %arg14[%c48_204, %c0_205] : memref<64x64xf32, #tpu.memory_space<vmem>>, vector<8x32xf32>
    tpu.vector_store %arg14[%c48_204, %c0_205], %582 {strides = array<i32>} : memref<64x64xf32, #tpu.memory_space<vmem>>, vector<8x32xf32>,
    %584 = vector.extract_strided_slice %581 {offsets = [0, 32], sizes = [8, 32], strides = [1, 1]} : vector<8x64xf32> to vector<8x32xf32>
    %c8_206 = arith.constant 8 : index
    %c32_207 = arith.constant 32 : index
    %585 = vector.load %arg14[%c8_206, %c32_207] : memref<64x64xf32, #tpu.memory_space<vmem>>, vector<8x32xf32>
    tpu.vector_store %arg14[%c8_206, %c32_207], %584 {strides = array<i32>} : memref<64x64xf32, #tpu.memory_space<vmem>>, vector<8x32xf32>,
    %c56_208 = arith.constant 56 : index
    %c0_209 = arith.constant 0 : index
    %586 = vector.load %arg13[%c56_208, %c0_209] : memref<64x192xf32, #tpu.memory_space<vmem>>, vector<8x192xf32>
    %c0_210 = arith.constant 0 : index
    %c0_211 = arith.constant 0 : index
    %587 = vector.load %arg13[%c0_210, %c0_211] : memref<64x192xf32, #tpu.memory_space<vmem>>, vector<8x192xf32>
    %588 = arith.select %18, %586, %587 : vector<8x192xi1>, vector<8x192xf32>
    %cst_212 = arith.constant dense<0.000000e+00> : vector<8x192xf32>
    %589 = tpu.matmul %581, %330, %cst_212 {dimension_numbers = #tpu.dot_dimension_numbers<[1], [0], [0], [1], [0, 0, 1, 1], [], []>} : vector<8x64xf32>, vector<64x192xf32>, vector<8x192xf32> -> vector<8x192xf32>
    %590 = vector.broadcast %332 : vector<1x192xf32> to vector<8x192xf32>
    %591 = arith.addf %589, %590 : vector<8x192xf32>
    %592 = vector.extract_strided_slice %588 {offsets = [0, 0], sizes = [8, 64], strides = [1, 1]} : vector<8x192xf32> to vector<8x64xf32>
    %593 = vector.extract_strided_slice %591 {offsets = [0, 0], sizes = [8, 64], strides = [1, 1]} : vector<8x192xf32> to vector<8x64xf32>
    %594 = arith.addf %592, %593 : vector<8x64xf32>
    %595 = arith.negf %594 : vector<8x64xf32>
    %596 = math.exp %595 : vector<8x64xf32>
    %cst_213 = arith.constant 1.000000e+00 : f32
    %597 = vector.broadcast %cst_213 : f32 to vector<8x64xf32>
    %598 = arith.addf %597, %596 : vector<8x64xf32>
    %599 = arith.divf %597, %598 : vector<8x64xf32>
    %600 = vector.extract_strided_slice %588 {offsets = [0, 64], sizes = [8, 64], strides = [1, 1]} : vector<8x192xf32> to vector<8x64xf32>
    %601 = vector.extract_strided_slice %591 {offsets = [0, 64], sizes = [8, 64], strides = [1, 1]} : vector<8x192xf32> to vector<8x64xf32>
    %602 = arith.addf %600, %601 : vector<8x64xf32>
    %603 = arith.negf %602 : vector<8x64xf32>
    %604 = math.exp %603 : vector<8x64xf32>
    %cst_214 = arith.constant 1.000000e+00 : f32
    %605 = vector.broadcast %cst_214 : f32 to vector<8x64xf32>
    %606 = arith.addf %605, %604 : vector<8x64xf32>
    %607 = arith.divf %605, %606 : vector<8x64xf32>
    %608 = vector.extract_strided_slice %588 {offsets = [0, 128], sizes = [8, 64], strides = [1, 1]} : vector<8x192xf32> to vector<8x64xf32>
    %609 = vector.extract_strided_slice %591 {offsets = [0, 128], sizes = [8, 64], strides = [1, 1]} : vector<8x192xf32> to vector<8x64xf32>
    %610 = arith.mulf %599, %609 : vector<8x64xf32>
    %611 = arith.addf %608, %610 : vector<8x64xf32>
    %612 = math.tanh %611 : vector<8x64xf32>
    %cst_215 = arith.constant 1.000000e+00 : f32
    %613 = vector.broadcast %cst_215 : f32 to vector<8x64xf32>
    %614 = arith.subf %613, %607 : vector<8x64xf32>
    %615 = arith.mulf %614, %612 : vector<8x64xf32>
    %616 = arith.mulf %607, %581 : vector<8x64xf32>
    %617 = arith.addf %615, %616 : vector<8x64xf32>
    %618 = vector.extract_strided_slice %617 {offsets = [0, 0], sizes = [8, 32], strides = [1, 1]} : vector<8x64xf32> to vector<8x32xf32>
    %c56_216 = arith.constant 56 : index
    %c0_217 = arith.constant 0 : index
    %619 = vector.load %arg14[%c56_216, %c0_217] : memref<64x64xf32, #tpu.memory_space<vmem>>, vector<8x32xf32>
    tpu.vector_store %arg14[%c56_216, %c0_217], %618 {strides = array<i32>} : memref<64x64xf32, #tpu.memory_space<vmem>>, vector<8x32xf32>,
    %620 = vector.extract_strided_slice %617 {offsets = [0, 32], sizes = [8, 32], strides = [1, 1]} : vector<8x64xf32> to vector<8x32xf32>
    %c0_218 = arith.constant 0 : index
    %c32_219 = arith.constant 32 : index
    %621 = vector.load %arg14[%c0_218, %c32_219] : memref<64x64xf32, #tpu.memory_space<vmem>>, vector<8x32xf32>
    tpu.vector_store %arg14[%c0_218, %c32_219], %620 {strides = array<i32>} : memref<64x64xf32, #tpu.memory_space<vmem>>, vector<8x32xf32>,
    %c0_220 = arith.constant 0 : index
    %c0_221 = arith.constant 0 : index
    %622 = vector.load %arg14[%c0_220, %c0_221] : memref<64x64xf32, #tpu.memory_space<vmem>>, vector<64x64xf32>
    %c1_222 = arith.constant 1 : index
    %c0_223 = arith.constant 0 : index
    %c0_224 = arith.constant 0 : index
    %623 = vector.load %arg2[%c1_222, %c0_223, %c0_224] : memref<3x64x192xf32, #tpu.memory_space<vmem>>, vector<1x64x192xf32>
    %624 = vector.shape_cast %623 : vector<1x64x192xf32> to vector<64x192xf32>
    %cst_225 = arith.constant dense<0.000000e+00> : vector<64x192xf32>
    %625 = tpu.matmul %622, %624, %cst_225 {dimension_numbers = #tpu.dot_dimension_numbers<[1], [0], [0], [1], [0, 0, 1, 1], [], []>} : vector<64x64xf32>, vector<64x192xf32>, vector<64x192xf32> -> vector<64x192xf32>
    %c2 = arith.constant 2 : index
    %c0_226 = arith.constant 0 : index
    %c0_227 = arith.constant 0 : index
    %626 = vector.load %arg4[%c2, %c0_226, %c0_227] : memref<4x1x192xf32, #tpu.memory_space<vmem>>, vector<1x1x192xf32>
    %627 = vector.shape_cast %626 : vector<1x1x192xf32> to vector<1x192xf32>
    %628 = vector.broadcast %627 : vector<1x192xf32> to vector<64x192xf32>
    %629 = arith.addf %625, %628 : vector<64x192xf32>
    %c0_228 = arith.constant 0 : index
    %c0_229 = arith.constant 0 : index
    %630 = vector.load %arg13[%c0_228, %c0_229] : memref<64x192xf32, #tpu.memory_space<vmem>>, vector<64x192xf32>
    tpu.vector_store %arg13[%c0_228, %c0_229], %629 {strides = array<i32>} : memref<64x192xf32, #tpu.memory_space<vmem>>, vector<64x192xf32>,
    %c2_230 = arith.constant 2 : index
    %c0_231 = arith.constant 0 : index
    %c0_232 = arith.constant 0 : index
    %631 = vector.load %arg3[%c2_230, %c0_231, %c0_232] : memref<4x64x192xf32, #tpu.memory_space<vmem>>, vector<1x64x192xf32>
    %632 = vector.shape_cast %631 : vector<1x64x192xf32> to vector<64x192xf32>
    %c2_233 = arith.constant 2 : index
    %c0_234 = arith.constant 0 : index
    %c0_235 = arith.constant 0 : index
    %633 = vector.load %arg5[%c2_233, %c0_234, %c0_235] : memref<4x1x192xf32, #tpu.memory_space<vmem>>, vector<1x1x192xf32>
    %634 = vector.shape_cast %633 : vector<1x1x192xf32> to vector<1x192xf32>
    %cst_236 = arith.constant 0.000000e+00 : f32
    %635 = vector.broadcast %cst_236 : f32 to vector<8x64xf32>
    %c0_237 = arith.constant 0 : index
    %c0_238 = arith.constant 0 : index
    %636 = vector.load %arg13[%c0_237, %c0_238] : memref<64x192xf32, #tpu.memory_space<vmem>>, vector<8x192xf32>
    %c56_239 = arith.constant 56 : index
    %c0_240 = arith.constant 0 : index
    %637 = vector.load %arg13[%c56_239, %c0_240] : memref<64x192xf32, #tpu.memory_space<vmem>>, vector<8x192xf32>
    %638 = arith.select %18, %636, %637 : vector<8x192xi1>, vector<8x192xf32>
    %cst_241 = arith.constant dense<0.000000e+00> : vector<8x192xf32>
    %639 = tpu.matmul %635, %632, %cst_241 {dimension_numbers = #tpu.dot_dimension_numbers<[1], [0], [0], [1], [0, 0, 1, 1], [], []>} : vector<8x64xf32>, vector<64x192xf32>, vector<8x192xf32> -> vector<8x192xf32>
    %640 = vector.broadcast %634 : vector<1x192xf32> to vector<8x192xf32>
    %641 = arith.addf %639, %640 : vector<8x192xf32>
    %642 = vector.extract_strided_slice %638 {offsets = [0, 0], sizes = [8, 64], strides = [1, 1]} : vector<8x192xf32> to vector<8x64xf32>
    %643 = vector.extract_strided_slice %641 {offsets = [0, 0], sizes = [8, 64], strides = [1, 1]} : vector<8x192xf32> to vector<8x64xf32>
    %644 = arith.addf %642, %643 : vector<8x64xf32>
    %645 = arith.negf %644 : vector<8x64xf32>
    %646 = math.exp %645 : vector<8x64xf32>
    %cst_242 = arith.constant 1.000000e+00 : f32
    %647 = vector.broadcast %cst_242 : f32 to vector<8x64xf32>
    %648 = arith.addf %647, %646 : vector<8x64xf32>
    %649 = arith.divf %647, %648 : vector<8x64xf32>
    %650 = vector.extract_strided_slice %638 {offsets = [0, 64], sizes = [8, 64], strides = [1, 1]} : vector<8x192xf32> to vector<8x64xf32>
    %651 = vector.extract_strided_slice %641 {offsets = [0, 64], sizes = [8, 64], strides = [1, 1]} : vector<8x192xf32> to vector<8x64xf32>
    %652 = arith.addf %650, %651 : vector<8x64xf32>
    %653 = arith.negf %652 : vector<8x64xf32>
    %654 = math.exp %653 : vector<8x64xf32>
    %cst_243 = arith.constant 1.000000e+00 : f32
    %655 = vector.broadcast %cst_243 : f32 to vector<8x64xf32>
    %656 = arith.addf %655, %654 : vector<8x64xf32>
    %657 = arith.divf %655, %656 : vector<8x64xf32>
    %658 = vector.extract_strided_slice %638 {offsets = [0, 128], sizes = [8, 64], strides = [1, 1]} : vector<8x192xf32> to vector<8x64xf32>
    %659 = vector.extract_strided_slice %641 {offsets = [0, 128], sizes = [8, 64], strides = [1, 1]} : vector<8x192xf32> to vector<8x64xf32>
    %660 = arith.mulf %649, %659 : vector<8x64xf32>
    %661 = arith.addf %658, %660 : vector<8x64xf32>
    %662 = math.tanh %661 : vector<8x64xf32>
    %cst_244 = arith.constant 1.000000e+00 : f32
    %663 = vector.broadcast %cst_244 : f32 to vector<8x64xf32>
    %664 = arith.subf %663, %657 : vector<8x64xf32>
    %665 = arith.mulf %664, %662 : vector<8x64xf32>
    %666 = arith.mulf %657, %635 : vector<8x64xf32>
    %667 = arith.addf %665, %666 : vector<8x64xf32>
    %668 = vector.extract_strided_slice %667 {offsets = [0, 0], sizes = [8, 32], strides = [1, 1]} : vector<8x64xf32> to vector<8x32xf32>
    %c0_245 = arith.constant 0 : index
    %c0_246 = arith.constant 0 : index
    %669 = vector.load %arg14[%c0_245, %c0_246] : memref<64x64xf32, #tpu.memory_space<vmem>>, vector<8x32xf32>
    tpu.vector_store %arg14[%c0_245, %c0_246], %668 {strides = array<i32>} : memref<64x64xf32, #tpu.memory_space<vmem>>, vector<8x32xf32>,
    %670 = vector.extract_strided_slice %667 {offsets = [0, 32], sizes = [8, 32], strides = [1, 1]} : vector<8x64xf32> to vector<8x32xf32>
    %c56_247 = arith.constant 56 : index
    %c32_248 = arith.constant 32 : index
    %671 = vector.load %arg14[%c56_247, %c32_248] : memref<64x64xf32, #tpu.memory_space<vmem>>, vector<8x32xf32>
    tpu.vector_store %arg14[%c56_247, %c32_248], %670 {strides = array<i32>} : memref<64x64xf32, #tpu.memory_space<vmem>>, vector<8x32xf32>,
    %c8_249 = arith.constant 8 : index
    %c0_250 = arith.constant 0 : index
    %672 = vector.load %arg13[%c8_249, %c0_250] : memref<64x192xf32, #tpu.memory_space<vmem>>, vector<8x192xf32>
    %c48_251 = arith.constant 48 : index
    %c0_252 = arith.constant 0 : index
    %673 = vector.load %arg13[%c48_251, %c0_252] : memref<64x192xf32, #tpu.memory_space<vmem>>, vector<8x192xf32>
    %674 = arith.select %18, %672, %673 : vector<8x192xi1>, vector<8x192xf32>
    %cst_253 = arith.constant dense<0.000000e+00> : vector<8x192xf32>
    %675 = tpu.matmul %667, %632, %cst_253 {dimension_numbers = #tpu.dot_dimension_numbers<[1], [0], [0], [1], [0, 0, 1, 1], [], []>} : vector<8x64xf32>, vector<64x192xf32>, vector<8x192xf32> -> vector<8x192xf32>
    %676 = vector.broadcast %634 : vector<1x192xf32> to vector<8x192xf32>
    %677 = arith.addf %675, %676 : vector<8x192xf32>
    %678 = vector.extract_strided_slice %674 {offsets = [0, 0], sizes = [8, 64], strides = [1, 1]} : vector<8x192xf32> to vector<8x64xf32>
    %679 = vector.extract_strided_slice %677 {offsets = [0, 0], sizes = [8, 64], strides = [1, 1]} : vector<8x192xf32> to vector<8x64xf32>
    %680 = arith.addf %678, %679 : vector<8x64xf32>
    %681 = arith.negf %680 : vector<8x64xf32>
    %682 = math.exp %681 : vector<8x64xf32>
    %cst_254 = arith.constant 1.000000e+00 : f32
    %683 = vector.broadcast %cst_254 : f32 to vector<8x64xf32>
    %684 = arith.addf %683, %682 : vector<8x64xf32>
    %685 = arith.divf %683, %684 : vector<8x64xf32>
    %686 = vector.extract_strided_slice %674 {offsets = [0, 64], sizes = [8, 64], strides = [1, 1]} : vector<8x192xf32> to vector<8x64xf32>
    %687 = vector.extract_strided_slice %677 {offsets = [0, 64], sizes = [8, 64], strides = [1, 1]} : vector<8x192xf32> to vector<8x64xf32>
    %688 = arith.addf %686, %687 : vector<8x64xf32>
    %689 = arith.negf %688 : vector<8x64xf32>
    %690 = math.exp %689 : vector<8x64xf32>
    %cst_255 = arith.constant 1.000000e+00 : f32
    %691 = vector.broadcast %cst_255 : f32 to vector<8x64xf32>
    %692 = arith.addf %691, %690 : vector<8x64xf32>
    %693 = arith.divf %691, %692 : vector<8x64xf32>
    %694 = vector.extract_strided_slice %674 {offsets = [0, 128], sizes = [8, 64], strides = [1, 1]} : vector<8x192xf32> to vector<8x64xf32>
    %695 = vector.extract_strided_slice %677 {offsets = [0, 128], sizes = [8, 64], strides = [1, 1]} : vector<8x192xf32> to vector<8x64xf32>
    %696 = arith.mulf %685, %695 : vector<8x64xf32>
    %697 = arith.addf %694, %696 : vector<8x64xf32>
    %698 = math.tanh %697 : vector<8x64xf32>
    %cst_256 = arith.constant 1.000000e+00 : f32
    %699 = vector.broadcast %cst_256 : f32 to vector<8x64xf32>
    %700 = arith.subf %699, %693 : vector<8x64xf32>
    %701 = arith.mulf %700, %698 : vector<8x64xf32>
    %702 = arith.mulf %693, %667 : vector<8x64xf32>
    %703 = arith.addf %701, %702 : vector<8x64xf32>
    %704 = vector.extract_strided_slice %703 {offsets = [0, 0], sizes = [8, 32], strides = [1, 1]} : vector<8x64xf32> to vector<8x32xf32>
    %c8_257 = arith.constant 8 : index
    %c0_258 = arith.constant 0 : index
    %705 = vector.load %arg14[%c8_257, %c0_258] : memref<64x64xf32, #tpu.memory_space<vmem>>, vector<8x32xf32>
    tpu.vector_store %arg14[%c8_257, %c0_258], %704 {strides = array<i32>} : memref<64x64xf32, #tpu.memory_space<vmem>>, vector<8x32xf32>,
    %706 = vector.extract_strided_slice %703 {offsets = [0, 32], sizes = [8, 32], strides = [1, 1]} : vector<8x64xf32> to vector<8x32xf32>
    %c48_259 = arith.constant 48 : index
    %c32_260 = arith.constant 32 : index
    %707 = vector.load %arg14[%c48_259, %c32_260] : memref<64x64xf32, #tpu.memory_space<vmem>>, vector<8x32xf32>
    tpu.vector_store %arg14[%c48_259, %c32_260], %706 {strides = array<i32>} : memref<64x64xf32, #tpu.memory_space<vmem>>, vector<8x32xf32>,
    %c16_261 = arith.constant 16 : index
    %c0_262 = arith.constant 0 : index
    %708 = vector.load %arg13[%c16_261, %c0_262] : memref<64x192xf32, #tpu.memory_space<vmem>>, vector<8x192xf32>
    %c40_263 = arith.constant 40 : index
    %c0_264 = arith.constant 0 : index
    %709 = vector.load %arg13[%c40_263, %c0_264] : memref<64x192xf32, #tpu.memory_space<vmem>>, vector<8x192xf32>
    %710 = arith.select %18, %708, %709 : vector<8x192xi1>, vector<8x192xf32>
    %cst_265 = arith.constant dense<0.000000e+00> : vector<8x192xf32>
    %711 = tpu.matmul %703, %632, %cst_265 {dimension_numbers = #tpu.dot_dimension_numbers<[1], [0], [0], [1], [0, 0, 1, 1], [], []>} : vector<8x64xf32>, vector<64x192xf32>, vector<8x192xf32> -> vector<8x192xf32>
    %712 = vector.broadcast %634 : vector<1x192xf32> to vector<8x192xf32>
    %713 = arith.addf %711, %712 : vector<8x192xf32>
    %714 = vector.extract_strided_slice %710 {offsets = [0, 0], sizes = [8, 64], strides = [1, 1]} : vector<8x192xf32> to vector<8x64xf32>
    %715 = vector.extract_strided_slice %713 {offsets = [0, 0], sizes = [8, 64], strides = [1, 1]} : vector<8x192xf32> to vector<8x64xf32>
    %716 = arith.addf %714, %715 : vector<8x64xf32>
    %717 = arith.negf %716 : vector<8x64xf32>
    %718 = math.exp %717 : vector<8x64xf32>
    %cst_266 = arith.constant 1.000000e+00 : f32
    %719 = vector.broadcast %cst_266 : f32 to vector<8x64xf32>
    %720 = arith.addf %719, %718 : vector<8x64xf32>
    %721 = arith.divf %719, %720 : vector<8x64xf32>
    %722 = vector.extract_strided_slice %710 {offsets = [0, 64], sizes = [8, 64], strides = [1, 1]} : vector<8x192xf32> to vector<8x64xf32>
    %723 = vector.extract_strided_slice %713 {offsets = [0, 64], sizes = [8, 64], strides = [1, 1]} : vector<8x192xf32> to vector<8x64xf32>
    %724 = arith.addf %722, %723 : vector<8x64xf32>
    %725 = arith.negf %724 : vector<8x64xf32>
    %726 = math.exp %725 : vector<8x64xf32>
    %cst_267 = arith.constant 1.000000e+00 : f32
    %727 = vector.broadcast %cst_267 : f32 to vector<8x64xf32>
    %728 = arith.addf %727, %726 : vector<8x64xf32>
    %729 = arith.divf %727, %728 : vector<8x64xf32>
    %730 = vector.extract_strided_slice %710 {offsets = [0, 128], sizes = [8, 64], strides = [1, 1]} : vector<8x192xf32> to vector<8x64xf32>
    %731 = vector.extract_strided_slice %713 {offsets = [0, 128], sizes = [8, 64], strides = [1, 1]} : vector<8x192xf32> to vector<8x64xf32>
    %732 = arith.mulf %721, %731 : vector<8x64xf32>
    %733 = arith.addf %730, %732 : vector<8x64xf32>
    %734 = math.tanh %733 : vector<8x64xf32>
    %cst_268 = arith.constant 1.000000e+00 : f32
    %735 = vector.broadcast %cst_268 : f32 to vector<8x64xf32>
    %736 = arith.subf %735, %729 : vector<8x64xf32>
    %737 = arith.mulf %736, %734 : vector<8x64xf32>
    %738 = arith.mulf %729, %703 : vector<8x64xf32>
    %739 = arith.addf %737, %738 : vector<8x64xf32>
    %740 = vector.extract_strided_slice %739 {offsets = [0, 0], sizes = [8, 32], strides = [1, 1]} : vector<8x64xf32> to vector<8x32xf32>
    %c16_269 = arith.constant 16 : index
    %c0_270 = arith.constant 0 : index
    %741 = vector.load %arg14[%c16_269, %c0_270] : memref<64x64xf32, #tpu.memory_space<vmem>>, vector<8x32xf32>
    tpu.vector_store %arg14[%c16_269, %c0_270], %740 {strides = array<i32>} : memref<64x64xf32, #tpu.memory_space<vmem>>, vector<8x32xf32>,
    %742 = vector.extract_strided_slice %739 {offsets = [0, 32], sizes = [8, 32], strides = [1, 1]} : vector<8x64xf32> to vector<8x32xf32>
    %c40_271 = arith.constant 40 : index
    %c32_272 = arith.constant 32 : index
    %743 = vector.load %arg14[%c40_271, %c32_272] : memref<64x64xf32, #tpu.memory_space<vmem>>, vector<8x32xf32>
    tpu.vector_store %arg14[%c40_271, %c32_272], %742 {strides = array<i32>} : memref<64x64xf32, #tpu.memory_space<vmem>>, vector<8x32xf32>,
    %c24_273 = arith.constant 24 : index
    %c0_274 = arith.constant 0 : index
    %744 = vector.load %arg13[%c24_273, %c0_274] : memref<64x192xf32, #tpu.memory_space<vmem>>, vector<8x192xf32>
    %c32_275 = arith.constant 32 : index
    %c0_276 = arith.constant 0 : index
    %745 = vector.load %arg13[%c32_275, %c0_276] : memref<64x192xf32, #tpu.memory_space<vmem>>, vector<8x192xf32>
    %746 = arith.select %18, %744, %745 : vector<8x192xi1>, vector<8x192xf32>
    %cst_277 = arith.constant dense<0.000000e+00> : vector<8x192xf32>
    %747 = tpu.matmul %739, %632, %cst_277 {dimension_numbers = #tpu.dot_dimension_numbers<[1], [0], [0], [1], [0, 0, 1, 1], [], []>} : vector<8x64xf32>, vector<64x192xf32>, vector<8x192xf32> -> vector<8x192xf32>
    %748 = vector.broadcast %634 : vector<1x192xf32> to vector<8x192xf32>
    %749 = arith.addf %747, %748 : vector<8x192xf32>
    %750 = vector.extract_strided_slice %746 {offsets = [0, 0], sizes = [8, 64], strides = [1, 1]} : vector<8x192xf32> to vector<8x64xf32>
    %751 = vector.extract_strided_slice %749 {offsets = [0, 0], sizes = [8, 64], strides = [1, 1]} : vector<8x192xf32> to vector<8x64xf32>
    %752 = arith.addf %750, %751 : vector<8x64xf32>
    %753 = arith.negf %752 : vector<8x64xf32>
    %754 = math.exp %753 : vector<8x64xf32>
    %cst_278 = arith.constant 1.000000e+00 : f32
    %755 = vector.broadcast %cst_278 : f32 to vector<8x64xf32>
    %756 = arith.addf %755, %754 : vector<8x64xf32>
    %757 = arith.divf %755, %756 : vector<8x64xf32>
    %758 = vector.extract_strided_slice %746 {offsets = [0, 64], sizes = [8, 64], strides = [1, 1]} : vector<8x192xf32> to vector<8x64xf32>
    %759 = vector.extract_strided_slice %749 {offsets = [0, 64], sizes = [8, 64], strides = [1, 1]} : vector<8x192xf32> to vector<8x64xf32>
    %760 = arith.addf %758, %759 : vector<8x64xf32>
    %761 = arith.negf %760 : vector<8x64xf32>
    %762 = math.exp %761 : vector<8x64xf32>
    %cst_279 = arith.constant 1.000000e+00 : f32
    %763 = vector.broadcast %cst_279 : f32 to vector<8x64xf32>
    %764 = arith.addf %763, %762 : vector<8x64xf32>
    %765 = arith.divf %763, %764 : vector<8x64xf32>
    %766 = vector.extract_strided_slice %746 {offsets = [0, 128], sizes = [8, 64], strides = [1, 1]} : vector<8x192xf32> to vector<8x64xf32>
    %767 = vector.extract_strided_slice %749 {offsets = [0, 128], sizes = [8, 64], strides = [1, 1]} : vector<8x192xf32> to vector<8x64xf32>
    %768 = arith.mulf %757, %767 : vector<8x64xf32>
    %769 = arith.addf %766, %768 : vector<8x64xf32>
    %770 = math.tanh %769 : vector<8x64xf32>
    %cst_280 = arith.constant 1.000000e+00 : f32
    %771 = vector.broadcast %cst_280 : f32 to vector<8x64xf32>
    %772 = arith.subf %771, %765 : vector<8x64xf32>
    %773 = arith.mulf %772, %770 : vector<8x64xf32>
    %774 = arith.mulf %765, %739 : vector<8x64xf32>
    %775 = arith.addf %773, %774 : vector<8x64xf32>
    %776 = vector.extract_strided_slice %775 {offsets = [0, 0], sizes = [8, 32], strides = [1, 1]} : vector<8x64xf32> to vector<8x32xf32>
    %c24_281 = arith.constant 24 : index
    %c0_282 = arith.constant 0 : index
    %777 = vector.load %arg14[%c24_281, %c0_282] : memref<64x64xf32, #tpu.memory_space<vmem>>, vector<8x32xf32>
    tpu.vector_store %arg14[%c24_281, %c0_282], %776 {strides = array<i32>} : memref<64x64xf32, #tpu.memory_space<vmem>>, vector<8x32xf32>,
    %778 = vector.extract_strided_slice %775 {offsets = [0, 32], sizes = [8, 32], strides = [1, 1]} : vector<8x64xf32> to vector<8x32xf32>
    %c32_283 = arith.constant 32 : index
    %c32_284 = arith.constant 32 : index
    %779 = vector.load %arg14[%c32_283, %c32_284] : memref<64x64xf32, #tpu.memory_space<vmem>>, vector<8x32xf32>
    tpu.vector_store %arg14[%c32_283, %c32_284], %778 {strides = array<i32>} : memref<64x64xf32, #tpu.memory_space<vmem>>, vector<8x32xf32>,
    %c32_285 = arith.constant 32 : index
    %c0_286 = arith.constant 0 : index
    %780 = vector.load %arg13[%c32_285, %c0_286] : memref<64x192xf32, #tpu.memory_space<vmem>>, vector<8x192xf32>
    %c24_287 = arith.constant 24 : index
    %c0_288 = arith.constant 0 : index
    %781 = vector.load %arg13[%c24_287, %c0_288] : memref<64x192xf32, #tpu.memory_space<vmem>>, vector<8x192xf32>
    %782 = arith.select %18, %780, %781 : vector<8x192xi1>, vector<8x192xf32>
    %cst_289 = arith.constant dense<0.000000e+00> : vector<8x192xf32>
    %783 = tpu.matmul %775, %632, %cst_289 {dimension_numbers = #tpu.dot_dimension_numbers<[1], [0], [0], [1], [0, 0, 1, 1], [], []>} : vector<8x64xf32>, vector<64x192xf32>, vector<8x192xf32> -> vector<8x192xf32>
    %784 = vector.broadcast %634 : vector<1x192xf32> to vector<8x192xf32>
    %785 = arith.addf %783, %784 : vector<8x192xf32>
    %786 = vector.extract_strided_slice %782 {offsets = [0, 0], sizes = [8, 64], strides = [1, 1]} : vector<8x192xf32> to vector<8x64xf32>
    %787 = vector.extract_strided_slice %785 {offsets = [0, 0], sizes = [8, 64], strides = [1, 1]} : vector<8x192xf32> to vector<8x64xf32>
    %788 = arith.addf %786, %787 : vector<8x64xf32>
    %789 = arith.negf %788 : vector<8x64xf32>
    %790 = math.exp %789 : vector<8x64xf32>
    %cst_290 = arith.constant 1.000000e+00 : f32
    %791 = vector.broadcast %cst_290 : f32 to vector<8x64xf32>
    %792 = arith.addf %791, %790 : vector<8x64xf32>
    %793 = arith.divf %791, %792 : vector<8x64xf32>
    %794 = vector.extract_strided_slice %782 {offsets = [0, 64], sizes = [8, 64], strides = [1, 1]} : vector<8x192xf32> to vector<8x64xf32>
    %795 = vector.extract_strided_slice %785 {offsets = [0, 64], sizes = [8, 64], strides = [1, 1]} : vector<8x192xf32> to vector<8x64xf32>
    %796 = arith.addf %794, %795 : vector<8x64xf32>
    %797 = arith.negf %796 : vector<8x64xf32>
    %798 = math.exp %797 : vector<8x64xf32>
    %cst_291 = arith.constant 1.000000e+00 : f32
    %799 = vector.broadcast %cst_291 : f32 to vector<8x64xf32>
    %800 = arith.addf %799, %798 : vector<8x64xf32>
    %801 = arith.divf %799, %800 : vector<8x64xf32>
    %802 = vector.extract_strided_slice %782 {offsets = [0, 128], sizes = [8, 64], strides = [1, 1]} : vector<8x192xf32> to vector<8x64xf32>
    %803 = vector.extract_strided_slice %785 {offsets = [0, 128], sizes = [8, 64], strides = [1, 1]} : vector<8x192xf32> to vector<8x64xf32>
    %804 = arith.mulf %793, %803 : vector<8x64xf32>
    %805 = arith.addf %802, %804 : vector<8x64xf32>
    %806 = math.tanh %805 : vector<8x64xf32>
    %cst_292 = arith.constant 1.000000e+00 : f32
    %807 = vector.broadcast %cst_292 : f32 to vector<8x64xf32>
    %808 = arith.subf %807, %801 : vector<8x64xf32>
    %809 = arith.mulf %808, %806 : vector<8x64xf32>
    %810 = arith.mulf %801, %775 : vector<8x64xf32>
    %811 = arith.addf %809, %810 : vector<8x64xf32>
    %812 = vector.extract_strided_slice %811 {offsets = [0, 0], sizes = [8, 32], strides = [1, 1]} : vector<8x64xf32> to vector<8x32xf32>
    %c32_293 = arith.constant 32 : index
    %c0_294 = arith.constant 0 : index
    %813 = vector.load %arg14[%c32_293, %c0_294] : memref<64x64xf32, #tpu.memory_space<vmem>>, vector<8x32xf32>
    tpu.vector_store %arg14[%c32_293, %c0_294], %812 {strides = array<i32>} : memref<64x64xf32, #tpu.memory_space<vmem>>, vector<8x32xf32>,
    %814 = vector.extract_strided_slice %811 {offsets = [0, 32], sizes = [8, 32], strides = [1, 1]} : vector<8x64xf32> to vector<8x32xf32>
    %c24_295 = arith.constant 24 : index
    %c32_296 = arith.constant 32 : index
    %815 = vector.load %arg14[%c24_295, %c32_296] : memref<64x64xf32, #tpu.memory_space<vmem>>, vector<8x32xf32>
    tpu.vector_store %arg14[%c24_295, %c32_296], %814 {strides = array<i32>} : memref<64x64xf32, #tpu.memory_space<vmem>>, vector<8x32xf32>,
    %c40_297 = arith.constant 40 : index
    %c0_298 = arith.constant 0 : index
    %816 = vector.load %arg13[%c40_297, %c0_298] : memref<64x192xf32, #tpu.memory_space<vmem>>, vector<8x192xf32>
    %c16_299 = arith.constant 16 : index
    %c0_300 = arith.constant 0 : index
    %817 = vector.load %arg13[%c16_299, %c0_300] : memref<64x192xf32, #tpu.memory_space<vmem>>, vector<8x192xf32>
    %818 = arith.select %18, %816, %817 : vector<8x192xi1>, vector<8x192xf32>
    %cst_301 = arith.constant dense<0.000000e+00> : vector<8x192xf32>
    %819 = tpu.matmul %811, %632, %cst_301 {dimension_numbers = #tpu.dot_dimension_numbers<[1], [0], [0], [1], [0, 0, 1, 1], [], []>} : vector<8x64xf32>, vector<64x192xf32>, vector<8x192xf32> -> vector<8x192xf32>
    %820 = vector.broadcast %634 : vector<1x192xf32> to vector<8x192xf32>
    %821 = arith.addf %819, %820 : vector<8x192xf32>
    %822 = vector.extract_strided_slice %818 {offsets = [0, 0], sizes = [8, 64], strides = [1, 1]} : vector<8x192xf32> to vector<8x64xf32>
    %823 = vector.extract_strided_slice %821 {offsets = [0, 0], sizes = [8, 64], strides = [1, 1]} : vector<8x192xf32> to vector<8x64xf32>
    %824 = arith.addf %822, %823 : vector<8x64xf32>
    %825 = arith.negf %824 : vector<8x64xf32>
    %826 = math.exp %825 : vector<8x64xf32>
    %cst_302 = arith.constant 1.000000e+00 : f32
    %827 = vector.broadcast %cst_302 : f32 to vector<8x64xf32>
    %828 = arith.addf %827, %826 : vector<8x64xf32>
    %829 = arith.divf %827, %828 : vector<8x64xf32>
    %830 = vector.extract_strided_slice %818 {offsets = [0, 64], sizes = [8, 64], strides = [1, 1]} : vector<8x192xf32> to vector<8x64xf32>
    %831 = vector.extract_strided_slice %821 {offsets = [0, 64], sizes = [8, 64], strides = [1, 1]} : vector<8x192xf32> to vector<8x64xf32>
    %832 = arith.addf %830, %831 : vector<8x64xf32>
    %833 = arith.negf %832 : vector<8x64xf32>
    %834 = math.exp %833 : vector<8x64xf32>
    %cst_303 = arith.constant 1.000000e+00 : f32
    %835 = vector.broadcast %cst_303 : f32 to vector<8x64xf32>
    %836 = arith.addf %835, %834 : vector<8x64xf32>
    %837 = arith.divf %835, %836 : vector<8x64xf32>
    %838 = vector.extract_strided_slice %818 {offsets = [0, 128], sizes = [8, 64], strides = [1, 1]} : vector<8x192xf32> to vector<8x64xf32>
    %839 = vector.extract_strided_slice %821 {offsets = [0, 128], sizes = [8, 64], strides = [1, 1]} : vector<8x192xf32> to vector<8x64xf32>
    %840 = arith.mulf %829, %839 : vector<8x64xf32>
    %841 = arith.addf %838, %840 : vector<8x64xf32>
    %842 = math.tanh %841 : vector<8x64xf32>
    %cst_304 = arith.constant 1.000000e+00 : f32
    %843 = vector.broadcast %cst_304 : f32 to vector<8x64xf32>
    %844 = arith.subf %843, %837 : vector<8x64xf32>
    %845 = arith.mulf %844, %842 : vector<8x64xf32>
    %846 = arith.mulf %837, %811 : vector<8x64xf32>
    %847 = arith.addf %845, %846 : vector<8x64xf32>
    %848 = vector.extract_strided_slice %847 {offsets = [0, 0], sizes = [8, 32], strides = [1, 1]} : vector<8x64xf32> to vector<8x32xf32>
    %c40_305 = arith.constant 40 : index
    %c0_306 = arith.constant 0 : index
    %849 = vector.load %arg14[%c40_305, %c0_306] : memref<64x64xf32, #tpu.memory_space<vmem>>, vector<8x32xf32>
    tpu.vector_store %arg14[%c40_305, %c0_306], %848 {strides = array<i32>} : memref<64x64xf32, #tpu.memory_space<vmem>>, vector<8x32xf32>,
    %850 = vector.extract_strided_slice %847 {offsets = [0, 32], sizes = [8, 32], strides = [1, 1]} : vector<8x64xf32> to vector<8x32xf32>
    %c16_307 = arith.constant 16 : index
    %c32_308 = arith.constant 32 : index
    %851 = vector.load %arg14[%c16_307, %c32_308] : memref<64x64xf32, #tpu.memory_space<vmem>>, vector<8x32xf32>
    tpu.vector_store %arg14[%c16_307, %c32_308], %850 {strides = array<i32>} : memref<64x64xf32, #tpu.memory_space<vmem>>, vector<8x32xf32>,
    %c48_309 = arith.constant 48 : index
    %c0_310 = arith.constant 0 : index
    %852 = vector.load %arg13[%c48_309, %c0_310] : memref<64x192xf32, #tpu.memory_space<vmem>>, vector<8x192xf32>
    %c8_311 = arith.constant 8 : index
    %c0_312 = arith.constant 0 : index
    %853 = vector.load %arg13[%c8_311, %c0_312] : memref<64x192xf32, #tpu.memory_space<vmem>>, vector<8x192xf32>
    %854 = arith.select %18, %852, %853 : vector<8x192xi1>, vector<8x192xf32>
    %cst_313 = arith.constant dense<0.000000e+00> : vector<8x192xf32>
    %855 = tpu.matmul %847, %632, %cst_313 {dimension_numbers = #tpu.dot_dimension_numbers<[1], [0], [0], [1], [0, 0, 1, 1], [], []>} : vector<8x64xf32>, vector<64x192xf32>, vector<8x192xf32> -> vector<8x192xf32>
    %856 = vector.broadcast %634 : vector<1x192xf32> to vector<8x192xf32>
    %857 = arith.addf %855, %856 : vector<8x192xf32>
    %858 = vector.extract_strided_slice %854 {offsets = [0, 0], sizes = [8, 64], strides = [1, 1]} : vector<8x192xf32> to vector<8x64xf32>
    %859 = vector.extract_strided_slice %857 {offsets = [0, 0], sizes = [8, 64], strides = [1, 1]} : vector<8x192xf32> to vector<8x64xf32>
    %860 = arith.addf %858, %859 : vector<8x64xf32>
    %861 = arith.negf %860 : vector<8x64xf32>
    %862 = math.exp %861 : vector<8x64xf32>
    %cst_314 = arith.constant 1.000000e+00 : f32
    %863 = vector.broadcast %cst_314 : f32 to vector<8x64xf32>
    %864 = arith.addf %863, %862 : vector<8x64xf32>
    %865 = arith.divf %863, %864 : vector<8x64xf32>
    %866 = vector.extract_strided_slice %854 {offsets = [0, 64], sizes = [8, 64], strides = [1, 1]} : vector<8x192xf32> to vector<8x64xf32>
    %867 = vector.extract_strided_slice %857 {offsets = [0, 64], sizes = [8, 64], strides = [1, 1]} : vector<8x192xf32> to vector<8x64xf32>
    %868 = arith.addf %866, %867 : vector<8x64xf32>
    %869 = arith.negf %868 : vector<8x64xf32>
    %870 = math.exp %869 : vector<8x64xf32>
    %cst_315 = arith.constant 1.000000e+00 : f32
    %871 = vector.broadcast %cst_315 : f32 to vector<8x64xf32>
    %872 = arith.addf %871, %870 : vector<8x64xf32>
    %873 = arith.divf %871, %872 : vector<8x64xf32>
    %874 = vector.extract_strided_slice %854 {offsets = [0, 128], sizes = [8, 64], strides = [1, 1]} : vector<8x192xf32> to vector<8x64xf32>
    %875 = vector.extract_strided_slice %857 {offsets = [0, 128], sizes = [8, 64], strides = [1, 1]} : vector<8x192xf32> to vector<8x64xf32>
    %876 = arith.mulf %865, %875 : vector<8x64xf32>
    %877 = arith.addf %874, %876 : vector<8x64xf32>
    %878 = math.tanh %877 : vector<8x64xf32>
    %cst_316 = arith.constant 1.000000e+00 : f32
    %879 = vector.broadcast %cst_316 : f32 to vector<8x64xf32>
    %880 = arith.subf %879, %873 : vector<8x64xf32>
    %881 = arith.mulf %880, %878 : vector<8x64xf32>
    %882 = arith.mulf %873, %847 : vector<8x64xf32>
    %883 = arith.addf %881, %882 : vector<8x64xf32>
    %884 = vector.extract_strided_slice %883 {offsets = [0, 0], sizes = [8, 32], strides = [1, 1]} : vector<8x64xf32> to vector<8x32xf32>
    %c48_317 = arith.constant 48 : index
    %c0_318 = arith.constant 0 : index
    %885 = vector.load %arg14[%c48_317, %c0_318] : memref<64x64xf32, #tpu.memory_space<vmem>>, vector<8x32xf32>
    tpu.vector_store %arg14[%c48_317, %c0_318], %884 {strides = array<i32>} : memref<64x64xf32, #tpu.memory_space<vmem>>, vector<8x32xf32>,
    %886 = vector.extract_strided_slice %883 {offsets = [0, 32], sizes = [8, 32], strides = [1, 1]} : vector<8x64xf32> to vector<8x32xf32>
    %c8_319 = arith.constant 8 : index
    %c32_320 = arith.constant 32 : index
    %887 = vector.load %arg14[%c8_319, %c32_320] : memref<64x64xf32, #tpu.memory_space<vmem>>, vector<8x32xf32>
    tpu.vector_store %arg14[%c8_319, %c32_320], %886 {strides = array<i32>} : memref<64x64xf32, #tpu.memory_space<vmem>>, vector<8x32xf32>,
    %c56_321 = arith.constant 56 : index
    %c0_322 = arith.constant 0 : index
    %888 = vector.load %arg13[%c56_321, %c0_322] : memref<64x192xf32, #tpu.memory_space<vmem>>, vector<8x192xf32>
    %c0_323 = arith.constant 0 : index
    %c0_324 = arith.constant 0 : index
    %889 = vector.load %arg13[%c0_323, %c0_324] : memref<64x192xf32, #tpu.memory_space<vmem>>, vector<8x192xf32>
    %890 = arith.select %18, %888, %889 : vector<8x192xi1>, vector<8x192xf32>
    %cst_325 = arith.constant dense<0.000000e+00> : vector<8x192xf32>
    %891 = tpu.matmul %883, %632, %cst_325 {dimension_numbers = #tpu.dot_dimension_numbers<[1], [0], [0], [1], [0, 0, 1, 1], [], []>} : vector<8x64xf32>, vector<64x192xf32>, vector<8x192xf32> -> vector<8x192xf32>
    %892 = vector.broadcast %634 : vector<1x192xf32> to vector<8x192xf32>
    %893 = arith.addf %891, %892 : vector<8x192xf32>
    %894 = vector.extract_strided_slice %890 {offsets = [0, 0], sizes = [8, 64], strides = [1, 1]} : vector<8x192xf32> to vector<8x64xf32>
    %895 = vector.extract_strided_slice %893 {offsets = [0, 0], sizes = [8, 64], strides = [1, 1]} : vector<8x192xf32> to vector<8x64xf32>
    %896 = arith.addf %894, %895 : vector<8x64xf32>
    %897 = arith.negf %896 : vector<8x64xf32>
    %898 = math.exp %897 : vector<8x64xf32>
    %cst_326 = arith.constant 1.000000e+00 : f32
    %899 = vector.broadcast %cst_326 : f32 to vector<8x64xf32>
    %900 = arith.addf %899, %898 : vector<8x64xf32>
    %901 = arith.divf %899, %900 : vector<8x64xf32>
    %902 = vector.extract_strided_slice %890 {offsets = [0, 64], sizes = [8, 64], strides = [1, 1]} : vector<8x192xf32> to vector<8x64xf32>
    %903 = vector.extract_strided_slice %893 {offsets = [0, 64], sizes = [8, 64], strides = [1, 1]} : vector<8x192xf32> to vector<8x64xf32>
    %904 = arith.addf %902, %903 : vector<8x64xf32>
    %905 = arith.negf %904 : vector<8x64xf32>
    %906 = math.exp %905 : vector<8x64xf32>
    %cst_327 = arith.constant 1.000000e+00 : f32
    %907 = vector.broadcast %cst_327 : f32 to vector<8x64xf32>
    %908 = arith.addf %907, %906 : vector<8x64xf32>
    %909 = arith.divf %907, %908 : vector<8x64xf32>
    %910 = vector.extract_strided_slice %890 {offsets = [0, 128], sizes = [8, 64], strides = [1, 1]} : vector<8x192xf32> to vector<8x64xf32>
    %911 = vector.extract_strided_slice %893 {offsets = [0, 128], sizes = [8, 64], strides = [1, 1]} : vector<8x192xf32> to vector<8x64xf32>
    %912 = arith.mulf %901, %911 : vector<8x64xf32>
    %913 = arith.addf %910, %912 : vector<8x64xf32>
    %914 = math.tanh %913 : vector<8x64xf32>
    %cst_328 = arith.constant 1.000000e+00 : f32
    %915 = vector.broadcast %cst_328 : f32 to vector<8x64xf32>
    %916 = arith.subf %915, %909 : vector<8x64xf32>
    %917 = arith.mulf %916, %914 : vector<8x64xf32>
    %918 = arith.mulf %909, %883 : vector<8x64xf32>
    %919 = arith.addf %917, %918 : vector<8x64xf32>
    %920 = vector.extract_strided_slice %919 {offsets = [0, 0], sizes = [8, 32], strides = [1, 1]} : vector<8x64xf32> to vector<8x32xf32>
    %c56_329 = arith.constant 56 : index
    %c0_330 = arith.constant 0 : index
    %921 = vector.load %arg14[%c56_329, %c0_330] : memref<64x64xf32, #tpu.memory_space<vmem>>, vector<8x32xf32>
    tpu.vector_store %arg14[%c56_329, %c0_330], %920 {strides = array<i32>} : memref<64x64xf32, #tpu.memory_space<vmem>>, vector<8x32xf32>,
    %922 = vector.extract_strided_slice %919 {offsets = [0, 32], sizes = [8, 32], strides = [1, 1]} : vector<8x64xf32> to vector<8x32xf32>
    %c0_331 = arith.constant 0 : index
    %c32_332 = arith.constant 32 : index
    %923 = vector.load %arg14[%c0_331, %c32_332] : memref<64x64xf32, #tpu.memory_space<vmem>>, vector<8x32xf32>
    tpu.vector_store %arg14[%c0_331, %c32_332], %922 {strides = array<i32>} : memref<64x64xf32, #tpu.memory_space<vmem>>, vector<8x32xf32>,
    %c0_333 = arith.constant 0 : index
    %c0_334 = arith.constant 0 : index
    %924 = vector.load %arg14[%c0_333, %c0_334] : memref<64x64xf32, #tpu.memory_space<vmem>>, vector<64x64xf32>
    %c2_335 = arith.constant 2 : index
    %c0_336 = arith.constant 0 : index
    %c0_337 = arith.constant 0 : index
    %925 = vector.load %arg2[%c2_335, %c0_336, %c0_337] : memref<3x64x192xf32, #tpu.memory_space<vmem>>, vector<1x64x192xf32>
    %926 = vector.shape_cast %925 : vector<1x64x192xf32> to vector<64x192xf32>
    %cst_338 = arith.constant dense<0.000000e+00> : vector<64x192xf32>
    %927 = tpu.matmul %924, %926, %cst_338 {dimension_numbers = #tpu.dot_dimension_numbers<[1], [0], [0], [1], [0, 0, 1, 1], [], []>} : vector<64x64xf32>, vector<64x192xf32>, vector<64x192xf32> -> vector<64x192xf32>
    %c3 = arith.constant 3 : index
    %c0_339 = arith.constant 0 : index
    %c0_340 = arith.constant 0 : index
    %928 = vector.load %arg4[%c3, %c0_339, %c0_340] : memref<4x1x192xf32, #tpu.memory_space<vmem>>, vector<1x1x192xf32>
    %929 = vector.shape_cast %928 : vector<1x1x192xf32> to vector<1x192xf32>
    %930 = vector.broadcast %929 : vector<1x192xf32> to vector<64x192xf32>
    %931 = arith.addf %927, %930 : vector<64x192xf32>
    %c0_341 = arith.constant 0 : index
    %c0_342 = arith.constant 0 : index
    %932 = vector.load %arg13[%c0_341, %c0_342] : memref<64x192xf32, #tpu.memory_space<vmem>>, vector<64x192xf32>
    tpu.vector_store %arg13[%c0_341, %c0_342], %931 {strides = array<i32>} : memref<64x192xf32, #tpu.memory_space<vmem>>, vector<64x192xf32>,
    %c3_343 = arith.constant 3 : index
    %c0_344 = arith.constant 0 : index
    %c0_345 = arith.constant 0 : index
    %933 = vector.load %arg3[%c3_343, %c0_344, %c0_345] : memref<4x64x192xf32, #tpu.memory_space<vmem>>, vector<1x64x192xf32>
    %934 = vector.shape_cast %933 : vector<1x64x192xf32> to vector<64x192xf32>
    %c3_346 = arith.constant 3 : index
    %c0_347 = arith.constant 0 : index
    %c0_348 = arith.constant 0 : index
    %935 = vector.load %arg5[%c3_346, %c0_347, %c0_348] : memref<4x1x192xf32, #tpu.memory_space<vmem>>, vector<1x1x192xf32>
    %936 = vector.shape_cast %935 : vector<1x1x192xf32> to vector<1x192xf32>
    %cst_349 = arith.constant 0.000000e+00 : f32
    %937 = vector.broadcast %cst_349 : f32 to vector<8x64xf32>
    %c0_350 = arith.constant 0 : index
    %c0_351 = arith.constant 0 : index
    %938 = vector.load %arg13[%c0_350, %c0_351] : memref<64x192xf32, #tpu.memory_space<vmem>>, vector<8x192xf32>
    %c56_352 = arith.constant 56 : index
    %c0_353 = arith.constant 0 : index
    %939 = vector.load %arg13[%c56_352, %c0_353] : memref<64x192xf32, #tpu.memory_space<vmem>>, vector<8x192xf32>
    %940 = arith.select %18, %938, %939 : vector<8x192xi1>, vector<8x192xf32>
    %cst_354 = arith.constant dense<0.000000e+00> : vector<8x192xf32>
    %941 = tpu.matmul %937, %934, %cst_354 {dimension_numbers = #tpu.dot_dimension_numbers<[1], [0], [0], [1], [0, 0, 1, 1], [], []>} : vector<8x64xf32>, vector<64x192xf32>, vector<8x192xf32> -> vector<8x192xf32>
    %942 = vector.broadcast %936 : vector<1x192xf32> to vector<8x192xf32>
    %943 = arith.addf %941, %942 : vector<8x192xf32>
    %944 = vector.extract_strided_slice %940 {offsets = [0, 0], sizes = [8, 64], strides = [1, 1]} : vector<8x192xf32> to vector<8x64xf32>
    %945 = vector.extract_strided_slice %943 {offsets = [0, 0], sizes = [8, 64], strides = [1, 1]} : vector<8x192xf32> to vector<8x64xf32>
    %946 = arith.addf %944, %945 : vector<8x64xf32>
    %947 = arith.negf %946 : vector<8x64xf32>
    %948 = math.exp %947 : vector<8x64xf32>
    %cst_355 = arith.constant 1.000000e+00 : f32
    %949 = vector.broadcast %cst_355 : f32 to vector<8x64xf32>
    %950 = arith.addf %949, %948 : vector<8x64xf32>
    %951 = arith.divf %949, %950 : vector<8x64xf32>
    %952 = vector.extract_strided_slice %940 {offsets = [0, 64], sizes = [8, 64], strides = [1, 1]} : vector<8x192xf32> to vector<8x64xf32>
    %953 = vector.extract_strided_slice %943 {offsets = [0, 64], sizes = [8, 64], strides = [1, 1]} : vector<8x192xf32> to vector<8x64xf32>
    %954 = arith.addf %952, %953 : vector<8x64xf32>
    %955 = arith.negf %954 : vector<8x64xf32>
    %956 = math.exp %955 : vector<8x64xf32>
    %cst_356 = arith.constant 1.000000e+00 : f32
    %957 = vector.broadcast %cst_356 : f32 to vector<8x64xf32>
    %958 = arith.addf %957, %956 : vector<8x64xf32>
    %959 = arith.divf %957, %958 : vector<8x64xf32>
    %960 = vector.extract_strided_slice %940 {offsets = [0, 128], sizes = [8, 64], strides = [1, 1]} : vector<8x192xf32> to vector<8x64xf32>
    %961 = vector.extract_strided_slice %943 {offsets = [0, 128], sizes = [8, 64], strides = [1, 1]} : vector<8x192xf32> to vector<8x64xf32>
    %962 = arith.mulf %951, %961 : vector<8x64xf32>
    %963 = arith.addf %960, %962 : vector<8x64xf32>
    %964 = math.tanh %963 : vector<8x64xf32>
    %cst_357 = arith.constant 1.000000e+00 : f32
    %965 = vector.broadcast %cst_357 : f32 to vector<8x64xf32>
    %966 = arith.subf %965, %959 : vector<8x64xf32>
    %967 = arith.mulf %966, %964 : vector<8x64xf32>
    %968 = arith.mulf %959, %937 : vector<8x64xf32>
    %969 = arith.addf %967, %968 : vector<8x64xf32>
    %970 = vector.extract_strided_slice %969 {offsets = [0, 0], sizes = [8, 32], strides = [1, 1]} : vector<8x64xf32> to vector<8x32xf32>
    %c0_358 = arith.constant 0 : index
    %c0_359 = arith.constant 0 : index
    %971 = vector.load %arg14[%c0_358, %c0_359] : memref<64x64xf32, #tpu.memory_space<vmem>>, vector<8x32xf32>
    tpu.vector_store %arg14[%c0_358, %c0_359], %970 {strides = array<i32>} : memref<64x64xf32, #tpu.memory_space<vmem>>, vector<8x32xf32>,
    %972 = vector.extract_strided_slice %969 {offsets = [0, 32], sizes = [8, 32], strides = [1, 1]} : vector<8x64xf32> to vector<8x32xf32>
    %c56_360 = arith.constant 56 : index
    %c32_361 = arith.constant 32 : index
    %973 = vector.load %arg14[%c56_360, %c32_361] : memref<64x64xf32, #tpu.memory_space<vmem>>, vector<8x32xf32>
    tpu.vector_store %arg14[%c56_360, %c32_361], %972 {strides = array<i32>} : memref<64x64xf32, #tpu.memory_space<vmem>>, vector<8x32xf32>,
    %c8_362 = arith.constant 8 : index
    %c0_363 = arith.constant 0 : index
    %974 = vector.load %arg13[%c8_362, %c0_363] : memref<64x192xf32, #tpu.memory_space<vmem>>, vector<8x192xf32>
    %c48_364 = arith.constant 48 : index
    %c0_365 = arith.constant 0 : index
    %975 = vector.load %arg13[%c48_364, %c0_365] : memref<64x192xf32, #tpu.memory_space<vmem>>, vector<8x192xf32>
    %976 = arith.select %18, %974, %975 : vector<8x192xi1>, vector<8x192xf32>
    %cst_366 = arith.constant dense<0.000000e+00> : vector<8x192xf32>
    %977 = tpu.matmul %969, %934, %cst_366 {dimension_numbers = #tpu.dot_dimension_numbers<[1], [0], [0], [1], [0, 0, 1, 1], [], []>} : vector<8x64xf32>, vector<64x192xf32>, vector<8x192xf32> -> vector<8x192xf32>
    %978 = vector.broadcast %936 : vector<1x192xf32> to vector<8x192xf32>
    %979 = arith.addf %977, %978 : vector<8x192xf32>
    %980 = vector.extract_strided_slice %976 {offsets = [0, 0], sizes = [8, 64], strides = [1, 1]} : vector<8x192xf32> to vector<8x64xf32>
    %981 = vector.extract_strided_slice %979 {offsets = [0, 0], sizes = [8, 64], strides = [1, 1]} : vector<8x192xf32> to vector<8x64xf32>
    %982 = arith.addf %980, %981 : vector<8x64xf32>
    %983 = arith.negf %982 : vector<8x64xf32>
    %984 = math.exp %983 : vector<8x64xf32>
    %cst_367 = arith.constant 1.000000e+00 : f32
    %985 = vector.broadcast %cst_367 : f32 to vector<8x64xf32>
    %986 = arith.addf %985, %984 : vector<8x64xf32>
    %987 = arith.divf %985, %986 : vector<8x64xf32>
    %988 = vector.extract_strided_slice %976 {offsets = [0, 64], sizes = [8, 64], strides = [1, 1]} : vector<8x192xf32> to vector<8x64xf32>
    %989 = vector.extract_strided_slice %979 {offsets = [0, 64], sizes = [8, 64], strides = [1, 1]} : vector<8x192xf32> to vector<8x64xf32>
    %990 = arith.addf %988, %989 : vector<8x64xf32>
    %991 = arith.negf %990 : vector<8x64xf32>
    %992 = math.exp %991 : vector<8x64xf32>
    %cst_368 = arith.constant 1.000000e+00 : f32
    %993 = vector.broadcast %cst_368 : f32 to vector<8x64xf32>
    %994 = arith.addf %993, %992 : vector<8x64xf32>
    %995 = arith.divf %993, %994 : vector<8x64xf32>
    %996 = vector.extract_strided_slice %976 {offsets = [0, 128], sizes = [8, 64], strides = [1, 1]} : vector<8x192xf32> to vector<8x64xf32>
    %997 = vector.extract_strided_slice %979 {offsets = [0, 128], sizes = [8, 64], strides = [1, 1]} : vector<8x192xf32> to vector<8x64xf32>
    %998 = arith.mulf %987, %997 : vector<8x64xf32>
    %999 = arith.addf %996, %998 : vector<8x64xf32>
    %1000 = math.tanh %999 : vector<8x64xf32>
    %cst_369 = arith.constant 1.000000e+00 : f32
    %1001 = vector.broadcast %cst_369 : f32 to vector<8x64xf32>
    %1002 = arith.subf %1001, %995 : vector<8x64xf32>
    %1003 = arith.mulf %1002, %1000 : vector<8x64xf32>
    %1004 = arith.mulf %995, %969 : vector<8x64xf32>
    %1005 = arith.addf %1003, %1004 : vector<8x64xf32>
    %1006 = vector.extract_strided_slice %1005 {offsets = [0, 0], sizes = [8, 32], strides = [1, 1]} : vector<8x64xf32> to vector<8x32xf32>
    %c8_370 = arith.constant 8 : index
    %c0_371 = arith.constant 0 : index
    %1007 = vector.load %arg14[%c8_370, %c0_371] : memref<64x64xf32, #tpu.memory_space<vmem>>, vector<8x32xf32>
    tpu.vector_store %arg14[%c8_370, %c0_371], %1006 {strides = array<i32>} : memref<64x64xf32, #tpu.memory_space<vmem>>, vector<8x32xf32>,
    %1008 = vector.extract_strided_slice %1005 {offsets = [0, 32], sizes = [8, 32], strides = [1, 1]} : vector<8x64xf32> to vector<8x32xf32>
    %c48_372 = arith.constant 48 : index
    %c32_373 = arith.constant 32 : index
    %1009 = vector.load %arg14[%c48_372, %c32_373] : memref<64x64xf32, #tpu.memory_space<vmem>>, vector<8x32xf32>
    tpu.vector_store %arg14[%c48_372, %c32_373], %1008 {strides = array<i32>} : memref<64x64xf32, #tpu.memory_space<vmem>>, vector<8x32xf32>,
    %c16_374 = arith.constant 16 : index
    %c0_375 = arith.constant 0 : index
    %1010 = vector.load %arg13[%c16_374, %c0_375] : memref<64x192xf32, #tpu.memory_space<vmem>>, vector<8x192xf32>
    %c40_376 = arith.constant 40 : index
    %c0_377 = arith.constant 0 : index
    %1011 = vector.load %arg13[%c40_376, %c0_377] : memref<64x192xf32, #tpu.memory_space<vmem>>, vector<8x192xf32>
    %1012 = arith.select %18, %1010, %1011 : vector<8x192xi1>, vector<8x192xf32>
    %cst_378 = arith.constant dense<0.000000e+00> : vector<8x192xf32>
    %1013 = tpu.matmul %1005, %934, %cst_378 {dimension_numbers = #tpu.dot_dimension_numbers<[1], [0], [0], [1], [0, 0, 1, 1], [], []>} : vector<8x64xf32>, vector<64x192xf32>, vector<8x192xf32> -> vector<8x192xf32>
    %1014 = vector.broadcast %936 : vector<1x192xf32> to vector<8x192xf32>
    %1015 = arith.addf %1013, %1014 : vector<8x192xf32>
    %1016 = vector.extract_strided_slice %1012 {offsets = [0, 0], sizes = [8, 64], strides = [1, 1]} : vector<8x192xf32> to vector<8x64xf32>
    %1017 = vector.extract_strided_slice %1015 {offsets = [0, 0], sizes = [8, 64], strides = [1, 1]} : vector<8x192xf32> to vector<8x64xf32>
    %1018 = arith.addf %1016, %1017 : vector<8x64xf32>
    %1019 = arith.negf %1018 : vector<8x64xf32>
    %1020 = math.exp %1019 : vector<8x64xf32>
    %cst_379 = arith.constant 1.000000e+00 : f32
    %1021 = vector.broadcast %cst_379 : f32 to vector<8x64xf32>
    %1022 = arith.addf %1021, %1020 : vector<8x64xf32>
    %1023 = arith.divf %1021, %1022 : vector<8x64xf32>
    %1024 = vector.extract_strided_slice %1012 {offsets = [0, 64], sizes = [8, 64], strides = [1, 1]} : vector<8x192xf32> to vector<8x64xf32>
    %1025 = vector.extract_strided_slice %1015 {offsets = [0, 64], sizes = [8, 64], strides = [1, 1]} : vector<8x192xf32> to vector<8x64xf32>
    %1026 = arith.addf %1024, %1025 : vector<8x64xf32>
    %1027 = arith.negf %1026 : vector<8x64xf32>
    %1028 = math.exp %1027 : vector<8x64xf32>
    %cst_380 = arith.constant 1.000000e+00 : f32
    %1029 = vector.broadcast %cst_380 : f32 to vector<8x64xf32>
    %1030 = arith.addf %1029, %1028 : vector<8x64xf32>
    %1031 = arith.divf %1029, %1030 : vector<8x64xf32>
    %1032 = vector.extract_strided_slice %1012 {offsets = [0, 128], sizes = [8, 64], strides = [1, 1]} : vector<8x192xf32> to vector<8x64xf32>
    %1033 = vector.extract_strided_slice %1015 {offsets = [0, 128], sizes = [8, 64], strides = [1, 1]} : vector<8x192xf32> to vector<8x64xf32>
    %1034 = arith.mulf %1023, %1033 : vector<8x64xf32>
    %1035 = arith.addf %1032, %1034 : vector<8x64xf32>
    %1036 = math.tanh %1035 : vector<8x64xf32>
    %cst_381 = arith.constant 1.000000e+00 : f32
    %1037 = vector.broadcast %cst_381 : f32 to vector<8x64xf32>
    %1038 = arith.subf %1037, %1031 : vector<8x64xf32>
    %1039 = arith.mulf %1038, %1036 : vector<8x64xf32>
    %1040 = arith.mulf %1031, %1005 : vector<8x64xf32>
    %1041 = arith.addf %1039, %1040 : vector<8x64xf32>
    %1042 = vector.extract_strided_slice %1041 {offsets = [0, 0], sizes = [8, 32], strides = [1, 1]} : vector<8x64xf32> to vector<8x32xf32>
    %c16_382 = arith.constant 16 : index
    %c0_383 = arith.constant 0 : index
    %1043 = vector.load %arg14[%c16_382, %c0_383] : memref<64x64xf32, #tpu.memory_space<vmem>>, vector<8x32xf32>
    tpu.vector_store %arg14[%c16_382, %c0_383], %1042 {strides = array<i32>} : memref<64x64xf32, #tpu.memory_space<vmem>>, vector<8x32xf32>,
    %1044 = vector.extract_strided_slice %1041 {offsets = [0, 32], sizes = [8, 32], strides = [1, 1]} : vector<8x64xf32> to vector<8x32xf32>
    %c40_384 = arith.constant 40 : index
    %c32_385 = arith.constant 32 : index
    %1045 = vector.load %arg14[%c40_384, %c32_385] : memref<64x64xf32, #tpu.memory_space<vmem>>, vector<8x32xf32>
    tpu.vector_store %arg14[%c40_384, %c32_385], %1044 {strides = array<i32>} : memref<64x64xf32, #tpu.memory_space<vmem>>, vector<8x32xf32>,
    %c24_386 = arith.constant 24 : index
    %c0_387 = arith.constant 0 : index
    %1046 = vector.load %arg13[%c24_386, %c0_387] : memref<64x192xf32, #tpu.memory_space<vmem>>, vector<8x192xf32>
    %c32_388 = arith.constant 32 : index
    %c0_389 = arith.constant 0 : index
    %1047 = vector.load %arg13[%c32_388, %c0_389] : memref<64x192xf32, #tpu.memory_space<vmem>>, vector<8x192xf32>
    %1048 = arith.select %18, %1046, %1047 : vector<8x192xi1>, vector<8x192xf32>
    %cst_390 = arith.constant dense<0.000000e+00> : vector<8x192xf32>
    %1049 = tpu.matmul %1041, %934, %cst_390 {dimension_numbers = #tpu.dot_dimension_numbers<[1], [0], [0], [1], [0, 0, 1, 1], [], []>} : vector<8x64xf32>, vector<64x192xf32>, vector<8x192xf32> -> vector<8x192xf32>
    %1050 = vector.broadcast %936 : vector<1x192xf32> to vector<8x192xf32>
    %1051 = arith.addf %1049, %1050 : vector<8x192xf32>
    %1052 = vector.extract_strided_slice %1048 {offsets = [0, 0], sizes = [8, 64], strides = [1, 1]} : vector<8x192xf32> to vector<8x64xf32>
    %1053 = vector.extract_strided_slice %1051 {offsets = [0, 0], sizes = [8, 64], strides = [1, 1]} : vector<8x192xf32> to vector<8x64xf32>
    %1054 = arith.addf %1052, %1053 : vector<8x64xf32>
    %1055 = arith.negf %1054 : vector<8x64xf32>
    %1056 = math.exp %1055 : vector<8x64xf32>
    %cst_391 = arith.constant 1.000000e+00 : f32
    %1057 = vector.broadcast %cst_391 : f32 to vector<8x64xf32>
    %1058 = arith.addf %1057, %1056 : vector<8x64xf32>
    %1059 = arith.divf %1057, %1058 : vector<8x64xf32>
    %1060 = vector.extract_strided_slice %1048 {offsets = [0, 64], sizes = [8, 64], strides = [1, 1]} : vector<8x192xf32> to vector<8x64xf32>
    %1061 = vector.extract_strided_slice %1051 {offsets = [0, 64], sizes = [8, 64], strides = [1, 1]} : vector<8x192xf32> to vector<8x64xf32>
    %1062 = arith.addf %1060, %1061 : vector<8x64xf32>
    %1063 = arith.negf %1062 : vector<8x64xf32>
    %1064 = math.exp %1063 : vector<8x64xf32>
    %cst_392 = arith.constant 1.000000e+00 : f32
    %1065 = vector.broadcast %cst_392 : f32 to vector<8x64xf32>
    %1066 = arith.addf %1065, %1064 : vector<8x64xf32>
    %1067 = arith.divf %1065, %1066 : vector<8x64xf32>
    %1068 = vector.extract_strided_slice %1048 {offsets = [0, 128], sizes = [8, 64], strides = [1, 1]} : vector<8x192xf32> to vector<8x64xf32>
    %1069 = vector.extract_strided_slice %1051 {offsets = [0, 128], sizes = [8, 64], strides = [1, 1]} : vector<8x192xf32> to vector<8x64xf32>
    %1070 = arith.mulf %1059, %1069 : vector<8x64xf32>
    %1071 = arith.addf %1068, %1070 : vector<8x64xf32>
    %1072 = math.tanh %1071 : vector<8x64xf32>
    %cst_393 = arith.constant 1.000000e+00 : f32
    %1073 = vector.broadcast %cst_393 : f32 to vector<8x64xf32>
    %1074 = arith.subf %1073, %1067 : vector<8x64xf32>
    %1075 = arith.mulf %1074, %1072 : vector<8x64xf32>
    %1076 = arith.mulf %1067, %1041 : vector<8x64xf32>
    %1077 = arith.addf %1075, %1076 : vector<8x64xf32>
    %1078 = vector.extract_strided_slice %1077 {offsets = [0, 0], sizes = [8, 32], strides = [1, 1]} : vector<8x64xf32> to vector<8x32xf32>
    %c24_394 = arith.constant 24 : index
    %c0_395 = arith.constant 0 : index
    %1079 = vector.load %arg14[%c24_394, %c0_395] : memref<64x64xf32, #tpu.memory_space<vmem>>, vector<8x32xf32>
    tpu.vector_store %arg14[%c24_394, %c0_395], %1078 {strides = array<i32>} : memref<64x64xf32, #tpu.memory_space<vmem>>, vector<8x32xf32>,
    %1080 = vector.extract_strided_slice %1077 {offsets = [0, 32], sizes = [8, 32], strides = [1, 1]} : vector<8x64xf32> to vector<8x32xf32>
    %c32_396 = arith.constant 32 : index
    %c32_397 = arith.constant 32 : index
    %1081 = vector.load %arg14[%c32_396, %c32_397] : memref<64x64xf32, #tpu.memory_space<vmem>>, vector<8x32xf32>
    tpu.vector_store %arg14[%c32_396, %c32_397], %1080 {strides = array<i32>} : memref<64x64xf32, #tpu.memory_space<vmem>>, vector<8x32xf32>,
    %c32_398 = arith.constant 32 : index
    %c0_399 = arith.constant 0 : index
    %1082 = vector.load %arg13[%c32_398, %c0_399] : memref<64x192xf32, #tpu.memory_space<vmem>>, vector<8x192xf32>
    %c24_400 = arith.constant 24 : index
    %c0_401 = arith.constant 0 : index
    %1083 = vector.load %arg13[%c24_400, %c0_401] : memref<64x192xf32, #tpu.memory_space<vmem>>, vector<8x192xf32>
    %1084 = arith.select %18, %1082, %1083 : vector<8x192xi1>, vector<8x192xf32>
    %cst_402 = arith.constant dense<0.000000e+00> : vector<8x192xf32>
    %1085 = tpu.matmul %1077, %934, %cst_402 {dimension_numbers = #tpu.dot_dimension_numbers<[1], [0], [0], [1], [0, 0, 1, 1], [], []>} : vector<8x64xf32>, vector<64x192xf32>, vector<8x192xf32> -> vector<8x192xf32>
    %1086 = vector.broadcast %936 : vector<1x192xf32> to vector<8x192xf32>
    %1087 = arith.addf %1085, %1086 : vector<8x192xf32>
    %1088 = vector.extract_strided_slice %1084 {offsets = [0, 0], sizes = [8, 64], strides = [1, 1]} : vector<8x192xf32> to vector<8x64xf32>
    %1089 = vector.extract_strided_slice %1087 {offsets = [0, 0], sizes = [8, 64], strides = [1, 1]} : vector<8x192xf32> to vector<8x64xf32>
    %1090 = arith.addf %1088, %1089 : vector<8x64xf32>
    %1091 = arith.negf %1090 : vector<8x64xf32>
    %1092 = math.exp %1091 : vector<8x64xf32>
    %cst_403 = arith.constant 1.000000e+00 : f32
    %1093 = vector.broadcast %cst_403 : f32 to vector<8x64xf32>
    %1094 = arith.addf %1093, %1092 : vector<8x64xf32>
    %1095 = arith.divf %1093, %1094 : vector<8x64xf32>
    %1096 = vector.extract_strided_slice %1084 {offsets = [0, 64], sizes = [8, 64], strides = [1, 1]} : vector<8x192xf32> to vector<8x64xf32>
    %1097 = vector.extract_strided_slice %1087 {offsets = [0, 64], sizes = [8, 64], strides = [1, 1]} : vector<8x192xf32> to vector<8x64xf32>
    %1098 = arith.addf %1096, %1097 : vector<8x64xf32>
    %1099 = arith.negf %1098 : vector<8x64xf32>
    %1100 = math.exp %1099 : vector<8x64xf32>
    %cst_404 = arith.constant 1.000000e+00 : f32
    %1101 = vector.broadcast %cst_404 : f32 to vector<8x64xf32>
    %1102 = arith.addf %1101, %1100 : vector<8x64xf32>
    %1103 = arith.divf %1101, %1102 : vector<8x64xf32>
    %1104 = vector.extract_strided_slice %1084 {offsets = [0, 128], sizes = [8, 64], strides = [1, 1]} : vector<8x192xf32> to vector<8x64xf32>
    %1105 = vector.extract_strided_slice %1087 {offsets = [0, 128], sizes = [8, 64], strides = [1, 1]} : vector<8x192xf32> to vector<8x64xf32>
    %1106 = arith.mulf %1095, %1105 : vector<8x64xf32>
    %1107 = arith.addf %1104, %1106 : vector<8x64xf32>
    %1108 = math.tanh %1107 : vector<8x64xf32>
    %cst_405 = arith.constant 1.000000e+00 : f32
    %1109 = vector.broadcast %cst_405 : f32 to vector<8x64xf32>
    %1110 = arith.subf %1109, %1103 : vector<8x64xf32>
    %1111 = arith.mulf %1110, %1108 : vector<8x64xf32>
    %1112 = arith.mulf %1103, %1077 : vector<8x64xf32>
    %1113 = arith.addf %1111, %1112 : vector<8x64xf32>
    %1114 = vector.extract_strided_slice %1113 {offsets = [0, 0], sizes = [8, 32], strides = [1, 1]} : vector<8x64xf32> to vector<8x32xf32>
    %c32_406 = arith.constant 32 : index
    %c0_407 = arith.constant 0 : index
    %1115 = vector.load %arg14[%c32_406, %c0_407] : memref<64x64xf32, #tpu.memory_space<vmem>>, vector<8x32xf32>
    tpu.vector_store %arg14[%c32_406, %c0_407], %1114 {strides = array<i32>} : memref<64x64xf32, #tpu.memory_space<vmem>>, vector<8x32xf32>,
    %1116 = vector.extract_strided_slice %1113 {offsets = [0, 32], sizes = [8, 32], strides = [1, 1]} : vector<8x64xf32> to vector<8x32xf32>
    %c24_408 = arith.constant 24 : index
    %c32_409 = arith.constant 32 : index
    %1117 = vector.load %arg14[%c24_408, %c32_409] : memref<64x64xf32, #tpu.memory_space<vmem>>, vector<8x32xf32>
    tpu.vector_store %arg14[%c24_408, %c32_409], %1116 {strides = array<i32>} : memref<64x64xf32, #tpu.memory_space<vmem>>, vector<8x32xf32>,
    %c40_410 = arith.constant 40 : index
    %c0_411 = arith.constant 0 : index
    %1118 = vector.load %arg13[%c40_410, %c0_411] : memref<64x192xf32, #tpu.memory_space<vmem>>, vector<8x192xf32>
    %c16_412 = arith.constant 16 : index
    %c0_413 = arith.constant 0 : index
    %1119 = vector.load %arg13[%c16_412, %c0_413] : memref<64x192xf32, #tpu.memory_space<vmem>>, vector<8x192xf32>
    %1120 = arith.select %18, %1118, %1119 : vector<8x192xi1>, vector<8x192xf32>
    %cst_414 = arith.constant dense<0.000000e+00> : vector<8x192xf32>
    %1121 = tpu.matmul %1113, %934, %cst_414 {dimension_numbers = #tpu.dot_dimension_numbers<[1], [0], [0], [1], [0, 0, 1, 1], [], []>} : vector<8x64xf32>, vector<64x192xf32>, vector<8x192xf32> -> vector<8x192xf32>
    %1122 = vector.broadcast %936 : vector<1x192xf32> to vector<8x192xf32>
    %1123 = arith.addf %1121, %1122 : vector<8x192xf32>
    %1124 = vector.extract_strided_slice %1120 {offsets = [0, 0], sizes = [8, 64], strides = [1, 1]} : vector<8x192xf32> to vector<8x64xf32>
    %1125 = vector.extract_strided_slice %1123 {offsets = [0, 0], sizes = [8, 64], strides = [1, 1]} : vector<8x192xf32> to vector<8x64xf32>
    %1126 = arith.addf %1124, %1125 : vector<8x64xf32>
    %1127 = arith.negf %1126 : vector<8x64xf32>
    %1128 = math.exp %1127 : vector<8x64xf32>
    %cst_415 = arith.constant 1.000000e+00 : f32
    %1129 = vector.broadcast %cst_415 : f32 to vector<8x64xf32>
    %1130 = arith.addf %1129, %1128 : vector<8x64xf32>
    %1131 = arith.divf %1129, %1130 : vector<8x64xf32>
    %1132 = vector.extract_strided_slice %1120 {offsets = [0, 64], sizes = [8, 64], strides = [1, 1]} : vector<8x192xf32> to vector<8x64xf32>
    %1133 = vector.extract_strided_slice %1123 {offsets = [0, 64], sizes = [8, 64], strides = [1, 1]} : vector<8x192xf32> to vector<8x64xf32>
    %1134 = arith.addf %1132, %1133 : vector<8x64xf32>
    %1135 = arith.negf %1134 : vector<8x64xf32>
    %1136 = math.exp %1135 : vector<8x64xf32>
    %cst_416 = arith.constant 1.000000e+00 : f32
    %1137 = vector.broadcast %cst_416 : f32 to vector<8x64xf32>
    %1138 = arith.addf %1137, %1136 : vector<8x64xf32>
    %1139 = arith.divf %1137, %1138 : vector<8x64xf32>
    %1140 = vector.extract_strided_slice %1120 {offsets = [0, 128], sizes = [8, 64], strides = [1, 1]} : vector<8x192xf32> to vector<8x64xf32>
    %1141 = vector.extract_strided_slice %1123 {offsets = [0, 128], sizes = [8, 64], strides = [1, 1]} : vector<8x192xf32> to vector<8x64xf32>
    %1142 = arith.mulf %1131, %1141 : vector<8x64xf32>
    %1143 = arith.addf %1140, %1142 : vector<8x64xf32>
    %1144 = math.tanh %1143 : vector<8x64xf32>
    %cst_417 = arith.constant 1.000000e+00 : f32
    %1145 = vector.broadcast %cst_417 : f32 to vector<8x64xf32>
    %1146 = arith.subf %1145, %1139 : vector<8x64xf32>
    %1147 = arith.mulf %1146, %1144 : vector<8x64xf32>
    %1148 = arith.mulf %1139, %1113 : vector<8x64xf32>
    %1149 = arith.addf %1147, %1148 : vector<8x64xf32>
    %1150 = vector.extract_strided_slice %1149 {offsets = [0, 0], sizes = [8, 32], strides = [1, 1]} : vector<8x64xf32> to vector<8x32xf32>
    %c40_418 = arith.constant 40 : index
    %c0_419 = arith.constant 0 : index
    %1151 = vector.load %arg14[%c40_418, %c0_419] : memref<64x64xf32, #tpu.memory_space<vmem>>, vector<8x32xf32>
    tpu.vector_store %arg14[%c40_418, %c0_419], %1150 {strides = array<i32>} : memref<64x64xf32, #tpu.memory_space<vmem>>, vector<8x32xf32>,
    %1152 = vector.extract_strided_slice %1149 {offsets = [0, 32], sizes = [8, 32], strides = [1, 1]} : vector<8x64xf32> to vector<8x32xf32>
    %c16_420 = arith.constant 16 : index
    %c32_421 = arith.constant 32 : index
    %1153 = vector.load %arg14[%c16_420, %c32_421] : memref<64x64xf32, #tpu.memory_space<vmem>>, vector<8x32xf32>
    tpu.vector_store %arg14[%c16_420, %c32_421], %1152 {strides = array<i32>} : memref<64x64xf32, #tpu.memory_space<vmem>>, vector<8x32xf32>,
    %c48_422 = arith.constant 48 : index
    %c0_423 = arith.constant 0 : index
    %1154 = vector.load %arg13[%c48_422, %c0_423] : memref<64x192xf32, #tpu.memory_space<vmem>>, vector<8x192xf32>
    %c8_424 = arith.constant 8 : index
    %c0_425 = arith.constant 0 : index
    %1155 = vector.load %arg13[%c8_424, %c0_425] : memref<64x192xf32, #tpu.memory_space<vmem>>, vector<8x192xf32>
    %1156 = arith.select %18, %1154, %1155 : vector<8x192xi1>, vector<8x192xf32>
    %cst_426 = arith.constant dense<0.000000e+00> : vector<8x192xf32>
    %1157 = tpu.matmul %1149, %934, %cst_426 {dimension_numbers = #tpu.dot_dimension_numbers<[1], [0], [0], [1], [0, 0, 1, 1], [], []>} : vector<8x64xf32>, vector<64x192xf32>, vector<8x192xf32> -> vector<8x192xf32>
    %1158 = vector.broadcast %936 : vector<1x192xf32> to vector<8x192xf32>
    %1159 = arith.addf %1157, %1158 : vector<8x192xf32>
    %1160 = vector.extract_strided_slice %1156 {offsets = [0, 0], sizes = [8, 64], strides = [1, 1]} : vector<8x192xf32> to vector<8x64xf32>
    %1161 = vector.extract_strided_slice %1159 {offsets = [0, 0], sizes = [8, 64], strides = [1, 1]} : vector<8x192xf32> to vector<8x64xf32>
    %1162 = arith.addf %1160, %1161 : vector<8x64xf32>
    %1163 = arith.negf %1162 : vector<8x64xf32>
    %1164 = math.exp %1163 : vector<8x64xf32>
    %cst_427 = arith.constant 1.000000e+00 : f32
    %1165 = vector.broadcast %cst_427 : f32 to vector<8x64xf32>
    %1166 = arith.addf %1165, %1164 : vector<8x64xf32>
    %1167 = arith.divf %1165, %1166 : vector<8x64xf32>
    %1168 = vector.extract_strided_slice %1156 {offsets = [0, 64], sizes = [8, 64], strides = [1, 1]} : vector<8x192xf32> to vector<8x64xf32>
    %1169 = vector.extract_strided_slice %1159 {offsets = [0, 64], sizes = [8, 64], strides = [1, 1]} : vector<8x192xf32> to vector<8x64xf32>
    %1170 = arith.addf %1168, %1169 : vector<8x64xf32>
    %1171 = arith.negf %1170 : vector<8x64xf32>
    %1172 = math.exp %1171 : vector<8x64xf32>
    %cst_428 = arith.constant 1.000000e+00 : f32
    %1173 = vector.broadcast %cst_428 : f32 to vector<8x64xf32>
    %1174 = arith.addf %1173, %1172 : vector<8x64xf32>
    %1175 = arith.divf %1173, %1174 : vector<8x64xf32>
    %1176 = vector.extract_strided_slice %1156 {offsets = [0, 128], sizes = [8, 64], strides = [1, 1]} : vector<8x192xf32> to vector<8x64xf32>
    %1177 = vector.extract_strided_slice %1159 {offsets = [0, 128], sizes = [8, 64], strides = [1, 1]} : vector<8x192xf32> to vector<8x64xf32>
    %1178 = arith.mulf %1167, %1177 : vector<8x64xf32>
    %1179 = arith.addf %1176, %1178 : vector<8x64xf32>
    %1180 = math.tanh %1179 : vector<8x64xf32>
    %cst_429 = arith.constant 1.000000e+00 : f32
    %1181 = vector.broadcast %cst_429 : f32 to vector<8x64xf32>
    %1182 = arith.subf %1181, %1175 : vector<8x64xf32>
    %1183 = arith.mulf %1182, %1180 : vector<8x64xf32>
    %1184 = arith.mulf %1175, %1149 : vector<8x64xf32>
    %1185 = arith.addf %1183, %1184 : vector<8x64xf32>
    %1186 = vector.extract_strided_slice %1185 {offsets = [0, 0], sizes = [8, 32], strides = [1, 1]} : vector<8x64xf32> to vector<8x32xf32>
    %c48_430 = arith.constant 48 : index
    %c0_431 = arith.constant 0 : index
    %1187 = vector.load %arg14[%c48_430, %c0_431] : memref<64x64xf32, #tpu.memory_space<vmem>>, vector<8x32xf32>
    tpu.vector_store %arg14[%c48_430, %c0_431], %1186 {strides = array<i32>} : memref<64x64xf32, #tpu.memory_space<vmem>>, vector<8x32xf32>,
    %1188 = vector.extract_strided_slice %1185 {offsets = [0, 32], sizes = [8, 32], strides = [1, 1]} : vector<8x64xf32> to vector<8x32xf32>
    %c8_432 = arith.constant 8 : index
    %c32_433 = arith.constant 32 : index
    %1189 = vector.load %arg14[%c8_432, %c32_433] : memref<64x64xf32, #tpu.memory_space<vmem>>, vector<8x32xf32>
    tpu.vector_store %arg14[%c8_432, %c32_433], %1188 {strides = array<i32>} : memref<64x64xf32, #tpu.memory_space<vmem>>, vector<8x32xf32>,
    %c56_434 = arith.constant 56 : index
    %c0_435 = arith.constant 0 : index
    %1190 = vector.load %arg13[%c56_434, %c0_435] : memref<64x192xf32, #tpu.memory_space<vmem>>, vector<8x192xf32>
    %c0_436 = arith.constant 0 : index
    %c0_437 = arith.constant 0 : index
    %1191 = vector.load %arg13[%c0_436, %c0_437] : memref<64x192xf32, #tpu.memory_space<vmem>>, vector<8x192xf32>
    %1192 = arith.select %18, %1190, %1191 : vector<8x192xi1>, vector<8x192xf32>
    %cst_438 = arith.constant dense<0.000000e+00> : vector<8x192xf32>
    %1193 = tpu.matmul %1185, %934, %cst_438 {dimension_numbers = #tpu.dot_dimension_numbers<[1], [0], [0], [1], [0, 0, 1, 1], [], []>} : vector<8x64xf32>, vector<64x192xf32>, vector<8x192xf32> -> vector<8x192xf32>
    %1194 = vector.broadcast %936 : vector<1x192xf32> to vector<8x192xf32>
    %1195 = arith.addf %1193, %1194 : vector<8x192xf32>
    %1196 = vector.extract_strided_slice %1192 {offsets = [0, 0], sizes = [8, 64], strides = [1, 1]} : vector<8x192xf32> to vector<8x64xf32>
    %1197 = vector.extract_strided_slice %1195 {offsets = [0, 0], sizes = [8, 64], strides = [1, 1]} : vector<8x192xf32> to vector<8x64xf32>
    %1198 = arith.addf %1196, %1197 : vector<8x64xf32>
    %1199 = arith.negf %1198 : vector<8x64xf32>
    %1200 = math.exp %1199 : vector<8x64xf32>
    %cst_439 = arith.constant 1.000000e+00 : f32
    %1201 = vector.broadcast %cst_439 : f32 to vector<8x64xf32>
    %1202 = arith.addf %1201, %1200 : vector<8x64xf32>
    %1203 = arith.divf %1201, %1202 : vector<8x64xf32>
    %1204 = vector.extract_strided_slice %1192 {offsets = [0, 64], sizes = [8, 64], strides = [1, 1]} : vector<8x192xf32> to vector<8x64xf32>
    %1205 = vector.extract_strided_slice %1195 {offsets = [0, 64], sizes = [8, 64], strides = [1, 1]} : vector<8x192xf32> to vector<8x64xf32>
    %1206 = arith.addf %1204, %1205 : vector<8x64xf32>
    %1207 = arith.negf %1206 : vector<8x64xf32>
    %1208 = math.exp %1207 : vector<8x64xf32>
    %cst_440 = arith.constant 1.000000e+00 : f32
    %1209 = vector.broadcast %cst_440 : f32 to vector<8x64xf32>
    %1210 = arith.addf %1209, %1208 : vector<8x64xf32>
    %1211 = arith.divf %1209, %1210 : vector<8x64xf32>
    %1212 = vector.extract_strided_slice %1192 {offsets = [0, 128], sizes = [8, 64], strides = [1, 1]} : vector<8x192xf32> to vector<8x64xf32>
    %1213 = vector.extract_strided_slice %1195 {offsets = [0, 128], sizes = [8, 64], strides = [1, 1]} : vector<8x192xf32> to vector<8x64xf32>
    %1214 = arith.mulf %1203, %1213 : vector<8x64xf32>
    %1215 = arith.addf %1212, %1214 : vector<8x64xf32>
    %1216 = math.tanh %1215 : vector<8x64xf32>
    %cst_441 = arith.constant 1.000000e+00 : f32
    %1217 = vector.broadcast %cst_441 : f32 to vector<8x64xf32>
    %1218 = arith.subf %1217, %1211 : vector<8x64xf32>
    %1219 = arith.mulf %1218, %1216 : vector<8x64xf32>
    %1220 = arith.mulf %1211, %1185 : vector<8x64xf32>
    %1221 = arith.addf %1219, %1220 : vector<8x64xf32>
    %1222 = vector.extract_strided_slice %1221 {offsets = [0, 0], sizes = [8, 32], strides = [1, 1]} : vector<8x64xf32> to vector<8x32xf32>
    %c56_442 = arith.constant 56 : index
    %c0_443 = arith.constant 0 : index
    %1223 = vector.load %arg14[%c56_442, %c0_443] : memref<64x64xf32, #tpu.memory_space<vmem>>, vector<8x32xf32>
    tpu.vector_store %arg14[%c56_442, %c0_443], %1222 {strides = array<i32>} : memref<64x64xf32, #tpu.memory_space<vmem>>, vector<8x32xf32>,
    %1224 = vector.extract_strided_slice %1221 {offsets = [0, 32], sizes = [8, 32], strides = [1, 1]} : vector<8x64xf32> to vector<8x32xf32>
    %c0_444 = arith.constant 0 : index
    %c32_445 = arith.constant 32 : index
    %1225 = vector.load %arg14[%c0_444, %c32_445] : memref<64x64xf32, #tpu.memory_space<vmem>>, vector<8x32xf32>
    tpu.vector_store %arg14[%c0_444, %c32_445], %1224 {strides = array<i32>} : memref<64x64xf32, #tpu.memory_space<vmem>>, vector<8x32xf32>,
    %c0_446 = arith.constant 0 : index
    %c0_447 = arith.constant 0 : index
    %1226 = vector.load %arg14[%c0_446, %c0_447] : memref<64x64xf32, #tpu.memory_space<vmem>>, vector<8x64xf32>
    %c8_448 = arith.constant 8 : index
    %c0_449 = arith.constant 0 : index
    %1227 = vector.load %arg14[%c8_448, %c0_449] : memref<64x64xf32, #tpu.memory_space<vmem>>, vector<8x64xf32>
    %c16_450 = arith.constant 16 : index
    %c0_451 = arith.constant 0 : index
    %1228 = vector.load %arg14[%c16_450, %c0_451] : memref<64x64xf32, #tpu.memory_space<vmem>>, vector<8x64xf32>
    %c24_452 = arith.constant 24 : index
    %c0_453 = arith.constant 0 : index
    %1229 = vector.load %arg14[%c24_452, %c0_453] : memref<64x64xf32, #tpu.memory_space<vmem>>, vector<8x64xf32>
    %c32_454 = arith.constant 32 : index
    %c0_455 = arith.constant 0 : index
    %1230 = vector.load %arg14[%c32_454, %c0_455] : memref<64x64xf32, #tpu.memory_space<vmem>>, vector<8x64xf32>
    %c40_456 = arith.constant 40 : index
    %c0_457 = arith.constant 0 : index
    %1231 = vector.load %arg14[%c40_456, %c0_457] : memref<64x64xf32, #tpu.memory_space<vmem>>, vector<8x64xf32>
    %c48_458 = arith.constant 48 : index
    %c0_459 = arith.constant 0 : index
    %1232 = vector.load %arg14[%c48_458, %c0_459] : memref<64x64xf32, #tpu.memory_space<vmem>>, vector<8x64xf32>
    %c56_460 = arith.constant 56 : index
    %c0_461 = arith.constant 0 : index
    %1233 = vector.load %arg14[%c56_460, %c0_461] : memref<64x64xf32, #tpu.memory_space<vmem>>, vector<8x64xf32>
    %c0_462 = arith.constant 0 : index
    %c0_463 = arith.constant 0 : index
    %1234 = vector.load %arg6[%c0_462, %c0_463] : memref<64x8xf32, #tpu.memory_space<vmem>>, vector<64x8xf32>
    %cst_464 = arith.constant dense<0.000000e+00> : vector<8x8xf32>
    %1235 = tpu.matmul %315, %1234, %cst_464 {dimension_numbers = #tpu.dot_dimension_numbers<[1], [0], [0], [1], [0, 0, 1, 1], [], []>} : vector<8x64xf32>, vector<64x8xf32>, vector<8x8xf32> -> vector<8x8xf32>
    %c0_465 = arith.constant 0 : index
    %c0_466 = arith.constant 0 : index
    %1236 = vector.load %arg7[%c0_465, %c0_466] : memref<1x8xf32, #tpu.memory_space<vmem>>, vector<1x8xf32>
    %1237 = vector.broadcast %1236 : vector<1x8xf32> to vector<8x8xf32>
    %1238 = arith.addf %1235, %1237 : vector<8x8xf32>
    %1239 = vector.extract_strided_slice %1238 {offsets = [0, 0], sizes = [8, 1], strides = [1, 1]} : vector<8x8xf32> to vector<8x1xf32>
    %1240 = vector.broadcast %1239 : vector<8x1xf32> to vector<8x64xf32>
    %1241 = arith.mulf %1240, %1226 : vector<8x64xf32>
    %1242 = vector.extract_strided_slice %1238 {offsets = [0, 1], sizes = [8, 1], strides = [1, 1]} : vector<8x8xf32> to vector<8x1xf32>
    %1243 = vector.broadcast %1242 : vector<8x1xf32> to vector<8x64xf32>
    %1244 = arith.mulf %1243, %1227 : vector<8x64xf32>
    %1245 = arith.addf %1241, %1244 : vector<8x64xf32>
    %1246 = vector.extract_strided_slice %1238 {offsets = [0, 2], sizes = [8, 1], strides = [1, 1]} : vector<8x8xf32> to vector<8x1xf32>
    %1247 = vector.broadcast %1246 : vector<8x1xf32> to vector<8x64xf32>
    %1248 = arith.mulf %1247, %1228 : vector<8x64xf32>
    %1249 = arith.addf %1245, %1248 : vector<8x64xf32>
    %1250 = vector.extract_strided_slice %1238 {offsets = [0, 3], sizes = [8, 1], strides = [1, 1]} : vector<8x8xf32> to vector<8x1xf32>
    %1251 = vector.broadcast %1250 : vector<8x1xf32> to vector<8x64xf32>
    %1252 = arith.mulf %1251, %1229 : vector<8x64xf32>
    %1253 = arith.addf %1249, %1252 : vector<8x64xf32>
    %1254 = vector.extract_strided_slice %1238 {offsets = [0, 4], sizes = [8, 1], strides = [1, 1]} : vector<8x8xf32> to vector<8x1xf32>
    %1255 = vector.broadcast %1254 : vector<8x1xf32> to vector<8x64xf32>
    %1256 = arith.mulf %1255, %1230 : vector<8x64xf32>
    %1257 = arith.addf %1253, %1256 : vector<8x64xf32>
    %1258 = vector.extract_strided_slice %1238 {offsets = [0, 5], sizes = [8, 1], strides = [1, 1]} : vector<8x8xf32> to vector<8x1xf32>
    %1259 = vector.broadcast %1258 : vector<8x1xf32> to vector<8x64xf32>
    %1260 = arith.mulf %1259, %1231 : vector<8x64xf32>
    %1261 = arith.addf %1257, %1260 : vector<8x64xf32>
    %1262 = vector.extract_strided_slice %1238 {offsets = [0, 6], sizes = [8, 1], strides = [1, 1]} : vector<8x8xf32> to vector<8x1xf32>
    %1263 = vector.broadcast %1262 : vector<8x1xf32> to vector<8x64xf32>
    %1264 = arith.mulf %1263, %1232 : vector<8x64xf32>
    %1265 = arith.addf %1261, %1264 : vector<8x64xf32>
    %1266 = vector.extract_strided_slice %1238 {offsets = [0, 7], sizes = [8, 1], strides = [1, 1]} : vector<8x8xf32> to vector<8x1xf32>
    %1267 = vector.broadcast %1266 : vector<8x1xf32> to vector<8x64xf32>
    %1268 = arith.mulf %1267, %1233 : vector<8x64xf32>
    %1269 = arith.addf %1265, %1268 : vector<8x64xf32>
    %c0_467 = arith.constant 0 : index
    %c0_468 = arith.constant 0 : index
    %1270 = vector.load %arg6[%c0_467, %c0_468] : memref<64x8xf32, #tpu.memory_space<vmem>>, vector<64x8xf32>
    %cst_469 = arith.constant dense<0.000000e+00> : vector<8x8xf32>
    %1271 = tpu.matmul %1269, %1270, %cst_469 {dimension_numbers = #tpu.dot_dimension_numbers<[1], [0], [0], [1], [0, 0, 1, 1], [], []>} : vector<8x64xf32>, vector<64x8xf32>, vector<8x8xf32> -> vector<8x8xf32>
    %c0_470 = arith.constant 0 : index
    %c0_471 = arith.constant 0 : index
    %1272 = vector.load %arg7[%c0_470, %c0_471] : memref<1x8xf32, #tpu.memory_space<vmem>>, vector<1x8xf32>
    %1273 = vector.broadcast %1272 : vector<1x8xf32> to vector<8x8xf32>
    %1274 = arith.addf %1271, %1273 : vector<8x8xf32>
    %cst_472 = arith.constant dense<0xFF800000> : vector<8xf32>
    %1275 = vector.multi_reduction <maximumf>, %1274, %cst_472 [1] : vector<8x8xf32> to vector<8xf32>
    %1276 = vector.shape_cast %1275 : vector<8xf32> to vector<8x1xf32>
    %1277 = vector.broadcast %1276 : vector<8x1xf32> to vector<8x8xf32>
    %1278 = arith.subf %1274, %1277 : vector<8x8xf32>
    %1279 = math.exp %1278 : vector<8x8xf32>
    %cst_473 = arith.constant dense<0.000000e+00> : vector<8xf32>
    %1280 = vector.multi_reduction <add>, %1279, %cst_473 [1] : vector<8x8xf32> to vector<8xf32>
    %1281 = vector.shape_cast %1280 : vector<8xf32> to vector<8x1xf32>
    %1282 = tpu.reciprocal %1281 {approx = true} : vector<8x1xf32> -> vector<8x1xf32>
    %1283 = vector.broadcast %1282 : vector<8x1xf32> to vector<8x8xf32>
    %1284 = arith.mulf %1279, %1283 : vector<8x8xf32>
    %1285 = vector.extract_strided_slice %1284 {offsets = [0, 0], sizes = [8, 1], strides = [1, 1]} : vector<8x8xf32> to vector<8x1xf32>
    %1286 = vector.broadcast %1285 : vector<8x1xf32> to vector<8x64xf32>
    %1287 = arith.mulf %1286, %1226 : vector<8x64xf32>
    %1288 = vector.extract_strided_slice %1284 {offsets = [0, 1], sizes = [8, 1], strides = [1, 1]} : vector<8x8xf32> to vector<8x1xf32>
    %1289 = vector.broadcast %1288 : vector<8x1xf32> to vector<8x64xf32>
    %1290 = arith.mulf %1289, %1227 : vector<8x64xf32>
    %1291 = arith.addf %1287, %1290 : vector<8x64xf32>
    %1292 = vector.extract_strided_slice %1284 {offsets = [0, 2], sizes = [8, 1], strides = [1, 1]} : vector<8x8xf32> to vector<8x1xf32>
    %1293 = vector.broadcast %1292 : vector<8x1xf32> to vector<8x64xf32>
    %1294 = arith.mulf %1293, %1228 : vector<8x64xf32>
    %1295 = arith.addf %1291, %1294 : vector<8x64xf32>
    %1296 = vector.extract_strided_slice %1284 {offsets = [0, 3], sizes = [8, 1], strides = [1, 1]} : vector<8x8xf32> to vector<8x1xf32>
    %1297 = vector.broadcast %1296 : vector<8x1xf32> to vector<8x64xf32>
    %1298 = arith.mulf %1297, %1229 : vector<8x64xf32>
    %1299 = arith.addf %1295, %1298 : vector<8x64xf32>
    %1300 = vector.extract_strided_slice %1284 {offsets = [0, 4], sizes = [8, 1], strides = [1, 1]} : vector<8x8xf32> to vector<8x1xf32>
    %1301 = vector.broadcast %1300 : vector<8x1xf32> to vector<8x64xf32>
    %1302 = arith.mulf %1301, %1230 : vector<8x64xf32>
    %1303 = arith.addf %1299, %1302 : vector<8x64xf32>
    %1304 = vector.extract_strided_slice %1284 {offsets = [0, 5], sizes = [8, 1], strides = [1, 1]} : vector<8x8xf32> to vector<8x1xf32>
    %1305 = vector.broadcast %1304 : vector<8x1xf32> to vector<8x64xf32>
    %1306 = arith.mulf %1305, %1231 : vector<8x64xf32>
    %1307 = arith.addf %1303, %1306 : vector<8x64xf32>
    %1308 = vector.extract_strided_slice %1284 {offsets = [0, 6], sizes = [8, 1], strides = [1, 1]} : vector<8x8xf32> to vector<8x1xf32>
    %1309 = vector.broadcast %1308 : vector<8x1xf32> to vector<8x64xf32>
    %1310 = arith.mulf %1309, %1232 : vector<8x64xf32>
    %1311 = arith.addf %1307, %1310 : vector<8x64xf32>
    %1312 = vector.extract_strided_slice %1284 {offsets = [0, 7], sizes = [8, 1], strides = [1, 1]} : vector<8x8xf32> to vector<8x1xf32>
    %1313 = vector.broadcast %1312 : vector<8x1xf32> to vector<8x64xf32>
    %1314 = arith.mulf %1313, %1233 : vector<8x64xf32>
    %1315 = arith.addf %1311, %1314 : vector<8x64xf32>
    %c0_474 = arith.constant 0 : index
    %c0_475 = arith.constant 0 : index
    %1316 = vector.load %arg8[%c0_474, %c0_475] : memref<64x32xf32, #tpu.memory_space<vmem>>, vector<64x32xf32>
    %cst_476 = arith.constant dense<0.000000e+00> : vector<8x32xf32>
    %1317 = tpu.matmul %1315, %1316, %cst_476 {dimension_numbers = #tpu.dot_dimension_numbers<[1], [0], [0], [1], [0, 0, 1, 1], [], []>} : vector<8x64xf32>, vector<64x32xf32>, vector<8x32xf32> -> vector<8x32xf32>
    %c0_477 = arith.constant 0 : index
    %c0_478 = arith.constant 0 : index
    %1318 = vector.load %arg9[%c0_477, %c0_478] : memref<1x32xf32, #tpu.memory_space<vmem>>, vector<1x32xf32>
    %1319 = vector.broadcast %1318 : vector<1x32xf32> to vector<8x32xf32>
    %1320 = arith.addf %1317, %1319 : vector<8x32xf32>
    %cst_479 = arith.constant 0.000000e+00 : f32
    %1321 = vector.broadcast %cst_479 : f32 to vector<8x32xf32>
    %1322 = arith.maximumf %1320, %1321 : vector<8x32xf32>
    %c0_480 = arith.constant 0 : index
    %c0_481 = arith.constant 0 : index
    %1323 = vector.load %arg10[%c0_480, %c0_481] : memref<32x4xf32, #tpu.memory_space<vmem>>, vector<32x4xf32>
    %cst_482 = arith.constant dense<0.000000e+00> : vector<8x4xf32>
    %1324 = tpu.matmul %1322, %1323, %cst_482 {dimension_numbers = #tpu.dot_dimension_numbers<[1], [0], [0], [1], [0, 0, 1, 1], [], []>} : vector<8x32xf32>, vector<32x4xf32>, vector<8x4xf32> -> vector<8x4xf32>
    %c0_483 = arith.constant 0 : index
    %c0_484 = arith.constant 0 : index
    %1325 = vector.load %arg11[%c0_483, %c0_484] : memref<1x4xf32, #tpu.memory_space<vmem>>, vector<1x4xf32>
    %1326 = vector.broadcast %1325 : vector<1x4xf32> to vector<8x4xf32>
    %1327 = arith.addf %1324, %1326 : vector<8x4xf32>
    %cst_485 = arith.constant 0.000000e+00 : f32
    %1328 = vector.broadcast %cst_485 : f32 to vector<8x52xf32>
    %1329 = tpu.concatenate %315, %1284, %1327, %1328 in 1 : vector<8x64xf32>, vector<8x8xf32>, vector<8x4xf32>, vector<8x52xf32> -> vector<8x128xf32>
    %c0_486 = arith.constant 0 : index
    %c0_487 = arith.constant 0 : index
    %1330 = vector.load %arg12[%c0_486, %c0_487] : memref<8x128xf32, #tpu.memory_space<vmem>>, vector<8x128xf32>
    tpu.vector_store %arg12[%c0_486, %c0_487], %1329 {strides = array<i32>} : memref<8x128xf32, #tpu.memory_space<vmem>>, vector<8x128xf32>,
    return
  }
}

</mosaic_0001>

<llo_original>
// kernel: tpu_custom_call.1
$region0: #{tpu_custom_call.1}
  #allocation0 [shape = 'u32[]', space=smem, size = 0x4, offset = 0x4, fixed_abs, tag = 'smem constant byte address 0x4 - core index']
  #allocation1 [shape = 'u32[144,128]{1,0:T(1,128)}', space=vmem, size = 0x12000, scoped, tag = 'internal scratch']
  #allocation2 [shape = 'f32[64,192]{1,0:T(8,128)}', space=vmem, size = 0x10000, scoped, tag = 'scratch operand']
  #allocation3 [shape = 'f32[64,64]{1,0:T(8,128)}', space=vmem, size = 0x8000, scoped, tag = 'scratch operand']
  %s0 = inlined_call_operand.vmem [shape: f32[64,16], index: 0, kind: input, shape index: {}]
  %s1 = inlined_call_operand.vmem [shape: f32[16,192], index: 1, kind: input, shape index: {}]
  %s2 = inlined_call_operand.hbm [shape: f32[3,64,192], index: 2, kind: input, shape index: {}]
  %s3 = inlined_call_operand.hbm [shape: f32[4,64,192], index: 3, kind: input, shape index: {}]
  %s4 = inlined_call_operand.vmem [shape: f32[4,1,192], index: 4, kind: input, shape index: {}]
  %s5 = inlined_call_operand.vmem [shape: f32[4,1,192], index: 5, kind: input, shape index: {}]
  %s6 = inlined_call_operand.vmem [shape: f32[64,8], index: 6, kind: input, shape index: {}]
  %s7 = inlined_call_operand.vmem [shape: f32[1,8], index: 7, kind: input, shape index: {}]
  %s8 = inlined_call_operand.vmem [shape: f32[64,32], index: 8, kind: input, shape index: {}]
  %s9 = inlined_call_operand.vmem [shape: f32[1,32], index: 9, kind: input, shape index: {}]
  %s10 = inlined_call_operand.vmem [shape: f32[32,4], index: 10, kind: input, shape index: {}]
  %s11 = inlined_call_operand.vmem [shape: f32[1,4], index: 11, kind: input, shape index: {}]
  %s12 = inlined_call_operand.hbm [shape: f32[8,128], index: 12, kind: output, shape index: {}]
  %s13 = sld [smem:[#allocation0]]
  $region66: #{tpu_custom_call.1} parent=0
    _
  %s15 = ssub.s32 1, %s13
  %s16 = scalar_select 0, %s15, %s13
  $region1: #{tpu_custom_call.1} parent=0
    #allocation4 [shape = 'u8[196608]{0}', space=vmem, size = 0x30000, scoped, tag = 'input window, operand 2, single buffered']
    #allocation5 [shape = 's32[1]{0}', space=sflag, size = 0x4, scoped, tag = 'scoped memory for tpu_custom_call.1']
    #allocation6 [shape = 's32[1]{0}', space=sflag, size = 0x4, scoped, tag = 'scoped memory for tpu_custom_call.1']
    #allocation7 [shape = 'u8[262144]{0}', space=vmem, size = 0x40000, scoped, tag = 'input window, operand 3, single buffered']
    #allocation8 [shape = 's32[1]{0}', space=sflag, size = 0x4, scoped, tag = 'scoped memory for tpu_custom_call.1']
    #allocation9 [shape = 'u8[4096]{0}', space=vmem, size = 0x1000, scoped, tag = 'output window, operand 0, single buffered']
    %17 = vsyncpa [#allocation5], 0
    %18 = vsyncpa [#allocation8], 0
    %19 = vsyncpa [#allocation6], 0
    // Predicated region
    $region2: #{tpu_custom_call.1} parent=1 // pred_check
      _
    $region3: #{tpu_custom_call.1} parent=1 // pred_check_branch
      %21 = sbr.rel (0) target = $region5
    $region4: #{tpu_custom_call.1} parent=1 // pred_region
      _
    $region5: #{tpu_custom_call.1} parent=1 // pred_fallthru
      _
    // Predicated region
    $region6: #{tpu_custom_call.1} parent=1 // pred_check
      _
    $region7: #{tpu_custom_call.1} parent=1 // pred_check_branch
      %23 = sbr.rel (0) target = $region9
    $region8: #{tpu_custom_call.1} parent=1 // pred_region
      _
    $region9: #{tpu_custom_call.1} parent=1 // pred_fallthru
      _
    // Predicated region
    $region10: #{tpu_custom_call.1} parent=1 // pred_check
      _
    $region11: #{tpu_custom_call.1} parent=1 // pred_check_branch
      %25 = sbr.rel (0) target = $region13
    $region12: #{tpu_custom_call.1} parent=1 // pred_region
      %s27 = ssub.s32 6144, 6144
      %28 = vsyncadd [#allocation5], %s27
      %s29 = sshll.u32 [#allocation4], 4
      %s30 = int_to_ptr.vmem [resolvable:$true] %s29
      %35 = dma.hbm_to_vmem [thread:$0]  %s2, 6144, %s30, [#allocation5], 256, 256, 16
    $region13: #{tpu_custom_call.1} parent=1 // pred_fallthru
      _
    // Predicated region
    $region14: #{tpu_custom_call.1} parent=1 // pred_check
      _
    $region15: #{tpu_custom_call.1} parent=1 // pred_check_branch
      %37 = sbr.rel (0) target = $region17
    $region16: #{tpu_custom_call.1} parent=1 // pred_region
      %s39 = ssub.s32 8192, 8192
      %40 = vsyncadd [#allocation8], %s39
      %s41 = sshll.u32 [#allocation7], 4
      %s42 = int_to_ptr.vmem [resolvable:$true] %s41
      %47 = dma.hbm_to_vmem [thread:$0]  %s3, 8192, %s42, [#allocation8], 256, 256, 16
    $region17: #{tpu_custom_call.1} parent=1 // pred_fallthru
      _
    // Predicated region
    $region18: #{tpu_custom_call.1} parent=1 // pred_check
      _
    $region19: #{tpu_custom_call.1} parent=1 // pred_check_branch
      %49 = sbr.rel (0) target = $region21
    $region20: #{tpu_custom_call.1} parent=1 // pred_region
      _
    $region21: #{tpu_custom_call.1} parent=1 // pred_fallthru
      _
    // Predicated region
    $region22: #{tpu_custom_call.1} parent=1 // pred_check
      _
    $region23: #{tpu_custom_call.1} parent=1 // pred_check_branch
      %51 = sbr.rel (0) target = $region25
    $region24: #{tpu_custom_call.1} parent=1 // pred_region
      _
    $region25: #{tpu_custom_call.1} parent=1 // pred_fallthru
      _
    // Predicated region
    $region26: #{tpu_custom_call.1} parent=1 // pred_check
      _
    $region27: #{tpu_custom_call.1} parent=1 // pred_check_branch
      %53 = sbr.rel (0) target = $region29
    $region28: #{tpu_custom_call.1} parent=1 // pred_region
      _
    $region29: #{tpu_custom_call.1} parent=1 // pred_fallthru
      _
    // Predicated region
    $region30: #{tpu_custom_call.1} parent=1 // pred_check
      _
    $region31: #{tpu_custom_call.1} parent=1 // pred_check_branch
      %55 = sbr.rel (0) target = $region33
    $region32: #{tpu_custom_call.1} parent=1 // pred_region
      _
    $region33: #{tpu_custom_call.1} parent=1 // pred_fallthru
      _
    // Predicated region
    $region34: #{tpu_custom_call.1} parent=1 // pred_check
      _
    $region35: #{tpu_custom_call.1} parent=1 // pred_check_branch
      %57 = sbr.rel (0) target = $region37
    $region36: #{tpu_custom_call.1} parent=1 // pred_region
      _
    $region37: #{tpu_custom_call.1} parent=1 // pred_fallthru
      _
    // Predicated region
    $region38: #{tpu_custom_call.1} parent=1 // pred_check
      _
    $region39: #{tpu_custom_call.1} parent=1 // pred_check_branch
      %59 = sbr.rel (0) target = $region41
    $region40: #{tpu_custom_call.1} parent=1 // pred_region
      _
    $region41: #{tpu_custom_call.1} parent=1 // pred_fallthru
      _
    // Predicated region
    $region42: #{tpu_custom_call.1} parent=1 // pred_check
      _
    $region43: #{tpu_custom_call.1} parent=1 // pred_check_branch
      %61 = sbr.rel (0) target = $region45
    $region44: #{tpu_custom_call.1} parent=1 // pred_region
      _
    $region45: #{tpu_custom_call.1} parent=1 // pred_fallthru
      _
    // Predicated region
    $region46: #{tpu_custom_call.1} parent=1 // pred_check
      _
    $region47: #{tpu_custom_call.1} parent=1 // pred_check_branch
      %63 = sbr.rel (0) target = $region49
    $region48: #{tpu_custom_call.1} parent=1 // pred_region
      _
    $region49: #{tpu_custom_call.1} parent=1 // pred_fallthru
      _
    // Predicated region
    $region50: #{tpu_custom_call.1} parent=1 // pred_check
      _
    $region51: #{tpu_custom_call.1} parent=1 // pred_check_branch
      %65 = sbr.rel (0) target = $region53
    $region52: #{tpu_custom_call.1} parent=1 // pred_region
      %66 = dma.done [#allocation5], 6144
    $region53: #{tpu_custom_call.1} parent=1 // pred_fallthru
      _
    // Predicated region
    $region54: #{tpu_custom_call.1} parent=1 // pred_check
      _
    $region55: #{tpu_custom_call.1} parent=1 // pred_check_branch
      %68 = sbr.rel (0) target = $region57
    $region56: #{tpu_custom_call.1} parent=1 // pred_region
      %69 = dma.done [#allocation8], 8192
    $region57: #{tpu_custom_call.1} parent=1 // pred_fallthru
      _
    %v70 = vlaneseq
    %v71 = vand.u32 %v70, 127
    %v72 = vadd.s32 %v71, 128
    %vm73 = vcmp.lt.s32.totalorder %v71, 0
    %v74 = vsub.s32 0, %v71
    %v75 = vsel %vm73, %v74, %v71
    %v76 = vshrl.u32 %v75, 6
    %v77 = vand.u32 %v75, 63
    %v78 = vsub.s32 0, %v77
    %v79 = vsel %vm73, %v78, %v77
    %vm80 = vcmp.lt.s32.totalorder %v72, 0
    %v81 = vsub.s32 0, %v72
    %v82 = vsel %vm80, %v81, %v72
    %v83 = vshrl.u32 %v82, 6
    %v84 = vand.u32 %v82, 63
    %v85 = vsub.s32 0, %v84
    %v86 = vsel %vm80, %v85, %v84
    %vm87 = vcmp.ne.s32.totalorder %v79, 0
    %vm88 = vcmp.ne.s32.totalorder %v86, 0
    %vm89 = vcmp.lt.s32.totalorder %v79, 0
    %vm90 = vcmp.lt.s32.totalorder %v86, 0
    %vm91 = vmand %vm89, %vm87
    %vm92 = vmand %vm90, %vm88
    %v93 = vadd.s32 %v79, 64
    %v94 = vadd.s32 %v86, 64
    %v95 = vsel %vm91, %v93, %v79
    %v96 = vsel %vm92, %v94, %v86
    %vm97 = vcmp.lt.s32.totalorder %v95, 32
    %vm98 = vcmp.lt.s32.totalorder %v96, 32
    %v99 = vld [vmem:[%s0] sm:$0xff]
    %v100 = vld [vmem:[%s0 + $0x8] sm:$0xff]
    %v101 = vld [vmem:[%s0 + $0x10] sm:$0xff]
    %v102 = vld [vmem:[%s0 + $0x18] sm:$0xff]
    %v103 = vld [vmem:[%s0 + $0x20] sm:$0xff]
    %v104 = vld [vmem:[%s0 + $0x28] sm:$0xff]
    %v105 = vld [vmem:[%s0 + $0x30] sm:$0xff]
    %v106 = vld [vmem:[%s0 + $0x38] sm:$0xff]
    %v107 = vld [vmem:[%s1] sm:$0xff]
    %v108 = vld [vmem:[%s1 + $0x8] sm:$0xff]
    %v109 = vld [vmem:[%s1 + $0x10] sm:$0xff]
    %v110 = vld [vmem:[%s1 + $0x18] sm:$0xff]
    %v111 = vld [vmem:[%s4] sm:$0x3]
    %v113 = vlaneseq
    %v114 = vshrl.u32 %v113, 7
    %v115 = vsub.s32 0, %v114
    %v116 = vrot.slane %v111, %v115
    %v117 = vlaneseq
    %v118 = vshrl.u32 %v117, 7
    %v119 = vsub.s32 1, %v118
    %v120 = vrot.slane %v111, %v119
    %vm123 = vcmask 130048
    %v125 = vsel %vm123, %v99, 0
    %v128 = vsel %vm123, %v100, 0
    %v131 = vsel %vm123, %v101, 0
    %v134 = vsel %vm123, %v102, 0
    %v137 = vsel %vm123, %v103, 0
    %v140 = vsel %vm123, %v104, 0
    %v143 = vsel %vm123, %v105, 0
    %v146 = vsel %vm123, %v106, 0
    %148 = vmatprep.subr.mxu0 %v108
    %149 = vmatpush1.msra.mxu0 %v107
    %150 = vmatprep.subr.mxu0 %v110
    %151 = vmatpush1.msra.mxu0 %v109
    %152 = vmatprep.subr.mxu0 0.0
    %153 = vmatpush1.msra.mxu0 0.0
    %154 = vmatprep.subr.mxu0 0.0
    %155 = vmatpush1.msra.mxu0 0.0
    %156 = vmatprep.subr.mxu0 0.0
    %157 = vmatpush1.msra.mxu0 0.0
    %158 = vmatprep.subr.mxu0 0.0
    %159 = vmatpush1.msra.mxu0 0.0
    %160 = vmatprep.subr.mxu0 0.0
    %161 = vmatpush1.msra.mxu0 0.0
    %162 = vmatprep.subr.mxu0 0.0
    %163 = vmatpush1.msra.mxu0 0.0
    %164 = vmatprep.subr.mxu0 0.0
    %165 = vmatpush1.msra.mxu0 0.0
    %166 = vmatprep.subr.mxu0 0.0
    %167 = vmatpush1.msra.mxu0 0.0
    %168 = vmatprep.subr.mxu0 0.0
    %169 = vmatpush1.msra.mxu0 0.0
    %170 = vmatprep.subr.mxu0 0.0
    %171 = vmatpush1.msra.mxu0 0.0
    %172 = vmatprep.subr.mxu0 0.0
    %173 = vmatpush1.msra.mxu0 0.0
    %174 = vmatprep.subr.mxu0 0.0
    %175 = vmatpush1.msra.mxu0 0.0
    %176 = vmatprep.subr.mxu0 0.0
    %177 = vmatpush1.msra.mxu0 0.0
    %178 = vmatprep.subr.mxu0 0.0
    %179 = vmatpush1.msra.mxu0 0.0
    %180 = vmatprep.subr.mxu0 0.0
    %181 = vmatpush1.msra.mxu0 0.0
    %182 = vmatprep.subr.mxu0 0.0
    %183 = vmatpush1.msra.mxu0 0.0
    %184 = vmatprep.subr.mxu0 0.0
    %185 = vmatpush1.msra.mxu0 0.0
    %186 = vmatprep.subr.mxu0 0.0
    %187 = vmatpush1.msra.mxu0 0.0
    %188 = vmatprep.subr.mxu0 0.0
    %189 = vmatpush1.msra.mxu0 0.0
    %190 = vmatprep.subr.mxu0 0.0
    %191 = vmatpush1.msra.mxu0 0.0
    %192 = vmatprep.subr.mxu0 0.0
    %193 = vmatpush1.msra.mxu0 0.0
    %194 = vmatprep.subr.mxu0 0.0
    %195 = vmatpush1.msra.mxu0 0.0
    %196 = vmatprep.subr.mxu0 0.0
    %197 = vmatpush1.msra.mxu0 0.0
    %198 = vmatprep.subr.mxu0 0.0
    %199 = vmatpush1.msra.mxu0 0.0
    %200 = vmatprep.subr.mxu0 0.0
    %201 = vmatpush1.msra.mxu0 0.0
    %202 = vmatprep.subr.mxu0 0.0
    %203 = vmatpush1.msra.mxu0 0.0
    %204 = vmatprep.subr.mxu0 0.0
    %205 = vmatpush1.msra.mxu0 0.0
    %206 = vmatprep.subr.mxu0 0.0
    %207 = vmatpush1.msra.mxu0 0.0
    %208 = vmatprep.subr.mxu0 0.0
    %209 = vmatpush1.msra.mxu0 0.0
    %210 = vmatprep.subr.mxu0 0.0
    %211 = vmatpush1.msra.mxu0 0.0
    %212 = vmatprep.mubr.f32.mxu0 0.0
    %213 = vmatmul.mubr.f32.gmra.mrb[0].mxu0 %v125
    %v214 = vpop.f32.mrb[0].mxu0
    %v215 = vadd.f32 %v116, %v214
    %v216 = vpop.f32.mrb[0].mxu0
    %v217 = vadd.f32 %v120, %v216
    %218 = vmatprep.mubr.f32.mxu0 0.0
    %219 = vmatmul.mubr.f32.gmra.mrb[0].mxu0 %v128
    %v220 = vpop.f32.mrb[0].mxu0
    %v221 = vadd.f32 %v116, %v220
    %v222 = vpop.f32.mrb[0].mxu0
    %v223 = vadd.f32 %v120, %v222
    %224 = vmatprep.mubr.f32.mxu0 0.0
    %225 = vmatmul.mubr.f32.gmra.mrb[0].mxu0 %v131
    %v226 = vpop.f32.mrb[0].mxu0
    %v227 = vadd.f32 %v116, %v226
    %v228 = vpop.f32.mrb[0].mxu0
    %v229 = vadd.f32 %v120, %v228
    %230 = vmatprep.mubr.f32.mxu0 0.0
    %231 = vmatmul.mubr.f32.gmra.mrb[0].mxu0 %v134
    %v232 = vpop.f32.mrb[0].mxu0
    %v233 = vadd.f32 %v116, %v232
    %v234 = vpop.f32.mrb[0].mxu0
    %v235 = vadd.f32 %v120, %v234
    %236 = vmatprep.mubr.f32.mxu0 0.0
    %237 = vmatmul.mubr.f32.gmra.mrb[0].mxu0 %v137
    %v238 = vpop.f32.mrb[0].mxu0
    %v239 = vadd.f32 %v116, %v238
    %v240 = vpop.f32.mrb[0].mxu0
    %v241 = vadd.f32 %v120, %v240
    %242 = vmatprep.mubr.f32.mxu0 0.0
    %243 = vmatmul.mubr.f32.gmra.mrb[0].mxu0 %v140
    %v244 = vpop.f32.mrb[0].mxu0
    %v245 = vadd.f32 %v116, %v244
    %v246 = vpop.f32.mrb[0].mxu0
    %v247 = vadd.f32 %v120, %v246
    %248 = vmatprep.mubr.f32.mxu0 0.0
    %249 = vmatmul.mubr.f32.gmra.mrb[0].mxu0 %v143
    %v250 = vpop.f32.mrb[0].mxu0
    %v251 = vadd.f32 %v116, %v250
    %v252 = vpop.f32.mrb[0].mxu0
    %v253 = vadd.f32 %v120, %v252
    %254 = vmatprep.mubr.f32.mxu0 0.0
    %255 = vmatmul.mubr.f32.gmra.mrb[0].mxu0 %v146
    %v256 = vpop.f32.mrb[0].mxu0
    %v257 = vadd.f32 %v116, %v256
    %v258 = vpop.f32.mrb[0].mxu0
    %v259 = vadd.f32 %v120, %v258
    %260 = vdwg.mxu0
    %261 = vst [vmem:[#allocation2] sm:$0xff] %v215
    %vm262 = vcmask 523264
    %263 = vst.msk [vmem:[#allocation2 + $0x8] sm:$0xff] %vm262, %v217
    %264 = vst [vmem:[#allocation2 + $0x10] sm:$0xff] %v221
    %265 = vst.msk [vmem:[#allocation2 + $0x18] sm:$0xff] %vm262, %v223
    %266 = vst [vmem:[#allocation2 + $0x20] sm:$0xff] %v227
    %267 = vst.msk [vmem:[#allocation2 + $0x28] sm:$0xff] %vm262, %v229
    %268 = vst [vmem:[#allocation2 + $0x30] sm:$0xff] %v233
    %269 = vst.msk [vmem:[#allocation2 + $0x38] sm:$0xff] %vm262, %v235
    %270 = vst [vmem:[#allocation2 + $0x40] sm:$0xff] %v239
    %271 = vst.msk [vmem:[#allocation2 + $0x48] sm:$0xff] %vm262, %v241
    %272 = vst [vmem:[#allocation2 + $0x50] sm:$0xff] %v245
    %273 = vst.msk [vmem:[#allocation2 + $0x58] sm:$0xff] %vm262, %v247
    %274 = vst [vmem:[#allocation2 + $0x60] sm:$0xff] %v251
    %275 = vst.msk [vmem:[#allocation2 + $0x68] sm:$0xff] %vm262, %v253
    %276 = vst [vmem:[#allocation2 + $0x70] sm:$0xff] %v257
    %277 = vst.msk [vmem:[#allocation2 + $0x78] sm:$0xff] %vm262, %v259
    %v278 = vld [vmem:[#allocation7] sm:$0xff]
    %v279 = vld [vmem:[#allocation7 + $0x8] sm:$0xff]
    %v280 = vld [vmem:[#allocation7 + $0x10] sm:$0xff]
    %v281 = vld [vmem:[#allocation7 + $0x18] sm:$0xff]
    %v282 = vld [vmem:[#allocation7 + $0x20] sm:$0xff]
    %v283 = vld [vmem:[#allocation7 + $0x28] sm:$0xff]
    %v284 = vld [vmem:[#allocation7 + $0x30] sm:$0xff]
    %v285 = vld [vmem:[#allocation7 + $0x38] sm:$0xff]
    %v286 = vld [vmem:[#allocation7 + $0x40] sm:$0xff]
    %v287 = vld [vmem:[#allocation7 + $0x48] sm:$0xff]
    %v288 = vld [vmem:[#allocation7 + $0x50] sm:$0xff]
    %v289 = vld [vmem:[#allocation7 + $0x58] sm:$0xff]
    %v290 = vld [vmem:[#allocation7 + $0x60] sm:$0xff]
    %v291 = vld [vmem:[#allocation7 + $0x68] sm:$0xff]
    %v292 = vld [vmem:[#allocation7 + $0x70] sm:$0xff]
    %v293 = vld [vmem:[#allocation7 + $0x78] sm:$0xff]
    %v294 = vld [vmem:[%s5] sm:$0x3]
    %v295 = vld [vmem:[#allocation2] sm:$0xff]
    %v296 = vld [vmem:[#allocation2 + $0x8] sm:$0xff]
    %v297 = vld [vmem:[#allocation2 + $0x70] sm:$0xff]
    %v298 = vld [vmem:[#allocation2 + $0x78] sm:$0xff]
    %v299 = vsel %vm97, %v295, %v297
    %v300 = vsel %vm98, %v296, %v298
    %v302 = vlaneseq
    %v303 = vshrl.u32 %v302, 7
    %v304 = vsub.s32 0, %v303
    %v305 = vrot.slane %v294, %v304
    %v306 = vlaneseq
    %v307 = vshrl.u32 %v306, 7
    %v308 = vsub.s32 1, %v307
    %v309 = vrot.slane %v294, %v308
    %v313 = vsel %vm262, 0.0, 0
    %315 = vmatprep.subr.mxu0 %v279
    %316 = vmatpush1.msra.mxu0 %v278
    %317 = vmatprep.subr.mxu0 %v281
    %318 = vmatpush1.msra.mxu0 %v280
    %319 = vmatprep.subr.mxu0 %v283
    %320 = vmatpush1.msra.mxu0 %v282
    %321 = vmatprep.subr.mxu0 %v285
    %322 = vmatpush1.msra.mxu0 %v284
    %323 = vmatprep.subr.mxu0 %v287
    %324 = vmatpush1.msra.mxu0 %v286
    %325 = vmatprep.subr.mxu0 %v289
    %326 = vmatpush1.msra.mxu0 %v288
    %327 = vmatprep.subr.mxu0 %v291
    %328 = vmatpush1.msra.mxu0 %v290
    %329 = vmatprep.subr.mxu0 %v293
    %330 = vmatpush1.msra.mxu0 %v292
    %331 = vmatprep.subr.mxu0 0.0
    %332 = vmatpush1.msra.mxu0 0.0
    %333 = vmatprep.subr.mxu0 0.0
    %334 = vmatpush1.msra.mxu0 0.0
    %335 = vmatprep.subr.mxu0 0.0
    %336 = vmatpush1.msra.mxu0 0.0
    %337 = vmatprep.subr.mxu0 0.0
    %338 = vmatpush1.msra.mxu0 0.0
    %339 = vmatprep.subr.mxu0 0.0
    %340 = vmatpush1.msra.mxu0 0.0
    %341 = vmatprep.subr.mxu0 0.0
    %342 = vmatpush1.msra.mxu0 0.0
    %343 = vmatprep.subr.mxu0 0.0
    %344 = vmatpush1.msra.mxu0 0.0
    %345 = vmatprep.subr.mxu0 0.0
    %346 = vmatpush1.msra.mxu0 0.0
    %347 = vmatprep.subr.mxu0 0.0
    %348 = vmatpush1.msra.mxu0 0.0
    %349 = vmatprep.subr.mxu0 0.0
    %350 = vmatpush1.msra.mxu0 0.0
    %351 = vmatprep.subr.mxu0 0.0
    %352 = vmatpush1.msra.mxu0 0.0
    %353 = vmatprep.subr.mxu0 0.0
    %354 = vmatpush1.msra.mxu0 0.0
    %355 = vmatprep.subr.mxu0 0.0
    %356 = vmatpush1.msra.mxu0 0.0
    %357 = vmatprep.subr.mxu0 0.0
    %358 = vmatpush1.msra.mxu0 0.0
    %359 = vmatprep.subr.mxu0 0.0
    %360 = vmatpush1.msra.mxu0 0.0
    %361 = vmatprep.subr.mxu0 0.0
    %362 = vmatpush1.msra.mxu0 0.0
    %363 = vmatprep.subr.mxu0 0.0
    %364 = vmatpush1.msra.mxu0 0.0
    %365 = vmatprep.subr.mxu0 0.0
    %366 = vmatpush1.msra.mxu0 0.0
    %367 = vmatprep.subr.mxu0 0.0
    %368 = vmatpush1.msra.mxu0 0.0
    %369 = vmatprep.subr.mxu0 0.0
    %370 = vmatpush1.msra.mxu0 0.0
    %371 = vmatprep.subr.mxu0 0.0
    %372 = vmatpush1.msra.mxu0 0.0
    %373 = vmatprep.subr.mxu0 0.0
    %374 = vmatpush1.msra.mxu0 0.0
    %375 = vmatprep.subr.mxu0 0.0
    %376 = vmatpush1.msra.mxu0 0.0
    %377 = vmatprep.subr.mxu0 0.0
    %378 = vmatpush1.msra.mxu0 0.0
    %379 = vmatprep.mubr.f32.mxu0 0.0
    %380 = vmatmul.mubr.f32.gmra.mrb[0].mxu0 %v313
    %v381 = vpop.f32.mrb[0].mxu0
    %v382 = vadd.f32 %v305, %v381
    %v383 = vpop.f32.mrb[0].mxu0
    %v384 = vadd.f32 %v309, %v383
    %385 = vdwg.mxu0
    %v386 = vadd.f32 %v299, %v382
    %v387 = vxor.u32 %v386, 2147483648
    %v388 = vmul.f32 %v387, 1.442695
    %v389 = vpow.pop %v388
    %v390 = vadd.f32 %v389, 1.0
    %v391 = vrcp.pop %v390
    %v392 = vmul.f32 1.0, %v391
    %v393 = vmul.f32 %v392, %v384
    %v394 = vadd.f32 %v300, %v393
    %v395 = vtanh.pop %v394
    %v396 = vsub.f32 1.0, %v392
    %398 = vrot.lane.b32.xlu0 %v395, 64
    %v399 = vpop.permute.xlu0 %398
    %v401 = vmul.f32 %v396, %v399
    %v402 = vmul.f32 %v392, 0.0
    %v403 = vadd.f32 %v401, %v402
    %405 = vrot.lane.b32.xlu0 %v403, 64
    %v406 = vpop.permute.xlu0 %405
    %vm408 = vcmask 261120
    %409 = vst.msk [vmem:[#allocation3] sm:$0xff] %vm408, %v406
    %vm410 = vcmask 523520
    %411 = vst.msk [vmem:[#allocation3 + $0x38] sm:$0xff] %vm410, %v406
    %v412 = vld [vmem:[#allocation2 + $0x10] sm:$0xff]
    %v413 = vld [vmem:[#allocation2 + $0x18] sm:$0xff]
    %v414 = vld [vmem:[#allocation2 + $0x60] sm:$0xff]
    %v415 = vld [vmem:[#allocation2 + $0x68] sm:$0xff]
    %v416 = vsel %vm97, %v412, %v414
    %v417 = vsel %vm98, %v413, %v415
    %v418 = vsel %vm262, %v406, 0
    %420 = vmatprep.subr.mxu0 %v279
    %421 = vmatpush1.msra.mxu0 %v278
    %422 = vmatprep.subr.mxu0 %v281
    %423 = vmatpush1.msra.mxu0 %v280
    %424 = vmatprep.subr.mxu0 %v283
    %425 = vmatpush1.msra.mxu0 %v282
    %426 = vmatprep.subr.mxu0 %v285
    %427 = vmatpush1.msra.mxu0 %v284
    %428 = vmatprep.subr.mxu0 %v287
    %429 = vmatpush1.msra.mxu0 %v286
    %430 = vmatprep.subr.mxu0 %v289
    %431 = vmatpush1.msra.mxu0 %v288
    %432 = vmatprep.subr.mxu0 %v291
    %433 = vmatpush1.msra.mxu0 %v290
    %434 = vmatprep.subr.mxu0 %v293
    %435 = vmatpush1.msra.mxu0 %v292
    %436 = vmatprep.subr.mxu0 0.0
    %437 = vmatpush1.msra.mxu0 0.0
    %438 = vmatprep.subr.mxu0 0.0
    %439 = vmatpush1.msra.mxu0 0.0
    %440 = vmatprep.subr.mxu0 0.0
    %441 = vmatpush1.msra.mxu0 0.0
    %442 = vmatprep.subr.mxu0 0.0
    %443 = vmatpush1.msra.mxu0 0.0
    %444 = vmatprep.subr.mxu0 0.0
    %445 = vmatpush1.msra.mxu0 0.0
    %446 = vmatprep.subr.mxu0 0.0
    %447 = vmatpush1.msra.mxu0 0.0
    %448 = vmatprep.subr.mxu0 0.0
    %449 = vmatpush1.msra.mxu0 0.0
    %450 = vmatprep.subr.mxu0 0.0
    %451 = vmatpush1.msra.mxu0 0.0
    %452 = vmatprep.subr.mxu0 0.0
    %453 = vmatpush1.msra.mxu0 0.0
    %454 = vmatprep.subr.mxu0 0.0
    %455 = vmatpush1.msra.mxu0 0.0
    %456 = vmatprep.subr.mxu0 0.0
    %457 = vmatpush1.msra.mxu0 0.0
    %458 = vmatprep.subr.mxu0 0.0
    %459 = vmatpush1.msra.mxu0 0.0
    %460 = vmatprep.subr.mxu0 0.0
    %461 = vmatpush1.msra.mxu0 0.0
    %462 = vmatprep.subr.mxu0 0.0
    %463 = vmatpush1.msra.mxu0 0.0
    %464 = vmatprep.subr.mxu0 0.0
    %465 = vmatpush1.msra.mxu0 0.0
    %466 = vmatprep.subr.mxu0 0.0
    %467 = vmatpush1.msra.mxu0 0.0
    %468 = vmatprep.subr.mxu0 0.0
    %469 = vmatpush1.msra.mxu0 0.0
    %470 = vmatprep.subr.mxu0 0.0
    %471 = vmatpush1.msra.mxu0 0.0
    %472 = vmatprep.subr.mxu0 0.0
    %473 = vmatpush1.msra.mxu0 0.0
    %474 = vmatprep.subr.mxu0 0.0
    %475 = vmatpush1.msra.mxu0 0.0
    %476 = vmatprep.subr.mxu0 0.0
    %477 = vmatpush1.msra.mxu0 0.0
    %478 = vmatprep.subr.mxu0 0.0
    %479 = vmatpush1.msra.mxu0 0.0
    %480 = vmatprep.subr.mxu0 0.0
    %481 = vmatpush1.msra.mxu0 0.0
    %482 = vmatprep.subr.mxu0 0.0
    %483 = vmatpush1.msra.mxu0 0.0
    %484 = vmatprep.mubr.f32.mxu0 0.0
    %485 = vmatmul.mubr.f32.gmra.mrb[0].mxu0 %v418
    %v486 = vpop.f32.mrb[0].mxu0
    %v487 = vadd.f32 %v305, %v486
    %v488 = vpop.f32.mrb[0].mxu0
    %v489 = vadd.f32 %v309, %v488
    %490 = vdwg.mxu0
    %v491 = vadd.f32 %v416, %v487
    %v492 = vxor.u32 %v491, 2147483648
    %v493 = vmul.f32 %v492, 1.442695
    %v494 = vpow.pop %v493
    %v495 = vadd.f32 %v494, 1.0
    %v496 = vrcp.pop %v495
    %v497 = vmul.f32 1.0, %v496
    %v498 = vmul.f32 %v497, %v489
    %v499 = vadd.f32 %v417, %v498
    %v500 = vtanh.pop %v499
    %v501 = vsub.f32 1.0, %v497
    %503 = vrot.lane.b32.xlu0 %v500, 64
    %v504 = vpop.permute.xlu0 %503
    %v506 = vmul.f32 %v501, %v504
    %v507 = vmul.f32 %v497, %v403
    %v508 = vadd.f32 %v506, %v507
    %510 = vrot.lane.b32.xlu0 %v508, 64
    %v511 = vpop.permute.xlu0 %510
    %513 = vst.msk [vmem:[#allocation3 + $0x8] sm:$0xff] %vm408, %v511
    %514 = vst.msk [vmem:[#allocation3 + $0x30] sm:$0xff] %vm410, %v511
    %v515 = vld [vmem:[#allocation2 + $0x20] sm:$0xff]
    %v516 = vld [vmem:[#allocation2 + $0x28] sm:$0xff]
    %v517 = vld [vmem:[#allocation2 + $0x50] sm:$0xff]
    %v518 = vld [vmem:[#allocation2 + $0x58] sm:$0xff]
    %v519 = vsel %vm97, %v515, %v517
    %v520 = vsel %vm98, %v516, %v518
    %v521 = vsel %vm262, %v511, 0
    %523 = vmatprep.subr.mxu0 %v279
    %524 = vmatpush1.msra.mxu0 %v278
    %525 = vmatprep.subr.mxu0 %v281
    %526 = vmatpush1.msra.mxu0 %v280
    %527 = vmatprep.subr.mxu0 %v283
    %528 = vmatpush1.msra.mxu0 %v282
    %529 = vmatprep.subr.mxu0 %v285
    %530 = vmatpush1.msra.mxu0 %v284
    %531 = vmatprep.subr.mxu0 %v287
    %532 = vmatpush1.msra.mxu0 %v286
    %533 = vmatprep.subr.mxu0 %v289
    %534 = vmatpush1.msra.mxu0 %v288
    %535 = vmatprep.subr.mxu0 %v291
    %536 = vmatpush1.msra.mxu0 %v290
    %537 = vmatprep.subr.mxu0 %v293
    %538 = vmatpush1.msra.mxu0 %v292
    %539 = vmatprep.subr.mxu0 0.0
    %540 = vmatpush1.msra.mxu0 0.0
    %541 = vmatprep.subr.mxu0 0.0
    %542 = vmatpush1.msra.mxu0 0.0
    %543 = vmatprep.subr.mxu0 0.0
    %544 = vmatpush1.msra.mxu0 0.0
    %545 = vmatprep.subr.mxu0 0.0
    %546 = vmatpush1.msra.mxu0 0.0
    %547 = vmatprep.subr.mxu0 0.0
    %548 = vmatpush1.msra.mxu0 0.0
    %549 = vmatprep.subr.mxu0 0.0
    %550 = vmatpush1.msra.mxu0 0.0
    %551 = vmatprep.subr.mxu0 0.0
    %552 = vmatpush1.msra.mxu0 0.0
    %553 = vmatprep.subr.mxu0 0.0
    %554 = vmatpush1.msra.mxu0 0.0
    %555 = vmatprep.subr.mxu0 0.0
    %556 = vmatpush1.msra.mxu0 0.0
    %557 = vmatprep.subr.mxu0 0.0
    %558 = vmatpush1.msra.mxu0 0.0
    %559 = vmatprep.subr.mxu0 0.0
    %560 = vmatpush1.msra.mxu0 0.0
    %561 = vmatprep.subr.mxu0 0.0
    %562 = vmatpush1.msra.mxu0 0.0
    %563 = vmatprep.subr.mxu0 0.0
    %564 = vmatpush1.msra.mxu0 0.0
    %565 = vmatprep.subr.mxu0 0.0
    %566 = vmatpush1.msra.mxu0 0.0
    %567 = vmatprep.subr.mxu0 0.0
    %568 = vmatpush1.msra.mxu0 0.0
    %569 = vmatprep.subr.mxu0 0.0
    %570 = vmatpush1.msra.mxu0 0.0
    %571 = vmatprep.subr.mxu0 0.0
    %572 = vmatpush1.msra.mxu0 0.0
    %573 = vmatprep.subr.mxu0 0.0
    %574 = vmatpush1.msra.mxu0 0.0
    %575 = vmatprep.subr.mxu0 0.0
    %576 = vmatpush1.msra.mxu0 0.0
    %577 = vmatprep.subr.mxu0 0.0
    %578 = vmatpush1.msra.mxu0 0.0
    %579 = vmatprep.subr.mxu0 0.0
    %580 = vmatpush1.msra.mxu0 0.0
    %581 = vmatprep.subr.mxu0 0.0
    %582 = vmatpush1.msra.mxu0 0.0
    %583 = vmatprep.subr.mxu0 0.0
    %584 = vmatpush1.msra.mxu0 0.0
    %585 = vmatprep.subr.mxu0 0.0
    %586 = vmatpush1.msra.mxu0 0.0
    %587 = vmatprep.mubr.f32.mxu0 0.0
    %588 = vmatmul.mubr.f32.gmra.mrb[0].mxu0 %v521
    %v589 = vpop.f32.mrb[0].mxu0
    %v590 = vadd.f32 %v305, %v589
    %v591 = vpop.f32.mrb[0].mxu0
    %v592 = vadd.f32 %v309, %v591
    %593 = vdwg.mxu0
    %v594 = vadd.f32 %v519, %v590
    %v595 = vxor.u32 %v594, 2147483648
    %v596 = vmul.f32 %v595, 1.442695
    %v597 = vpow.pop %v596
    %v598 = vadd.f32 %v597, 1.0
    %v599 = vrcp.pop %v598
    %v600 = vmul.f32 1.0, %v599
    %v601 = vmul.f32 %v600, %v592
    %v602 = vadd.f32 %v520, %v601
    %v603 = vtanh.pop %v602
    %v604 = vsub.f32 1.0, %v600
    %606 = vrot.lane.b32.xlu0 %v603, 64
    %v607 = vpop.permute.xlu0 %606
    %v609 = vmul.f32 %v604, %v607
    %v610 = vmul.f32 %v600, %v508
    %v611 = vadd.f32 %v609, %v610
    %613 = vrot.lane.b32.xlu0 %v611, 64
    %v614 = vpop.permute.xlu0 %613
    %616 = vst.msk [vmem:[#allocation3 + $0x10] sm:$0xff] %vm408, %v614
    %617 = vst.msk [vmem:[#allocation3 + $0x28] sm:$0xff] %vm410, %v614
    %v618 = vld [vmem:[#allocation2 + $0x30] sm:$0xff]
    %v619 = vld [vmem:[#allocation2 + $0x38] sm:$0xff]
    %v620 = vld [vmem:[#allocation2 + $0x40] sm:$0xff]
    %v621 = vld [vmem:[#allocation2 + $0x48] sm:$0xff]
    %v622 = vsel %vm97, %v618, %v620
    %v623 = vsel %vm98, %v619, %v621
    %v624 = vsel %vm262, %v614, 0
    %626 = vmatprep.subr.mxu0 %v279
    %627 = vmatpush1.msra.mxu0 %v278
    %628 = vmatprep.subr.mxu0 %v281
    %629 = vmatpush1.msra.mxu0 %v280
    %630 = vmatprep.subr.mxu0 %v283
    %631 = vmatpush1.msra.mxu0 %v282
    %632 = vmatprep.subr.mxu0 %v285
    %633 = vmatpush1.msra.mxu0 %v284
    %634 = vmatprep.subr.mxu0 %v287
    %635 = vmatpush1.msra.mxu0 %v286
    %636 = vmatprep.subr.mxu0 %v289
    %637 = vmatpush1.msra.mxu0 %v288
    %638 = vmatprep.subr.mxu0 %v291
    %639 = vmatpush1.msra.mxu0 %v290
    %640 = vmatprep.subr.mxu0 %v293
    %641 = vmatpush1.msra.mxu0 %v292
    %642 = vmatprep.subr.mxu0 0.0
    %643 = vmatpush1.msra.mxu0 0.0
    %644 = vmatprep.subr.mxu0 0.0
    %645 = vmatpush1.msra.mxu0 0.0
    %646 = vmatprep.subr.mxu0 0.0
    %647 = vmatpush1.msra.mxu0 0.0
    %648 = vmatprep.subr.mxu0 0.0
    %649 = vmatpush1.msra.mxu0 0.0
    %650 = vmatprep.subr.mxu0 0.0
    %651 = vmatpush1.msra.mxu0 0.0
    %652 = vmatprep.subr.mxu0 0.0
    %653 = vmatpush1.msra.mxu0 0.0
    %654 = vmatprep.subr.mxu0 0.0
    %655 = vmatpush1.msra.mxu0 0.0
    %656 = vmatprep.subr.mxu0 0.0
    %657 = vmatpush1.msra.mxu0 0.0
    %658 = vmatprep.subr.mxu0 0.0
    %659 = vmatpush1.msra.mxu0 0.0
    %660 = vmatprep.subr.mxu0 0.0
    %661 = vmatpush1.msra.mxu0 0.0
    %662 = vmatprep.subr.mxu0 0.0
    %663 = vmatpush1.msra.mxu0 0.0
    %664 = vmatprep.subr.mxu0 0.0
    %665 = vmatpush1.msra.mxu0 0.0
    %666 = vmatprep.subr.mxu0 0.0
    %667 = vmatpush1.msra.mxu0 0.0
    %668 = vmatprep.subr.mxu0 0.0
    %669 = vmatpush1.msra.mxu0 0.0
    %670 = vmatprep.subr.mxu0 0.0
    %671 = vmatpush1.msra.mxu0 0.0
    %672 = vmatprep.subr.mxu0 0.0
    %673 = vmatpush1.msra.mxu0 0.0
    %674 = vmatprep.subr.mxu0 0.0
    %675 = vmatpush1.msra.mxu0 0.0
    %676 = vmatprep.subr.mxu0 0.0
    %677 = vmatpush1.msra.mxu0 0.0
    %678 = vmatprep.subr.mxu0 0.0
    %679 = vmatpush1.msra.mxu0 0.0
    %680 = vmatprep.subr.mxu0 0.0
    %681 = vmatpush1.msra.mxu0 0.0
    %682 = vmatprep.subr.mxu0 0.0
    %683 = vmatpush1.msra.mxu0 0.0
    %684 = vmatprep.subr.mxu0 0.0
    %685 = vmatpush1.msra.mxu0 0.0
    %686 = vmatprep.subr.mxu0 0.0
    %687 = vmatpush1.msra.mxu0 0.0
    %688 = vmatprep.subr.mxu0 0.0
    %689 = vmatpush1.msra.mxu0 0.0
    %690 = vmatprep.mubr.f32.mxu0 0.0
    %691 = vmatmul.mubr.f32.gmra.mrb[0].mxu0 %v624
    %v692 = vpop.f32.mrb[0].mxu0
    %v693 = vadd.f32 %v305, %v692
    %v694 = vpop.f32.mrb[0].mxu0
    %v695 = vadd.f32 %v309, %v694
    %696 = vdwg.mxu0
    %v697 = vadd.f32 %v622, %v693
    %v698 = vxor.u32 %v697, 2147483648
    %v699 = vmul.f32 %v698, 1.442695
    %v700 = vpow.pop %v699
    %v701 = vadd.f32 %v700, 1.0
    %v702 = vrcp.pop %v701
    %v703 = vmul.f32 1.0, %v702
    %v704 = vmul.f32 %v703, %v695
    %v705 = vadd.f32 %v623, %v704
    %v706 = vtanh.pop %v705
    %v707 = vsub.f32 1.0, %v703
    %709 = vrot.lane.b32.xlu0 %v706, 64
    %v710 = vpop.permute.xlu0 %709
    %v712 = vmul.f32 %v707, %v710
    %v713 = vmul.f32 %v703, %v611
    %v714 = vadd.f32 %v712, %v713
    %716 = vrot.lane.b32.xlu0 %v714, 64
    %v717 = vpop.permute.xlu0 %716
    %719 = vst.msk [vmem:[#allocation3 + $0x18] sm:$0xff] %vm408, %v717
    %720 = vst.msk [vmem:[#allocation3 + $0x20] sm:$0xff] %vm410, %v717
    %v721 = vld [vmem:[#allocation2 + $0x40] sm:$0xff]
    %v722 = vld [vmem:[#allocation2 + $0x48] sm:$0xff]
    %v723 = vld [vmem:[#allocation2 + $0x30] sm:$0xff]
    %v724 = vld [vmem:[#allocation2 + $0x38] sm:$0xff]
    %v725 = vsel %vm97, %v721, %v723
    %v726 = vsel %vm98, %v722, %v724
    %v727 = vsel %vm262, %v717, 0
    %729 = vmatprep.subr.mxu0 %v279
    %730 = vmatpush1.msra.mxu0 %v278
    %731 = vmatprep.subr.mxu0 %v281
    %732 = vmatpush1.msra.mxu0 %v280
    %733 = vmatprep.subr.mxu0 %v283
    %734 = vmatpush1.msra.mxu0 %v282
    %735 = vmatprep.subr.mxu0 %v285
    %736 = vmatpush1.msra.mxu0 %v284
    %737 = vmatprep.subr.mxu0 %v287
    %738 = vmatpush1.msra.mxu0 %v286
    %739 = vmatprep.subr.mxu0 %v289
    %740 = vmatpush1.msra.mxu0 %v288
    %741 = vmatprep.subr.mxu0 %v291
    %742 = vmatpush1.msra.mxu0 %v290
    %743 = vmatprep.subr.mxu0 %v293
    %744 = vmatpush1.msra.mxu0 %v292
    %745 = vmatprep.subr.mxu0 0.0
    %746 = vmatpush1.msra.mxu0 0.0
    %747 = vmatprep.subr.mxu0 0.0
    %748 = vmatpush1.msra.mxu0 0.0
    %749 = vmatprep.subr.mxu0 0.0
    %750 = vmatpush1.msra.mxu0 0.0
    %751 = vmatprep.subr.mxu0 0.0
    %752 = vmatpush1.msra.mxu0 0.0
    %753 = vmatprep.subr.mxu0 0.0
    %754 = vmatpush1.msra.mxu0 0.0
    %755 = vmatprep.subr.mxu0 0.0
    %756 = vmatpush1.msra.mxu0 0.0
    %757 = vmatprep.subr.mxu0 0.0
    %758 = vmatpush1.msra.mxu0 0.0
    %759 = vmatprep.subr.mxu0 0.0
    %760 = vmatpush1.msra.mxu0 0.0
    %761 = vmatprep.subr.mxu0 0.0
    %762 = vmatpush1.msra.mxu0 0.0
    %763 = vmatprep.subr.mxu0 0.0
    %764 = vmatpush1.msra.mxu0 0.0
    %765 = vmatprep.subr.mxu0 0.0
    %766 = vmatpush1.msra.mxu0 0.0
    %767 = vmatprep.subr.mxu0 0.0
    %768 = vmatpush1.msra.mxu0 0.0
    %769 = vmatprep.subr.mxu0 0.0
    %770 = vmatpush1.msra.mxu0 0.0
    %771 = vmatprep.subr.mxu0 0.0
    %772 = vmatpush1.msra.mxu0 0.0
    %773 = vmatprep.subr.mxu0 0.0
    %774 = vmatpush1.msra.mxu0 0.0
    %775 = vmatprep.subr.mxu0 0.0
    %776 = vmatpush1.msra.mxu0 0.0
    %777 = vmatprep.subr.mxu0 0.0
    %778 = vmatpush1.msra.mxu0 0.0
    %779 = vmatprep.subr.mxu0 0.0
    %780 = vmatpush1.msra.mxu0 0.0
    %781 = vmatprep.subr.mxu0 0.0
    %782 = vmatpush1.msra.mxu0 0.0
    %783 = vmatprep.subr.mxu0 0.0
    %784 = vmatpush1.msra.mxu0 0.0
    %785 = vmatprep.subr.mxu0 0.0
    %786 = vmatpush1.msra.mxu0 0.0
    %787 = vmatprep.subr.mxu0 0.0
    %788 = vmatpush1.msra.mxu0 0.0
    %789 = vmatprep.subr.mxu0 0.0
    %790 = vmatpush1.msra.mxu0 0.0
    %791 = vmatprep.subr.mxu0 0.0
    %792 = vmatpush1.msra.mxu0 0.0
    %793 = vmatprep.mubr.f32.mxu0 0.0
    %794 = vmatmul.mubr.f32.gmra.mrb[0].mxu0 %v727
    %v795 = vpop.f32.mrb[0].mxu0
    %v796 = vadd.f32 %v305, %v795
    %v797 = vpop.f32.mrb[0].mxu0
    %v798 = vadd.f32 %v309, %v797
    %799 = vdwg.mxu0
    %v800 = vadd.f32 %v725, %v796
    %v801 = vxor.u32 %v800, 2147483648
    %v802 = vmul.f32 %v801, 1.442695
    %v803 = vpow.pop %v802
    %v804 = vadd.f32 %v803, 1.0
    %v805 = vrcp.pop %v804
    %v806 = vmul.f32 1.0, %v805
    %v807 = vmul.f32 %v806, %v798
    %v808 = vadd.f32 %v726, %v807
    %v809 = vtanh.pop %v808
    %v810 = vsub.f32 1.0, %v806
    %812 = vrot.lane.b32.xlu0 %v809, 64
    %v813 = vpop.permute.xlu0 %812
    %v815 = vmul.f32 %v810, %v813
    %v816 = vmul.f32 %v806, %v714
    %v817 = vadd.f32 %v815, %v816
    %819 = vrot.lane.b32.xlu0 %v817, 64
    %v820 = vpop.permute.xlu0 %819
    %822 = vst.msk [vmem:[#allocation3 + $0x20] sm:$0xff] %vm408, %v820
    %823 = vst.msk [vmem:[#allocation3 + $0x18] sm:$0xff] %vm410, %v820
    %v824 = vld [vmem:[#allocation2 + $0x50] sm:$0xff]
    %v825 = vld [vmem:[#allocation2 + $0x58] sm:$0xff]
    %v826 = vld [vmem:[#allocation2 + $0x20] sm:$0xff]
    %v827 = vld [vmem:[#allocation2 + $0x28] sm:$0xff]
    %v828 = vsel %vm97, %v824, %v826
    %v829 = vsel %vm98, %v825, %v827
    %v830 = vsel %vm262, %v820, 0
    %832 = vmatprep.subr.mxu0 %v279
    %833 = vmatpush1.msra.mxu0 %v278
    %834 = vmatprep.subr.mxu0 %v281
    %835 = vmatpush1.msra.mxu0 %v280
    %836 = vmatprep.subr.mxu0 %v283
    %837 = vmatpush1.msra.mxu0 %v282
    %838 = vmatprep.subr.mxu0 %v285
    %839 = vmatpush1.msra.mxu0 %v284
    %840 = vmatprep.subr.mxu0 %v287
    %841 = vmatpush1.msra.mxu0 %v286
    %842 = vmatprep.subr.mxu0 %v289
    %843 = vmatpush1.msra.mxu0 %v288
    %844 = vmatprep.subr.mxu0 %v291
    %845 = vmatpush1.msra.mxu0 %v290
    %846 = vmatprep.subr.mxu0 %v293
    %847 = vmatpush1.msra.mxu0 %v292
    %848 = vmatprep.subr.mxu0 0.0
    %849 = vmatpush1.msra.mxu0 0.0
    %850 = vmatprep.subr.mxu0 0.0
    %851 = vmatpush1.msra.mxu0 0.0
    %852 = vmatprep.subr.mxu0 0.0
    %853 = vmatpush1.msra.mxu0 0.0
    %854 = vmatprep.subr.mxu0 0.0
    %855 = vmatpush1.msra.mxu0 0.0
    %856 = vmatprep.subr.mxu0 0.0
    %857 = vmatpush1.msra.mxu0 0.0
    %858 = vmatprep.subr.mxu0 0.0
    %859 = vmatpush1.msra.mxu0 0.0
    %860 = vmatprep.subr.mxu0 0.0
    %861 = vmatpush1.msra.mxu0 0.0
    %862 = vmatprep.subr.mxu0 0.0
    %863 = vmatpush1.msra.mxu0 0.0
    %864 = vmatprep.subr.mxu0 0.0
    %865 = vmatpush1.msra.mxu0 0.0
    %866 = vmatprep.subr.mxu0 0.0
    %867 = vmatpush1.msra.mxu0 0.0
    %868 = vmatprep.subr.mxu0 0.0
    %869 = vmatpush1.msra.mxu0 0.0
    %870 = vmatprep.subr.mxu0 0.0
    %871 = vmatpush1.msra.mxu0 0.0
    %872 = vmatprep.subr.mxu0 0.0
    %873 = vmatpush1.msra.mxu0 0.0
    %874 = vmatprep.subr.mxu0 0.0
    %875 = vmatpush1.msra.mxu0 0.0
    %876 = vmatprep.subr.mxu0 0.0
    %877 = vmatpush1.msra.mxu0 0.0
    %878 = vmatprep.subr.mxu0 0.0
    %879 = vmatpush1.msra.mxu0 0.0
    %880 = vmatprep.subr.mxu0 0.0
    %881 = vmatpush1.msra.mxu0 0.0
    %882 = vmatprep.subr.mxu0 0.0
    %883 = vmatpush1.msra.mxu0 0.0
    %884 = vmatprep.subr.mxu0 0.0
    %885 = vmatpush1.msra.mxu0 0.0
    %886 = vmatprep.subr.mxu0 0.0
    %887 = vmatpush1.msra.mxu0 0.0
    %888 = vmatprep.subr.mxu0 0.0
    %889 = vmatpush1.msra.mxu0 0.0
    %890 = vmatprep.subr.mxu0 0.0
    %891 = vmatpush1.msra.mxu0 0.0
    %892 = vmatprep.subr.mxu0 0.0
    %893 = vmatpush1.msra.mxu0 0.0
    %894 = vmatprep.subr.mxu0 0.0
    %895 = vmatpush1.msra.mxu0 0.0
    %896 = vmatprep.mubr.f32.mxu0 0.0
    %897 = vmatmul.mubr.f32.gmra.mrb[0].mxu0 %v830
    %v898 = vpop.f32.mrb[0].mxu0
    %v899 = vadd.f32 %v305, %v898
    %v900 = vpop.f32.mrb[0].mxu0
    %v901 = vadd.f32 %v309, %v900
    %902 = vdwg.mxu0
    %v903 = vadd.f32 %v828, %v899
    %v904 = vxor.u32 %v903, 2147483648
    %v905 = vmul.f32 %v904, 1.442695
    %v906 = vpow.pop %v905
    %v907 = vadd.f32 %v906, 1.0
    %v908 = vrcp.pop %v907
    %v909 = vmul.f32 1.0, %v908
    %v910 = vmul.f32 %v909, %v901
    %v911 = vadd.f32 %v829, %v910
    %v912 = vtanh.pop %v911
    %v913 = vsub.f32 1.0, %v909
    %915 = vrot.lane.b32.xlu0 %v912, 64
    %v916 = vpop.permute.xlu0 %915
    %v918 = vmul.f32 %v913, %v916
    %v919 = vmul.f32 %v909, %v817
    %v920 = vadd.f32 %v918, %v919
    %922 = vrot.lane.b32.xlu0 %v920, 64
    %v923 = vpop.permute.xlu0 %922
    %925 = vst.msk [vmem:[#allocation3 + $0x28] sm:$0xff] %vm408, %v923
    %926 = vst.msk [vmem:[#allocation3 + $0x10] sm:$0xff] %vm410, %v923
    %v927 = vld [vmem:[#allocation2 + $0x60] sm:$0xff]
    %v928 = vld [vmem:[#allocation2 + $0x68] sm:$0xff]
    %v929 = vld [vmem:[#allocation2 + $0x10] sm:$0xff]
    %v930 = vld [vmem:[#allocation2 + $0x18] sm:$0xff]
    %v931 = vsel %vm97, %v927, %v929
    %v932 = vsel %vm98, %v928, %v930
    %v933 = vsel %vm262, %v923, 0
    %935 = vmatprep.subr.mxu0 %v279
    %936 = vmatpush1.msra.mxu0 %v278
    %937 = vmatprep.subr.mxu0 %v281
    %938 = vmatpush1.msra.mxu0 %v280
    %939 = vmatprep.subr.mxu0 %v283
    %940 = vmatpush1.msra.mxu0 %v282
    %941 = vmatprep.subr.mxu0 %v285
    %942 = vmatpush1.msra.mxu0 %v284
    %943 = vmatprep.subr.mxu0 %v287
    %944 = vmatpush1.msra.mxu0 %v286
    %945 = vmatprep.subr.mxu0 %v289
    %946 = vmatpush1.msra.mxu0 %v288
    %947 = vmatprep.subr.mxu0 %v291
    %948 = vmatpush1.msra.mxu0 %v290
    %949 = vmatprep.subr.mxu0 %v293
    %950 = vmatpush1.msra.mxu0 %v292
    %951 = vmatprep.subr.mxu0 0.0
    %952 = vmatpush1.msra.mxu0 0.0
    %953 = vmatprep.subr.mxu0 0.0
    %954 = vmatpush1.msra.mxu0 0.0
    %955 = vmatprep.subr.mxu0 0.0
    %956 = vmatpush1.msra.mxu0 0.0
    %957 = vmatprep.subr.mxu0 0.0
    %958 = vmatpush1.msra.mxu0 0.0
    %959 = vmatprep.subr.mxu0 0.0
    %960 = vmatpush1.msra.mxu0 0.0
    %961 = vmatprep.subr.mxu0 0.0
    %962 = vmatpush1.msra.mxu0 0.0
    %963 = vmatprep.subr.mxu0 0.0
    %964 = vmatpush1.msra.mxu0 0.0
    %965 = vmatprep.subr.mxu0 0.0
    %966 = vmatpush1.msra.mxu0 0.0
    %967 = vmatprep.subr.mxu0 0.0
    %968 = vmatpush1.msra.mxu0 0.0
    %969 = vmatprep.subr.mxu0 0.0
    %970 = vmatpush1.msra.mxu0 0.0
    %971 = vmatprep.subr.mxu0 0.0
    %972 = vmatpush1.msra.mxu0 0.0
    %973 = vmatprep.subr.mxu0 0.0
    %974 = vmatpush1.msra.mxu0 0.0
    %975 = vmatprep.subr.mxu0 0.0
    %976 = vmatpush1.msra.mxu0 0.0
    %977 = vmatprep.subr.mxu0 0.0
    %978 = vmatpush1.msra.mxu0 0.0
    %979 = vmatprep.subr.mxu0 0.0
    %980 = vmatpush1.msra.mxu0 0.0
    %981 = vmatprep.subr.mxu0 0.0
    %982 = vmatpush1.msra.mxu0 0.0
    %983 = vmatprep.subr.mxu0 0.0
    %984 = vmatpush1.msra.mxu0 0.0
    %985 = vmatprep.subr.mxu0 0.0
    %986 = vmatpush1.msra.mxu0 0.0
    %987 = vmatprep.subr.mxu0 0.0
    %988 = vmatpush1.msra.mxu0 0.0
    %989 = vmatprep.subr.mxu0 0.0
    %990 = vmatpush1.msra.mxu0 0.0
    %991 = vmatprep.subr.mxu0 0.0
    %992 = vmatpush1.msra.mxu0 0.0
    %993 = vmatprep.subr.mxu0 0.0
    %994 = vmatpush1.msra.mxu0 0.0
    %995 = vmatprep.subr.mxu0 0.0
    %996 = vmatpush1.msra.mxu0 0.0
    %997 = vmatprep.subr.mxu0 0.0
    %998 = vmatpush1.msra.mxu0 0.0
    %999 = vmatprep.mubr.f32.mxu0 0.0
    %1000 = vmatmul.mubr.f32.gmra.mrb[0].mxu0 %v933
    %v1001 = vpop.f32.mrb[0].mxu0
    %v1002 = vadd.f32 %v305, %v1001
    %v1003 = vpop.f32.mrb[0].mxu0
    %v1004 = vadd.f32 %v309, %v1003
    %1005 = vdwg.mxu0
    %v1006 = vadd.f32 %v931, %v1002
    %v1007 = vxor.u32 %v1006, 2147483648
    %v1008 = vmul.f32 %v1007, 1.442695
    %v1009 = vpow.pop %v1008
    %v1010 = vadd.f32 %v1009, 1.0
    %v1011 = vrcp.pop %v1010
    %v1012 = vmul.f32 1.0, %v1011
    %v1013 = vmul.f32 %v1012, %v1004
    %v1014 = vadd.f32 %v932, %v1013
    %v1015 = vtanh.pop %v1014
    %v1016 = vsub.f32 1.0, %v1012
    %1018 = vrot.lane.b32.xlu0 %v1015, 64
    %v1019 = vpop.permute.xlu0 %1018
    %v1021 = vmul.f32 %v1016, %v1019
    %v1022 = vmul.f32 %v1012, %v920
    %v1023 = vadd.f32 %v1021, %v1022
    %1025 = vrot.lane.b32.xlu0 %v1023, 64
    %v1026 = vpop.permute.xlu0 %1025
    %1028 = vst.msk [vmem:[#allocation3 + $0x30] sm:$0xff] %vm408, %v1026
    %1029 = vst.msk [vmem:[#allocation3 + $0x8] sm:$0xff] %vm410, %v1026
    %v1030 = vld [vmem:[#allocation2 + $0x70] sm:$0xff]
    %v1031 = vld [vmem:[#allocation2 + $0x78] sm:$0xff]
    %v1032 = vld [vmem:[#allocation2] sm:$0xff]
    %v1033 = vld [vmem:[#allocation2 + $0x8] sm:$0xff]
    %v1034 = vsel %vm97, %v1030, %v1032
    %v1035 = vsel %vm98, %v1031, %v1033
    %v1036 = vsel %vm262, %v1026, 0
    %1038 = vmatprep.subr.mxu0 %v279
    %1039 = vmatpush1.msra.mxu0 %v278
    %1040 = vmatprep.subr.mxu0 %v281
    %1041 = vmatpush1.msra.mxu0 %v280
    %1042 = vmatprep.subr.mxu0 %v283
    %1043 = vmatpush1.msra.mxu0 %v282
    %1044 = vmatprep.subr.mxu0 %v285
    %1045 = vmatpush1.msra.mxu0 %v284
    %1046 = vmatprep.subr.mxu0 %v287
    %1047 = vmatpush1.msra.mxu0 %v286
    %1048 = vmatprep.subr.mxu0 %v289
    %1049 = vmatpush1.msra.mxu0 %v288
    %1050 = vmatprep.subr.mxu0 %v291
    %1051 = vmatpush1.msra.mxu0 %v290
    %1052 = vmatprep.subr.mxu0 %v293
    %1053 = vmatpush1.msra.mxu0 %v292
    %1054 = vmatprep.subr.mxu0 0.0
    %1055 = vmatpush1.msra.mxu0 0.0
    %1056 = vmatprep.subr.mxu0 0.0
    %1057 = vmatpush1.msra.mxu0 0.0
    %1058 = vmatprep.subr.mxu0 0.0
    %1059 = vmatpush1.msra.mxu0 0.0
    %1060 = vmatprep.subr.mxu0 0.0
    %1061 = vmatpush1.msra.mxu0 0.0
    %1062 = vmatprep.subr.mxu0 0.0
    %1063 = vmatpush1.msra.mxu0 0.0
    %1064 = vmatprep.subr.mxu0 0.0
    %1065 = vmatpush1.msra.mxu0 0.0
    %1066 = vmatprep.subr.mxu0 0.0
    %1067 = vmatpush1.msra.mxu0 0.0
    %1068 = vmatprep.subr.mxu0 0.0
    %1069 = vmatpush1.msra.mxu0 0.0
    %1070 = vmatprep.subr.mxu0 0.0
    %1071 = vmatpush1.msra.mxu0 0.0
    %1072 = vmatprep.subr.mxu0 0.0
    %1073 = vmatpush1.msra.mxu0 0.0
    %1074 = vmatprep.subr.mxu0 0.0
    %1075 = vmatpush1.msra.mxu0 0.0
    %1076 = vmatprep.subr.mxu0 0.0
    %1077 = vmatpush1.msra.mxu0 0.0
    %1078 = vmatprep.subr.mxu0 0.0
    %1079 = vmatpush1.msra.mxu0 0.0
    %1080 = vmatprep.subr.mxu0 0.0
    %1081 = vmatpush1.msra.mxu0 0.0
    %1082 = vmatprep.subr.mxu0 0.0
    %1083 = vmatpush1.msra.mxu0 0.0
    %1084 = vmatprep.subr.mxu0 0.0
    %1085 = vmatpush1.msra.mxu0 0.0
    %1086 = vmatprep.subr.mxu0 0.0
    %1087 = vmatpush1.msra.mxu0 0.0
    %1088 = vmatprep.subr.mxu0 0.0
    %1089 = vmatpush1.msra.mxu0 0.0
    %1090 = vmatprep.subr.mxu0 0.0
    %1091 = vmatpush1.msra.mxu0 0.0
    %1092 = vmatprep.subr.mxu0 0.0
    %1093 = vmatpush1.msra.mxu0 0.0
    %1094 = vmatprep.subr.mxu0 0.0
    %1095 = vmatpush1.msra.mxu0 0.0
    %1096 = vmatprep.subr.mxu0 0.0
    %1097 = vmatpush1.msra.mxu0 0.0
    %1098 = vmatprep.subr.mxu0 0.0
    %1099 = vmatpush1.msra.mxu0 0.0
    %1100 = vmatprep.subr.mxu0 0.0
    %1101 = vmatpush1.msra.mxu0 0.0
    %1102 = vmatprep.mubr.f32.mxu0 0.0
    %1103 = vmatmul.mubr.f32.gmra.mrb[0].mxu0 %v1036
    %v1104 = vpop.f32.mrb[0].mxu0
    %v1105 = vadd.f32 %v305, %v1104
    %v1106 = vpop.f32.mrb[0].mxu0
    %v1107 = vadd.f32 %v309, %v1106
    %1108 = vdwg.mxu0
    %v1109 = vadd.f32 %v1034, %v1105
    %v1110 = vxor.u32 %v1109, 2147483648
    %v1111 = vmul.f32 %v1110, 1.442695
    %v1112 = vpow.pop %v1111
    %v1113 = vadd.f32 %v1112, 1.0
    %v1114 = vrcp.pop %v1113
    %v1115 = vmul.f32 1.0, %v1114
    %v1116 = vmul.f32 %v1115, %v1107
    %v1117 = vadd.f32 %v1035, %v1116
    %v1118 = vtanh.pop %v1117
    %v1119 = vsub.f32 1.0, %v1115
    %1121 = vrot.lane.b32.xlu0 %v1118, 64
    %v1122 = vpop.permute.xlu0 %1121
    %v1124 = vmul.f32 %v1119, %v1122
    %v1125 = vmul.f32 %v1115, %v1023
    %v1126 = vadd.f32 %v1124, %v1125
    %1128 = vrot.lane.b32.xlu0 %v1126, 64
    %v1129 = vpop.permute.xlu0 %1128
    %1131 = vst.msk [vmem:[#allocation3 + $0x38] sm:$0xff] %vm408, %v1129
    %1132 = vst.msk [vmem:[#allocation3] sm:$0xff] %vm410, %v1129
    %v1133 = vld [vmem:[#allocation3] sm:$0xff]
    %v1134 = vld [vmem:[#allocation3 + $0x8] sm:$0xff]
    %v1135 = vld [vmem:[#allocation3 + $0x10] sm:$0xff]
    %v1136 = vld [vmem:[#allocation3 + $0x18] sm:$0xff]
    %v1137 = vld [vmem:[#allocation3 + $0x20] sm:$0xff]
    %v1138 = vld [vmem:[#allocation3 + $0x28] sm:$0xff]
    %v1139 = vld [vmem:[#allocation3 + $0x30] sm:$0xff]
    %v1140 = vld [vmem:[#allocation3 + $0x38] sm:$0xff]
    %v1141 = vld [vmem:[#allocation4] sm:$0xff]
    %v1142 = vld [vmem:[#allocation4 + $0x8] sm:$0xff]
    %v1143 = vld [vmem:[#allocation4 + $0x10] sm:$0xff]
    %v1144 = vld [vmem:[#allocation4 + $0x18] sm:$0xff]
    %v1145 = vld [vmem:[#allocation4 + $0x20] sm:$0xff]
    %v1146 = vld [vmem:[#allocation4 + $0x28] sm:$0xff]
    %v1147 = vld [vmem:[#allocation4 + $0x30] sm:$0xff]
    %v1148 = vld [vmem:[#allocation4 + $0x38] sm:$0xff]
    %v1149 = vld [vmem:[#allocation4 + $0x40] sm:$0xff]
    %v1150 = vld [vmem:[#allocation4 + $0x48] sm:$0xff]
    %v1151 = vld [vmem:[#allocation4 + $0x50] sm:$0xff]
    %v1152 = vld [vmem:[#allocation4 + $0x58] sm:$0xff]
    %v1153 = vld [vmem:[#allocation4 + $0x60] sm:$0xff]
    %v1154 = vld [vmem:[#allocation4 + $0x68] sm:$0xff]
    %v1155 = vld [vmem:[#allocation4 + $0x70] sm:$0xff]
    %v1156 = vld [vmem:[#allocation4 + $0x78] sm:$0xff]
    %s1157 = scalar_lea.vmem %s4, 2
    %v1158 = vld [vmem:[%s1157] sm:$0x3]
    %v1160 = vlaneseq
    %v1161 = vshrl.u32 %v1160, 7
    %v1162 = vsub.s32 0, %v1161
    %v1163 = vrot.slane %v1158, %v1162
    %v1164 = vlaneseq
    %v1165 = vshrl.u32 %v1164, 7
    %v1166 = vsub.s32 1, %v1165
    %v1167 = vrot.slane %v1158, %v1166
    %v1171 = vsel %vm262, %v1133, 0
    %v1174 = vsel %vm262, %v1134, 0
    %v1177 = vsel %vm262, %v1135, 0
    %v1180 = vsel %vm262, %v1136, 0
    %v1183 = vsel %vm262, %v1137, 0
    %v1186 = vsel %vm262, %v1138, 0
    %v1189 = vsel %vm262, %v1139, 0
    %v1192 = vsel %vm262, %v1140, 0
    %1194 = vmatprep.subr.mxu0 %v1142
    %1195 = vmatpush1.msra.mxu0 %v1141
    %1196 = vmatprep.subr.mxu0 %v1144
    %1197 = vmatpush1.msra.mxu0 %v1143
    %1198 = vmatprep.subr.mxu0 %v1146
    %1199 = vmatpush1.msra.mxu0 %v1145
    %1200 = vmatprep.subr.mxu0 %v1148
    %1201 = vmatpush1.msra.mxu0 %v1147
    %1202 = vmatprep.subr.mxu0 %v1150
    %1203 = vmatpush1.msra.mxu0 %v1149
    %1204 = vmatprep.subr.mxu0 %v1152
    %1205 = vmatpush1.msra.mxu0 %v1151
    %1206 = vmatprep.subr.mxu0 %v1154
    %1207 = vmatpush1.msra.mxu0 %v1153
    %1208 = vmatprep.subr.mxu0 %v1156
    %1209 = vmatpush1.msra.mxu0 %v1155
    %1210 = vmatprep.subr.mxu0 0.0
    %1211 = vmatpush1.msra.mxu0 0.0
    %1212 = vmatprep.subr.mxu0 0.0
    %1213 = vmatpush1.msra.mxu0 0.0
    %1214 = vmatprep.subr.mxu0 0.0
    %1215 = vmatpush1.msra.mxu0 0.0
    %1216 = vmatprep.subr.mxu0 0.0
    %1217 = vmatpush1.msra.mxu0 0.0
    %1218 = vmatprep.subr.mxu0 0.0
    %1219 = vmatpush1.msra.mxu0 0.0
    %1220 = vmatprep.subr.mxu0 0.0
    %1221 = vmatpush1.msra.mxu0 0.0
    %1222 = vmatprep.subr.mxu0 0.0
    %1223 = vmatpush1.msra.mxu0 0.0
    %1224 = vmatprep.subr.mxu0 0.0
    %1225 = vmatpush1.msra.mxu0 0.0
    %1226 = vmatprep.subr.mxu0 0.0
    %1227 = vmatpush1.msra.mxu0 0.0
    %1228 = vmatprep.subr.mxu0 0.0
    %1229 = vmatpush1.msra.mxu0 0.0
    %1230 = vmatprep.subr.mxu0 0.0
    %1231 = vmatpush1.msra.mxu0 0.0
    %1232 = vmatprep.subr.mxu0 0.0
    %1233 = vmatpush1.msra.mxu0 0.0
    %1234 = vmatprep.subr.mxu0 0.0
    %1235 = vmatpush1.msra.mxu0 0.0
    %1236 = vmatprep.subr.mxu0 0.0
    %1237 = vmatpush1.msra.mxu0 0.0
    %1238 = vmatprep.subr.mxu0 0.0
    %1239 = vmatpush1.msra.mxu0 0.0
    %1240 = vmatprep.subr.mxu0 0.0
    %1241 = vmatpush1.msra.mxu0 0.0
    %1242 = vmatprep.subr.mxu0 0.0
    %1243 = vmatpush1.msra.mxu0 0.0
    %1244 = vmatprep.subr.mxu0 0.0
    %1245 = vmatpush1.msra.mxu0 0.0
    %1246 = vmatprep.subr.mxu0 0.0
    %1247 = vmatpush1.msra.mxu0 0.0
    %1248 = vmatprep.subr.mxu0 0.0
    %1249 = vmatpush1.msra.mxu0 0.0
    %1250 = vmatprep.subr.mxu0 0.0
    %1251 = vmatpush1.msra.mxu0 0.0
    %1252 = vmatprep.subr.mxu0 0.0
    %1253 = vmatpush1.msra.mxu0 0.0
    %1254 = vmatprep.subr.mxu0 0.0
    %1255 = vmatpush1.msra.mxu0 0.0
    %1256 = vmatprep.subr.mxu0 0.0
    %1257 = vmatpush1.msra.mxu0 0.0
    %1258 = vmatprep.mubr.f32.mxu0 0.0
    %1259 = vmatmul.mubr.f32.gmra.mrb[0].mxu0 %v1171
    %v1260 = vpop.f32.mrb[0].mxu0
    %v1261 = vadd.f32 %v1163, %v1260
    %v1262 = vpop.f32.mrb[0].mxu0
    %v1263 = vadd.f32 %v1167, %v1262
    %1264 = vmatprep.mubr.f32.mxu0 0.0
    %1265 = vmatmul.mubr.f32.gmra.mrb[0].mxu0 %v1174
    %v1266 = vpop.f32.mrb[0].mxu0
    %v1267 = vadd.f32 %v1163, %v1266
    %v1268 = vpop.f32.mrb[0].mxu0
    %v1269 = vadd.f32 %v1167, %v1268
    %1270 = vmatprep.mubr.f32.mxu0 0.0
    %1271 = vmatmul.mubr.f32.gmra.mrb[0].mxu0 %v1177
    %v1272 = vpop.f32.mrb[0].mxu0
    %v1273 = vadd.f32 %v1163, %v1272
    %v1274 = vpop.f32.mrb[0].mxu0
    %v1275 = vadd.f32 %v1167, %v1274
    %1276 = vmatprep.mubr.f32.mxu0 0.0
    %1277 = vmatmul.mubr.f32.gmra.mrb[0].mxu0 %v1180
    %v1278 = vpop.f32.mrb[0].mxu0
    %v1279 = vadd.f32 %v1163, %v1278
    %v1280 = vpop.f32.mrb[0].mxu0
    %v1281 = vadd.f32 %v1167, %v1280
    %1282 = vmatprep.mubr.f32.mxu0 0.0
    %1283 = vmatmul.mubr.f32.gmra.mrb[0].mxu0 %v1183
    %v1284 = vpop.f32.mrb[0].mxu0
    %v1285 = vadd.f32 %v1163, %v1284
    %v1286 = vpop.f32.mrb[0].mxu0
    %v1287 = vadd.f32 %v1167, %v1286
    %1288 = vmatprep.mubr.f32.mxu0 0.0
    %1289 = vmatmul.mubr.f32.gmra.mrb[0].mxu0 %v1186
    %v1290 = vpop.f32.mrb[0].mxu0
    %v1291 = vadd.f32 %v1163, %v1290
    %v1292 = vpop.f32.mrb[0].mxu0
    %v1293 = vadd.f32 %v1167, %v1292
    %1294 = vmatprep.mubr.f32.mxu0 0.0
    %1295 = vmatmul.mubr.f32.gmra.mrb[0].mxu0 %v1189
    %v1296 = vpop.f32.mrb[0].mxu0
    %v1297 = vadd.f32 %v1163, %v1296
    %v1298 = vpop.f32.mrb[0].mxu0
    %v1299 = vadd.f32 %v1167, %v1298
    %1300 = vmatprep.mubr.f32.mxu0 0.0
    %1301 = vmatmul.mubr.f32.gmra.mrb[0].mxu0 %v1192
    %v1302 = vpop.f32.mrb[0].mxu0
    %v1303 = vadd.f32 %v1163, %v1302
    %v1304 = vpop.f32.mrb[0].mxu0
    %v1305 = vadd.f32 %v1167, %v1304
    %1306 = vdwg.mxu0
    %1307 = vst [vmem:[#allocation2] sm:$0xff] %v1261
    %1308 = vst.msk [vmem:[#allocation2 + $0x8] sm:$0xff] %vm262, %v1263
    %1309 = vst [vmem:[#allocation2 + $0x10] sm:$0xff] %v1267
    %1310 = vst.msk [vmem:[#allocation2 + $0x18] sm:$0xff] %vm262, %v1269
    %1311 = vst [vmem:[#allocation2 + $0x20] sm:$0xff] %v1273
    %1312 = vst.msk [vmem:[#allocation2 + $0x28] sm:$0xff] %vm262, %v1275
    %1313 = vst [vmem:[#allocation2 + $0x30] sm:$0xff] %v1279
    %1314 = vst.msk [vmem:[#allocation2 + $0x38] sm:$0xff] %vm262, %v1281
    %1315 = vst [vmem:[#allocation2 + $0x40] sm:$0xff] %v1285
    %1316 = vst.msk [vmem:[#allocation2 + $0x48] sm:$0xff] %vm262, %v1287
    %1317 = vst [vmem:[#allocation2 + $0x50] sm:$0xff] %v1291
    %1318 = vst.msk [vmem:[#allocation2 + $0x58] sm:$0xff] %vm262, %v1293
    %1319 = vst [vmem:[#allocation2 + $0x60] sm:$0xff] %v1297
    %1320 = vst.msk [vmem:[#allocation2 + $0x68] sm:$0xff] %vm262, %v1299
    %1321 = vst [vmem:[#allocation2 + $0x70] sm:$0xff] %v1303
    %1322 = vst.msk [vmem:[#allocation2 + $0x78] sm:$0xff] %vm262, %v1305
    %s1323 = scalar_lea.vmem [#allocation7], 128
    %v1324 = vld [vmem:[%s1323] sm:$0xff]
    %v1325 = vld [vmem:[%s1323 + $0x8] sm:$0xff]
    %v1326 = vld [vmem:[%s1323 + $0x10] sm:$0xff]
    %v1327 = vld [vmem:[%s1323 + $0x18] sm:$0xff]
    %v1328 = vld [vmem:[%s1323 + $0x20] sm:$0xff]
    %v1329 = vld [vmem:[%s1323 + $0x28] sm:$0xff]
    %v1330 = vld [vmem:[%s1323 + $0x30] sm:$0xff]
    %v1331 = vld [vmem:[%s1323 + $0x38] sm:$0xff]
    %v1332 = vld [vmem:[%s1323 + $0x40] sm:$0xff]
    %v1333 = vld [vmem:[%s1323 + $0x48] sm:$0xff]
    %v1334 = vld [vmem:[%s1323 + $0x50] sm:$0xff]
    %v1335 = vld [vmem:[%s1323 + $0x58] sm:$0xff]
    %v1336 = vld [vmem:[%s1323 + $0x60] sm:$0xff]
    %v1337 = vld [vmem:[%s1323 + $0x68] sm:$0xff]
    %v1338 = vld [vmem:[%s1323 + $0x70] sm:$0xff]
    %v1339 = vld [vmem:[%s1323 + $0x78] sm:$0xff]
    %s1340 = scalar_lea.vmem %s5, 2
    %v1341 = vld [vmem:[%s1340] sm:$0x3]
    %v1342 = vld [vmem:[#allocation2] sm:$0xff]
    %v1343 = vld [vmem:[#allocation2 + $0x8] sm:$0xff]
    %v1344 = vld [vmem:[#allocation2 + $0x70] sm:$0xff]
    %v1345 = vld [vmem:[#allocation2 + $0x78] sm:$0xff]
    %v1346 = vsel %vm97, %v1342, %v1344
    %v1347 = vsel %vm98, %v1343, %v1345
    %v1349 = vlaneseq
    %v1350 = vshrl.u32 %v1349, 7
    %v1351 = vsub.s32 0, %v1350
    %v1352 = vrot.slane %v1341, %v1351
    %v1353 = vlaneseq
    %v1354 = vshrl.u32 %v1353, 7
    %v1355 = vsub.s32 1, %v1354
    %v1356 = vrot.slane %v1341, %v1355
    %1359 = vmatprep.subr.mxu0 %v1325
    %1360 = vmatpush1.msra.mxu0 %v1324
    %1361 = vmatprep.subr.mxu0 %v1327
    %1362 = vmatpush1.msra.mxu0 %v1326
    %1363 = vmatprep.subr.mxu0 %v1329
    %1364 = vmatpush1.msra.mxu0 %v1328
    %1365 = vmatprep.subr.mxu0 %v1331
    %1366 = vmatpush1.msra.mxu0 %v1330
    %1367 = vmatprep.subr.mxu0 %v1333
    %1368 = vmatpush1.msra.mxu0 %v1332
    %1369 = vmatprep.subr.mxu0 %v1335
    %1370 = vmatpush1.msra.mxu0 %v1334
    %1371 = vmatprep.subr.mxu0 %v1337
    %1372 = vmatpush1.msra.mxu0 %v1336
    %1373 = vmatprep.subr.mxu0 %v1339
    %1374 = vmatpush1.msra.mxu0 %v1338
    %1375 = vmatprep.subr.mxu0 0.0
    %1376 = vmatpush1.msra.mxu0 0.0
    %1377 = vmatprep.subr.mxu0 0.0
    %1378 = vmatpush1.msra.mxu0 0.0
    %1379 = vmatprep.subr.mxu0 0.0
    %1380 = vmatpush1.msra.mxu0 0.0
    %1381 = vmatprep.subr.mxu0 0.0
    %1382 = vmatpush1.msra.mxu0 0.0
    %1383 = vmatprep.subr.mxu0 0.0
    %1384 = vmatpush1.msra.mxu0 0.0
    %1385 = vmatprep.subr.mxu0 0.0
    %1386 = vmatpush1.msra.mxu0 0.0
    %1387 = vmatprep.subr.mxu0 0.0
    %1388 = vmatpush1.msra.mxu0 0.0
    %1389 = vmatprep.subr.mxu0 0.0
    %1390 = vmatpush1.msra.mxu0 0.0
    %1391 = vmatprep.subr.mxu0 0.0
    %1392 = vmatpush1.msra.mxu0 0.0
    %1393 = vmatprep.subr.mxu0 0.0
    %1394 = vmatpush1.msra.mxu0 0.0
    %1395 = vmatprep.subr.mxu0 0.0
    %1396 = vmatpush1.msra.mxu0 0.0
    %1397 = vmatprep.subr.mxu0 0.0
    %1398 = vmatpush1.msra.mxu0 0.0
    %1399 = vmatprep.subr.mxu0 0.0
    %1400 = vmatpush1.msra.mxu0 0.0
    %1401 = vmatprep.subr.mxu0 0.0
    %1402 = vmatpush1.msra.mxu0 0.0
    %1403 = vmatprep.subr.mxu0 0.0
    %1404 = vmatpush1.msra.mxu0 0.0
    %1405 = vmatprep.subr.mxu0 0.0
    %1406 = vmatpush1.msra.mxu0 0.0
    %1407 = vmatprep.subr.mxu0 0.0
    %1408 = vmatpush1.msra.mxu0 0.0
    %1409 = vmatprep.subr.mxu0 0.0
    %1410 = vmatpush1.msra.mxu0 0.0
    %1411 = vmatprep.subr.mxu0 0.0
    %1412 = vmatpush1.msra.mxu0 0.0
    %1413 = vmatprep.subr.mxu0 0.0
    %1414 = vmatpush1.msra.mxu0 0.0
    %1415 = vmatprep.subr.mxu0 0.0
    %1416 = vmatpush1.msra.mxu0 0.0
    %1417 = vmatprep.subr.mxu0 0.0
    %1418 = vmatpush1.msra.mxu0 0.0
    %1419 = vmatprep.subr.mxu0 0.0
    %1420 = vmatpush1.msra.mxu0 0.0
    %1421 = vmatprep.subr.mxu0 0.0
    %1422 = vmatpush1.msra.mxu0 0.0
    %1423 = vmatprep.mubr.f32.mxu0 0.0
    %1424 = vmatmul.mubr.f32.gmra.mrb[0].mxu0 %v313
    %v1425 = vpop.f32.mrb[0].mxu0
    %v1426 = vadd.f32 %v1352, %v1425
    %v1427 = vpop.f32.mrb[0].mxu0
    %v1428 = vadd.f32 %v1356, %v1427
    %1429 = vdwg.mxu0
    %v1430 = vadd.f32 %v1346, %v1426
    %v1431 = vxor.u32 %v1430, 2147483648
    %v1432 = vmul.f32 %v1431, 1.442695
    %v1433 = vpow.pop %v1432
    %v1434 = vadd.f32 %v1433, 1.0
    %v1435 = vrcp.pop %v1434
    %v1436 = vmul.f32 1.0, %v1435
    %v1437 = vmul.f32 %v1436, %v1428
    %v1438 = vadd.f32 %v1347, %v1437
    %v1439 = vtanh.pop %v1438
    %v1440 = vsub.f32 1.0, %v1436
    %1442 = vrot.lane.b32.xlu0 %v1439, 64
    %v1443 = vpop.permute.xlu0 %1442
    %v1445 = vmul.f32 %v1440, %v1443
    %v1446 = vmul.f32 %v1436, 0.0
    %v1447 = vadd.f32 %v1445, %v1446
    %1449 = vrot.lane.b32.xlu0 %v1447, 64
    %v1450 = vpop.permute.xlu0 %1449
    %1452 = vst.msk [vmem:[#allocation3] sm:$0xff] %vm408, %v1450
    %1453 = vst.msk [vmem:[#allocation3 + $0x38] sm:$0xff] %vm410, %v1450
    %v1454 = vld [vmem:[#allocation2 + $0x10] sm:$0xff]
    %v1455 = vld [vmem:[#allocation2 + $0x18] sm:$0xff]
    %v1456 = vld [vmem:[#allocation2 + $0x60] sm:$0xff]
    %v1457 = vld [vmem:[#allocation2 + $0x68] sm:$0xff]
    %v1458 = vsel %vm97, %v1454, %v1456
    %v1459 = vsel %vm98, %v1455, %v1457
    %v1460 = vsel %vm262, %v1450, 0
    %1462 = vmatprep.subr.mxu0 %v1325
    %1463 = vmatpush1.msra.mxu0 %v1324
    %1464 = vmatprep.subr.mxu0 %v1327
    %1465 = vmatpush1.msra.mxu0 %v1326
    %1466 = vmatprep.subr.mxu0 %v1329
    %1467 = vmatpush1.msra.mxu0 %v1328
    %1468 = vmatprep.subr.mxu0 %v1331
    %1469 = vmatpush1.msra.mxu0 %v1330
    %1470 = vmatprep.subr.mxu0 %v1333
    %1471 = vmatpush1.msra.mxu0 %v1332
    %1472 = vmatprep.subr.mxu0 %v1335
    %1473 = vmatpush1.msra.mxu0 %v1334
    %1474 = vmatprep.subr.mxu0 %v1337
    %1475 = vmatpush1.msra.mxu0 %v1336
    %1476 = vmatprep.subr.mxu0 %v1339
    %1477 = vmatpush1.msra.mxu0 %v1338
    %1478 = vmatprep.subr.mxu0 0.0
    %1479 = vmatpush1.msra.mxu0 0.0
    %1480 = vmatprep.subr.mxu0 0.0
    %1481 = vmatpush1.msra.mxu0 0.0
    %1482 = vmatprep.subr.mxu0 0.0
    %1483 = vmatpush1.msra.mxu0 0.0
    %1484 = vmatprep.subr.mxu0 0.0
    %1485 = vmatpush1.msra.mxu0 0.0
    %1486 = vmatprep.subr.mxu0 0.0
    %1487 = vmatpush1.msra.mxu0 0.0
    %1488 = vmatprep.subr.mxu0 0.0
    %1489 = vmatpush1.msra.mxu0 0.0
    %1490 = vmatprep.subr.mxu0 0.0
    %1491 = vmatpush1.msra.mxu0 0.0
    %1492 = vmatprep.subr.mxu0 0.0
    %1493 = vmatpush1.msra.mxu0 0.0
    %1494 = vmatprep.subr.mxu0 0.0
    %1495 = vmatpush1.msra.mxu0 0.0
    %1496 = vmatprep.subr.mxu0 0.0
    %1497 = vmatpush1.msra.mxu0 0.0
    %1498 = vmatprep.subr.mxu0 0.0
    %1499 = vmatpush1.msra.mxu0 0.0
    %1500 = vmatprep.subr.mxu0 0.0
    %1501 = vmatpush1.msra.mxu0 0.0
    %1502 = vmatprep.subr.mxu0 0.0
    %1503 = vmatpush1.msra.mxu0 0.0
    %1504 = vmatprep.subr.mxu0 0.0
    %1505 = vmatpush1.msra.mxu0 0.0
    %1506 = vmatprep.subr.mxu0 0.0
    %1507 = vmatpush1.msra.mxu0 0.0
    %1508 = vmatprep.subr.mxu0 0.0
    %1509 = vmatpush1.msra.mxu0 0.0
    %1510 = vmatprep.subr.mxu0 0.0
    %1511 = vmatpush1.msra.mxu0 0.0
    %1512 = vmatprep.subr.mxu0 0.0
    %1513 = vmatpush1.msra.mxu0 0.0
    %1514 = vmatprep.subr.mxu0 0.0
    %1515 = vmatpush1.msra.mxu0 0.0
    %1516 = vmatprep.subr.mxu0 0.0
    %1517 = vmatpush1.msra.mxu0 0.0
    %1518 = vmatprep.subr.mxu0 0.0
    %1519 = vmatpush1.msra.mxu0 0.0
    %1520 = vmatprep.subr.mxu0 0.0
    %1521 = vmatpush1.msra.mxu0 0.0
    %1522 = vmatprep.subr.mxu0 0.0
    %1523 = vmatpush1.msra.mxu0 0.0
    %1524 = vmatprep.subr.mxu0 0.0
    %1525 = vmatpush1.msra.mxu0 0.0
    %1526 = vmatprep.mubr.f32.mxu0 0.0
    %1527 = vmatmul.mubr.f32.gmra.mrb[0].mxu0 %v1460
    %v1528 = vpop.f32.mrb[0].mxu0
    %v1529 = vadd.f32 %v1352, %v1528
    %v1530 = vpop.f32.mrb[0].mxu0
    %v1531 = vadd.f32 %v1356, %v1530
    %1532 = vdwg.mxu0
    %v1533 = vadd.f32 %v1458, %v1529
    %v1534 = vxor.u32 %v1533, 2147483648
    %v1535 = vmul.f32 %v1534, 1.442695
    %v1536 = vpow.pop %v1535
    %v1537 = vadd.f32 %v1536, 1.0
    %v1538 = vrcp.pop %v1537
    %v1539 = vmul.f32 1.0, %v1538
    %v1540 = vmul.f32 %v1539, %v1531
    %v1541 = vadd.f32 %v1459, %v1540
    %v1542 = vtanh.pop %v1541
    %v1543 = vsub.f32 1.0, %v1539
    %1545 = vrot.lane.b32.xlu0 %v1542, 64
    %v1546 = vpop.permute.xlu0 %1545
    %v1548 = vmul.f32 %v1543, %v1546
    %v1549 = vmul.f32 %v1539, %v1447
    %v1550 = vadd.f32 %v1548, %v1549
    %1552 = vrot.lane.b32.xlu0 %v1550, 64
    %v1553 = vpop.permute.xlu0 %1552
    %1555 = vst.msk [vmem:[#allocation3 + $0x8] sm:$0xff] %vm408, %v1553
    %1556 = vst.msk [vmem:[#allocation3 + $0x30] sm:$0xff] %vm410, %v1553
    %v1557 = vld [vmem:[#allocation2 + $0x20] sm:$0xff]
    %v1558 = vld [vmem:[#allocation2 + $0x28] sm:$0xff]
    %v1559 = vld [vmem:[#allocation2 + $0x50] sm:$0xff]
    %v1560 = vld [vmem:[#allocation2 + $0x58] sm:$0xff]
    %v1561 = vsel %vm97, %v1557, %v1559
    %v1562 = vsel %vm98, %v1558, %v1560
    %v1563 = vsel %vm262, %v1553, 0
    %1565 = vmatprep.subr.mxu0 %v1325
    %1566 = vmatpush1.msra.mxu0 %v1324
    %1567 = vmatprep.subr.mxu0 %v1327
    %1568 = vmatpush1.msra.mxu0 %v1326
    %1569 = vmatprep.subr.mxu0 %v1329
    %1570 = vmatpush1.msra.mxu0 %v1328
    %1571 = vmatprep.subr.mxu0 %v1331
    %1572 = vmatpush1.msra.mxu0 %v1330
    %1573 = vmatprep.subr.mxu0 %v1333
    %1574 = vmatpush1.msra.mxu0 %v1332
    %1575 = vmatprep.subr.mxu0 %v1335
    %1576 = vmatpush1.msra.mxu0 %v1334
    %1577 = vmatprep.subr.mxu0 %v1337
    %1578 = vmatpush1.msra.mxu0 %v1336
    %1579 = vmatprep.subr.mxu0 %v1339
    %1580 = vmatpush1.msra.mxu0 %v1338
    %1581 = vmatprep.subr.mxu0 0.0
    %1582 = vmatpush1.msra.mxu0 0.0
    %1583 = vmatprep.subr.mxu0 0.0
    %1584 = vmatpush1.msra.mxu0 0.0
    %1585 = vmatprep.subr.mxu0 0.0
    %1586 = vmatpush1.msra.mxu0 0.0
    %1587 = vmatprep.subr.mxu0 0.0
    %1588 = vmatpush1.msra.mxu0 0.0
    %1589 = vmatprep.subr.mxu0 0.0
    %1590 = vmatpush1.msra.mxu0 0.0
    %1591 = vmatprep.subr.mxu0 0.0
    %1592 = vmatpush1.msra.mxu0 0.0
    %1593 = vmatprep.subr.mxu0 0.0
    %1594 = vmatpush1.msra.mxu0 0.0
    %1595 = vmatprep.subr.mxu0 0.0
    %1596 = vmatpush1.msra.mxu0 0.0
    %1597 = vmatprep.subr.mxu0 0.0
    %1598 = vmatpush1.msra.mxu0 0.0
    %1599 = vmatprep.subr.mxu0 0.0
    %1600 = vmatpush1.msra.mxu0 0.0
    %1601 = vmatprep.subr.mxu0 0.0
    %1602 = vmatpush1.msra.mxu0 0.0
    %1603 = vmatprep.subr.mxu0 0.0
    %1604 = vmatpush1.msra.mxu0 0.0
    %1605 = vmatprep.subr.mxu0 0.0
    %1606 = vmatpush1.msra.mxu0 0.0
    %1607 = vmatprep.subr.mxu0 0.0
    %1608 = vmatpush1.msra.mxu0 0.0
    %1609 = vmatprep.subr.mxu0 0.0
    %1610 = vmatpush1.msra.mxu0 0.0
    %1611 = vmatprep.subr.mxu0 0.0
    %1612 = vmatpush1.msra.mxu0 0.0
    %1613 = vmatprep.subr.mxu0 0.0
    %1614 = vmatpush1.msra.mxu0 0.0
    %1615 = vmatprep.subr.mxu0 0.0
    %1616 = vmatpush1.msra.mxu0 0.0
    %1617 = vmatprep.subr.mxu0 0.0
    %1618 = vmatpush1.msra.mxu0 0.0
    %1619 = vmatprep.subr.mxu0 0.0
    %1620 = vmatpush1.msra.mxu0 0.0
    %1621 = vmatprep.subr.mxu0 0.0
    %1622 = vmatpush1.msra.mxu0 0.0
    %1623 = vmatprep.subr.mxu0 0.0
    %1624 = vmatpush1.msra.mxu0 0.0
    %1625 = vmatprep.subr.mxu0 0.0
    %1626 = vmatpush1.msra.mxu0 0.0
    %1627 = vmatprep.subr.mxu0 0.0
    %1628 = vmatpush1.msra.mxu0 0.0
    %1629 = vmatprep.mubr.f32.mxu0 0.0
    %1630 = vmatmul.mubr.f32.gmra.mrb[0].mxu0 %v1563
    %v1631 = vpop.f32.mrb[0].mxu0
    %v1632 = vadd.f32 %v1352, %v1631
    %v1633 = vpop.f32.mrb[0].mxu0
    %v1634 = vadd.f32 %v1356, %v1633
    %1635 = vdwg.mxu0
    %v1636 = vadd.f32 %v1561, %v1632
    %v1637 = vxor.u32 %v1636, 2147483648
    %v1638 = vmul.f32 %v1637, 1.442695
    %v1639 = vpow.pop %v1638
    %v1640 = vadd.f32 %v1639, 1.0
    %v1641 = vrcp.pop %v1640
    %v1642 = vmul.f32 1.0, %v1641
    %v1643 = vmul.f32 %v1642, %v1634
    %v1644 = vadd.f32 %v1562, %v1643
    %v1645 = vtanh.pop %v1644
    %v1646 = vsub.f32 1.0, %v1642
    %1648 = vrot.lane.b32.xlu0 %v1645, 64
    %v1649 = vpop.permute.xlu0 %1648
    %v1651 = vmul.f32 %v1646, %v1649
    %v1652 = vmul.f32 %v1642, %v1550
    %v1653 = vadd.f32 %v1651, %v1652
    %1655 = vrot.lane.b32.xlu0 %v1653, 64
    %v1656 = vpop.permute.xlu0 %1655
    %1658 = vst.msk [vmem:[#allocation3 + $0x10] sm:$0xff] %vm408, %v1656
    %1659 = vst.msk [vmem:[#allocation3 + $0x28] sm:$0xff] %vm410, %v1656
    %v1660 = vld [vmem:[#allocation2 + $0x30] sm:$0xff]
    %v1661 = vld [vmem:[#allocation2 + $0x38] sm:$0xff]
    %v1662 = vld [vmem:[#allocation2 + $0x40] sm:$0xff]
    %v1663 = vld [vmem:[#allocation2 + $0x48] sm:$0xff]
    %v1664 = vsel %vm97, %v1660, %v1662
    %v1665 = vsel %vm98, %v1661, %v1663
    %v1666 = vsel %vm262, %v1656, 0
    %1668 = vmatprep.subr.mxu0 %v1325
    %1669 = vmatpush1.msra.mxu0 %v1324
    %1670 = vmatprep.subr.mxu0 %v1327
    %1671 = vmatpush1.msra.mxu0 %v1326
    %1672 = vmatprep.subr.mxu0 %v1329
    %1673 = vmatpush1.msra.mxu0 %v1328
    %1674 = vmatprep.subr.mxu0 %v1331
    %1675 = vmatpush1.msra.mxu0 %v1330
    %1676 = vmatprep.subr.mxu0 %v1333
    %1677 = vmatpush1.msra.mxu0 %v1332
    %1678 = vmatprep.subr.mxu0 %v1335
    %1679 = vmatpush1.msra.mxu0 %v1334
    %1680 = vmatprep.subr.mxu0 %v1337
    %1681 = vmatpush1.msra.mxu0 %v1336
    %1682 = vmatprep.subr.mxu0 %v1339
    %1683 = vmatpush1.msra.mxu0 %v1338
    %1684 = vmatprep.subr.mxu0 0.0
    %1685 = vmatpush1.msra.mxu0 0.0
    %1686 = vmatprep.subr.mxu0 0.0
    %1687 = vmatpush1.msra.mxu0 0.0
    %1688 = vmatprep.subr.mxu0 0.0
    %1689 = vmatpush1.msra.mxu0 0.0
    %1690 = vmatprep.subr.mxu0 0.0
    %1691 = vmatpush1.msra.mxu0 0.0
    %1692 = vmatprep.subr.mxu0 0.0
    %1693 = vmatpush1.msra.mxu0 0.0
    %1694 = vmatprep.subr.mxu0 0.0
    %1695 = vmatpush1.msra.mxu0 0.0
    %1696 = vmatprep.subr.mxu0 0.0
    %1697 = vmatpush1.msra.mxu0 0.0
    %1698 = vmatprep.subr.mxu0 0.0
    %1699 = vmatpush1.msra.mxu0 0.0
    %1700 = vmatprep.subr.mxu0 0.0
    %1701 = vmatpush1.msra.mxu0 0.0
    %1702 = vmatprep.subr.mxu0 0.0
    %1703 = vmatpush1.msra.mxu0 0.0
    %1704 = vmatprep.subr.mxu0 0.0
    %1705 = vmatpush1.msra.mxu0 0.0
    %1706 = vmatprep.subr.mxu0 0.0
    %1707 = vmatpush1.msra.mxu0 0.0
    %1708 = vmatprep.subr.mxu0 0.0
    %1709 = vmatpush1.msra.mxu0 0.0
    %1710 = vmatprep.subr.mxu0 0.0
    %1711 = vmatpush1.msra.mxu0 0.0
    %1712 = vmatprep.subr.mxu0 0.0
    %1713 = vmatpush1.msra.mxu0 0.0
    %1714 = vmatprep.subr.mxu0 0.0
    %1715 = vmatpush1.msra.mxu0 0.0
    %1716 = vmatprep.subr.mxu0 0.0
    %1717 = vmatpush1.msra.mxu0 0.0
    %1718 = vmatprep.subr.mxu0 0.0
    %1719 = vmatpush1.msra.mxu0 0.0
    %1720 = vmatprep.subr.mxu0 0.0
    %1721 = vmatpush1.msra.mxu0 0.0
    %1722 = vmatprep.subr.mxu0 0.0
    %1723 = vmatpush1.msra.mxu0 0.0
    %1724 = vmatprep.subr.mxu0 0.0
    %1725 = vmatpush1.msra.mxu0 0.0
    %1726 = vmatprep.subr.mxu0 0.0
    %1727 = vmatpush1.msra.mxu0 0.0
    %1728 = vmatprep.subr.mxu0 0.0
    %1729 = vmatpush1.msra.mxu0 0.0
    %1730 = vmatprep.subr.mxu0 0.0
    %1731 = vmatpush1.msra.mxu0 0.0
    %1732 = vmatprep.mubr.f32.mxu0 0.0
    %1733 = vmatmul.mubr.f32.gmra.mrb[0].mxu0 %v1666
    %v1734 = vpop.f32.mrb[0].mxu0
    %v1735 = vadd.f32 %v1352, %v1734
    %v1736 = vpop.f32.mrb[0].mxu0
    %v1737 = vadd.f32 %v1356, %v1736
    %1738 = vdwg.mxu0
    %v1739 = vadd.f32 %v1664, %v1735
    %v1740 = vxor.u32 %v1739, 2147483648
    %v1741 = vmul.f32 %v1740, 1.442695
    %v1742 = vpow.pop %v1741
    %v1743 = vadd.f32 %v1742, 1.0
    %v1744 = vrcp.pop %v1743
    %v1745 = vmul.f32 1.0, %v1744
    %v1746 = vmul.f32 %v1745, %v1737
    %v1747 = vadd.f32 %v1665, %v1746
    %v1748 = vtanh.pop %v1747
    %v1749 = vsub.f32 1.0, %v1745
    %1751 = vrot.lane.b32.xlu0 %v1748, 64
    %v1752 = vpop.permute.xlu0 %1751
    %v1754 = vmul.f32 %v1749, %v1752
    %v1755 = vmul.f32 %v1745, %v1653
    %v1756 = vadd.f32 %v1754, %v1755
    %1758 = vrot.lane.b32.xlu0 %v1756, 64
    %v1759 = vpop.permute.xlu0 %1758
    %1761 = vst.msk [vmem:[#allocation3 + $0x18] sm:$0xff] %vm408, %v1759
    %1762 = vst.msk [vmem:[#allocation3 + $0x20] sm:$0xff] %vm410, %v1759
    %v1763 = vld [vmem:[#allocation2 + $0x40] sm:$0xff]
    %v1764 = vld [vmem:[#allocation2 + $0x48] sm:$0xff]
    %v1765 = vld [vmem:[#allocation2 + $0x30] sm:$0xff]
    %v1766 = vld [vmem:[#allocation2 + $0x38] sm:$0xff]
    %v1767 = vsel %vm97, %v1763, %v1765
    %v1768 = vsel %vm98, %v1764, %v1766
    %v1769 = vsel %vm262, %v1759, 0
    %1771 = vmatprep.subr.mxu0 %v1325
    %1772 = vmatpush1.msra.mxu0 %v1324
    %1773 = vmatprep.subr.mxu0 %v1327
    %1774 = vmatpush1.msra.mxu0 %v1326
    %1775 = vmatprep.subr.mxu0 %v1329
    %1776 = vmatpush1.msra.mxu0 %v1328
    %1777 = vmatprep.subr.mxu0 %v1331
    %1778 = vmatpush1.msra.mxu0 %v1330
    %1779 = vmatprep.subr.mxu0 %v1333
    %1780 = vmatpush1.msra.mxu0 %v1332
    %1781 = vmatprep.subr.mxu0 %v1335
    %1782 = vmatpush1.msra.mxu0 %v1334
    %1783 = vmatprep.subr.mxu0 %v1337
    %1784 = vmatpush1.msra.mxu0 %v1336
    %1785 = vmatprep.subr.mxu0 %v1339
    %1786 = vmatpush1.msra.mxu0 %v1338
    %1787 = vmatprep.subr.mxu0 0.0
    %1788 = vmatpush1.msra.mxu0 0.0
    %1789 = vmatprep.subr.mxu0 0.0
    %1790 = vmatpush1.msra.mxu0 0.0
    %1791 = vmatprep.subr.mxu0 0.0
    %1792 = vmatpush1.msra.mxu0 0.0
    %1793 = vmatprep.subr.mxu0 0.0
    %1794 = vmatpush1.msra.mxu0 0.0
    %1795 = vmatprep.subr.mxu0 0.0
    %1796 = vmatpush1.msra.mxu0 0.0
    %1797 = vmatprep.subr.mxu0 0.0
    %1798 = vmatpush1.msra.mxu0 0.0
    %1799 = vmatprep.subr.mxu0 0.0
    %1800 = vmatpush1.msra.mxu0 0.0
    %1801 = vmatprep.subr.mxu0 0.0
    %1802 = vmatpush1.msra.mxu0 0.0
    %1803 = vmatprep.subr.mxu0 0.0
    %1804 = vmatpush1.msra.mxu0 0.0
    %1805 = vmatprep.subr.mxu0 0.0
    %1806 = vmatpush1.msra.mxu0 0.0
    %1807 = vmatprep.subr.mxu0 0.0
    %1808 = vmatpush1.msra.mxu0 0.0
    %1809 = vmatprep.subr.mxu0 0.0
    %1810 = vmatpush1.msra.mxu0 0.0
    %1811 = vmatprep.subr.mxu0 0.0
    %1812 = vmatpush1.msra.mxu0 0.0
    %1813 = vmatprep.subr.mxu0 0.0
    %1814 = vmatpush1.msra.mxu0 0.0
    %1815 = vmatprep.subr.mxu0 0.0
    %1816 = vmatpush1.msra.mxu0 0.0
    %1817 = vmatprep.subr.mxu0 0.0
    %1818 = vmatpush1.msra.mxu0 0.0
    %1819 = vmatprep.subr.mxu0 0.0
    %1820 = vmatpush1.msra.mxu0 0.0
    %1821 = vmatprep.subr.mxu0 0.0
    %1822 = vmatpush1.msra.mxu0 0.0
    %1823 = vmatprep.subr.mxu0 0.0
    %1824 = vmatpush1.msra.mxu0 0.0
    %1825 = vmatprep.subr.mxu0 0.0
    %1826 = vmatpush1.msra.mxu0 0.0
    %1827 = vmatprep.subr.mxu0 0.0
    %1828 = vmatpush1.msra.mxu0 0.0
    %1829 = vmatprep.subr.mxu0 0.0
    %1830 = vmatpush1.msra.mxu0 0.0
    %1831 = vmatprep.subr.mxu0 0.0
    %1832 = vmatpush1.msra.mxu0 0.0
    %1833 = vmatprep.subr.mxu0 0.0
    %1834 = vmatpush1.msra.mxu0 0.0
    %1835 = vmatprep.mubr.f32.mxu0 0.0
    %1836 = vmatmul.mubr.f32.gmra.mrb[0].mxu0 %v1769
    %v1837 = vpop.f32.mrb[0].mxu0
    %v1838 = vadd.f32 %v1352, %v1837
    %v1839 = vpop.f32.mrb[0].mxu0
    %v1840 = vadd.f32 %v1356, %v1839
    %1841 = vdwg.mxu0
    %v1842 = vadd.f32 %v1767, %v1838
    %v1843 = vxor.u32 %v1842, 2147483648
    %v1844 = vmul.f32 %v1843, 1.442695
    %v1845 = vpow.pop %v1844
    %v1846 = vadd.f32 %v1845, 1.0
    %v1847 = vrcp.pop %v1846
    %v1848 = vmul.f32 1.0, %v1847
    %v1849 = vmul.f32 %v1848, %v1840
    %v1850 = vadd.f32 %v1768, %v1849
    %v1851 = vtanh.pop %v1850
    %v1852 = vsub.f32 1.0, %v1848
    %1854 = vrot.lane.b32.xlu0 %v1851, 64
    %v1855 = vpop.permute.xlu0 %1854
    %v1857 = vmul.f32 %v1852, %v1855
    %v1858 = vmul.f32 %v1848, %v1756
    %v1859 = vadd.f32 %v1857, %v1858
    %1861 = vrot.lane.b32.xlu0 %v1859, 64
    %v1862 = vpop.permute.xlu0 %1861
    %1864 = vst.msk [vmem:[#allocation3 + $0x20] sm:$0xff] %vm408, %v1862
    %1865 = vst.msk [vmem:[#allocation3 + $0x18] sm:$0xff] %vm410, %v1862
    %v1866 = vld [vmem:[#allocation2 + $0x50] sm:$0xff]
    %v1867 = vld [vmem:[#allocation2 + $0x58] sm:$0xff]
    %v1868 = vld [vmem:[#allocation2 + $0x20] sm:$0xff]
    %v1869 = vld [vmem:[#allocation2 + $0x28] sm:$0xff]
    %v1870 = vsel %vm97, %v1866, %v1868
    %v1871 = vsel %vm98, %v1867, %v1869
    %v1872 = vsel %vm262, %v1862, 0
    %1874 = vmatprep.subr.mxu0 %v1325
    %1875 = vmatpush1.msra.mxu0 %v1324
    %1876 = vmatprep.subr.mxu0 %v1327
    %1877 = vmatpush1.msra.mxu0 %v1326
    %1878 = vmatprep.subr.mxu0 %v1329
    %1879 = vmatpush1.msra.mxu0 %v1328
    %1880 = vmatprep.subr.mxu0 %v1331
    %1881 = vmatpush1.msra.mxu0 %v1330
    %1882 = vmatprep.subr.mxu0 %v1333
    %1883 = vmatpush1.msra.mxu0 %v1332
    %1884 = vmatprep.subr.mxu0 %v1335
    %1885 = vmatpush1.msra.mxu0 %v1334
    %1886 = vmatprep.subr.mxu0 %v1337
    %1887 = vmatpush1.msra.mxu0 %v1336
    %1888 = vmatprep.subr.mxu0 %v1339
    %1889 = vmatpush1.msra.mxu0 %v1338
    %1890 = vmatprep.subr.mxu0 0.0
    %1891 = vmatpush1.msra.mxu0 0.0
    %1892 = vmatprep.subr.mxu0 0.0
    %1893 = vmatpush1.msra.mxu0 0.0
    %1894 = vmatprep.subr.mxu0 0.0
    %1895 = vmatpush1.msra.mxu0 0.0
    %1896 = vmatprep.subr.mxu0 0.0
    %1897 = vmatpush1.msra.mxu0 0.0
    %1898 = vmatprep.subr.mxu0 0.0
    %1899 = vmatpush1.msra.mxu0 0.0
    %1900 = vmatprep.subr.mxu0 0.0
    %1901 = vmatpush1.msra.mxu0 0.0
    %1902 = vmatprep.subr.mxu0 0.0
    %1903 = vmatpush1.msra.mxu0 0.0
    %1904 = vmatprep.subr.mxu0 0.0
    %1905 = vmatpush1.msra.mxu0 0.0
    %1906 = vmatprep.subr.mxu0 0.0
    %1907 = vmatpush1.msra.mxu0 0.0
    %1908 = vmatprep.subr.mxu0 0.0
    %1909 = vmatpush1.msra.mxu0 0.0
    %1910 = vmatprep.subr.mxu0 0.0
    %1911 = vmatpush1.msra.mxu0 0.0
    %1912 = vmatprep.subr.mxu0 0.0
    %1913 = vmatpush1.msra.mxu0 0.0
    %1914 = vmatprep.subr.mxu0 0.0
    %1915 = vmatpush1.msra.mxu0 0.0
    %1916 = vmatprep.subr.mxu0 0.0
    %1917 = vmatpush1.msra.mxu0 0.0
    %1918 = vmatprep.subr.mxu0 0.0
    %1919 = vmatpush1.msra.mxu0 0.0
    %1920 = vmatprep.subr.mxu0 0.0
    %1921 = vmatpush1.msra.mxu0 0.0
    %1922 = vmatprep.subr.mxu0 0.0
    %1923 = vmatpush1.msra.mxu0 0.0
    %1924 = vmatprep.subr.mxu0 0.0
    %1925 = vmatpush1.msra.mxu0 0.0
    %1926 = vmatprep.subr.mxu0 0.0
    %1927 = vmatpush1.msra.mxu0 0.0
    %1928 = vmatprep.subr.mxu0 0.0
    %1929 = vmatpush1.msra.mxu0 0.0
    %1930 = vmatprep.subr.mxu0 0.0
    %1931 = vmatpush1.msra.mxu0 0.0
    %1932 = vmatprep.subr.mxu0 0.0
    %1933 = vmatpush1.msra.mxu0 0.0
    %1934 = vmatprep.subr.mxu0 0.0
    %1935 = vmatpush1.msra.mxu0 0.0
    %1936 = vmatprep.subr.mxu0 0.0
    %1937 = vmatpush1.msra.mxu0 0.0
    %1938 = vmatprep.mubr.f32.mxu0 0.0
    %1939 = vmatmul.mubr.f32.gmra.mrb[0].mxu0 %v1872
    %v1940 = vpop.f32.mrb[0].mxu0
    %v1941 = vadd.f32 %v1352, %v1940
    %v1942 = vpop.f32.mrb[0].mxu0
    %v1943 = vadd.f32 %v1356, %v1942
    %1944 = vdwg.mxu0
    %v1945 = vadd.f32 %v1870, %v1941
    %v1946 = vxor.u32 %v1945, 2147483648
    %v1947 = vmul.f32 %v1946, 1.442695
    %v1948 = vpow.pop %v1947
    %v1949 = vadd.f32 %v1948, 1.0
    %v1950 = vrcp.pop %v1949
    %v1951 = vmul.f32 1.0, %v1950
    %v1952 = vmul.f32 %v1951, %v1943
    %v1953 = vadd.f32 %v1871, %v1952
    %v1954 = vtanh.pop %v1953
    %v1955 = vsub.f32 1.0, %v1951
    %1957 = vrot.lane.b32.xlu0 %v1954, 64
    %v1958 = vpop.permute.xlu0 %1957
    %v1960 = vmul.f32 %v1955, %v1958
    %v1961 = vmul.f32 %v1951, %v1859
    %v1962 = vadd.f32 %v1960, %v1961
    %1964 = vrot.lane.b32.xlu0 %v1962, 64
    %v1965 = vpop.permute.xlu0 %1964
    %1967 = vst.msk [vmem:[#allocation3 + $0x28] sm:$0xff] %vm408, %v1965
    %1968 = vst.msk [vmem:[#allocation3 + $0x10] sm:$0xff] %vm410, %v1965
    %v1969 = vld [vmem:[#allocation2 + $0x60] sm:$0xff]
    %v1970 = vld [vmem:[#allocation2 + $0x68] sm:$0xff]
    %v1971 = vld [vmem:[#allocation2 + $0x10] sm:$0xff]
    %v1972 = vld [vmem:[#allocation2 + $0x18] sm:$0xff]
    %v1973 = vsel %vm97, %v1969, %v1971
    %v1974 = vsel %vm98, %v1970, %v1972
    %v1975 = vsel %vm262, %v1965, 0
    %1977 = vmatprep.subr.mxu0 %v1325
    %1978 = vmatpush1.msra.mxu0 %v1324
    %1979 = vmatprep.subr.mxu0 %v1327
    %1980 = vmatpush1.msra.mxu0 %v1326
    %1981 = vmatprep.subr.mxu0 %v1329
    %1982 = vmatpush1.msra.mxu0 %v1328
    %1983 = vmatprep.subr.mxu0 %v1331
    %1984 = vmatpush1.msra.mxu0 %v1330
    %1985 = vmatprep.subr.mxu0 %v1333
    %1986 = vmatpush1.msra.mxu0 %v1332
    %1987 = vmatprep.subr.mxu0 %v1335
    %1988 = vmatpush1.msra.mxu0 %v1334
    %1989 = vmatprep.subr.mxu0 %v1337
    %1990 = vmatpush1.msra.mxu0 %v1336
    %1991 = vmatprep.subr.mxu0 %v1339
    %1992 = vmatpush1.msra.mxu0 %v1338
    %1993 = vmatprep.subr.mxu0 0.0
    %1994 = vmatpush1.msra.mxu0 0.0
    %1995 = vmatprep.subr.mxu0 0.0
    %1996 = vmatpush1.msra.mxu0 0.0
    %1997 = vmatprep.subr.mxu0 0.0
    %1998 = vmatpush1.msra.mxu0 0.0
    %1999 = vmatprep.subr.mxu0 0.0
    %2000 = vmatpush1.msra.mxu0 0.0
    %2001 = vmatprep.subr.mxu0 0.0
    %2002 = vmatpush1.msra.mxu0 0.0
    %2003 = vmatprep.subr.mxu0 0.0
    %2004 = vmatpush1.msra.mxu0 0.0
    %2005 = vmatprep.subr.mxu0 0.0
    %2006 = vmatpush1.msra.mxu0 0.0
    %2007 = vmatprep.subr.mxu0 0.0
    %2008 = vmatpush1.msra.mxu0 0.0
    %2009 = vmatprep.subr.mxu0 0.0
    %2010 = vmatpush1.msra.mxu0 0.0
    %2011 = vmatprep.subr.mxu0 0.0
    %2012 = vmatpush1.msra.mxu0 0.0
    %2013 = vmatprep.subr.mxu0 0.0
    %2014 = vmatpush1.msra.mxu0 0.0
    %2015 = vmatprep.subr.mxu0 0.0
    %2016 = vmatpush1.msra.mxu0 0.0
    %2017 = vmatprep.subr.mxu0 0.0
    %2018 = vmatpush1.msra.mxu0 0.0
    %2019 = vmatprep.subr.mxu0 0.0
    %2020 = vmatpush1.msra.mxu0 0.0
    %2021 = vmatprep.subr.mxu0 0.0
    %2022 = vmatpush1.msra.mxu0 0.0
    %2023 = vmatprep.subr.mxu0 0.0
    %2024 = vmatpush1.msra.mxu0 0.0
    %2025 = vmatprep.subr.mxu0 0.0
    %2026 = vmatpush1.msra.mxu0 0.0
    %2027 = vmatprep.subr.mxu0 0.0
    %2028 = vmatpush1.msra.mxu0 0.0
    %2029 = vmatprep.subr.mxu0 0.0
    %2030 = vmatpush1.msra.mxu0 0.0
    %2031 = vmatprep.subr.mxu0 0.0
    %2032 = vmatpush1.msra.mxu0 0.0
    %2033 = vmatprep.subr.mxu0 0.0
    %2034 = vmatpush1.msra.mxu0 0.0
    %2035 = vmatprep.subr.mxu0 0.0
    %2036 = vmatpush1.msra.mxu0 0.0
    %2037 = vmatprep.subr.mxu0 0.0
    %2038 = vmatpush1.msra.mxu0 0.0
    %2039 = vmatprep.subr.mxu0 0.0
    %2040 = vmatpush1.msra.mxu0 0.0
    %2041 = vmatprep.mubr.f32.mxu0 0.0
    %2042 = vmatmul.mubr.f32.gmra.mrb[0].mxu0 %v1975
    %v2043 = vpop.f32.mrb[0].mxu0
    %v2044 = vadd.f32 %v1352, %v2043
    %v2045 = vpop.f32.mrb[0].mxu0
    %v2046 = vadd.f32 %v1356, %v2045
    %2047 = vdwg.mxu0
    %v2048 = vadd.f32 %v1973, %v2044
    %v2049 = vxor.u32 %v2048, 2147483648
    %v2050 = vmul.f32 %v2049, 1.442695
    %v2051 = vpow.pop %v2050
    %v2052 = vadd.f32 %v2051, 1.0
    %v2053 = vrcp.pop %v2052
    %v2054 = vmul.f32 1.0, %v2053
    %v2055 = vmul.f32 %v2054, %v2046
    %v2056 = vadd.f32 %v1974, %v2055
    %v2057 = vtanh.pop %v2056
    %v2058 = vsub.f32 1.0, %v2054
    %2060 = vrot.lane.b32.xlu0 %v2057, 64
    %v2061 = vpop.permute.xlu0 %2060
    %v2063 = vmul.f32 %v2058, %v2061
    %v2064 = vmul.f32 %v2054, %v1962
    %v2065 = vadd.f32 %v2063, %v2064
    %2067 = vrot.lane.b32.xlu0 %v2065, 64
    %v2068 = vpop.permute.xlu0 %2067
    %2070 = vst.msk [vmem:[#allocation3 + $0x30] sm:$0xff] %vm408, %v2068
    %2071 = vst.msk [vmem:[#allocation3 + $0x8] sm:$0xff] %vm410, %v2068
    %v2072 = vld [vmem:[#allocation2 + $0x70] sm:$0xff]
    %v2073 = vld [vmem:[#allocation2 + $0x78] sm:$0xff]
    %v2074 = vld [vmem:[#allocation2] sm:$0xff]
    %v2075 = vld [vmem:[#allocation2 + $0x8] sm:$0xff]
    %v2076 = vsel %vm97, %v2072, %v2074
    %v2077 = vsel %vm98, %v2073, %v2075
    %v2078 = vsel %vm262, %v2068, 0
    %2080 = vmatprep.subr.mxu0 %v1325
    %2081 = vmatpush1.msra.mxu0 %v1324
    %2082 = vmatprep.subr.mxu0 %v1327
    %2083 = vmatpush1.msra.mxu0 %v1326
    %2084 = vmatprep.subr.mxu0 %v1329
    %2085 = vmatpush1.msra.mxu0 %v1328
    %2086 = vmatprep.subr.mxu0 %v1331
    %2087 = vmatpush1.msra.mxu0 %v1330
    %2088 = vmatprep.subr.mxu0 %v1333
    %2089 = vmatpush1.msra.mxu0 %v1332
    %2090 = vmatprep.subr.mxu0 %v1335
    %2091 = vmatpush1.msra.mxu0 %v1334
    %2092 = vmatprep.subr.mxu0 %v1337
    %2093 = vmatpush1.msra.mxu0 %v1336
    %2094 = vmatprep.subr.mxu0 %v1339
    %2095 = vmatpush1.msra.mxu0 %v1338
    %2096 = vmatprep.subr.mxu0 0.0
    %2097 = vmatpush1.msra.mxu0 0.0
    %2098 = vmatprep.subr.mxu0 0.0
    %2099 = vmatpush1.msra.mxu0 0.0
    %2100 = vmatprep.subr.mxu0 0.0
    %2101 = vmatpush1.msra.mxu0 0.0
    %2102 = vmatprep.subr.mxu0 0.0
    %2103 = vmatpush1.msra.mxu0 0.0
    %2104 = vmatprep.subr.mxu0 0.0
    %2105 = vmatpush1.msra.mxu0 0.0
    %2106 = vmatprep.subr.mxu0 0.0
    %2107 = vmatpush1.msra.mxu0 0.0
    %2108 = vmatprep.subr.mxu0 0.0
    %2109 = vmatpush1.msra.mxu0 0.0
    %2110 = vmatprep.subr.mxu0 0.0
    %2111 = vmatpush1.msra.mxu0 0.0
    %2112 = vmatprep.subr.mxu0 0.0
    %2113 = vmatpush1.msra.mxu0 0.0
    %2114 = vmatprep.subr.mxu0 0.0
    %2115 = vmatpush1.msra.mxu0 0.0
    %2116 = vmatprep.subr.mxu0 0.0
    %2117 = vmatpush1.msra.mxu0 0.0
    %2118 = vmatprep.subr.mxu0 0.0
    %2119 = vmatpush1.msra.mxu0 0.0
    %2120 = vmatprep.subr.mxu0 0.0
    %2121 = vmatpush1.msra.mxu0 0.0
    %2122 = vmatprep.subr.mxu0 0.0
    %2123 = vmatpush1.msra.mxu0 0.0
    %2124 = vmatprep.subr.mxu0 0.0
    %2125 = vmatpush1.msra.mxu0 0.0
    %2126 = vmatprep.subr.mxu0 0.0
    %2127 = vmatpush1.msra.mxu0 0.0
    %2128 = vmatprep.subr.mxu0 0.0
    %2129 = vmatpush1.msra.mxu0 0.0
    %2130 = vmatprep.subr.mxu0 0.0
    %2131 = vmatpush1.msra.mxu0 0.0
    %2132 = vmatprep.subr.mxu0 0.0
    %2133 = vmatpush1.msra.mxu0 0.0
    %2134 = vmatprep.subr.mxu0 0.0
    %2135 = vmatpush1.msra.mxu0 0.0
    %2136 = vmatprep.subr.mxu0 0.0
    %2137 = vmatpush1.msra.mxu0 0.0
    %2138 = vmatprep.subr.mxu0 0.0
    %2139 = vmatpush1.msra.mxu0 0.0
    %2140 = vmatprep.subr.mxu0 0.0
    %2141 = vmatpush1.msra.mxu0 0.0
    %2142 = vmatprep.subr.mxu0 0.0
    %2143 = vmatpush1.msra.mxu0 0.0
    %2144 = vmatprep.mubr.f32.mxu0 0.0
    %2145 = vmatmul.mubr.f32.gmra.mrb[0].mxu0 %v2078
    %v2146 = vpop.f32.mrb[0].mxu0
    %v2147 = vadd.f32 %v1352, %v2146
    %v2148 = vpop.f32.mrb[0].mxu0
    %v2149 = vadd.f32 %v1356, %v2148
    %2150 = vdwg.mxu0
    %v2151 = vadd.f32 %v2076, %v2147
    %v2152 = vxor.u32 %v2151, 2147483648
    %v2153 = vmul.f32 %v2152, 1.442695
    %v2154 = vpow.pop %v2153
    %v2155 = vadd.f32 %v2154, 1.0
    %v2156 = vrcp.pop %v2155
    %v2157 = vmul.f32 1.0, %v2156
    %v2158 = vmul.f32 %v2157, %v2149
    %v2159 = vadd.f32 %v2077, %v2158
    %v2160 = vtanh.pop %v2159
    %v2161 = vsub.f32 1.0, %v2157
    %2163 = vrot.lane.b32.xlu0 %v2160, 64
    %v2164 = vpop.permute.xlu0 %2163
    %v2166 = vmul.f32 %v2161, %v2164
    %v2167 = vmul.f32 %v2157, %v2065
    %v2168 = vadd.f32 %v2166, %v2167
    %2170 = vrot.lane.b32.xlu0 %v2168, 64
    %v2171 = vpop.permute.xlu0 %2170
    %2173 = vst.msk [vmem:[#allocation3 + $0x38] sm:$0xff] %vm408, %v2171
    %2174 = vst.msk [vmem:[#allocation3] sm:$0xff] %vm410, %v2171
    %v2175 = vld [vmem:[#allocation3] sm:$0xff]
    %v2176 = vld [vmem:[#allocation3 + $0x8] sm:$0xff]
    %v2177 = vld [vmem:[#allocation3 + $0x10] sm:$0xff]
    %v2178 = vld [vmem:[#allocation3 + $0x18] sm:$0xff]
    %v2179 = vld [vmem:[#allocation3 + $0x20] sm:$0xff]
    %v2180 = vld [vmem:[#allocation3 + $0x28] sm:$0xff]
    %v2181 = vld [vmem:[#allocation3 + $0x30] sm:$0xff]
    %v2182 = vld [vmem:[#allocation3 + $0x38] sm:$0xff]
    %s2183 = scalar_lea.vmem [#allocation4], 128
    %v2184 = vld [vmem:[%s2183] sm:$0xff]
    %v2185 = vld [vmem:[%s2183 + $0x8] sm:$0xff]
    %v2186 = vld [vmem:[%s2183 + $0x10] sm:$0xff]
    %v2187 = vld [vmem:[%s2183 + $0x18] sm:$0xff]
    %v2188 = vld [vmem:[%s2183 + $0x20] sm:$0xff]
    %v2189 = vld [vmem:[%s2183 + $0x28] sm:$0xff]
    %v2190 = vld [vmem:[%s2183 + $0x30] sm:$0xff]
    %v2191 = vld [vmem:[%s2183 + $0x38] sm:$0xff]
    %v2192 = vld [vmem:[%s2183 + $0x40] sm:$0xff]
    %v2193 = vld [vmem:[%s2183 + $0x48] sm:$0xff]
    %v2194 = vld [vmem:[%s2183 + $0x50] sm:$0xff]
    %v2195 = vld [vmem:[%s2183 + $0x58] sm:$0xff]
    %v2196 = vld [vmem:[%s2183 + $0x60] sm:$0xff]
    %v2197 = vld [vmem:[%s2183 + $0x68] sm:$0xff]
    %v2198 = vld [vmem:[%s2183 + $0x70] sm:$0xff]
    %v2199 = vld [vmem:[%s2183 + $0x78] sm:$0xff]
    %s2200 = scalar_lea.vmem %s4, 4
    %v2201 = vld [vmem:[%s2200] sm:$0x3]
    %v2203 = vlaneseq
    %v2204 = vshrl.u32 %v2203, 7
    %v2205 = vsub.s32 0, %v2204
    %v2206 = vrot.slane %v2201, %v2205
    %v2207 = vlaneseq
    %v2208 = vshrl.u32 %v2207, 7
    %v2209 = vsub.s32 1, %v2208
    %v2210 = vrot.slane %v2201, %v2209
    %v2214 = vsel %vm262, %v2175, 0
    %v2217 = vsel %vm262, %v2176, 0
    %v2220 = vsel %vm262, %v2177, 0
    %v2223 = vsel %vm262, %v2178, 0
    %v2226 = vsel %vm262, %v2179, 0
    %v2229 = vsel %vm262, %v2180, 0
    %v2232 = vsel %vm262, %v2181, 0
    %v2235 = vsel %vm262, %v2182, 0
    %2237 = vmatprep.subr.mxu0 %v2185
    %2238 = vmatpush1.msra.mxu0 %v2184
    %2239 = vmatprep.subr.mxu0 %v2187
    %2240 = vmatpush1.msra.mxu0 %v2186
    %2241 = vmatprep.subr.mxu0 %v2189
    %2242 = vmatpush1.msra.mxu0 %v2188
    %2243 = vmatprep.subr.mxu0 %v2191
    %2244 = vmatpush1.msra.mxu0 %v2190
    %2245 = vmatprep.subr.mxu0 %v2193
    %2246 = vmatpush1.msra.mxu0 %v2192
    %2247 = vmatprep.subr.mxu0 %v2195
    %2248 = vmatpush1.msra.mxu0 %v2194
    %2249 = vmatprep.subr.mxu0 %v2197
    %2250 = vmatpush1.msra.mxu0 %v2196
    %2251 = vmatprep.subr.mxu0 %v2199
    %2252 = vmatpush1.msra.mxu0 %v2198
    %2253 = vmatprep.subr.mxu0 0.0
    %2254 = vmatpush1.msra.mxu0 0.0
    %2255 = vmatprep.subr.mxu0 0.0
    %2256 = vmatpush1.msra.mxu0 0.0
    %2257 = vmatprep.subr.mxu0 0.0
    %2258 = vmatpush1.msra.mxu0 0.0
    %2259 = vmatprep.subr.mxu0 0.0
    %2260 = vmatpush1.msra.mxu0 0.0
    %2261 = vmatprep.subr.mxu0 0.0
    %2262 = vmatpush1.msra.mxu0 0.0
    %2263 = vmatprep.subr.mxu0 0.0
    %2264 = vmatpush1.msra.mxu0 0.0
    %2265 = vmatprep.subr.mxu0 0.0
    %2266 = vmatpush1.msra.mxu0 0.0
    %2267 = vmatprep.subr.mxu0 0.0
    %2268 = vmatpush1.msra.mxu0 0.0
    %2269 = vmatprep.subr.mxu0 0.0
    %2270 = vmatpush1.msra.mxu0 0.0
    %2271 = vmatprep.subr.mxu0 0.0
    %2272 = vmatpush1.msra.mxu0 0.0
    %2273 = vmatprep.subr.mxu0 0.0
    %2274 = vmatpush1.msra.mxu0 0.0
    %2275 = vmatprep.subr.mxu0 0.0
    %2276 = vmatpush1.msra.mxu0 0.0
    %2277 = vmatprep.subr.mxu0 0.0
    %2278 = vmatpush1.msra.mxu0 0.0
    %2279 = vmatprep.subr.mxu0 0.0
    %2280 = vmatpush1.msra.mxu0 0.0
    %2281 = vmatprep.subr.mxu0 0.0
    %2282 = vmatpush1.msra.mxu0 0.0
    %2283 = vmatprep.subr.mxu0 0.0
    %2284 = vmatpush1.msra.mxu0 0.0
    %2285 = vmatprep.subr.mxu0 0.0
    %2286 = vmatpush1.msra.mxu0 0.0
    %2287 = vmatprep.subr.mxu0 0.0
    %2288 = vmatpush1.msra.mxu0 0.0
    %2289 = vmatprep.subr.mxu0 0.0
    %2290 = vmatpush1.msra.mxu0 0.0
    %2291 = vmatprep.subr.mxu0 0.0
    %2292 = vmatpush1.msra.mxu0 0.0
    %2293 = vmatprep.subr.mxu0 0.0
    %2294 = vmatpush1.msra.mxu0 0.0
    %2295 = vmatprep.subr.mxu0 0.0
    %2296 = vmatpush1.msra.mxu0 0.0
    %2297 = vmatprep.subr.mxu0 0.0
    %2298 = vmatpush1.msra.mxu0 0.0
    %2299 = vmatprep.subr.mxu0 0.0
    %2300 = vmatpush1.msra.mxu0 0.0
    %2301 = vmatprep.mubr.f32.mxu0 0.0
    %2302 = vmatmul.mubr.f32.gmra.mrb[0].mxu0 %v2214
    %v2303 = vpop.f32.mrb[0].mxu0
    %v2304 = vadd.f32 %v2206, %v2303
    %v2305 = vpop.f32.mrb[0].mxu0
    %v2306 = vadd.f32 %v2210, %v2305
    %2307 = vmatprep.mubr.f32.mxu0 0.0
    %2308 = vmatmul.mubr.f32.gmra.mrb[0].mxu0 %v2217
    %v2309 = vpop.f32.mrb[0].mxu0
    %v2310 = vadd.f32 %v2206, %v2309
    %v2311 = vpop.f32.mrb[0].mxu0
    %v2312 = vadd.f32 %v2210, %v2311
    %2313 = vmatprep.mubr.f32.mxu0 0.0
    %2314 = vmatmul.mubr.f32.gmra.mrb[0].mxu0 %v2220
    %v2315 = vpop.f32.mrb[0].mxu0
    %v2316 = vadd.f32 %v2206, %v2315
    %v2317 = vpop.f32.mrb[0].mxu0
    %v2318 = vadd.f32 %v2210, %v2317
    %2319 = vmatprep.mubr.f32.mxu0 0.0
    %2320 = vmatmul.mubr.f32.gmra.mrb[0].mxu0 %v2223
    %v2321 = vpop.f32.mrb[0].mxu0
    %v2322 = vadd.f32 %v2206, %v2321
    %v2323 = vpop.f32.mrb[0].mxu0
    %v2324 = vadd.f32 %v2210, %v2323
    %2325 = vmatprep.mubr.f32.mxu0 0.0
    %2326 = vmatmul.mubr.f32.gmra.mrb[0].mxu0 %v2226
    %v2327 = vpop.f32.mrb[0].mxu0
    %v2328 = vadd.f32 %v2206, %v2327
    %v2329 = vpop.f32.mrb[0].mxu0
    %v2330 = vadd.f32 %v2210, %v2329
    %2331 = vmatprep.mubr.f32.mxu0 0.0
    %2332 = vmatmul.mubr.f32.gmra.mrb[0].mxu0 %v2229
    %v2333 = vpop.f32.mrb[0].mxu0
    %v2334 = vadd.f32 %v2206, %v2333
    %v2335 = vpop.f32.mrb[0].mxu0
    %v2336 = vadd.f32 %v2210, %v2335
    %2337 = vmatprep.mubr.f32.mxu0 0.0
    %2338 = vmatmul.mubr.f32.gmra.mrb[0].mxu0 %v2232
    %v2339 = vpop.f32.mrb[0].mxu0
    %v2340 = vadd.f32 %v2206, %v2339
    %v2341 = vpop.f32.mrb[0].mxu0
    %v2342 = vadd.f32 %v2210, %v2341
    %2343 = vmatprep.mubr.f32.mxu0 0.0
    %2344 = vmatmul.mubr.f32.gmra.mrb[0].mxu0 %v2235
    %v2345 = vpop.f32.mrb[0].mxu0
    %v2346 = vadd.f32 %v2206, %v2345
    %v2347 = vpop.f32.mrb[0].mxu0
    %v2348 = vadd.f32 %v2210, %v2347
    %2349 = vdwg.mxu0
    %2350 = vst [vmem:[#allocation2] sm:$0xff] %v2304
    %2351 = vst.msk [vmem:[#allocation2 + $0x8] sm:$0xff] %vm262, %v2306
    %2352 = vst [vmem:[#allocation2 + $0x10] sm:$0xff] %v2310
    %2353 = vst.msk [vmem:[#allocation2 + $0x18] sm:$0xff] %vm262, %v2312
    %2354 = vst [vmem:[#allocation2 + $0x20] sm:$0xff] %v2316
    %2355 = vst.msk [vmem:[#allocation2 + $0x28] sm:$0xff] %vm262, %v2318
    %2356 = vst [vmem:[#allocation2 + $0x30] sm:$0xff] %v2322
    %2357 = vst.msk [vmem:[#allocation2 + $0x38] sm:$0xff] %vm262, %v2324
    %2358 = vst [vmem:[#allocation2 + $0x40] sm:$0xff] %v2328
    %2359 = vst.msk [vmem:[#allocation2 + $0x48] sm:$0xff] %vm262, %v2330
    %2360 = vst [vmem:[#allocation2 + $0x50] sm:$0xff] %v2334
    %2361 = vst.msk [vmem:[#allocation2 + $0x58] sm:$0xff] %vm262, %v2336
    %2362 = vst [vmem:[#allocation2 + $0x60] sm:$0xff] %v2340
    %2363 = vst.msk [vmem:[#allocation2 + $0x68] sm:$0xff] %vm262, %v2342
    %2364 = vst [vmem:[#allocation2 + $0x70] sm:$0xff] %v2346
    %2365 = vst.msk [vmem:[#allocation2 + $0x78] sm:$0xff] %vm262, %v2348
    %s2366 = scalar_lea.vmem [#allocation7], 256
    %v2367 = vld [vmem:[%s2366] sm:$0xff]
    %v2368 = vld [vmem:[%s2366 + $0x8] sm:$0xff]
    %v2369 = vld [vmem:[%s2366 + $0x10] sm:$0xff]
    %v2370 = vld [vmem:[%s2366 + $0x18] sm:$0xff]
    %v2371 = vld [vmem:[%s2366 + $0x20] sm:$0xff]
    %v2372 = vld [vmem:[%s2366 + $0x28] sm:$0xff]
    %v2373 = vld [vmem:[%s2366 + $0x30] sm:$0xff]
    %v2374 = vld [vmem:[%s2366 + $0x38] sm:$0xff]
    %v2375 = vld [vmem:[%s2366 + $0x40] sm:$0xff]
    %v2376 = vld [vmem:[%s2366 + $0x48] sm:$0xff]
    %v2377 = vld [vmem:[%s2366 + $0x50] sm:$0xff]
    %v2378 = vld [vmem:[%s2366 + $0x58] sm:$0xff]
    %v2379 = vld [vmem:[%s2366 + $0x60] sm:$0xff]
    %v2380 = vld [vmem:[%s2366 + $0x68] sm:$0xff]
    %v2381 = vld [vmem:[%s2366 + $0x70] sm:$0xff]
    %v2382 = vld [vmem:[%s2366 + $0x78] sm:$0xff]
    %s2383 = scalar_lea.vmem %s5, 4
    %v2384 = vld [vmem:[%s2383] sm:$0x3]
    %v2385 = vld [vmem:[#allocation2] sm:$0xff]
    %v2386 = vld [vmem:[#allocation2 + $0x8] sm:$0xff]
    %v2387 = vld [vmem:[#allocation2 + $0x70] sm:$0xff]
    %v2388 = vld [vmem:[#allocation2 + $0x78] sm:$0xff]
    %v2389 = vsel %vm97, %v2385, %v2387
    %v2390 = vsel %vm98, %v2386, %v2388
    %v2392 = vlaneseq
    %v2393 = vshrl.u32 %v2392, 7
    %v2394 = vsub.s32 0, %v2393
    %v2395 = vrot.slane %v2384, %v2394
    %v2396 = vlaneseq
    %v2397 = vshrl.u32 %v2396, 7
    %v2398 = vsub.s32 1, %v2397
    %v2399 = vrot.slane %v2384, %v2398
    %2402 = vmatprep.subr.mxu0 %v2368
    %2403 = vmatpush1.msra.mxu0 %v2367
    %2404 = vmatprep.subr.mxu0 %v2370
    %2405 = vmatpush1.msra.mxu0 %v2369
    %2406 = vmatprep.subr.mxu0 %v2372
    %2407 = vmatpush1.msra.mxu0 %v2371
    %2408 = vmatprep.subr.mxu0 %v2374
    %2409 = vmatpush1.msra.mxu0 %v2373
    %2410 = vmatprep.subr.mxu0 %v2376
    %2411 = vmatpush1.msra.mxu0 %v2375
    %2412 = vmatprep.subr.mxu0 %v2378
    %2413 = vmatpush1.msra.mxu0 %v2377
    %2414 = vmatprep.subr.mxu0 %v2380
    %2415 = vmatpush1.msra.mxu0 %v2379
    %2416 = vmatprep.subr.mxu0 %v2382
    %2417 = vmatpush1.msra.mxu0 %v2381
    %2418 = vmatprep.subr.mxu0 0.0
    %2419 = vmatpush1.msra.mxu0 0.0
    %2420 = vmatprep.subr.mxu0 0.0
    %2421 = vmatpush1.msra.mxu0 0.0
    %2422 = vmatprep.subr.mxu0 0.0
    %2423 = vmatpush1.msra.mxu0 0.0
    %2424 = vmatprep.subr.mxu0 0.0
    %2425 = vmatpush1.msra.mxu0 0.0
    %2426 = vmatprep.subr.mxu0 0.0
    %2427 = vmatpush1.msra.mxu0 0.0
    %2428 = vmatprep.subr.mxu0 0.0
    %2429 = vmatpush1.msra.mxu0 0.0
    %2430 = vmatprep.subr.mxu0 0.0
    %2431 = vmatpush1.msra.mxu0 0.0
    %2432 = vmatprep.subr.mxu0 0.0
    %2433 = vmatpush1.msra.mxu0 0.0
    %2434 = vmatprep.subr.mxu0 0.0
    %2435 = vmatpush1.msra.mxu0 0.0
    %2436 = vmatprep.subr.mxu0 0.0
    %2437 = vmatpush1.msra.mxu0 0.0
    %2438 = vmatprep.subr.mxu0 0.0
    %2439 = vmatpush1.msra.mxu0 0.0
    %2440 = vmatprep.subr.mxu0 0.0
    %2441 = vmatpush1.msra.mxu0 0.0
    %2442 = vmatprep.subr.mxu0 0.0
    %2443 = vmatpush1.msra.mxu0 0.0
    %2444 = vmatprep.subr.mxu0 0.0
    %2445 = vmatpush1.msra.mxu0 0.0
    %2446 = vmatprep.subr.mxu0 0.0
    %2447 = vmatpush1.msra.mxu0 0.0
    %2448 = vmatprep.subr.mxu0 0.0
    %2449 = vmatpush1.msra.mxu0 0.0
    %2450 = vmatprep.subr.mxu0 0.0
    %2451 = vmatpush1.msra.mxu0 0.0
    %2452 = vmatprep.subr.mxu0 0.0
    %2453 = vmatpush1.msra.mxu0 0.0
    %2454 = vmatprep.subr.mxu0 0.0
    %2455 = vmatpush1.msra.mxu0 0.0
    %2456 = vmatprep.subr.mxu0 0.0
    %2457 = vmatpush1.msra.mxu0 0.0
    %2458 = vmatprep.subr.mxu0 0.0
    %2459 = vmatpush1.msra.mxu0 0.0
    %2460 = vmatprep.subr.mxu0 0.0
    %2461 = vmatpush1.msra.mxu0 0.0
    %2462 = vmatprep.subr.mxu0 0.0
    %2463 = vmatpush1.msra.mxu0 0.0
    %2464 = vmatprep.subr.mxu0 0.0
    %2465 = vmatpush1.msra.mxu0 0.0
    %2466 = vmatprep.mubr.f32.mxu0 0.0
    %2467 = vmatmul.mubr.f32.gmra.mrb[0].mxu0 %v313
    %v2468 = vpop.f32.mrb[0].mxu0
    %v2469 = vadd.f32 %v2395, %v2468
    %v2470 = vpop.f32.mrb[0].mxu0
    %v2471 = vadd.f32 %v2399, %v2470
    %2472 = vdwg.mxu0
    %v2473 = vadd.f32 %v2389, %v2469
    %v2474 = vxor.u32 %v2473, 2147483648
    %v2475 = vmul.f32 %v2474, 1.442695
    %v2476 = vpow.pop %v2475
    %v2477 = vadd.f32 %v2476, 1.0
    %v2478 = vrcp.pop %v2477
    %v2479 = vmul.f32 1.0, %v2478
    %v2480 = vmul.f32 %v2479, %v2471
    %v2481 = vadd.f32 %v2390, %v2480
    %v2482 = vtanh.pop %v2481
    %v2483 = vsub.f32 1.0, %v2479
    %2485 = vrot.lane.b32.xlu0 %v2482, 64
    %v2486 = vpop.permute.xlu0 %2485
    %v2488 = vmul.f32 %v2483, %v2486
    %v2489 = vmul.f32 %v2479, 0.0
    %v2490 = vadd.f32 %v2488, %v2489
    %2492 = vrot.lane.b32.xlu0 %v2490, 64
    %v2493 = vpop.permute.xlu0 %2492
    %2495 = vst.msk [vmem:[#allocation3] sm:$0xff] %vm408, %v2493
    %2496 = vst.msk [vmem:[#allocation3 + $0x38] sm:$0xff] %vm410, %v2493
    %v2497 = vld [vmem:[#allocation2 + $0x10] sm:$0xff]
    %v2498 = vld [vmem:[#allocation2 + $0x18] sm:$0xff]
    %v2499 = vld [vmem:[#allocation2 + $0x60] sm:$0xff]
    %v2500 = vld [vmem:[#allocation2 + $0x68] sm:$0xff]
    %v2501 = vsel %vm97, %v2497, %v2499
    %v2502 = vsel %vm98, %v2498, %v2500
    %v2503 = vsel %vm262, %v2493, 0
    %2505 = vmatprep.subr.mxu0 %v2368
    %2506 = vmatpush1.msra.mxu0 %v2367
    %2507 = vmatprep.subr.mxu0 %v2370
    %2508 = vmatpush1.msra.mxu0 %v2369
    %2509 = vmatprep.subr.mxu0 %v2372
    %2510 = vmatpush1.msra.mxu0 %v2371
    %2511 = vmatprep.subr.mxu0 %v2374
    %2512 = vmatpush1.msra.mxu0 %v2373
    %2513 = vmatprep.subr.mxu0 %v2376
    %2514 = vmatpush1.msra.mxu0 %v2375
    %2515 = vmatprep.subr.mxu0 %v2378
    %2516 = vmatpush1.msra.mxu0 %v2377
    %2517 = vmatprep.subr.mxu0 %v2380
    %2518 = vmatpush1.msra.mxu0 %v2379
    %2519 = vmatprep.subr.mxu0 %v2382
    %2520 = vmatpush1.msra.mxu0 %v2381
    %2521 = vmatprep.subr.mxu0 0.0
    %2522 = vmatpush1.msra.mxu0 0.0
    %2523 = vmatprep.subr.mxu0 0.0
    %2524 = vmatpush1.msra.mxu0 0.0
    %2525 = vmatprep.subr.mxu0 0.0
    %2526 = vmatpush1.msra.mxu0 0.0
    %2527 = vmatprep.subr.mxu0 0.0
    %2528 = vmatpush1.msra.mxu0 0.0
    %2529 = vmatprep.subr.mxu0 0.0
    %2530 = vmatpush1.msra.mxu0 0.0
    %2531 = vmatprep.subr.mxu0 0.0
    %2532 = vmatpush1.msra.mxu0 0.0
    %2533 = vmatprep.subr.mxu0 0.0
    %2534 = vmatpush1.msra.mxu0 0.0
    %2535 = vmatprep.subr.mxu0 0.0
    %2536 = vmatpush1.msra.mxu0 0.0
    %2537 = vmatprep.subr.mxu0 0.0
    %2538 = vmatpush1.msra.mxu0 0.0
    %2539 = vmatprep.subr.mxu0 0.0
    %2540 = vmatpush1.msra.mxu0 0.0
    %2541 = vmatprep.subr.mxu0 0.0
    %2542 = vmatpush1.msra.mxu0 0.0
    %2543 = vmatprep.subr.mxu0 0.0
    %2544 = vmatpush1.msra.mxu0 0.0
    %2545 = vmatprep.subr.mxu0 0.0
    %2546 = vmatpush1.msra.mxu0 0.0
    %2547 = vmatprep.subr.mxu0 0.0
    %2548 = vmatpush1.msra.mxu0 0.0
    %2549 = vmatprep.subr.mxu0 0.0
    %2550 = vmatpush1.msra.mxu0 0.0
    %2551 = vmatprep.subr.mxu0 0.0
    %2552 = vmatpush1.msra.mxu0 0.0
    %2553 = vmatprep.subr.mxu0 0.0
    %2554 = vmatpush1.msra.mxu0 0.0
    %2555 = vmatprep.subr.mxu0 0.0
    %2556 = vmatpush1.msra.mxu0 0.0
    %2557 = vmatprep.subr.mxu0 0.0
    %2558 = vmatpush1.msra.mxu0 0.0
    %2559 = vmatprep.subr.mxu0 0.0
    %2560 = vmatpush1.msra.mxu0 0.0
    %2561 = vmatprep.subr.mxu0 0.0
    %2562 = vmatpush1.msra.mxu0 0.0
    %2563 = vmatprep.subr.mxu0 0.0
    %2564 = vmatpush1.msra.mxu0 0.0
    %2565 = vmatprep.subr.mxu0 0.0
    %2566 = vmatpush1.msra.mxu0 0.0
    %2567 = vmatprep.subr.mxu0 0.0
    %2568 = vmatpush1.msra.mxu0 0.0
    %2569 = vmatprep.mubr.f32.mxu0 0.0
    %2570 = vmatmul.mubr.f32.gmra.mrb[0].mxu0 %v2503
    %v2571 = vpop.f32.mrb[0].mxu0
    %v2572 = vadd.f32 %v2395, %v2571
    %v2573 = vpop.f32.mrb[0].mxu0
    %v2574 = vadd.f32 %v2399, %v2573
    %2575 = vdwg.mxu0
    %v2576 = vadd.f32 %v2501, %v2572
    %v2577 = vxor.u32 %v2576, 2147483648
    %v2578 = vmul.f32 %v2577, 1.442695
    %v2579 = vpow.pop %v2578
    %v2580 = vadd.f32 %v2579, 1.0
    %v2581 = vrcp.pop %v2580
    %v2582 = vmul.f32 1.0, %v2581
    %v2583 = vmul.f32 %v2582, %v2574
    %v2584 = vadd.f32 %v2502, %v2583
    %v2585 = vtanh.pop %v2584
    %v2586 = vsub.f32 1.0, %v2582
    %2588 = vrot.lane.b32.xlu0 %v2585, 64
    %v2589 = vpop.permute.xlu0 %2588
    %v2591 = vmul.f32 %v2586, %v2589
    %v2592 = vmul.f32 %v2582, %v2490
    %v2593 = vadd.f32 %v2591, %v2592
    %2595 = vrot.lane.b32.xlu0 %v2593, 64
    %v2596 = vpop.permute.xlu0 %2595
    %2598 = vst.msk [vmem:[#allocation3 + $0x8] sm:$0xff] %vm408, %v2596
    %2599 = vst.msk [vmem:[#allocation3 + $0x30] sm:$0xff] %vm410, %v2596
    %v2600 = vld [vmem:[#allocation2 + $0x20] sm:$0xff]
    %v2601 = vld [vmem:[#allocation2 + $0x28] sm:$0xff]
    %v2602 = vld [vmem:[#allocation2 + $0x50] sm:$0xff]
    %v2603 = vld [vmem:[#allocation2 + $0x58] sm:$0xff]
    %v2604 = vsel %vm97, %v2600, %v2602
    %v2605 = vsel %vm98, %v2601, %v2603
    %v2606 = vsel %vm262, %v2596, 0
    %2608 = vmatprep.subr.mxu0 %v2368
    %2609 = vmatpush1.msra.mxu0 %v2367
    %2610 = vmatprep.subr.mxu0 %v2370
    %2611 = vmatpush1.msra.mxu0 %v2369
    %2612 = vmatprep.subr.mxu0 %v2372
    %2613 = vmatpush1.msra.mxu0 %v2371
    %2614 = vmatprep.subr.mxu0 %v2374
    %2615 = vmatpush1.msra.mxu0 %v2373
    %2616 = vmatprep.subr.mxu0 %v2376
    %2617 = vmatpush1.msra.mxu0 %v2375
    %2618 = vmatprep.subr.mxu0 %v2378
    %2619 = vmatpush1.msra.mxu0 %v2377
    %2620 = vmatprep.subr.mxu0 %v2380
    %2621 = vmatpush1.msra.mxu0 %v2379
    %2622 = vmatprep.subr.mxu0 %v2382
    %2623 = vmatpush1.msra.mxu0 %v2381
    %2624 = vmatprep.subr.mxu0 0.0
    %2625 = vmatpush1.msra.mxu0 0.0
    %2626 = vmatprep.subr.mxu0 0.0
    %2627 = vmatpush1.msra.mxu0 0.0
    %2628 = vmatprep.subr.mxu0 0.0
    %2629 = vmatpush1.msra.mxu0 0.0
    %2630 = vmatprep.subr.mxu0 0.0
    %2631 = vmatpush1.msra.mxu0 0.0
    %2632 = vmatprep.subr.mxu0 0.0
    %2633 = vmatpush1.msra.mxu0 0.0
    %2634 = vmatprep.subr.mxu0 0.0
    %2635 = vmatpush1.msra.mxu0 0.0
    %2636 = vmatprep.subr.mxu0 0.0
    %2637 = vmatpush1.msra.mxu0 0.0
    %2638 = vmatprep.subr.mxu0 0.0
    %2639 = vmatpush1.msra.mxu0 0.0
    %2640 = vmatprep.subr.mxu0 0.0
    %2641 = vmatpush1.msra.mxu0 0.0
    %2642 = vmatprep.subr.mxu0 0.0
    %2643 = vmatpush1.msra.mxu0 0.0
    %2644 = vmatprep.subr.mxu0 0.0
    %2645 = vmatpush1.msra.mxu0 0.0
    %2646 = vmatprep.subr.mxu0 0.0
    %2647 = vmatpush1.msra.mxu0 0.0
    %2648 = vmatprep.subr.mxu0 0.0
    %2649 = vmatpush1.msra.mxu0 0.0
    %2650 = vmatprep.subr.mxu0 0.0
    %2651 = vmatpush1.msra.mxu0 0.0
    %2652 = vmatprep.subr.mxu0 0.0
    %2653 = vmatpush1.msra.mxu0 0.0
    %2654 = vmatprep.subr.mxu0 0.0
    %2655 = vmatpush1.msra.mxu0 0.0
    %2656 = vmatprep.subr.mxu0 0.0
    %2657 = vmatpush1.msra.mxu0 0.0
    %2658 = vmatprep.subr.mxu0 0.0
    %2659 = vmatpush1.msra.mxu0 0.0
    %2660 = vmatprep.subr.mxu0 0.0
    %2661 = vmatpush1.msra.mxu0 0.0
    %2662 = vmatprep.subr.mxu0 0.0
    %2663 = vmatpush1.msra.mxu0 0.0
    %2664 = vmatprep.subr.mxu0 0.0
    %2665 = vmatpush1.msra.mxu0 0.0
    %2666 = vmatprep.subr.mxu0 0.0
    %2667 = vmatpush1.msra.mxu0 0.0
    %2668 = vmatprep.subr.mxu0 0.0
    %2669 = vmatpush1.msra.mxu0 0.0
    %2670 = vmatprep.subr.mxu0 0.0
    %2671 = vmatpush1.msra.mxu0 0.0
    %2672 = vmatprep.mubr.f32.mxu0 0.0
    %2673 = vmatmul.mubr.f32.gmra.mrb[0].mxu0 %v2606
    %v2674 = vpop.f32.mrb[0].mxu0
    %v2675 = vadd.f32 %v2395, %v2674
    %v2676 = vpop.f32.mrb[0].mxu0
    %v2677 = vadd.f32 %v2399, %v2676
    %2678 = vdwg.mxu0
    %v2679 = vadd.f32 %v2604, %v2675
    %v2680 = vxor.u32 %v2679, 2147483648
    %v2681 = vmul.f32 %v2680, 1.442695
    %v2682 = vpow.pop %v2681
    %v2683 = vadd.f32 %v2682, 1.0
    %v2684 = vrcp.pop %v2683
    %v2685 = vmul.f32 1.0, %v2684
    %v2686 = vmul.f32 %v2685, %v2677
    %v2687 = vadd.f32 %v2605, %v2686
    %v2688 = vtanh.pop %v2687
    %v2689 = vsub.f32 1.0, %v2685
    %2691 = vrot.lane.b32.xlu0 %v2688, 64
    %v2692 = vpop.permute.xlu0 %2691
    %v2694 = vmul.f32 %v2689, %v2692
    %v2695 = vmul.f32 %v2685, %v2593
    %v2696 = vadd.f32 %v2694, %v2695
    %2698 = vrot.lane.b32.xlu0 %v2696, 64
    %v2699 = vpop.permute.xlu0 %2698
    %2701 = vst.msk [vmem:[#allocation3 + $0x10] sm:$0xff] %vm408, %v2699
    %2702 = vst.msk [vmem:[#allocation3 + $0x28] sm:$0xff] %vm410, %v2699
    %v2703 = vld [vmem:[#allocation2 + $0x30] sm:$0xff]
    %v2704 = vld [vmem:[#allocation2 + $0x38] sm:$0xff]
    %v2705 = vld [vmem:[#allocation2 + $0x40] sm:$0xff]
    %v2706 = vld [vmem:[#allocation2 + $0x48] sm:$0xff]
    %v2707 = vsel %vm97, %v2703, %v2705
    %v2708 = vsel %vm98, %v2704, %v2706
    %v2709 = vsel %vm262, %v2699, 0
    %2711 = vmatprep.subr.mxu0 %v2368
    %2712 = vmatpush1.msra.mxu0 %v2367
    %2713 = vmatprep.subr.mxu0 %v2370
    %2714 = vmatpush1.msra.mxu0 %v2369
    %2715 = vmatprep.subr.mxu0 %v2372
    %2716 = vmatpush1.msra.mxu0 %v2371
    %2717 = vmatprep.subr.mxu0 %v2374
    %2718 = vmatpush1.msra.mxu0 %v2373
    %2719 = vmatprep.subr.mxu0 %v2376
    %2720 = vmatpush1.msra.mxu0 %v2375
    %2721 = vmatprep.subr.mxu0 %v2378
    %2722 = vmatpush1.msra.mxu0 %v2377
    %2723 = vmatprep.subr.mxu0 %v2380
    %2724 = vmatpush1.msra.mxu0 %v2379
    %2725 = vmatprep.subr.mxu0 %v2382
    %2726 = vmatpush1.msra.mxu0 %v2381
    %2727 = vmatprep.subr.mxu0 0.0
    %2728 = vmatpush1.msra.mxu0 0.0
    %2729 = vmatprep.subr.mxu0 0.0
    %2730 = vmatpush1.msra.mxu0 0.0
    %2731 = vmatprep.subr.mxu0 0.0
    %2732 = vmatpush1.msra.mxu0 0.0
    %2733 = vmatprep.subr.mxu0 0.0
    %2734 = vmatpush1.msra.mxu0 0.0
    %2735 = vmatprep.subr.mxu0 0.0
    %2736 = vmatpush1.msra.mxu0 0.0
    %2737 = vmatprep.subr.mxu0 0.0
    %2738 = vmatpush1.msra.mxu0 0.0
    %2739 = vmatprep.subr.mxu0 0.0
    %2740 = vmatpush1.msra.mxu0 0.0
    %2741 = vmatprep.subr.mxu0 0.0
    %2742 = vmatpush1.msra.mxu0 0.0
    %2743 = vmatprep.subr.mxu0 0.0
    %2744 = vmatpush1.msra.mxu0 0.0
    %2745 = vmatprep.subr.mxu0 0.0
    %2746 = vmatpush1.msra.mxu0 0.0
    %2747 = vmatprep.subr.mxu0 0.0
    %2748 = vmatpush1.msra.mxu0 0.0
    %2749 = vmatprep.subr.mxu0 0.0
    %2750 = vmatpush1.msra.mxu0 0.0
    %2751 = vmatprep.subr.mxu0 0.0
    %2752 = vmatpush1.msra.mxu0 0.0
    %2753 = vmatprep.subr.mxu0 0.0
    %2754 = vmatpush1.msra.mxu0 0.0
    %2755 = vmatprep.subr.mxu0 0.0
    %2756 = vmatpush1.msra.mxu0 0.0
    %2757 = vmatprep.subr.mxu0 0.0
    %2758 = vmatpush1.msra.mxu0 0.0
    %2759 = vmatprep.subr.mxu0 0.0
    %2760 = vmatpush1.msra.mxu0 0.0
    %2761 = vmatprep.subr.mxu0 0.0
    %2762 = vmatpush1.msra.mxu0 0.0
    %2763 = vmatprep.subr.mxu0 0.0
    %2764 = vmatpush1.msra.mxu0 0.0
    %2765 = vmatprep.subr.mxu0 0.0
    %2766 = vmatpush1.msra.mxu0 0.0
    %2767 = vmatprep.subr.mxu0 0.0
    %2768 = vmatpush1.msra.mxu0 0.0
    %2769 = vmatprep.subr.mxu0 0.0
    %2770 = vmatpush1.msra.mxu0 0.0
    %2771 = vmatprep.subr.mxu0 0.0
    %2772 = vmatpush1.msra.mxu0 0.0
    %2773 = vmatprep.subr.mxu0 0.0
    %2774 = vmatpush1.msra.mxu0 0.0
    %2775 = vmatprep.mubr.f32.mxu0 0.0
    %2776 = vmatmul.mubr.f32.gmra.mrb[0].mxu0 %v2709
    %v2777 = vpop.f32.mrb[0].mxu0
    %v2778 = vadd.f32 %v2395, %v2777
    %v2779 = vpop.f32.mrb[0].mxu0
    %v2780 = vadd.f32 %v2399, %v2779
    %2781 = vdwg.mxu0
    %v2782 = vadd.f32 %v2707, %v2778
    %v2783 = vxor.u32 %v2782, 2147483648
    %v2784 = vmul.f32 %v2783, 1.442695
    %v2785 = vpow.pop %v2784
    %v2786 = vadd.f32 %v2785, 1.0
    %v2787 = vrcp.pop %v2786
    %v2788 = vmul.f32 1.0, %v2787
    %v2789 = vmul.f32 %v2788, %v2780
    %v2790 = vadd.f32 %v2708, %v2789
    %v2791 = vtanh.pop %v2790
    %v2792 = vsub.f32 1.0, %v2788
    %2794 = vrot.lane.b32.xlu0 %v2791, 64
    %v2795 = vpop.permute.xlu0 %2794
    %v2797 = vmul.f32 %v2792, %v2795
    %v2798 = vmul.f32 %v2788, %v2696
    %v2799 = vadd.f32 %v2797, %v2798
    %2801 = vrot.lane.b32.xlu0 %v2799, 64
    %v2802 = vpop.permute.xlu0 %2801
    %2804 = vst.msk [vmem:[#allocation3 + $0x18] sm:$0xff] %vm408, %v2802
    %2805 = vst.msk [vmem:[#allocation3 + $0x20] sm:$0xff] %vm410, %v2802
    %v2806 = vld [vmem:[#allocation2 + $0x40] sm:$0xff]
    %v2807 = vld [vmem:[#allocation2 + $0x48] sm:$0xff]
    %v2808 = vld [vmem:[#allocation2 + $0x30] sm:$0xff]
    %v2809 = vld [vmem:[#allocation2 + $0x38] sm:$0xff]
    %v2810 = vsel %vm97, %v2806, %v2808
    %v2811 = vsel %vm98, %v2807, %v2809
    %v2812 = vsel %vm262, %v2802, 0
    %2814 = vmatprep.subr.mxu0 %v2368
    %2815 = vmatpush1.msra.mxu0 %v2367
    %2816 = vmatprep.subr.mxu0 %v2370
    %2817 = vmatpush1.msra.mxu0 %v2369
    %2818 = vmatprep.subr.mxu0 %v2372
    %2819 = vmatpush1.msra.mxu0 %v2371
    %2820 = vmatprep.subr.mxu0 %v2374
    %2821 = vmatpush1.msra.mxu0 %v2373
    %2822 = vmatprep.subr.mxu0 %v2376
    %2823 = vmatpush1.msra.mxu0 %v2375
    %2824 = vmatprep.subr.mxu0 %v2378
    %2825 = vmatpush1.msra.mxu0 %v2377
    %2826 = vmatprep.subr.mxu0 %v2380
    %2827 = vmatpush1.msra.mxu0 %v2379
    %2828 = vmatprep.subr.mxu0 %v2382
    %2829 = vmatpush1.msra.mxu0 %v2381
    %2830 = vmatprep.subr.mxu0 0.0
    %2831 = vmatpush1.msra.mxu0 0.0
    %2832 = vmatprep.subr.mxu0 0.0
    %2833 = vmatpush1.msra.mxu0 0.0
    %2834 = vmatprep.subr.mxu0 0.0
    %2835 = vmatpush1.msra.mxu0 0.0
    %2836 = vmatprep.subr.mxu0 0.0
    %2837 = vmatpush1.msra.mxu0 0.0
    %2838 = vmatprep.subr.mxu0 0.0
    %2839 = vmatpush1.msra.mxu0 0.0
    %2840 = vmatprep.subr.mxu0 0.0
    %2841 = vmatpush1.msra.mxu0 0.0
    %2842 = vmatprep.subr.mxu0 0.0
    %2843 = vmatpush1.msra.mxu0 0.0
    %2844 = vmatprep.subr.mxu0 0.0
    %2845 = vmatpush1.msra.mxu0 0.0
    %2846 = vmatprep.subr.mxu0 0.0
    %2847 = vmatpush1.msra.mxu0 0.0
    %2848 = vmatprep.subr.mxu0 0.0
    %2849 = vmatpush1.msra.mxu0 0.0
    %2850 = vmatprep.subr.mxu0 0.0
    %2851 = vmatpush1.msra.mxu0 0.0
    %2852 = vmatprep.subr.mxu0 0.0
    %2853 = vmatpush1.msra.mxu0 0.0
    %2854 = vmatprep.subr.mxu0 0.0
    %2855 = vmatpush1.msra.mxu0 0.0
    %2856 = vmatprep.subr.mxu0 0.0
    %2857 = vmatpush1.msra.mxu0 0.0
    %2858 = vmatprep.subr.mxu0 0.0
    %2859 = vmatpush1.msra.mxu0 0.0
    %2860 = vmatprep.subr.mxu0 0.0
    %2861 = vmatpush1.msra.mxu0 0.0
    %2862 = vmatprep.subr.mxu0 0.0
    %2863 = vmatpush1.msra.mxu0 0.0
    %2864 = vmatprep.subr.mxu0 0.0
    %2865 = vmatpush1.msra.mxu0 0.0
    %2866 = vmatprep.subr.mxu0 0.0
    %2867 = vmatpush1.msra.mxu0 0.0
    %2868 = vmatprep.subr.mxu0 0.0
    %2869 = vmatpush1.msra.mxu0 0.0
    %2870 = vmatprep.subr.mxu0 0.0
    %2871 = vmatpush1.msra.mxu0 0.0
    %2872 = vmatprep.subr.mxu0 0.0
    %2873 = vmatpush1.msra.mxu0 0.0
    %2874 = vmatprep.subr.mxu0 0.0
    %2875 = vmatpush1.msra.mxu0 0.0
    %2876 = vmatprep.subr.mxu0 0.0
    %2877 = vmatpush1.msra.mxu0 0.0
    %2878 = vmatprep.mubr.f32.mxu0 0.0
    %2879 = vmatmul.mubr.f32.gmra.mrb[0].mxu0 %v2812
    %v2880 = vpop.f32.mrb[0].mxu0
    %v2881 = vadd.f32 %v2395, %v2880
    %v2882 = vpop.f32.mrb[0].mxu0
    %v2883 = vadd.f32 %v2399, %v2882
    %2884 = vdwg.mxu0
    %v2885 = vadd.f32 %v2810, %v2881
    %v2886 = vxor.u32 %v2885, 2147483648
    %v2887 = vmul.f32 %v2886, 1.442695
    %v2888 = vpow.pop %v2887
    %v2889 = vadd.f32 %v2888, 1.0
    %v2890 = vrcp.pop %v2889
    %v2891 = vmul.f32 1.0, %v2890
    %v2892 = vmul.f32 %v2891, %v2883
    %v2893 = vadd.f32 %v2811, %v2892
    %v2894 = vtanh.pop %v2893
    %v2895 = vsub.f32 1.0, %v2891
    %2897 = vrot.lane.b32.xlu0 %v2894, 64
    %v2898 = vpop.permute.xlu0 %2897
    %v2900 = vmul.f32 %v2895, %v2898
    %v2901 = vmul.f32 %v2891, %v2799
    %v2902 = vadd.f32 %v2900, %v2901
    %2904 = vrot.lane.b32.xlu0 %v2902, 64
    %v2905 = vpop.permute.xlu0 %2904
    %2907 = vst.msk [vmem:[#allocation3 + $0x20] sm:$0xff] %vm408, %v2905
    %2908 = vst.msk [vmem:[#allocation3 + $0x18] sm:$0xff] %vm410, %v2905
    %v2909 = vld [vmem:[#allocation2 + $0x50] sm:$0xff]
    %v2910 = vld [vmem:[#allocation2 + $0x58] sm:$0xff]
    %v2911 = vld [vmem:[#allocation2 + $0x20] sm:$0xff]
    %v2912 = vld [vmem:[#allocation2 + $0x28] sm:$0xff]
    %v2913 = vsel %vm97, %v2909, %v2911
    %v2914 = vsel %vm98, %v2910, %v2912
    %v2915 = vsel %vm262, %v2905, 0
    %2917 = vmatprep.subr.mxu0 %v2368
    %2918 = vmatpush1.msra.mxu0 %v2367
    %2919 = vmatprep.subr.mxu0 %v2370
    %2920 = vmatpush1.msra.mxu0 %v2369
    %2921 = vmatprep.subr.mxu0 %v2372
    %2922 = vmatpush1.msra.mxu0 %v2371
    %2923 = vmatprep.subr.mxu0 %v2374
    %2924 = vmatpush1.msra.mxu0 %v2373
    %2925 = vmatprep.subr.mxu0 %v2376
    %2926 = vmatpush1.msra.mxu0 %v2375
    %2927 = vmatprep.subr.mxu0 %v2378
    %2928 = vmatpush1.msra.mxu0 %v2377
    %2929 = vmatprep.subr.mxu0 %v2380
    %2930 = vmatpush1.msra.mxu0 %v2379
    %2931 = vmatprep.subr.mxu0 %v2382
    %2932 = vmatpush1.msra.mxu0 %v2381
    %2933 = vmatprep.subr.mxu0 0.0
    %2934 = vmatpush1.msra.mxu0 0.0
    %2935 = vmatprep.subr.mxu0 0.0
    %2936 = vmatpush1.msra.mxu0 0.0
    %2937 = vmatprep.subr.mxu0 0.0
    %2938 = vmatpush1.msra.mxu0 0.0
    %2939 = vmatprep.subr.mxu0 0.0
    %2940 = vmatpush1.msra.mxu0 0.0
    %2941 = vmatprep.subr.mxu0 0.0
    %2942 = vmatpush1.msra.mxu0 0.0
    %2943 = vmatprep.subr.mxu0 0.0
    %2944 = vmatpush1.msra.mxu0 0.0
    %2945 = vmatprep.subr.mxu0 0.0
    %2946 = vmatpush1.msra.mxu0 0.0
    %2947 = vmatprep.subr.mxu0 0.0
    %2948 = vmatpush1.msra.mxu0 0.0
    %2949 = vmatprep.subr.mxu0 0.0
    %2950 = vmatpush1.msra.mxu0 0.0
    %2951 = vmatprep.subr.mxu0 0.0
    %2952 = vmatpush1.msra.mxu0 0.0
    %2953 = vmatprep.subr.mxu0 0.0
    %2954 = vmatpush1.msra.mxu0 0.0
    %2955 = vmatprep.subr.mxu0 0.0
    %2956 = vmatpush1.msra.mxu0 0.0
    %2957 = vmatprep.subr.mxu0 0.0
    %2958 = vmatpush1.msra.mxu0 0.0
    %2959 = vmatprep.subr.mxu0 0.0
    %2960 = vmatpush1.msra.mxu0 0.0
    %2961 = vmatprep.subr.mxu0 0.0
    %2962 = vmatpush1.msra.mxu0 0.0
    %2963 = vmatprep.subr.mxu0 0.0
    %2964 = vmatpush1.msra.mxu0 0.0
    %2965 = vmatprep.subr.mxu0 0.0
    %2966 = vmatpush1.msra.mxu0 0.0
    %2967 = vmatprep.subr.mxu0 0.0
    %2968 = vmatpush1.msra.mxu0 0.0
    %2969 = vmatprep.subr.mxu0 0.0
    %2970 = vmatpush1.msra.mxu0 0.0
    %2971 = vmatprep.subr.mxu0 0.0
    %2972 = vmatpush1.msra.mxu0 0.0
    %2973 = vmatprep.subr.mxu0 0.0
    %2974 = vmatpush1.msra.mxu0 0.0
    %2975 = vmatprep.subr.mxu0 0.0
    %2976 = vmatpush1.msra.mxu0 0.0
    %2977 = vmatprep.subr.mxu0 0.0
    %2978 = vmatpush1.msra.mxu0 0.0
    %2979 = vmatprep.subr.mxu0 0.0
    %2980 = vmatpush1.msra.mxu0 0.0
    %2981 = vmatprep.mubr.f32.mxu0 0.0
    %2982 = vmatmul.mubr.f32.gmra.mrb[0].mxu0 %v2915
    %v2983 = vpop.f32.mrb[0].mxu0
    %v2984 = vadd.f32 %v2395, %v2983
    %v2985 = vpop.f32.mrb[0].mxu0
    %v2986 = vadd.f32 %v2399, %v2985
    %2987 = vdwg.mxu0
    %v2988 = vadd.f32 %v2913, %v2984
    %v2989 = vxor.u32 %v2988, 2147483648
    %v2990 = vmul.f32 %v2989, 1.442695
    %v2991 = vpow.pop %v2990
    %v2992 = vadd.f32 %v2991, 1.0
    %v2993 = vrcp.pop %v2992
    %v2994 = vmul.f32 1.0, %v2993
    %v2995 = vmul.f32 %v2994, %v2986
    %v2996 = vadd.f32 %v2914, %v2995
    %v2997 = vtanh.pop %v2996
    %v2998 = vsub.f32 1.0, %v2994
    %3000 = vrot.lane.b32.xlu0 %v2997, 64
    %v3001 = vpop.permute.xlu0 %3000
    %v3003 = vmul.f32 %v2998, %v3001
    %v3004 = vmul.f32 %v2994, %v2902
    %v3005 = vadd.f32 %v3003, %v3004
    %3007 = vrot.lane.b32.xlu0 %v3005, 64
    %v3008 = vpop.permute.xlu0 %3007
    %3010 = vst.msk [vmem:[#allocation3 + $0x28] sm:$0xff] %vm408, %v3008
    %3011 = vst.msk [vmem:[#allocation3 + $0x10] sm:$0xff] %vm410, %v3008
    %v3012 = vld [vmem:[#allocation2 + $0x60] sm:$0xff]
    %v3013 = vld [vmem:[#allocation2 + $0x68] sm:$0xff]
    %v3014 = vld [vmem:[#allocation2 + $0x10] sm:$0xff]
    %v3015 = vld [vmem:[#allocation2 + $0x18] sm:$0xff]
    %v3016 = vsel %vm97, %v3012, %v3014
    %v3017 = vsel %vm98, %v3013, %v3015
    %v3018 = vsel %vm262, %v3008, 0
    %3020 = vmatprep.subr.mxu0 %v2368
    %3021 = vmatpush1.msra.mxu0 %v2367
    %3022 = vmatprep.subr.mxu0 %v2370
    %3023 = vmatpush1.msra.mxu0 %v2369
    %3024 = vmatprep.subr.mxu0 %v2372
    %3025 = vmatpush1.msra.mxu0 %v2371
    %3026 = vmatprep.subr.mxu0 %v2374
    %3027 = vmatpush1.msra.mxu0 %v2373
    %3028 = vmatprep.subr.mxu0 %v2376
    %3029 = vmatpush1.msra.mxu0 %v2375
    %3030 = vmatprep.subr.mxu0 %v2378
    %3031 = vmatpush1.msra.mxu0 %v2377
    %3032 = vmatprep.subr.mxu0 %v2380
    %3033 = vmatpush1.msra.mxu0 %v2379
    %3034 = vmatprep.subr.mxu0 %v2382
    %3035 = vmatpush1.msra.mxu0 %v2381
    %3036 = vmatprep.subr.mxu0 0.0
    %3037 = vmatpush1.msra.mxu0 0.0
    %3038 = vmatprep.subr.mxu0 0.0
    %3039 = vmatpush1.msra.mxu0 0.0
    %3040 = vmatprep.subr.mxu0 0.0
    %3041 = vmatpush1.msra.mxu0 0.0
    %3042 = vmatprep.subr.mxu0 0.0
    %3043 = vmatpush1.msra.mxu0 0.0
    %3044 = vmatprep.subr.mxu0 0.0
    %3045 = vmatpush1.msra.mxu0 0.0
    %3046 = vmatprep.subr.mxu0 0.0
    %3047 = vmatpush1.msra.mxu0 0.0
    %3048 = vmatprep.subr.mxu0 0.0
    %3049 = vmatpush1.msra.mxu0 0.0
    %3050 = vmatprep.subr.mxu0 0.0
    %3051 = vmatpush1.msra.mxu0 0.0
    %3052 = vmatprep.subr.mxu0 0.0
    %3053 = vmatpush1.msra.mxu0 0.0
    %3054 = vmatprep.subr.mxu0 0.0
    %3055 = vmatpush1.msra.mxu0 0.0
    %3056 = vmatprep.subr.mxu0 0.0
    %3057 = vmatpush1.msra.mxu0 0.0
    %3058 = vmatprep.subr.mxu0 0.0
    %3059 = vmatpush1.msra.mxu0 0.0
    %3060 = vmatprep.subr.mxu0 0.0
    %3061 = vmatpush1.msra.mxu0 0.0
    %3062 = vmatprep.subr.mxu0 0.0
    %3063 = vmatpush1.msra.mxu0 0.0
    %3064 = vmatprep.subr.mxu0 0.0
    %3065 = vmatpush1.msra.mxu0 0.0
    %3066 = vmatprep.subr.mxu0 0.0
    %3067 = vmatpush1.msra.mxu0 0.0
    %3068 = vmatprep.subr.mxu0 0.0
    %3069 = vmatpush1.msra.mxu0 0.0
    %3070 = vmatprep.subr.mxu0 0.0
    %3071 = vmatpush1.msra.mxu0 0.0
    %3072 = vmatprep.subr.mxu0 0.0
    %3073 = vmatpush1.msra.mxu0 0.0
    %3074 = vmatprep.subr.mxu0 0.0
    %3075 = vmatpush1.msra.mxu0 0.0
    %3076 = vmatprep.subr.mxu0 0.0
    %3077 = vmatpush1.msra.mxu0 0.0
    %3078 = vmatprep.subr.mxu0 0.0
    %3079 = vmatpush1.msra.mxu0 0.0
    %3080 = vmatprep.subr.mxu0 0.0
    %3081 = vmatpush1.msra.mxu0 0.0
    %3082 = vmatprep.subr.mxu0 0.0
    %3083 = vmatpush1.msra.mxu0 0.0
    %3084 = vmatprep.mubr.f32.mxu0 0.0
    %3085 = vmatmul.mubr.f32.gmra.mrb[0].mxu0 %v3018
    %v3086 = vpop.f32.mrb[0].mxu0
    %v3087 = vadd.f32 %v2395, %v3086
    %v3088 = vpop.f32.mrb[0].mxu0
    %v3089 = vadd.f32 %v2399, %v3088
    %3090 = vdwg.mxu0
    %v3091 = vadd.f32 %v3016, %v3087
    %v3092 = vxor.u32 %v3091, 2147483648
    %v3093 = vmul.f32 %v3092, 1.442695
    %v3094 = vpow.pop %v3093
    %v3095 = vadd.f32 %v3094, 1.0
    %v3096 = vrcp.pop %v3095
    %v3097 = vmul.f32 1.0, %v3096
    %v3098 = vmul.f32 %v3097, %v3089
    %v3099 = vadd.f32 %v3017, %v3098
    %v3100 = vtanh.pop %v3099
    %v3101 = vsub.f32 1.0, %v3097
    %3103 = vrot.lane.b32.xlu0 %v3100, 64
    %v3104 = vpop.permute.xlu0 %3103
    %v3106 = vmul.f32 %v3101, %v3104
    %v3107 = vmul.f32 %v3097, %v3005
    %v3108 = vadd.f32 %v3106, %v3107
    %3110 = vrot.lane.b32.xlu0 %v3108, 64
    %v3111 = vpop.permute.xlu0 %3110
    %3113 = vst.msk [vmem:[#allocation3 + $0x30] sm:$0xff] %vm408, %v3111
    %3114 = vst.msk [vmem:[#allocation3 + $0x8] sm:$0xff] %vm410, %v3111
    %v3115 = vld [vmem:[#allocation2 + $0x70] sm:$0xff]
    %v3116 = vld [vmem:[#allocation2 + $0x78] sm:$0xff]
    %v3117 = vld [vmem:[#allocation2] sm:$0xff]
    %v3118 = vld [vmem:[#allocation2 + $0x8] sm:$0xff]
    %v3119 = vsel %vm97, %v3115, %v3117
    %v3120 = vsel %vm98, %v3116, %v3118
    %v3121 = vsel %vm262, %v3111, 0
    %3123 = vmatprep.subr.mxu0 %v2368
    %3124 = vmatpush1.msra.mxu0 %v2367
    %3125 = vmatprep.subr.mxu0 %v2370
    %3126 = vmatpush1.msra.mxu0 %v2369
    %3127 = vmatprep.subr.mxu0 %v2372
    %3128 = vmatpush1.msra.mxu0 %v2371
    %3129 = vmatprep.subr.mxu0 %v2374
    %3130 = vmatpush1.msra.mxu0 %v2373
    %3131 = vmatprep.subr.mxu0 %v2376
    %3132 = vmatpush1.msra.mxu0 %v2375
    %3133 = vmatprep.subr.mxu0 %v2378
    %3134 = vmatpush1.msra.mxu0 %v2377
    %3135 = vmatprep.subr.mxu0 %v2380
    %3136 = vmatpush1.msra.mxu0 %v2379
    %3137 = vmatprep.subr.mxu0 %v2382
    %3138 = vmatpush1.msra.mxu0 %v2381
    %3139 = vmatprep.subr.mxu0 0.0
    %3140 = vmatpush1.msra.mxu0 0.0
    %3141 = vmatprep.subr.mxu0 0.0
    %3142 = vmatpush1.msra.mxu0 0.0
    %3143 = vmatprep.subr.mxu0 0.0
    %3144 = vmatpush1.msra.mxu0 0.0
    %3145 = vmatprep.subr.mxu0 0.0
    %3146 = vmatpush1.msra.mxu0 0.0
    %3147 = vmatprep.subr.mxu0 0.0
    %3148 = vmatpush1.msra.mxu0 0.0
    %3149 = vmatprep.subr.mxu0 0.0
    %3150 = vmatpush1.msra.mxu0 0.0
    %3151 = vmatprep.subr.mxu0 0.0
    %3152 = vmatpush1.msra.mxu0 0.0
    %3153 = vmatprep.subr.mxu0 0.0
    %3154 = vmatpush1.msra.mxu0 0.0
    %3155 = vmatprep.subr.mxu0 0.0
    %3156 = vmatpush1.msra.mxu0 0.0
    %3157 = vmatprep.subr.mxu0 0.0
    %3158 = vmatpush1.msra.mxu0 0.0
    %3159 = vmatprep.subr.mxu0 0.0
    %3160 = vmatpush1.msra.mxu0 0.0
    %3161 = vmatprep.subr.mxu0 0.0
    %3162 = vmatpush1.msra.mxu0 0.0
    %3163 = vmatprep.subr.mxu0 0.0
    %3164 = vmatpush1.msra.mxu0 0.0
    %3165 = vmatprep.subr.mxu0 0.0
    %3166 = vmatpush1.msra.mxu0 0.0
    %3167 = vmatprep.subr.mxu0 0.0
    %3168 = vmatpush1.msra.mxu0 0.0
    %3169 = vmatprep.subr.mxu0 0.0
    %3170 = vmatpush1.msra.mxu0 0.0
    %3171 = vmatprep.subr.mxu0 0.0
    %3172 = vmatpush1.msra.mxu0 0.0
    %3173 = vmatprep.subr.mxu0 0.0
    %3174 = vmatpush1.msra.mxu0 0.0
    %3175 = vmatprep.subr.mxu0 0.0
    %3176 = vmatpush1.msra.mxu0 0.0
    %3177 = vmatprep.subr.mxu0 0.0
    %3178 = vmatpush1.msra.mxu0 0.0
    %3179 = vmatprep.subr.mxu0 0.0
    %3180 = vmatpush1.msra.mxu0 0.0
    %3181 = vmatprep.subr.mxu0 0.0
    %3182 = vmatpush1.msra.mxu0 0.0
    %3183 = vmatprep.subr.mxu0 0.0
    %3184 = vmatpush1.msra.mxu0 0.0
    %3185 = vmatprep.subr.mxu0 0.0
    %3186 = vmatpush1.msra.mxu0 0.0
    %3187 = vmatprep.mubr.f32.mxu0 0.0
    %3188 = vmatmul.mubr.f32.gmra.mrb[0].mxu0 %v3121
    %v3189 = vpop.f32.mrb[0].mxu0
    %v3190 = vadd.f32 %v2395, %v3189
    %v3191 = vpop.f32.mrb[0].mxu0
    %v3192 = vadd.f32 %v2399, %v3191
    %3193 = vdwg.mxu0
    %v3194 = vadd.f32 %v3119, %v3190
    %v3195 = vxor.u32 %v3194, 2147483648
    %v3196 = vmul.f32 %v3195, 1.442695
    %v3197 = vpow.pop %v3196
    %v3198 = vadd.f32 %v3197, 1.0
    %v3199 = vrcp.pop %v3198
    %v3200 = vmul.f32 1.0, %v3199
    %v3201 = vmul.f32 %v3200, %v3192
    %v3202 = vadd.f32 %v3120, %v3201
    %v3203 = vtanh.pop %v3202
    %v3204 = vsub.f32 1.0, %v3200
    %3206 = vrot.lane.b32.xlu0 %v3203, 64
    %v3207 = vpop.permute.xlu0 %3206
    %v3209 = vmul.f32 %v3204, %v3207
    %v3210 = vmul.f32 %v3200, %v3108
    %v3211 = vadd.f32 %v3209, %v3210
    %3213 = vrot.lane.b32.xlu0 %v3211, 64
    %v3214 = vpop.permute.xlu0 %3213
    %3216 = vst.msk [vmem:[#allocation3 + $0x38] sm:$0xff] %vm408, %v3214
    %3217 = vst.msk [vmem:[#allocation3] sm:$0xff] %vm410, %v3214
    %v3218 = vld [vmem:[#allocation3] sm:$0xff]
    %v3219 = vld [vmem:[#allocation3 + $0x8] sm:$0xff]
    %v3220 = vld [vmem:[#allocation3 + $0x10] sm:$0xff]
    %v3221 = vld [vmem:[#allocation3 + $0x18] sm:$0xff]
    %v3222 = vld [vmem:[#allocation3 + $0x20] sm:$0xff]
    %v3223 = vld [vmem:[#allocation3 + $0x28] sm:$0xff]
    %v3224 = vld [vmem:[#allocation3 + $0x30] sm:$0xff]
    %v3225 = vld [vmem:[#allocation3 + $0x38] sm:$0xff]
    %s3226 = scalar_lea.vmem [#allocation4], 256
    %v3227 = vld [vmem:[%s3226] sm:$0xff]
    %v3228 = vld [vmem:[%s3226 + $0x8] sm:$0xff]
    %v3229 = vld [vmem:[%s3226 + $0x10] sm:$0xff]
    %v3230 = vld [vmem:[%s3226 + $0x18] sm:$0xff]
    %v3231 = vld [vmem:[%s3226 + $0x20] sm:$0xff]
    %v3232 = vld [vmem:[%s3226 + $0x28] sm:$0xff]
    %v3233 = vld [vmem:[%s3226 + $0x30] sm:$0xff]
    %v3234 = vld [vmem:[%s3226 + $0x38] sm:$0xff]
    %v3235 = vld [vmem:[%s3226 + $0x40] sm:$0xff]
    %v3236 = vld [vmem:[%s3226 + $0x48] sm:$0xff]
    %v3237 = vld [vmem:[%s3226 + $0x50] sm:$0xff]
    %v3238 = vld [vmem:[%s3226 + $0x58] sm:$0xff]
    %v3239 = vld [vmem:[%s3226 + $0x60] sm:$0xff]
    %v3240 = vld [vmem:[%s3226 + $0x68] sm:$0xff]
    %v3241 = vld [vmem:[%s3226 + $0x70] sm:$0xff]
    %v3242 = vld [vmem:[%s3226 + $0x78] sm:$0xff]
    %s3243 = scalar_lea.vmem %s4, 6
    %v3244 = vld [vmem:[%s3243] sm:$0x3]
    %v3246 = vlaneseq
    %v3247 = vshrl.u32 %v3246, 7
    %v3248 = vsub.s32 0, %v3247
    %v3249 = vrot.slane %v3244, %v3248
    %v3250 = vlaneseq
    %v3251 = vshrl.u32 %v3250, 7
    %v3252 = vsub.s32 1, %v3251
    %v3253 = vrot.slane %v3244, %v3252
    %v3257 = vsel %vm262, %v3218, 0
    %v3260 = vsel %vm262, %v3219, 0
    %v3263 = vsel %vm262, %v3220, 0
    %v3266 = vsel %vm262, %v3221, 0
    %v3269 = vsel %vm262, %v3222, 0
    %v3272 = vsel %vm262, %v3223, 0
    %v3275 = vsel %vm262, %v3224, 0
    %v3278 = vsel %vm262, %v3225, 0
    %3280 = vmatprep.subr.mxu0 %v3228
    %3281 = vmatpush1.msra.mxu0 %v3227
    %3282 = vmatprep.subr.mxu0 %v3230
    %3283 = vmatpush1.msra.mxu0 %v3229
    %3284 = vmatprep.subr.mxu0 %v3232
    %3285 = vmatpush1.msra.mxu0 %v3231
    %3286 = vmatprep.subr.mxu0 %v3234
    %3287 = vmatpush1.msra.mxu0 %v3233
    %3288 = vmatprep.subr.mxu0 %v3236
    %3289 = vmatpush1.msra.mxu0 %v3235
    %3290 = vmatprep.subr.mxu0 %v3238
    %3291 = vmatpush1.msra.mxu0 %v3237
    %3292 = vmatprep.subr.mxu0 %v3240
    %3293 = vmatpush1.msra.mxu0 %v3239
    %3294 = vmatprep.subr.mxu0 %v3242
    %3295 = vmatpush1.msra.mxu0 %v3241
    %3296 = vmatprep.subr.mxu0 0.0
    %3297 = vmatpush1.msra.mxu0 0.0
    %3298 = vmatprep.subr.mxu0 0.0
    %3299 = vmatpush1.msra.mxu0 0.0
    %3300 = vmatprep.subr.mxu0 0.0
    %3301 = vmatpush1.msra.mxu0 0.0
    %3302 = vmatprep.subr.mxu0 0.0
    %3303 = vmatpush1.msra.mxu0 0.0
    %3304 = vmatprep.subr.mxu0 0.0
    %3305 = vmatpush1.msra.mxu0 0.0
    %3306 = vmatprep.subr.mxu0 0.0
    %3307 = vmatpush1.msra.mxu0 0.0
    %3308 = vmatprep.subr.mxu0 0.0
    %3309 = vmatpush1.msra.mxu0 0.0
    %3310 = vmatprep.subr.mxu0 0.0
    %3311 = vmatpush1.msra.mxu0 0.0
    %3312 = vmatprep.subr.mxu0 0.0
    %3313 = vmatpush1.msra.mxu0 0.0
    %3314 = vmatprep.subr.mxu0 0.0
    %3315 = vmatpush1.msra.mxu0 0.0
    %3316 = vmatprep.subr.mxu0 0.0
    %3317 = vmatpush1.msra.mxu0 0.0
    %3318 = vmatprep.subr.mxu0 0.0
    %3319 = vmatpush1.msra.mxu0 0.0
    %3320 = vmatprep.subr.mxu0 0.0
    %3321 = vmatpush1.msra.mxu0 0.0
    %3322 = vmatprep.subr.mxu0 0.0
    %3323 = vmatpush1.msra.mxu0 0.0
    %3324 = vmatprep.subr.mxu0 0.0
    %3325 = vmatpush1.msra.mxu0 0.0
    %3326 = vmatprep.subr.mxu0 0.0
    %3327 = vmatpush1.msra.mxu0 0.0
    %3328 = vmatprep.subr.mxu0 0.0
    %3329 = vmatpush1.msra.mxu0 0.0
    %3330 = vmatprep.subr.mxu0 0.0
    %3331 = vmatpush1.msra.mxu0 0.0
    %3332 = vmatprep.subr.mxu0 0.0
    %3333 = vmatpush1.msra.mxu0 0.0
    %3334 = vmatprep.subr.mxu0 0.0
    %3335 = vmatpush1.msra.mxu0 0.0
    %3336 = vmatprep.subr.mxu0 0.0
    %3337 = vmatpush1.msra.mxu0 0.0
    %3338 = vmatprep.subr.mxu0 0.0
    %3339 = vmatpush1.msra.mxu0 0.0
    %3340 = vmatprep.subr.mxu0 0.0
    %3341 = vmatpush1.msra.mxu0 0.0
    %3342 = vmatprep.subr.mxu0 0.0
    %3343 = vmatpush1.msra.mxu0 0.0
    %3344 = vmatprep.mubr.f32.mxu0 0.0
    %3345 = vmatmul.mubr.f32.gmra.mrb[0].mxu0 %v3257
    %v3346 = vpop.f32.mrb[0].mxu0
    %v3347 = vadd.f32 %v3249, %v3346
    %v3348 = vpop.f32.mrb[0].mxu0
    %v3349 = vadd.f32 %v3253, %v3348
    %3350 = vmatprep.mubr.f32.mxu0 0.0
    %3351 = vmatmul.mubr.f32.gmra.mrb[0].mxu0 %v3260
    %v3352 = vpop.f32.mrb[0].mxu0
    %v3353 = vadd.f32 %v3249, %v3352
    %v3354 = vpop.f32.mrb[0].mxu0
    %v3355 = vadd.f32 %v3253, %v3354
    %3356 = vmatprep.mubr.f32.mxu0 0.0
    %3357 = vmatmul.mubr.f32.gmra.mrb[0].mxu0 %v3263
    %v3358 = vpop.f32.mrb[0].mxu0
    %v3359 = vadd.f32 %v3249, %v3358
    %v3360 = vpop.f32.mrb[0].mxu0
    %v3361 = vadd.f32 %v3253, %v3360
    %3362 = vmatprep.mubr.f32.mxu0 0.0
    %3363 = vmatmul.mubr.f32.gmra.mrb[0].mxu0 %v3266
    %v3364 = vpop.f32.mrb[0].mxu0
    %v3365 = vadd.f32 %v3249, %v3364
    %v3366 = vpop.f32.mrb[0].mxu0
    %v3367 = vadd.f32 %v3253, %v3366
    %3368 = vmatprep.mubr.f32.mxu0 0.0
    %3369 = vmatmul.mubr.f32.gmra.mrb[0].mxu0 %v3269
    %v3370 = vpop.f32.mrb[0].mxu0
    %v3371 = vadd.f32 %v3249, %v3370
    %v3372 = vpop.f32.mrb[0].mxu0
    %v3373 = vadd.f32 %v3253, %v3372
    %3374 = vmatprep.mubr.f32.mxu0 0.0
    %3375 = vmatmul.mubr.f32.gmra.mrb[0].mxu0 %v3272
    %v3376 = vpop.f32.mrb[0].mxu0
    %v3377 = vadd.f32 %v3249, %v3376
    %v3378 = vpop.f32.mrb[0].mxu0
    %v3379 = vadd.f32 %v3253, %v3378
    %3380 = vmatprep.mubr.f32.mxu0 0.0
    %3381 = vmatmul.mubr.f32.gmra.mrb[0].mxu0 %v3275
    %v3382 = vpop.f32.mrb[0].mxu0
    %v3383 = vadd.f32 %v3249, %v3382
    %v3384 = vpop.f32.mrb[0].mxu0
    %v3385 = vadd.f32 %v3253, %v3384
    %3386 = vmatprep.mubr.f32.mxu0 0.0
    %3387 = vmatmul.mubr.f32.gmra.mrb[0].mxu0 %v3278
    %v3388 = vpop.f32.mrb[0].mxu0
    %v3389 = vadd.f32 %v3249, %v3388
    %v3390 = vpop.f32.mrb[0].mxu0
    %v3391 = vadd.f32 %v3253, %v3390
    %3392 = vdwg.mxu0
    %3393 = vst [vmem:[#allocation2] sm:$0xff] %v3347
    %3394 = vst.msk [vmem:[#allocation2 + $0x8] sm:$0xff] %vm262, %v3349
    %3395 = vst [vmem:[#allocation2 + $0x10] sm:$0xff] %v3353
    %3396 = vst.msk [vmem:[#allocation2 + $0x18] sm:$0xff] %vm262, %v3355
    %3397 = vst [vmem:[#allocation2 + $0x20] sm:$0xff] %v3359
    %3398 = vst.msk [vmem:[#allocation2 + $0x28] sm:$0xff] %vm262, %v3361
    %3399 = vst [vmem:[#allocation2 + $0x30] sm:$0xff] %v3365
    %3400 = vst.msk [vmem:[#allocation2 + $0x38] sm:$0xff] %vm262, %v3367
    %3401 = vst [vmem:[#allocation2 + $0x40] sm:$0xff] %v3371
    %3402 = vst.msk [vmem:[#allocation2 + $0x48] sm:$0xff] %vm262, %v3373
    %3403 = vst [vmem:[#allocation2 + $0x50] sm:$0xff] %v3377
    %3404 = vst.msk [vmem:[#allocation2 + $0x58] sm:$0xff] %vm262, %v3379
    %3405 = vst [vmem:[#allocation2 + $0x60] sm:$0xff] %v3383
    %3406 = vst.msk [vmem:[#allocation2 + $0x68] sm:$0xff] %vm262, %v3385
    %3407 = vst [vmem:[#allocation2 + $0x70] sm:$0xff] %v3389
    %3408 = vst.msk [vmem:[#allocation2 + $0x78] sm:$0xff] %vm262, %v3391
    %s3409 = scalar_lea.vmem [#allocation7], 384
    %v3410 = vld [vmem:[%s3409] sm:$0xff]
    %v3411 = vld [vmem:[%s3409 + $0x8] sm:$0xff]
    %v3412 = vld [vmem:[%s3409 + $0x10] sm:$0xff]
    %v3413 = vld [vmem:[%s3409 + $0x18] sm:$0xff]
    %v3414 = vld [vmem:[%s3409 + $0x20] sm:$0xff]
    %v3415 = vld [vmem:[%s3409 + $0x28] sm:$0xff]
    %v3416 = vld [vmem:[%s3409 + $0x30] sm:$0xff]
    %v3417 = vld [vmem:[%s3409 + $0x38] sm:$0xff]
    %v3418 = vld [vmem:[%s3409 + $0x40] sm:$0xff]
    %v3419 = vld [vmem:[%s3409 + $0x48] sm:$0xff]
    %v3420 = vld [vmem:[%s3409 + $0x50] sm:$0xff]
    %v3421 = vld [vmem:[%s3409 + $0x58] sm:$0xff]
    %v3422 = vld [vmem:[%s3409 + $0x60] sm:$0xff]
    %v3423 = vld [vmem:[%s3409 + $0x68] sm:$0xff]
    %v3424 = vld [vmem:[%s3409 + $0x70] sm:$0xff]
    %v3425 = vld [vmem:[%s3409 + $0x78] sm:$0xff]
    %s3426 = scalar_lea.vmem %s5, 6
    %v3427 = vld [vmem:[%s3426] sm:$0x3]
    %v3428 = vld [vmem:[#allocation2] sm:$0xff]
    %v3429 = vld [vmem:[#allocation2 + $0x8] sm:$0xff]
    %v3430 = vld [vmem:[#allocation2 + $0x70] sm:$0xff]
    %v3431 = vld [vmem:[#allocation2 + $0x78] sm:$0xff]
    %v3432 = vsel %vm97, %v3428, %v3430
    %v3433 = vsel %vm98, %v3429, %v3431
    %v3435 = vlaneseq
    %v3436 = vshrl.u32 %v3435, 7
    %v3437 = vsub.s32 0, %v3436
    %v3438 = vrot.slane %v3427, %v3437
    %v3439 = vlaneseq
    %v3440 = vshrl.u32 %v3439, 7
    %v3441 = vsub.s32 1, %v3440
    %v3442 = vrot.slane %v3427, %v3441
    %3445 = vmatprep.subr.mxu0 %v3411
    %3446 = vmatpush1.msra.mxu0 %v3410
    %3447 = vmatprep.subr.mxu0 %v3413
    %3448 = vmatpush1.msra.mxu0 %v3412
    %3449 = vmatprep.subr.mxu0 %v3415
    %3450 = vmatpush1.msra.mxu0 %v3414
    %3451 = vmatprep.subr.mxu0 %v3417
    %3452 = vmatpush1.msra.mxu0 %v3416
    %3453 = vmatprep.subr.mxu0 %v3419
    %3454 = vmatpush1.msra.mxu0 %v3418
    %3455 = vmatprep.subr.mxu0 %v3421
    %3456 = vmatpush1.msra.mxu0 %v3420
    %3457 = vmatprep.subr.mxu0 %v3423
    %3458 = vmatpush1.msra.mxu0 %v3422
    %3459 = vmatprep.subr.mxu0 %v3425
    %3460 = vmatpush1.msra.mxu0 %v3424
    %3461 = vmatprep.subr.mxu0 0.0
    %3462 = vmatpush1.msra.mxu0 0.0
    %3463 = vmatprep.subr.mxu0 0.0
    %3464 = vmatpush1.msra.mxu0 0.0
    %3465 = vmatprep.subr.mxu0 0.0
    %3466 = vmatpush1.msra.mxu0 0.0
    %3467 = vmatprep.subr.mxu0 0.0
    %3468 = vmatpush1.msra.mxu0 0.0
    %3469 = vmatprep.subr.mxu0 0.0
    %3470 = vmatpush1.msra.mxu0 0.0
    %3471 = vmatprep.subr.mxu0 0.0
    %3472 = vmatpush1.msra.mxu0 0.0
    %3473 = vmatprep.subr.mxu0 0.0
    %3474 = vmatpush1.msra.mxu0 0.0
    %3475 = vmatprep.subr.mxu0 0.0
    %3476 = vmatpush1.msra.mxu0 0.0
    %3477 = vmatprep.subr.mxu0 0.0
    %3478 = vmatpush1.msra.mxu0 0.0
    %3479 = vmatprep.subr.mxu0 0.0
    %3480 = vmatpush1.msra.mxu0 0.0
    %3481 = vmatprep.subr.mxu0 0.0
    %3482 = vmatpush1.msra.mxu0 0.0
    %3483 = vmatprep.subr.mxu0 0.0
    %3484 = vmatpush1.msra.mxu0 0.0
    %3485 = vmatprep.subr.mxu0 0.0
    %3486 = vmatpush1.msra.mxu0 0.0
    %3487 = vmatprep.subr.mxu0 0.0
    %3488 = vmatpush1.msra.mxu0 0.0
    %3489 = vmatprep.subr.mxu0 0.0
    %3490 = vmatpush1.msra.mxu0 0.0
    %3491 = vmatprep.subr.mxu0 0.0
    %3492 = vmatpush1.msra.mxu0 0.0
    %3493 = vmatprep.subr.mxu0 0.0
    %3494 = vmatpush1.msra.mxu0 0.0
    %3495 = vmatprep.subr.mxu0 0.0
    %3496 = vmatpush1.msra.mxu0 0.0
    %3497 = vmatprep.subr.mxu0 0.0
    %3498 = vmatpush1.msra.mxu0 0.0
    %3499 = vmatprep.subr.mxu0 0.0
    %3500 = vmatpush1.msra.mxu0 0.0
    %3501 = vmatprep.subr.mxu0 0.0
    %3502 = vmatpush1.msra.mxu0 0.0
    %3503 = vmatprep.subr.mxu0 0.0
    %3504 = vmatpush1.msra.mxu0 0.0
    %3505 = vmatprep.subr.mxu0 0.0
    %3506 = vmatpush1.msra.mxu0 0.0
    %3507 = vmatprep.subr.mxu0 0.0
    %3508 = vmatpush1.msra.mxu0 0.0
    %3509 = vmatprep.mubr.f32.mxu0 0.0
    %3510 = vmatmul.mubr.f32.gmra.mrb[0].mxu0 %v313
    %v3511 = vpop.f32.mrb[0].mxu0
    %v3512 = vadd.f32 %v3438, %v3511
    %v3513 = vpop.f32.mrb[0].mxu0
    %v3514 = vadd.f32 %v3442, %v3513
    %3515 = vdwg.mxu0
    %v3516 = vadd.f32 %v3432, %v3512
    %v3517 = vxor.u32 %v3516, 2147483648
    %v3518 = vmul.f32 %v3517, 1.442695
    %v3519 = vpow.pop %v3518
    %v3520 = vadd.f32 %v3519, 1.0
    %v3521 = vrcp.pop %v3520
    %v3522 = vmul.f32 1.0, %v3521
    %v3523 = vmul.f32 %v3522, %v3514
    %v3524 = vadd.f32 %v3433, %v3523
    %v3525 = vtanh.pop %v3524
    %v3526 = vsub.f32 1.0, %v3522
    %3528 = vrot.lane.b32.xlu0 %v3525, 64
    %v3529 = vpop.permute.xlu0 %3528
    %v3531 = vmul.f32 %v3526, %v3529
    %v3532 = vmul.f32 %v3522, 0.0
    %v3533 = vadd.f32 %v3531, %v3532
    %3535 = vrot.lane.b32.xlu0 %v3533, 64
    %v3536 = vpop.permute.xlu0 %3535
    %3538 = vst.msk [vmem:[#allocation3] sm:$0xff] %vm408, %v3536
    %3539 = vst.msk [vmem:[#allocation3 + $0x38] sm:$0xff] %vm410, %v3536
    %v3540 = vld [vmem:[#allocation2 + $0x10] sm:$0xff]
    %v3541 = vld [vmem:[#allocation2 + $0x18] sm:$0xff]
    %v3542 = vld [vmem:[#allocation2 + $0x60] sm:$0xff]
    %v3543 = vld [vmem:[#allocation2 + $0x68] sm:$0xff]
    %v3544 = vsel %vm97, %v3540, %v3542
    %v3545 = vsel %vm98, %v3541, %v3543
    %v3546 = vsel %vm262, %v3536, 0
    %3548 = vmatprep.subr.mxu0 %v3411
    %3549 = vmatpush1.msra.mxu0 %v3410
    %3550 = vmatprep.subr.mxu0 %v3413
    %3551 = vmatpush1.msra.mxu0 %v3412
    %3552 = vmatprep.subr.mxu0 %v3415
    %3553 = vmatpush1.msra.mxu0 %v3414
    %3554 = vmatprep.subr.mxu0 %v3417
    %3555 = vmatpush1.msra.mxu0 %v3416
    %3556 = vmatprep.subr.mxu0 %v3419
    %3557 = vmatpush1.msra.mxu0 %v3418
    %3558 = vmatprep.subr.mxu0 %v3421
    %3559 = vmatpush1.msra.mxu0 %v3420
    %3560 = vmatprep.subr.mxu0 %v3423
    %3561 = vmatpush1.msra.mxu0 %v3422
    %3562 = vmatprep.subr.mxu0 %v3425
    %3563 = vmatpush1.msra.mxu0 %v3424
    %3564 = vmatprep.subr.mxu0 0.0
    %3565 = vmatpush1.msra.mxu0 0.0
    %3566 = vmatprep.subr.mxu0 0.0
    %3567 = vmatpush1.msra.mxu0 0.0
    %3568 = vmatprep.subr.mxu0 0.0
    %3569 = vmatpush1.msra.mxu0 0.0
    %3570 = vmatprep.subr.mxu0 0.0
    %3571 = vmatpush1.msra.mxu0 0.0
    %3572 = vmatprep.subr.mxu0 0.0
    %3573 = vmatpush1.msra.mxu0 0.0
    %3574 = vmatprep.subr.mxu0 0.0
    %3575 = vmatpush1.msra.mxu0 0.0
    %3576 = vmatprep.subr.mxu0 0.0
    %3577 = vmatpush1.msra.mxu0 0.0
    %3578 = vmatprep.subr.mxu0 0.0
    %3579 = vmatpush1.msra.mxu0 0.0
    %3580 = vmatprep.subr.mxu0 0.0
    %3581 = vmatpush1.msra.mxu0 0.0
    %3582 = vmatprep.subr.mxu0 0.0
    %3583 = vmatpush1.msra.mxu0 0.0
    %3584 = vmatprep.subr.mxu0 0.0
    %3585 = vmatpush1.msra.mxu0 0.0
    %3586 = vmatprep.subr.mxu0 0.0
    %3587 = vmatpush1.msra.mxu0 0.0
    %3588 = vmatprep.subr.mxu0 0.0
    %3589 = vmatpush1.msra.mxu0 0.0
    %3590 = vmatprep.subr.mxu0 0.0
    %3591 = vmatpush1.msra.mxu0 0.0
    %3592 = vmatprep.subr.mxu0 0.0
    %3593 = vmatpush1.msra.mxu0 0.0
    %3594 = vmatprep.subr.mxu0 0.0
    %3595 = vmatpush1.msra.mxu0 0.0
    %3596 = vmatprep.subr.mxu0 0.0
    %3597 = vmatpush1.msra.mxu0 0.0
    %3598 = vmatprep.subr.mxu0 0.0
    %3599 = vmatpush1.msra.mxu0 0.0
    %3600 = vmatprep.subr.mxu0 0.0
    %3601 = vmatpush1.msra.mxu0 0.0
    %3602 = vmatprep.subr.mxu0 0.0
    %3603 = vmatpush1.msra.mxu0 0.0
    %3604 = vmatprep.subr.mxu0 0.0
    %3605 = vmatpush1.msra.mxu0 0.0
    %3606 = vmatprep.subr.mxu0 0.0
    %3607 = vmatpush1.msra.mxu0 0.0
    %3608 = vmatprep.subr.mxu0 0.0
    %3609 = vmatpush1.msra.mxu0 0.0
    %3610 = vmatprep.subr.mxu0 0.0
    %3611 = vmatpush1.msra.mxu0 0.0
    %3612 = vmatprep.mubr.f32.mxu0 0.0
    %3613 = vmatmul.mubr.f32.gmra.mrb[0].mxu0 %v3546
    %v3614 = vpop.f32.mrb[0].mxu0
    %v3615 = vadd.f32 %v3438, %v3614
    %v3616 = vpop.f32.mrb[0].mxu0
    %v3617 = vadd.f32 %v3442, %v3616
    %3618 = vdwg.mxu0
    %v3619 = vadd.f32 %v3544, %v3615
    %v3620 = vxor.u32 %v3619, 2147483648
    %v3621 = vmul.f32 %v3620, 1.442695
    %v3622 = vpow.pop %v3621
    %v3623 = vadd.f32 %v3622, 1.0
    %v3624 = vrcp.pop %v3623
    %v3625 = vmul.f32 1.0, %v3624
    %v3626 = vmul.f32 %v3625, %v3617
    %v3627 = vadd.f32 %v3545, %v3626
    %v3628 = vtanh.pop %v3627
    %v3629 = vsub.f32 1.0, %v3625
    %3631 = vrot.lane.b32.xlu0 %v3628, 64
    %v3632 = vpop.permute.xlu0 %3631
    %v3634 = vmul.f32 %v3629, %v3632
    %v3635 = vmul.f32 %v3625, %v3533
    %v3636 = vadd.f32 %v3634, %v3635
    %3638 = vrot.lane.b32.xlu0 %v3636, 64
    %v3639 = vpop.permute.xlu0 %3638
    %3641 = vst.msk [vmem:[#allocation3 + $0x8] sm:$0xff] %vm408, %v3639
    %3642 = vst.msk [vmem:[#allocation3 + $0x30] sm:$0xff] %vm410, %v3639
    %v3643 = vld [vmem:[#allocation2 + $0x20] sm:$0xff]
    %v3644 = vld [vmem:[#allocation2 + $0x28] sm:$0xff]
    %v3645 = vld [vmem:[#allocation2 + $0x50] sm:$0xff]
    %v3646 = vld [vmem:[#allocation2 + $0x58] sm:$0xff]
    %v3647 = vsel %vm97, %v3643, %v3645
    %v3648 = vsel %vm98, %v3644, %v3646
    %v3649 = vsel %vm262, %v3639, 0
    %3651 = vmatprep.subr.mxu0 %v3411
    %3652 = vmatpush1.msra.mxu0 %v3410
    %3653 = vmatprep.subr.mxu0 %v3413
    %3654 = vmatpush1.msra.mxu0 %v3412
    %3655 = vmatprep.subr.mxu0 %v3415
    %3656 = vmatpush1.msra.mxu0 %v3414
    %3657 = vmatprep.subr.mxu0 %v3417
    %3658 = vmatpush1.msra.mxu0 %v3416
    %3659 = vmatprep.subr.mxu0 %v3419
    %3660 = vmatpush1.msra.mxu0 %v3418
    %3661 = vmatprep.subr.mxu0 %v3421
    %3662 = vmatpush1.msra.mxu0 %v3420
    %3663 = vmatprep.subr.mxu0 %v3423
    %3664 = vmatpush1.msra.mxu0 %v3422
    %3665 = vmatprep.subr.mxu0 %v3425
    %3666 = vmatpush1.msra.mxu0 %v3424
    %3667 = vmatprep.subr.mxu0 0.0
    %3668 = vmatpush1.msra.mxu0 0.0
    %3669 = vmatprep.subr.mxu0 0.0
    %3670 = vmatpush1.msra.mxu0 0.0
    %3671 = vmatprep.subr.mxu0 0.0
    %3672 = vmatpush1.msra.mxu0 0.0
    %3673 = vmatprep.subr.mxu0 0.0
    %3674 = vmatpush1.msra.mxu0 0.0
    %3675 = vmatprep.subr.mxu0 0.0
    %3676 = vmatpush1.msra.mxu0 0.0
    %3677 = vmatprep.subr.mxu0 0.0
    %3678 = vmatpush1.msra.mxu0 0.0
    %3679 = vmatprep.subr.mxu0 0.0
    %3680 = vmatpush1.msra.mxu0 0.0
    %3681 = vmatprep.subr.mxu0 0.0
    %3682 = vmatpush1.msra.mxu0 0.0
    %3683 = vmatprep.subr.mxu0 0.0
    %3684 = vmatpush1.msra.mxu0 0.0
    %3685 = vmatprep.subr.mxu0 0.0
    %3686 = vmatpush1.msra.mxu0 0.0
    %3687 = vmatprep.subr.mxu0 0.0
    %3688 = vmatpush1.msra.mxu0 0.0
    %3689 = vmatprep.subr.mxu0 0.0
    %3690 = vmatpush1.msra.mxu0 0.0
    %3691 = vmatprep.subr.mxu0 0.0
    %3692 = vmatpush1.msra.mxu0 0.0
    %3693 = vmatprep.subr.mxu0 0.0
    %3694 = vmatpush1.msra.mxu0 0.0
    %3695 = vmatprep.subr.mxu0 0.0
    %3696 = vmatpush1.msra.mxu0 0.0
    %3697 = vmatprep.subr.mxu0 0.0
    %3698 = vmatpush1.msra.mxu0 0.0
    %3699 = vmatprep.subr.mxu0 0.0
    %3700 = vmatpush1.msra.mxu0 0.0
    %3701 = vmatprep.subr.mxu0 0.0
    %3702 = vmatpush1.msra.mxu0 0.0
    %3703 = vmatprep.subr.mxu0 0.0
    %3704 = vmatpush1.msra.mxu0 0.0
    %3705 = vmatprep.subr.mxu0 0.0
    %3706 = vmatpush1.msra.mxu0 0.0
    %3707 = vmatprep.subr.mxu0 0.0
    %3708 = vmatpush1.msra.mxu0 0.0
    %3709 = vmatprep.subr.mxu0 0.0
    %3710 = vmatpush1.msra.mxu0 0.0
    %3711 = vmatprep.subr.mxu0 0.0
    %3712 = vmatpush1.msra.mxu0 0.0
    %3713 = vmatprep.subr.mxu0 0.0
    %3714 = vmatpush1.msra.mxu0 0.0
    %3715 = vmatprep.mubr.f32.mxu0 0.0
    %3716 = vmatmul.mubr.f32.gmra.mrb[0].mxu0 %v3649
    %v3717 = vpop.f32.mrb[0].mxu0
    %v3718 = vadd.f32 %v3438, %v3717
    %v3719 = vpop.f32.mrb[0].mxu0
    %v3720 = vadd.f32 %v3442, %v3719
    %3721 = vdwg.mxu0
    %v3722 = vadd.f32 %v3647, %v3718
    %v3723 = vxor.u32 %v3722, 2147483648
    %v3724 = vmul.f32 %v3723, 1.442695
    %v3725 = vpow.pop %v3724
    %v3726 = vadd.f32 %v3725, 1.0
    %v3727 = vrcp.pop %v3726
    %v3728 = vmul.f32 1.0, %v3727
    %v3729 = vmul.f32 %v3728, %v3720
    %v3730 = vadd.f32 %v3648, %v3729
    %v3731 = vtanh.pop %v3730
    %v3732 = vsub.f32 1.0, %v3728
    %3734 = vrot.lane.b32.xlu0 %v3731, 64
    %v3735 = vpop.permute.xlu0 %3734
    %v3737 = vmul.f32 %v3732, %v3735
    %v3738 = vmul.f32 %v3728, %v3636
    %v3739 = vadd.f32 %v3737, %v3738
    %3741 = vrot.lane.b32.xlu0 %v3739, 64
    %v3742 = vpop.permute.xlu0 %3741
    %3744 = vst.msk [vmem:[#allocation3 + $0x10] sm:$0xff] %vm408, %v3742
    %3745 = vst.msk [vmem:[#allocation3 + $0x28] sm:$0xff] %vm410, %v3742
    %v3746 = vld [vmem:[#allocation2 + $0x30] sm:$0xff]
    %v3747 = vld [vmem:[#allocation2 + $0x38] sm:$0xff]
    %v3748 = vld [vmem:[#allocation2 + $0x40] sm:$0xff]
    %v3749 = vld [vmem:[#allocation2 + $0x48] sm:$0xff]
    %v3750 = vsel %vm97, %v3746, %v3748
    %v3751 = vsel %vm98, %v3747, %v3749
    %v3752 = vsel %vm262, %v3742, 0
    %3754 = vmatprep.subr.mxu0 %v3411
    %3755 = vmatpush1.msra.mxu0 %v3410
    %3756 = vmatprep.subr.mxu0 %v3413
    %3757 = vmatpush1.msra.mxu0 %v3412
    %3758 = vmatprep.subr.mxu0 %v3415
    %3759 = vmatpush1.msra.mxu0 %v3414
    %3760 = vmatprep.subr.mxu0 %v3417
    %3761 = vmatpush1.msra.mxu0 %v3416
    %3762 = vmatprep.subr.mxu0 %v3419
    %3763 = vmatpush1.msra.mxu0 %v3418
    %3764 = vmatprep.subr.mxu0 %v3421
    %3765 = vmatpush1.msra.mxu0 %v3420
    %3766 = vmatprep.subr.mxu0 %v3423
    %3767 = vmatpush1.msra.mxu0 %v3422
    %3768 = vmatprep.subr.mxu0 %v3425
    %3769 = vmatpush1.msra.mxu0 %v3424
    %3770 = vmatprep.subr.mxu0 0.0
    %3771 = vmatpush1.msra.mxu0 0.0
    %3772 = vmatprep.subr.mxu0 0.0
    %3773 = vmatpush1.msra.mxu0 0.0
    %3774 = vmatprep.subr.mxu0 0.0
    %3775 = vmatpush1.msra.mxu0 0.0
    %3776 = vmatprep.subr.mxu0 0.0
    %3777 = vmatpush1.msra.mxu0 0.0
    %3778 = vmatprep.subr.mxu0 0.0
    %3779 = vmatpush1.msra.mxu0 0.0
    %3780 = vmatprep.subr.mxu0 0.0
    %3781 = vmatpush1.msra.mxu0 0.0
    %3782 = vmatprep.subr.mxu0 0.0
    %3783 = vmatpush1.msra.mxu0 0.0
    %3784 = vmatprep.subr.mxu0 0.0
    %3785 = vmatpush1.msra.mxu0 0.0
    %3786 = vmatprep.subr.mxu0 0.0
    %3787 = vmatpush1.msra.mxu0 0.0
    %3788 = vmatprep.subr.mxu0 0.0
    %3789 = vmatpush1.msra.mxu0 0.0
    %3790 = vmatprep.subr.mxu0 0.0
    %3791 = vmatpush1.msra.mxu0 0.0
    %3792 = vmatprep.subr.mxu0 0.0
    %3793 = vmatpush1.msra.mxu0 0.0
    %3794 = vmatprep.subr.mxu0 0.0
    %3795 = vmatpush1.msra.mxu0 0.0
    %3796 = vmatprep.subr.mxu0 0.0
    %3797 = vmatpush1.msra.mxu0 0.0
    %3798 = vmatprep.subr.mxu0 0.0
    %3799 = vmatpush1.msra.mxu0 0.0
    %3800 = vmatprep.subr.mxu0 0.0
    %3801 = vmatpush1.msra.mxu0 0.0
    %3802 = vmatprep.subr.mxu0 0.0
    %3803 = vmatpush1.msra.mxu0 0.0
    %3804 = vmatprep.subr.mxu0 0.0
    %3805 = vmatpush1.msra.mxu0 0.0
    %3806 = vmatprep.subr.mxu0 0.0
    %3807 = vmatpush1.msra.mxu0 0.0
    %3808 = vmatprep.subr.mxu0 0.0
    %3809 = vmatpush1.msra.mxu0 0.0
    %3810 = vmatprep.subr.mxu0 0.0
    %3811 = vmatpush1.msra.mxu0 0.0
    %3812 = vmatprep.subr.mxu0 0.0
    %3813 = vmatpush1.msra.mxu0 0.0
    %3814 = vmatprep.subr.mxu0 0.0
    %3815 = vmatpush1.msra.mxu0 0.0
    %3816 = vmatprep.subr.mxu0 0.0
    %3817 = vmatpush1.msra.mxu0 0.0
    %3818 = vmatprep.mubr.f32.mxu0 0.0
    %3819 = vmatmul.mubr.f32.gmra.mrb[0].mxu0 %v3752
    %v3820 = vpop.f32.mrb[0].mxu0
    %v3821 = vadd.f32 %v3438, %v3820
    %v3822 = vpop.f32.mrb[0].mxu0
    %v3823 = vadd.f32 %v3442, %v3822
    %3824 = vdwg.mxu0
    %v3825 = vadd.f32 %v3750, %v3821
    %v3826 = vxor.u32 %v3825, 2147483648
    %v3827 = vmul.f32 %v3826, 1.442695
    %v3828 = vpow.pop %v3827
    %v3829 = vadd.f32 %v3828, 1.0
    %v3830 = vrcp.pop %v3829
    %v3831 = vmul.f32 1.0, %v3830
    %v3832 = vmul.f32 %v3831, %v3823
    %v3833 = vadd.f32 %v3751, %v3832
    %v3834 = vtanh.pop %v3833
    %v3835 = vsub.f32 1.0, %v3831
    %3837 = vrot.lane.b32.xlu0 %v3834, 64
    %v3838 = vpop.permute.xlu0 %3837
    %v3840 = vmul.f32 %v3835, %v3838
    %v3841 = vmul.f32 %v3831, %v3739
    %v3842 = vadd.f32 %v3840, %v3841
    %3844 = vrot.lane.b32.xlu0 %v3842, 64
    %v3845 = vpop.permute.xlu0 %3844
    %3847 = vst.msk [vmem:[#allocation3 + $0x18] sm:$0xff] %vm408, %v3845
    %3848 = vst.msk [vmem:[#allocation3 + $0x20] sm:$0xff] %vm410, %v3845
    %v3849 = vld [vmem:[#allocation2 + $0x40] sm:$0xff]
    %v3850 = vld [vmem:[#allocation2 + $0x48] sm:$0xff]
    %v3851 = vld [vmem:[#allocation2 + $0x30] sm:$0xff]
    %v3852 = vld [vmem:[#allocation2 + $0x38] sm:$0xff]
    %v3853 = vsel %vm97, %v3849, %v3851
    %v3854 = vsel %vm98, %v3850, %v3852
    %v3855 = vsel %vm262, %v3845, 0
    %3857 = vmatprep.subr.mxu0 %v3411
    %3858 = vmatpush1.msra.mxu0 %v3410
    %3859 = vmatprep.subr.mxu0 %v3413
    %3860 = vmatpush1.msra.mxu0 %v3412
    %3861 = vmatprep.subr.mxu0 %v3415
    %3862 = vmatpush1.msra.mxu0 %v3414
    %3863 = vmatprep.subr.mxu0 %v3417
    %3864 = vmatpush1.msra.mxu0 %v3416
    %3865 = vmatprep.subr.mxu0 %v3419
    %3866 = vmatpush1.msra.mxu0 %v3418
    %3867 = vmatprep.subr.mxu0 %v3421
    %3868 = vmatpush1.msra.mxu0 %v3420
    %3869 = vmatprep.subr.mxu0 %v3423
    %3870 = vmatpush1.msra.mxu0 %v3422
    %3871 = vmatprep.subr.mxu0 %v3425
    %3872 = vmatpush1.msra.mxu0 %v3424
    %3873 = vmatprep.subr.mxu0 0.0
    %3874 = vmatpush1.msra.mxu0 0.0
    %3875 = vmatprep.subr.mxu0 0.0
    %3876 = vmatpush1.msra.mxu0 0.0
    %3877 = vmatprep.subr.mxu0 0.0
    %3878 = vmatpush1.msra.mxu0 0.0
    %3879 = vmatprep.subr.mxu0 0.0
    %3880 = vmatpush1.msra.mxu0 0.0
    %3881 = vmatprep.subr.mxu0 0.0
    %3882 = vmatpush1.msra.mxu0 0.0
    %3883 = vmatprep.subr.mxu0 0.0
    %3884 = vmatpush1.msra.mxu0 0.0
    %3885 = vmatprep.subr.mxu0 0.0
    %3886 = vmatpush1.msra.mxu0 0.0
    %3887 = vmatprep.subr.mxu0 0.0
    %3888 = vmatpush1.msra.mxu0 0.0
    %3889 = vmatprep.subr.mxu0 0.0
    %3890 = vmatpush1.msra.mxu0 0.0
    %3891 = vmatprep.subr.mxu0 0.0
    %3892 = vmatpush1.msra.mxu0 0.0
    %3893 = vmatprep.subr.mxu0 0.0
    %3894 = vmatpush1.msra.mxu0 0.0
    %3895 = vmatprep.subr.mxu0 0.0
    %3896 = vmatpush1.msra.mxu0 0.0
    %3897 = vmatprep.subr.mxu0 0.0
    %3898 = vmatpush1.msra.mxu0 0.0
    %3899 = vmatprep.subr.mxu0 0.0
    %3900 = vmatpush1.msra.mxu0 0.0
    %3901 = vmatprep.subr.mxu0 0.0
    %3902 = vmatpush1.msra.mxu0 0.0
    %3903 = vmatprep.subr.mxu0 0.0
    %3904 = vmatpush1.msra.mxu0 0.0
    %3905 = vmatprep.subr.mxu0 0.0
    %3906 = vmatpush1.msra.mxu0 0.0
    %3907 = vmatprep.subr.mxu0 0.0
    %3908 = vmatpush1.msra.mxu0 0.0
    %3909 = vmatprep.subr.mxu0 0.0
    %3910 = vmatpush1.msra.mxu0 0.0
    %3911 = vmatprep.subr.mxu0 0.0
    %3912 = vmatpush1.msra.mxu0 0.0
    %3913 = vmatprep.subr.mxu0 0.0
    %3914 = vmatpush1.msra.mxu0 0.0
    %3915 = vmatprep.subr.mxu0 0.0
    %3916 = vmatpush1.msra.mxu0 0.0
    %3917 = vmatprep.subr.mxu0 0.0
    %3918 = vmatpush1.msra.mxu0 0.0
    %3919 = vmatprep.subr.mxu0 0.0
    %3920 = vmatpush1.msra.mxu0 0.0
    %3921 = vmatprep.mubr.f32.mxu0 0.0
    %3922 = vmatmul.mubr.f32.gmra.mrb[0].mxu0 %v3855
    %v3923 = vpop.f32.mrb[0].mxu0
    %v3924 = vadd.f32 %v3438, %v3923
    %v3925 = vpop.f32.mrb[0].mxu0
    %v3926 = vadd.f32 %v3442, %v3925
    %3927 = vdwg.mxu0
    %v3928 = vadd.f32 %v3853, %v3924
    %v3929 = vxor.u32 %v3928, 2147483648
    %v3930 = vmul.f32 %v3929, 1.442695
    %v3931 = vpow.pop %v3930
    %v3932 = vadd.f32 %v3931, 1.0
    %v3933 = vrcp.pop %v3932
    %v3934 = vmul.f32 1.0, %v3933
    %v3935 = vmul.f32 %v3934, %v3926
    %v3936 = vadd.f32 %v3854, %v3935
    %v3937 = vtanh.pop %v3936
    %v3938 = vsub.f32 1.0, %v3934
    %3940 = vrot.lane.b32.xlu0 %v3937, 64
    %v3941 = vpop.permute.xlu0 %3940
    %v3943 = vmul.f32 %v3938, %v3941
    %v3944 = vmul.f32 %v3934, %v3842
    %v3945 = vadd.f32 %v3943, %v3944
    %3947 = vrot.lane.b32.xlu0 %v3945, 64
    %v3948 = vpop.permute.xlu0 %3947
    %3950 = vst.msk [vmem:[#allocation3 + $0x20] sm:$0xff] %vm408, %v3948
    %3951 = vst.msk [vmem:[#allocation3 + $0x18] sm:$0xff] %vm410, %v3948
    %v3952 = vld [vmem:[#allocation2 + $0x50] sm:$0xff]
    %v3953 = vld [vmem:[#allocation2 + $0x58] sm:$0xff]
    %v3954 = vld [vmem:[#allocation2 + $0x20] sm:$0xff]
    %v3955 = vld [vmem:[#allocation2 + $0x28] sm:$0xff]
    %v3956 = vsel %vm97, %v3952, %v3954
    %v3957 = vsel %vm98, %v3953, %v3955
    %v3958 = vsel %vm262, %v3948, 0
    %3960 = vmatprep.subr.mxu0 %v3411
    %3961 = vmatpush1.msra.mxu0 %v3410
    %3962 = vmatprep.subr.mxu0 %v3413
    %3963 = vmatpush1.msra.mxu0 %v3412
    %3964 = vmatprep.subr.mxu0 %v3415
    %3965 = vmatpush1.msra.mxu0 %v3414
    %3966 = vmatprep.subr.mxu0 %v3417
    %3967 = vmatpush1.msra.mxu0 %v3416
    %3968 = vmatprep.subr.mxu0 %v3419
    %3969 = vmatpush1.msra.mxu0 %v3418
    %3970 = vmatprep.subr.mxu0 %v3421
    %3971 = vmatpush1.msra.mxu0 %v3420
    %3972 = vmatprep.subr.mxu0 %v3423
    %3973 = vmatpush1.msra.mxu0 %v3422
    %3974 = vmatprep.subr.mxu0 %v3425
    %3975 = vmatpush1.msra.mxu0 %v3424
    %3976 = vmatprep.subr.mxu0 0.0
    %3977 = vmatpush1.msra.mxu0 0.0
    %3978 = vmatprep.subr.mxu0 0.0
    %3979 = vmatpush1.msra.mxu0 0.0
    %3980 = vmatprep.subr.mxu0 0.0
    %3981 = vmatpush1.msra.mxu0 0.0
    %3982 = vmatprep.subr.mxu0 0.0
    %3983 = vmatpush1.msra.mxu0 0.0
    %3984 = vmatprep.subr.mxu0 0.0
    %3985 = vmatpush1.msra.mxu0 0.0
    %3986 = vmatprep.subr.mxu0 0.0
    %3987 = vmatpush1.msra.mxu0 0.0
    %3988 = vmatprep.subr.mxu0 0.0
    %3989 = vmatpush1.msra.mxu0 0.0
    %3990 = vmatprep.subr.mxu0 0.0
    %3991 = vmatpush1.msra.mxu0 0.0
    %3992 = vmatprep.subr.mxu0 0.0
    %3993 = vmatpush1.msra.mxu0 0.0
    %3994 = vmatprep.subr.mxu0 0.0
    %3995 = vmatpush1.msra.mxu0 0.0
    %3996 = vmatprep.subr.mxu0 0.0
    %3997 = vmatpush1.msra.mxu0 0.0
    %3998 = vmatprep.subr.mxu0 0.0
    %3999 = vmatpush1.msra.mxu0 0.0
    %4000 = vmatprep.subr.mxu0 0.0
    %4001 = vmatpush1.msra.mxu0 0.0
    %4002 = vmatprep.subr.mxu0 0.0
    %4003 = vmatpush1.msra.mxu0 0.0
    %4004 = vmatprep.subr.mxu0 0.0
    %4005 = vmatpush1.msra.mxu0 0.0
    %4006 = vmatprep.subr.mxu0 0.0
    %4007 = vmatpush1.msra.mxu0 0.0
    %4008 = vmatprep.subr.mxu0 0.0
    %4009 = vmatpush1.msra.mxu0 0.0
    %4010 = vmatprep.subr.mxu0 0.0
    %4011 = vmatpush1.msra.mxu0 0.0
    %4012 = vmatprep.subr.mxu0 0.0
    %4013 = vmatpush1.msra.mxu0 0.0
    %4014 = vmatprep.subr.mxu0 0.0
    %4015 = vmatpush1.msra.mxu0 0.0
    %4016 = vmatprep.subr.mxu0 0.0
    %4017 = vmatpush1.msra.mxu0 0.0
    %4018 = vmatprep.subr.mxu0 0.0
    %4019 = vmatpush1.msra.mxu0 0.0
    %4020 = vmatprep.subr.mxu0 0.0
    %4021 = vmatpush1.msra.mxu0 0.0
    %4022 = vmatprep.subr.mxu0 0.0
    %4023 = vmatpush1.msra.mxu0 0.0
    %4024 = vmatprep.mubr.f32.mxu0 0.0
    %4025 = vmatmul.mubr.f32.gmra.mrb[0].mxu0 %v3958
    %v4026 = vpop.f32.mrb[0].mxu0
    %v4027 = vadd.f32 %v3438, %v4026
    %v4028 = vpop.f32.mrb[0].mxu0
    %v4029 = vadd.f32 %v3442, %v4028
    %4030 = vdwg.mxu0
    %v4031 = vadd.f32 %v3956, %v4027
    %v4032 = vxor.u32 %v4031, 2147483648
    %v4033 = vmul.f32 %v4032, 1.442695
    %v4034 = vpow.pop %v4033
    %v4035 = vadd.f32 %v4034, 1.0
    %v4036 = vrcp.pop %v4035
    %v4037 = vmul.f32 1.0, %v4036
    %v4038 = vmul.f32 %v4037, %v4029
    %v4039 = vadd.f32 %v3957, %v4038
    %v4040 = vtanh.pop %v4039
    %v4041 = vsub.f32 1.0, %v4037
    %4043 = vrot.lane.b32.xlu0 %v4040, 64
    %v4044 = vpop.permute.xlu0 %4043
    %v4046 = vmul.f32 %v4041, %v4044
    %v4047 = vmul.f32 %v4037, %v3945
    %v4048 = vadd.f32 %v4046, %v4047
    %4050 = vrot.lane.b32.xlu0 %v4048, 64
    %v4051 = vpop.permute.xlu0 %4050
    %4053 = vst.msk [vmem:[#allocation3 + $0x28] sm:$0xff] %vm408, %v4051
    %4054 = vst.msk [vmem:[#allocation3 + $0x10] sm:$0xff] %vm410, %v4051
    %v4055 = vld [vmem:[#allocation2 + $0x60] sm:$0xff]
    %v4056 = vld [vmem:[#allocation2 + $0x68] sm:$0xff]
    %v4057 = vld [vmem:[#allocation2 + $0x10] sm:$0xff]
    %v4058 = vld [vmem:[#allocation2 + $0x18] sm:$0xff]
    %v4059 = vsel %vm97, %v4055, %v4057
    %v4060 = vsel %vm98, %v4056, %v4058
    %v4061 = vsel %vm262, %v4051, 0
    %4063 = vmatprep.subr.mxu0 %v3411
    %4064 = vmatpush1.msra.mxu0 %v3410
    %4065 = vmatprep.subr.mxu0 %v3413
    %4066 = vmatpush1.msra.mxu0 %v3412
    %4067 = vmatprep.subr.mxu0 %v3415
    %4068 = vmatpush1.msra.mxu0 %v3414
    %4069 = vmatprep.subr.mxu0 %v3417
    %4070 = vmatpush1.msra.mxu0 %v3416
    %4071 = vmatprep.subr.mxu0 %v3419
    %4072 = vmatpush1.msra.mxu0 %v3418
    %4073 = vmatprep.subr.mxu0 %v3421
    %4074 = vmatpush1.msra.mxu0 %v3420
    %4075 = vmatprep.subr.mxu0 %v3423
    %4076 = vmatpush1.msra.mxu0 %v3422
    %4077 = vmatprep.subr.mxu0 %v3425
    %4078 = vmatpush1.msra.mxu0 %v3424
    %4079 = vmatprep.subr.mxu0 0.0
    %4080 = vmatpush1.msra.mxu0 0.0
    %4081 = vmatprep.subr.mxu0 0.0
    %4082 = vmatpush1.msra.mxu0 0.0
    %4083 = vmatprep.subr.mxu0 0.0
    %4084 = vmatpush1.msra.mxu0 0.0
    %4085 = vmatprep.subr.mxu0 0.0
    %4086 = vmatpush1.msra.mxu0 0.0
    %4087 = vmatprep.subr.mxu0 0.0
    %4088 = vmatpush1.msra.mxu0 0.0
    %4089 = vmatprep.subr.mxu0 0.0
    %4090 = vmatpush1.msra.mxu0 0.0
    %4091 = vmatprep.subr.mxu0 0.0
    %4092 = vmatpush1.msra.mxu0 0.0
    %4093 = vmatprep.subr.mxu0 0.0
    %4094 = vmatpush1.msra.mxu0 0.0
    %4095 = vmatprep.subr.mxu0 0.0
    %4096 = vmatpush1.msra.mxu0 0.0
    %4097 = vmatprep.subr.mxu0 0.0
    %4098 = vmatpush1.msra.mxu0 0.0
    %4099 = vmatprep.subr.mxu0 0.0
    %4100 = vmatpush1.msra.mxu0 0.0
    %4101 = vmatprep.subr.mxu0 0.0
    %4102 = vmatpush1.msra.mxu0 0.0
    %4103 = vmatprep.subr.mxu0 0.0
    %4104 = vmatpush1.msra.mxu0 0.0
    %4105 = vmatprep.subr.mxu0 0.0
    %4106 = vmatpush1.msra.mxu0 0.0
    %4107 = vmatprep.subr.mxu0 0.0
    %4108 = vmatpush1.msra.mxu0 0.0
    %4109 = vmatprep.subr.mxu0 0.0
    %4110 = vmatpush1.msra.mxu0 0.0
    %4111 = vmatprep.subr.mxu0 0.0
    %4112 = vmatpush1.msra.mxu0 0.0
    %4113 = vmatprep.subr.mxu0 0.0
    %4114 = vmatpush1.msra.mxu0 0.0
    %4115 = vmatprep.subr.mxu0 0.0
    %4116 = vmatpush1.msra.mxu0 0.0
    %4117 = vmatprep.subr.mxu0 0.0
    %4118 = vmatpush1.msra.mxu0 0.0
    %4119 = vmatprep.subr.mxu0 0.0
    %4120 = vmatpush1.msra.mxu0 0.0
    %4121 = vmatprep.subr.mxu0 0.0
    %4122 = vmatpush1.msra.mxu0 0.0
    %4123 = vmatprep.subr.mxu0 0.0
    %4124 = vmatpush1.msra.mxu0 0.0
    %4125 = vmatprep.subr.mxu0 0.0
    %4126 = vmatpush1.msra.mxu0 0.0
    %4127 = vmatprep.mubr.f32.mxu0 0.0
    %4128 = vmatmul.mubr.f32.gmra.mrb[0].mxu0 %v4061
    %v4129 = vpop.f32.mrb[0].mxu0
    %v4130 = vadd.f32 %v3438, %v4129
    %v4131 = vpop.f32.mrb[0].mxu0
    %v4132 = vadd.f32 %v3442, %v4131
    %4133 = vdwg.mxu0
    %v4134 = vadd.f32 %v4059, %v4130
    %v4135 = vxor.u32 %v4134, 2147483648
    %v4136 = vmul.f32 %v4135, 1.442695
    %v4137 = vpow.pop %v4136
    %v4138 = vadd.f32 %v4137, 1.0
    %v4139 = vrcp.pop %v4138
    %v4140 = vmul.f32 1.0, %v4139
    %v4141 = vmul.f32 %v4140, %v4132
    %v4142 = vadd.f32 %v4060, %v4141
    %v4143 = vtanh.pop %v4142
    %v4144 = vsub.f32 1.0, %v4140
    %4146 = vrot.lane.b32.xlu0 %v4143, 64
    %v4147 = vpop.permute.xlu0 %4146
    %v4149 = vmul.f32 %v4144, %v4147
    %v4150 = vmul.f32 %v4140, %v4048
    %v4151 = vadd.f32 %v4149, %v4150
    %4153 = vrot.lane.b32.xlu0 %v4151, 64
    %v4154 = vpop.permute.xlu0 %4153
    %4156 = vst.msk [vmem:[#allocation3 + $0x30] sm:$0xff] %vm408, %v4154
    %4157 = vst.msk [vmem:[#allocation3 + $0x8] sm:$0xff] %vm410, %v4154
    %v4158 = vld [vmem:[#allocation2 + $0x70] sm:$0xff]
    %v4159 = vld [vmem:[#allocation2 + $0x78] sm:$0xff]
    %v4160 = vld [vmem:[#allocation2] sm:$0xff]
    %v4161 = vld [vmem:[#allocation2 + $0x8] sm:$0xff]
    %v4162 = vsel %vm97, %v4158, %v4160
    %v4163 = vsel %vm98, %v4159, %v4161
    %v4164 = vsel %vm262, %v4154, 0
    %4166 = vmatprep.subr.mxu0 %v3411
    %4167 = vmatpush1.msra.mxu0 %v3410
    %4168 = vmatprep.subr.mxu0 %v3413
    %4169 = vmatpush1.msra.mxu0 %v3412
    %4170 = vmatprep.subr.mxu0 %v3415
    %4171 = vmatpush1.msra.mxu0 %v3414
    %4172 = vmatprep.subr.mxu0 %v3417
    %4173 = vmatpush1.msra.mxu0 %v3416
    %4174 = vmatprep.subr.mxu0 %v3419
    %4175 = vmatpush1.msra.mxu0 %v3418
    %4176 = vmatprep.subr.mxu0 %v3421
    %4177 = vmatpush1.msra.mxu0 %v3420
    %4178 = vmatprep.subr.mxu0 %v3423
    %4179 = vmatpush1.msra.mxu0 %v3422
    %4180 = vmatprep.subr.mxu0 %v3425
    %4181 = vmatpush1.msra.mxu0 %v3424
    %4182 = vmatprep.subr.mxu0 0.0
    %4183 = vmatpush1.msra.mxu0 0.0
    %4184 = vmatprep.subr.mxu0 0.0
    %4185 = vmatpush1.msra.mxu0 0.0
    %4186 = vmatprep.subr.mxu0 0.0
    %4187 = vmatpush1.msra.mxu0 0.0
    %4188 = vmatprep.subr.mxu0 0.0
    %4189 = vmatpush1.msra.mxu0 0.0
    %4190 = vmatprep.subr.mxu0 0.0
    %4191 = vmatpush1.msra.mxu0 0.0
    %4192 = vmatprep.subr.mxu0 0.0
    %4193 = vmatpush1.msra.mxu0 0.0
    %4194 = vmatprep.subr.mxu0 0.0
    %4195 = vmatpush1.msra.mxu0 0.0
    %4196 = vmatprep.subr.mxu0 0.0
    %4197 = vmatpush1.msra.mxu0 0.0
    %4198 = vmatprep.subr.mxu0 0.0
    %4199 = vmatpush1.msra.mxu0 0.0
    %4200 = vmatprep.subr.mxu0 0.0
    %4201 = vmatpush1.msra.mxu0 0.0
    %4202 = vmatprep.subr.mxu0 0.0
    %4203 = vmatpush1.msra.mxu0 0.0
    %4204 = vmatprep.subr.mxu0 0.0
    %4205 = vmatpush1.msra.mxu0 0.0
    %4206 = vmatprep.subr.mxu0 0.0
    %4207 = vmatpush1.msra.mxu0 0.0
    %4208 = vmatprep.subr.mxu0 0.0
    %4209 = vmatpush1.msra.mxu0 0.0
    %4210 = vmatprep.subr.mxu0 0.0
    %4211 = vmatpush1.msra.mxu0 0.0
    %4212 = vmatprep.subr.mxu0 0.0
    %4213 = vmatpush1.msra.mxu0 0.0
    %4214 = vmatprep.subr.mxu0 0.0
    %4215 = vmatpush1.msra.mxu0 0.0
    %4216 = vmatprep.subr.mxu0 0.0
    %4217 = vmatpush1.msra.mxu0 0.0
    %4218 = vmatprep.subr.mxu0 0.0
    %4219 = vmatpush1.msra.mxu0 0.0
    %4220 = vmatprep.subr.mxu0 0.0
    %4221 = vmatpush1.msra.mxu0 0.0
    %4222 = vmatprep.subr.mxu0 0.0
    %4223 = vmatpush1.msra.mxu0 0.0
    %4224 = vmatprep.subr.mxu0 0.0
    %4225 = vmatpush1.msra.mxu0 0.0
    %4226 = vmatprep.subr.mxu0 0.0
    %4227 = vmatpush1.msra.mxu0 0.0
    %4228 = vmatprep.subr.mxu0 0.0
    %4229 = vmatpush1.msra.mxu0 0.0
    %4230 = vmatprep.mubr.f32.mxu0 0.0
    %4231 = vmatmul.mubr.f32.gmra.mrb[0].mxu0 %v4164
    %v4232 = vpop.f32.mrb[0].mxu0
    %v4233 = vadd.f32 %v3438, %v4232
    %v4234 = vpop.f32.mrb[0].mxu0
    %v4235 = vadd.f32 %v3442, %v4234
    %4236 = vdwg.mxu0
    %v4237 = vadd.f32 %v4162, %v4233
    %v4238 = vxor.u32 %v4237, 2147483648
    %v4239 = vmul.f32 %v4238, 1.442695
    %v4240 = vpow.pop %v4239
    %v4241 = vadd.f32 %v4240, 1.0
    %v4242 = vrcp.pop %v4241
    %v4243 = vmul.f32 1.0, %v4242
    %v4244 = vmul.f32 %v4243, %v4235
    %v4245 = vadd.f32 %v4163, %v4244
    %v4246 = vtanh.pop %v4245
    %v4247 = vsub.f32 1.0, %v4243
    %4249 = vrot.lane.b32.xlu0 %v4246, 64
    %v4250 = vpop.permute.xlu0 %4249
    %v4252 = vmul.f32 %v4247, %v4250
    %v4253 = vmul.f32 %v4243, %v4151
    %v4254 = vadd.f32 %v4252, %v4253
    %4256 = vrot.lane.b32.xlu0 %v4254, 64
    %v4257 = vpop.permute.xlu0 %4256
    %4259 = vst.msk [vmem:[#allocation3 + $0x38] sm:$0xff] %vm408, %v4257
    %4260 = vst.msk [vmem:[#allocation3] sm:$0xff] %vm410, %v4257
    %v4261 = vld [vmem:[#allocation3] sm:$0xff]
    %v4262 = vld [vmem:[#allocation3 + $0x8] sm:$0xff]
    %v4263 = vld [vmem:[#allocation3 + $0x10] sm:$0xff]
    %v4264 = vld [vmem:[#allocation3 + $0x18] sm:$0xff]
    %v4265 = vld [vmem:[#allocation3 + $0x20] sm:$0xff]
    %v4266 = vld [vmem:[#allocation3 + $0x28] sm:$0xff]
    %v4267 = vld [vmem:[#allocation3 + $0x30] sm:$0xff]
    %v4268 = vld [vmem:[#allocation3 + $0x38] sm:$0xff]
    %v4269 = vld [vmem:[%s6] sm:$0xff]
    %v4270 = vld [vmem:[%s6 + $0x8] sm:$0xff]
    %v4271 = vld [vmem:[%s6 + $0x10] sm:$0xff]
    %v4272 = vld [vmem:[%s6 + $0x18] sm:$0xff]
    %v4273 = vld [vmem:[%s6 + $0x20] sm:$0xff]
    %v4274 = vld [vmem:[%s6 + $0x28] sm:$0xff]
    %v4275 = vld [vmem:[%s6 + $0x30] sm:$0xff]
    %v4276 = vld [vmem:[%s6 + $0x38] sm:$0xff]
    %v4277 = vld [vmem:[%s7] sm:$0x1]
    %v4279 = vlaneseq
    %v4280 = vshrl.u32 %v4279, 7
    %v4281 = vsub.s32 0, %v4280
    %v4282 = vrot.slane %v4277, %v4281
    %v4284 = vsel %vm262, %v1129, 0
    %4286 = vmatprep.subr.mxu0 0.0
    %4287 = vmatpush1.msra.mxu0 %v4269
    %4288 = vmatprep.subr.mxu0 0.0
    %4289 = vmatpush1.msra.mxu0 %v4270
    %4290 = vmatprep.subr.mxu0 0.0
    %4291 = vmatpush1.msra.mxu0 %v4271
    %4292 = vmatprep.subr.mxu0 0.0
    %4293 = vmatpush1.msra.mxu0 %v4272
    %4294 = vmatprep.subr.mxu0 0.0
    %4295 = vmatpush1.msra.mxu0 %v4273
    %4296 = vmatprep.subr.mxu0 0.0
    %4297 = vmatpush1.msra.mxu0 %v4274
    %4298 = vmatprep.subr.mxu0 0.0
    %4299 = vmatpush1.msra.mxu0 %v4275
    %4300 = vmatprep.subr.mxu0 0.0
    %4301 = vmatpush1.msra.mxu0 %v4276
    %4302 = vmatprep.subr.mxu0 0.0
    %4303 = vmatpush1.msra.mxu0 0.0
    %4304 = vmatprep.subr.mxu0 0.0
    %4305 = vmatpush1.msra.mxu0 0.0
    %4306 = vmatprep.subr.mxu0 0.0
    %4307 = vmatpush1.msra.mxu0 0.0
    %4308 = vmatprep.subr.mxu0 0.0
    %4309 = vmatpush1.msra.mxu0 0.0
    %4310 = vmatprep.subr.mxu0 0.0
    %4311 = vmatpush1.msra.mxu0 0.0
    %4312 = vmatprep.subr.mxu0 0.0
    %4313 = vmatpush1.msra.mxu0 0.0
    %4314 = vmatprep.subr.mxu0 0.0
    %4315 = vmatpush1.msra.mxu0 0.0
    %4316 = vmatprep.subr.mxu0 0.0
    %4317 = vmatpush1.msra.mxu0 0.0
    %4318 = vmatprep.subr.mxu0 0.0
    %4319 = vmatpush1.msra.mxu0 0.0
    %4320 = vmatprep.subr.mxu0 0.0
    %4321 = vmatpush1.msra.mxu0 0.0
    %4322 = vmatprep.subr.mxu0 0.0
    %4323 = vmatpush1.msra.mxu0 0.0
    %4324 = vmatprep.subr.mxu0 0.0
    %4325 = vmatpush1.msra.mxu0 0.0
    %4326 = vmatprep.subr.mxu0 0.0
    %4327 = vmatpush1.msra.mxu0 0.0
    %4328 = vmatprep.subr.mxu0 0.0
    %4329 = vmatpush1.msra.mxu0 0.0
    %4330 = vmatprep.subr.mxu0 0.0
    %4331 = vmatpush1.msra.mxu0 0.0
    %4332 = vmatprep.subr.mxu0 0.0
    %4333 = vmatpush1.msra.mxu0 0.0
    %4334 = vmatprep.subr.mxu0 0.0
    %4335 = vmatpush1.msra.mxu0 0.0
    %4336 = vmatprep.subr.mxu0 0.0
    %4337 = vmatpush1.msra.mxu0 0.0
    %4338 = vmatprep.subr.mxu0 0.0
    %4339 = vmatpush1.msra.mxu0 0.0
    %4340 = vmatprep.subr.mxu0 0.0
    %4341 = vmatpush1.msra.mxu0 0.0
    %4342 = vmatprep.subr.mxu0 0.0
    %4343 = vmatpush1.msra.mxu0 0.0
    %4344 = vmatprep.subr.mxu0 0.0
    %4345 = vmatpush1.msra.mxu0 0.0
    %4346 = vmatprep.subr.mxu0 0.0
    %4347 = vmatpush1.msra.mxu0 0.0
    %4348 = vmatprep.subr.mxu0 0.0
    %4349 = vmatpush1.msra.mxu0 0.0
    %4350 = vmatprep.mubr.f32.mxu0 0.0
    %4351 = vmatmul.mubr.f32.gmra.mrb[0].mxu0 %v4284
    %v4352 = vpop.f32.mrb[0].mxu0
    %v4353 = vadd.f32 %v4282, %v4352
    %v4354 = vpop.f32.mrb[0].mxu0
    %4355 = vdwg.mxu0
    %4357 = vset.pattern.permute.xlu0 0
    %4358 = vperm.xlu0 %4357, %v4353
    %v4359 = vpop.permute.xlu0 %4358
    %v4361 = vmul.f32 %v4359, %v4261
    %4362 = vset.pattern.permute.xlu0 1
    %4363 = vperm.xlu0 %4362, %v4353
    %v4364 = vpop.permute.xlu0 %4363
    %v4366 = vmul.f32 %v4364, %v4262
    %v4367 = vadd.f32 %v4361, %v4366
    %4368 = vset.pattern.permute.xlu0 2
    %4369 = vperm.xlu0 %4368, %v4353
    %v4370 = vpop.permute.xlu0 %4369
    %v4372 = vmul.f32 %v4370, %v4263
    %v4373 = vadd.f32 %v4367, %v4372
    %4374 = vset.pattern.permute.xlu0 3
    %4375 = vperm.xlu0 %4374, %v4353
    %v4376 = vpop.permute.xlu0 %4375
    %v4378 = vmul.f32 %v4376, %v4264
    %v4379 = vadd.f32 %v4373, %v4378
    %4380 = vset.pattern.permute.xlu0 4
    %4381 = vperm.xlu0 %4380, %v4353
    %v4382 = vpop.permute.xlu0 %4381
    %v4384 = vmul.f32 %v4382, %v4265
    %v4385 = vadd.f32 %v4379, %v4384
    %4386 = vset.pattern.permute.xlu0 5
    %4387 = vperm.xlu0 %4386, %v4353
    %v4388 = vpop.permute.xlu0 %4387
    %v4390 = vmul.f32 %v4388, %v4266
    %v4391 = vadd.f32 %v4385, %v4390
    %4392 = vset.pattern.permute.xlu0 6
    %4393 = vperm.xlu0 %4392, %v4353
    %v4394 = vpop.permute.xlu0 %4393
    %v4396 = vmul.f32 %v4394, %v4267
    %v4397 = vadd.f32 %v4391, %v4396
    %4398 = vset.pattern.permute.xlu0 7
    %4399 = vperm.xlu0 %4398, %v4353
    %v4400 = vpop.permute.xlu0 %4399
    %v4402 = vmul.f32 %v4400, %v4268
    %v4403 = vadd.f32 %v4397, %v4402
    %v4405 = vsel %vm262, %v4403, 0
    %4407 = vmatprep.subr.mxu0 0.0
    %4408 = vmatpush1.msra.mxu0 %v4269
    %4409 = vmatprep.subr.mxu0 0.0
    %4410 = vmatpush1.msra.mxu0 %v4270
    %4411 = vmatprep.subr.mxu0 0.0
    %4412 = vmatpush1.msra.mxu0 %v4271
    %4413 = vmatprep.subr.mxu0 0.0
    %4414 = vmatpush1.msra.mxu0 %v4272
    %4415 = vmatprep.subr.mxu0 0.0
    %4416 = vmatpush1.msra.mxu0 %v4273
    %4417 = vmatprep.subr.mxu0 0.0
    %4418 = vmatpush1.msra.mxu0 %v4274
    %4419 = vmatprep.subr.mxu0 0.0
    %4420 = vmatpush1.msra.mxu0 %v4275
    %4421 = vmatprep.subr.mxu0 0.0
    %4422 = vmatpush1.msra.mxu0 %v4276
    %4423 = vmatprep.subr.mxu0 0.0
    %4424 = vmatpush1.msra.mxu0 0.0
    %4425 = vmatprep.subr.mxu0 0.0
    %4426 = vmatpush1.msra.mxu0 0.0
    %4427 = vmatprep.subr.mxu0 0.0
    %4428 = vmatpush1.msra.mxu0 0.0
    %4429 = vmatprep.subr.mxu0 0.0
    %4430 = vmatpush1.msra.mxu0 0.0
    %4431 = vmatprep.subr.mxu0 0.0
    %4432 = vmatpush1.msra.mxu0 0.0
    %4433 = vmatprep.subr.mxu0 0.0
    %4434 = vmatpush1.msra.mxu0 0.0
    %4435 = vmatprep.subr.mxu0 0.0
    %4436 = vmatpush1.msra.mxu0 0.0
    %4437 = vmatprep.subr.mxu0 0.0
    %4438 = vmatpush1.msra.mxu0 0.0
    %4439 = vmatprep.subr.mxu0 0.0
    %4440 = vmatpush1.msra.mxu0 0.0
    %4441 = vmatprep.subr.mxu0 0.0
    %4442 = vmatpush1.msra.mxu0 0.0
    %4443 = vmatprep.subr.mxu0 0.0
    %4444 = vmatpush1.msra.mxu0 0.0
    %4445 = vmatprep.subr.mxu0 0.0
    %4446 = vmatpush1.msra.mxu0 0.0
    %4447 = vmatprep.subr.mxu0 0.0
    %4448 = vmatpush1.msra.mxu0 0.0
    %4449 = vmatprep.subr.mxu0 0.0
    %4450 = vmatpush1.msra.mxu0 0.0
    %4451 = vmatprep.subr.mxu0 0.0
    %4452 = vmatpush1.msra.mxu0 0.0
    %4453 = vmatprep.subr.mxu0 0.0
    %4454 = vmatpush1.msra.mxu0 0.0
    %4455 = vmatprep.subr.mxu0 0.0
    %4456 = vmatpush1.msra.mxu0 0.0
    %4457 = vmatprep.subr.mxu0 0.0
    %4458 = vmatpush1.msra.mxu0 0.0
    %4459 = vmatprep.subr.mxu0 0.0
    %4460 = vmatpush1.msra.mxu0 0.0
    %4461 = vmatprep.subr.mxu0 0.0
    %4462 = vmatpush1.msra.mxu0 0.0
    %4463 = vmatprep.subr.mxu0 0.0
    %4464 = vmatpush1.msra.mxu0 0.0
    %4465 = vmatprep.subr.mxu0 0.0
    %4466 = vmatpush1.msra.mxu0 0.0
    %4467 = vmatprep.subr.mxu0 0.0
    %4468 = vmatpush1.msra.mxu0 0.0
    %4469 = vmatprep.subr.mxu0 0.0
    %4470 = vmatpush1.msra.mxu0 0.0
    %4471 = vmatprep.mubr.f32.mxu0 0.0
    %4472 = vmatmul.mubr.f32.gmra.mrb[0].mxu0 %v4405
    %v4473 = vpop.f32.mrb[0].mxu0
    %v4474 = vadd.f32 %v4282, %v4473
    %v4475 = vpop.f32.mrb[0].mxu0
    %4476 = vdwg.mxu0
    %vm4477 = vcmask 64512
    %v4478 = vsel %vm4477, %v4474, -inf
    %4479 = vmax.xlane.f32.xlu0 %v4478
    %v4480 = vpop.xlane.xlu0 %4479
    %v4481 = vsub.f32 %v4474, %v4480
    %v4482 = vmul.f32 %v4481, 1.442695
    %v4483 = vpow.pop %v4482
    %v4484 = vsel %vm4477, %v4483, 0.0
    %4485 = vadd.xlane.f32.xlu0 %v4484
    %v4486 = vpop.xlane.xlu0 %4485
    %v4487 = vrcp.pop %v4486
    %v4488 = vmul.f32 %v4483, %v4487
    %4490 = vset.pattern.permute.xlu0 0
    %4491 = vperm.xlu0 %4490, %v4488
    %v4492 = vpop.permute.xlu0 %4491
    %v4494 = vmul.f32 %v4492, %v4261
    %4495 = vset.pattern.permute.xlu0 1
    %4496 = vperm.xlu0 %4495, %v4488
    %v4497 = vpop.permute.xlu0 %4496
    %v4499 = vmul.f32 %v4497, %v4262
    %v4500 = vadd.f32 %v4494, %v4499
    %4501 = vset.pattern.permute.xlu0 2
    %4502 = vperm.xlu0 %4501, %v4488
    %v4503 = vpop.permute.xlu0 %4502
    %v4505 = vmul.f32 %v4503, %v4263
    %v4506 = vadd.f32 %v4500, %v4505
    %4507 = vset.pattern.permute.xlu0 3
    %4508 = vperm.xlu0 %4507, %v4488
    %v4509 = vpop.permute.xlu0 %4508
    %v4511 = vmul.f32 %v4509, %v4264
    %v4512 = vadd.f32 %v4506, %v4511
    %4513 = vset.pattern.permute.xlu0 4
    %4514 = vperm.xlu0 %4513, %v4488
    %v4515 = vpop.permute.xlu0 %4514
    %v4517 = vmul.f32 %v4515, %v4265
    %v4518 = vadd.f32 %v4512, %v4517
    %4519 = vset.pattern.permute.xlu0 5
    %4520 = vperm.xlu0 %4519, %v4488
    %v4521 = vpop.permute.xlu0 %4520
    %v4523 = vmul.f32 %v4521, %v4266
    %v4524 = vadd.f32 %v4518, %v4523
    %4525 = vset.pattern.permute.xlu0 6
    %4526 = vperm.xlu0 %4525, %v4488
    %v4527 = vpop.permute.xlu0 %4526
    %v4529 = vmul.f32 %v4527, %v4267
    %v4530 = vadd.f32 %v4524, %v4529
    %4531 = vset.pattern.permute.xlu0 7
    %4532 = vperm.xlu0 %4531, %v4488
    %v4533 = vpop.permute.xlu0 %4532
    %v4535 = vmul.f32 %v4533, %v4268
    %v4536 = vadd.f32 %v4530, %v4535
    %v4537 = vld [vmem:[%s8] sm:$0xff]
    %v4538 = vld [vmem:[%s8 + $0x8] sm:$0xff]
    %v4539 = vld [vmem:[%s8 + $0x10] sm:$0xff]
    %v4540 = vld [vmem:[%s8 + $0x18] sm:$0xff]
    %v4541 = vld [vmem:[%s8 + $0x20] sm:$0xff]
    %v4542 = vld [vmem:[%s8 + $0x28] sm:$0xff]
    %v4543 = vld [vmem:[%s8 + $0x30] sm:$0xff]
    %v4544 = vld [vmem:[%s8 + $0x38] sm:$0xff]
    %v4545 = vld [vmem:[%s9] sm:$0x1]
    %v4547 = vlaneseq
    %v4548 = vshrl.u32 %v4547, 7
    %v4549 = vsub.s32 0, %v4548
    %v4550 = vrot.slane %v4545, %v4549
    %v4553 = vsel %vm262, %v4536, 0
    %4555 = vmatprep.subr.mxu0 0.0
    %4556 = vmatpush1.msra.mxu0 %v4537
    %4557 = vmatprep.subr.mxu0 0.0
    %4558 = vmatpush1.msra.mxu0 %v4538
    %4559 = vmatprep.subr.mxu0 0.0
    %4560 = vmatpush1.msra.mxu0 %v4539
    %4561 = vmatprep.subr.mxu0 0.0
    %4562 = vmatpush1.msra.mxu0 %v4540
    %4563 = vmatprep.subr.mxu0 0.0
    %4564 = vmatpush1.msra.mxu0 %v4541
    %4565 = vmatprep.subr.mxu0 0.0
    %4566 = vmatpush1.msra.mxu0 %v4542
    %4567 = vmatprep.subr.mxu0 0.0
    %4568 = vmatpush1.msra.mxu0 %v4543
    %4569 = vmatprep.subr.mxu0 0.0
    %4570 = vmatpush1.msra.mxu0 %v4544
    %4571 = vmatprep.subr.mxu0 0.0
    %4572 = vmatpush1.msra.mxu0 0.0
    %4573 = vmatprep.subr.mxu0 0.0
    %4574 = vmatpush1.msra.mxu0 0.0
    %4575 = vmatprep.subr.mxu0 0.0
    %4576 = vmatpush1.msra.mxu0 0.0
    %4577 = vmatprep.subr.mxu0 0.0
    %4578 = vmatpush1.msra.mxu0 0.0
    %4579 = vmatprep.subr.mxu0 0.0
    %4580 = vmatpush1.msra.mxu0 0.0
    %4581 = vmatprep.subr.mxu0 0.0
    %4582 = vmatpush1.msra.mxu0 0.0
    %4583 = vmatprep.subr.mxu0 0.0
    %4584 = vmatpush1.msra.mxu0 0.0
    %4585 = vmatprep.subr.mxu0 0.0
    %4586 = vmatpush1.msra.mxu0 0.0
    %4587 = vmatprep.subr.mxu0 0.0
    %4588 = vmatpush1.msra.mxu0 0.0
    %4589 = vmatprep.subr.mxu0 0.0
    %4590 = vmatpush1.msra.mxu0 0.0
    %4591 = vmatprep.subr.mxu0 0.0
    %4592 = vmatpush1.msra.mxu0 0.0
    %4593 = vmatprep.subr.mxu0 0.0
    %4594 = vmatpush1.msra.mxu0 0.0
    %4595 = vmatprep.subr.mxu0 0.0
    %4596 = vmatpush1.msra.mxu0 0.0
    %4597 = vmatprep.subr.mxu0 0.0
    %4598 = vmatpush1.msra.mxu0 0.0
    %4599 = vmatprep.subr.mxu0 0.0
    %4600 = vmatpush1.msra.mxu0 0.0
    %4601 = vmatprep.subr.mxu0 0.0
    %4602 = vmatpush1.msra.mxu0 0.0
    %4603 = vmatprep.subr.mxu0 0.0
    %4604 = vmatpush1.msra.mxu0 0.0
    %4605 = vmatprep.subr.mxu0 0.0
    %4606 = vmatpush1.msra.mxu0 0.0
    %4607 = vmatprep.subr.mxu0 0.0
    %4608 = vmatpush1.msra.mxu0 0.0
    %4609 = vmatprep.subr.mxu0 0.0
    %4610 = vmatpush1.msra.mxu0 0.0
    %4611 = vmatprep.subr.mxu0 0.0
    %4612 = vmatpush1.msra.mxu0 0.0
    %4613 = vmatprep.subr.mxu0 0.0
    %4614 = vmatpush1.msra.mxu0 0.0
    %4615 = vmatprep.subr.mxu0 0.0
    %4616 = vmatpush1.msra.mxu0 0.0
    %4617 = vmatprep.subr.mxu0 0.0
    %4618 = vmatpush1.msra.mxu0 0.0
    %4619 = vmatprep.mubr.f32.mxu0 0.0
    %4620 = vmatmul.mubr.f32.gmra.mrb[0].mxu0 %v4553
    %v4621 = vpop.f32.mrb[0].mxu0
    %v4622 = vadd.f32 %v4550, %v4621
    %v4623 = vpop.f32.mrb[0].mxu0
    %4624 = vdwg.mxu0
    %v4625 = vmax.f32 %v4622, 0.0
    %v4626 = vld [vmem:[%s10] sm:$0xff]
    %v4627 = vld [vmem:[%s10 + $0x8] sm:$0xff]
    %v4628 = vld [vmem:[%s10 + $0x10] sm:$0xff]
    %v4629 = vld [vmem:[%s10 + $0x18] sm:$0xff]
    %v4630 = vld [vmem:[%s11] sm:$0x1]
    %v4632 = vlaneseq
    %v4633 = vshrl.u32 %v4632, 7
    %v4634 = vsub.s32 0, %v4633
    %v4635 = vrot.slane %v4630, %v4634
    %v4638 = vsel %vm408, %v4625, 0
    %4640 = vmatprep.subr.mxu0 0.0
    %4641 = vmatpush1.msra.mxu0 %v4626
    %4642 = vmatprep.subr.mxu0 0.0
    %4643 = vmatpush1.msra.mxu0 %v4627
    %4644 = vmatprep.subr.mxu0 0.0
    %4645 = vmatpush1.msra.mxu0 %v4628
    %4646 = vmatprep.subr.mxu0 0.0
    %4647 = vmatpush1.msra.mxu0 %v4629
    %4648 = vmatprep.subr.mxu0 0.0
    %4649 = vmatpush1.msra.mxu0 0.0
    %4650 = vmatprep.subr.mxu0 0.0
    %4651 = vmatpush1.msra.mxu0 0.0
    %4652 = vmatprep.subr.mxu0 0.0
    %4653 = vmatpush1.msra.mxu0 0.0
    %4654 = vmatprep.subr.mxu0 0.0
    %4655 = vmatpush1.msra.mxu0 0.0
    %4656 = vmatprep.subr.mxu0 0.0
    %4657 = vmatpush1.msra.mxu0 0.0
    %4658 = vmatprep.subr.mxu0 0.0
    %4659 = vmatpush1.msra.mxu0 0.0
    %4660 = vmatprep.subr.mxu0 0.0
    %4661 = vmatpush1.msra.mxu0 0.0
    %4662 = vmatprep.subr.mxu0 0.0
    %4663 = vmatpush1.msra.mxu0 0.0
    %4664 = vmatprep.subr.mxu0 0.0
    %4665 = vmatpush1.msra.mxu0 0.0
    %4666 = vmatprep.subr.mxu0 0.0
    %4667 = vmatpush1.msra.mxu0 0.0
    %4668 = vmatprep.subr.mxu0 0.0
    %4669 = vmatpush1.msra.mxu0 0.0
    %4670 = vmatprep.subr.mxu0 0.0
    %4671 = vmatpush1.msra.mxu0 0.0
    %4672 = vmatprep.subr.mxu0 0.0
    %4673 = vmatpush1.msra.mxu0 0.0
    %4674 = vmatprep.subr.mxu0 0.0
    %4675 = vmatpush1.msra.mxu0 0.0
    %4676 = vmatprep.subr.mxu0 0.0
    %4677 = vmatpush1.msra.mxu0 0.0
    %4678 = vmatprep.subr.mxu0 0.0
    %4679 = vmatpush1.msra.mxu0 0.0
    %4680 = vmatprep.subr.mxu0 0.0
    %4681 = vmatpush1.msra.mxu0 0.0
    %4682 = vmatprep.subr.mxu0 0.0
    %4683 = vmatpush1.msra.mxu0 0.0
    %4684 = vmatprep.subr.mxu0 0.0
    %4685 = vmatpush1.msra.mxu0 0.0
    %4686 = vmatprep.subr.mxu0 0.0
    %4687 = vmatpush1.msra.mxu0 0.0
    %4688 = vmatprep.subr.mxu0 0.0
    %4689 = vmatpush1.msra.mxu0 0.0
    %4690 = vmatprep.subr.mxu0 0.0
    %4691 = vmatpush1.msra.mxu0 0.0
    %4692 = vmatprep.subr.mxu0 0.0
    %4693 = vmatpush1.msra.mxu0 0.0
    %4694 = vmatprep.subr.mxu0 0.0
    %4695 = vmatpush1.msra.mxu0 0.0
    %4696 = vmatprep.subr.mxu0 0.0
    %4697 = vmatpush1.msra.mxu0 0.0
    %4698 = vmatprep.subr.mxu0 0.0
    %4699 = vmatpush1.msra.mxu0 0.0
    %4700 = vmatprep.subr.mxu0 0.0
    %4701 = vmatpush1.msra.mxu0 0.0
    %4702 = vmatprep.subr.mxu0 0.0
    %4703 = vmatpush1.msra.mxu0 0.0
    %4704 = vmatprep.mubr.f32.mxu0 0.0
    %4705 = vmatmul.mubr.f32.gmra.mrb[0].mxu0 %v4638
    %v4706 = vpop.f32.mrb[0].mxu0
    %v4707 = vadd.f32 %v4635, %v4706
    %v4708 = vpop.f32.mrb[0].mxu0
    %4709 = vdwg.mxu0
    %4710 = vrot.lane.b32.xlu0 %v4488, 64
    %v4711 = vpop.permute.xlu0 %4710
    %4714 = vrot.lane.b32.xlu0 %v4707, 72
    %v4715 = vpop.permute.xlu0 %4714
    %v4717 = vsel %vm262, %v1129, %v4711
    %vm4718 = vcmask 588800
    %v4719 = vsel %vm4718, %v4717, %v4715
    %vm4720 = vcmask 621568
    %v4721 = vsel %vm4720, %v4719, 0.0
    %4722 = vst [vmem:[#allocation9] sm:$0xff] %v4721
    // Predicated region
    $region58: #{tpu_custom_call.1} parent=1 // pred_check
      _
    $region59: #{tpu_custom_call.1} parent=1 // pred_check_branch
      %4724 = sbr.rel (0) target = $region61
    $region60: #{tpu_custom_call.1} parent=1 // pred_region
      %s4726 = ssub.s32 128, 128
      %4727 = vsyncadd [#allocation6], %s4726
      %s4729 = sshll.u32 [#allocation9], 4
      %s4730 = int_to_ptr.vmem [resolvable:$true] %s4729
      %4732 = dma.vmem_to_hbm [thread:$0]  %s4730, 128, %s12, [#allocation6]
    $region61: #{tpu_custom_call.1} parent=1 // pred_fallthru
      _
    // Predicated region
    $region62: #{tpu_custom_call.1} parent=1 // pred_check
      _
    $region63: #{tpu_custom_call.1} parent=1 // pred_check_branch
      %4734 = sbr.rel (0) target = $region65
    $region64: #{tpu_custom_call.1} parent=1 // pred_region
      %4735 = dma.done [#allocation6], 128
    $region65: #{tpu_custom_call.1} parent=1 // pred_fallthru
      _
    %4736 = vsyncpa [#allocation5], 1
    %4737 = vsyncpa [#allocation8], 1
    %4738 = vsyncpa [#allocation6], 1

</llo_original>
